<compile_context>
chip_gen: v7x
topology: tpu7x:2x2x1
jax: 0.10.0
libtpu: 0.0.40
codegen_flags: <defaults>
</compile_context>

<pallas_src>
import numpy as np

import jax
import jax.numpy as jnp
from jax.experimental import pallas as pl
from jax.experimental.pallas import tpu as pltpu


# ---------------------------------------------------------------------------
# Static network geometry (MNIST: 1x28x28 -> ... -> 320 -> 50 -> 10)
# ---------------------------------------------------------------------------
_IMG = 28                       # input H = W
_K = 5                          # conv kernel size
_C1, _C2 = 10, 20               # conv output channels
_P1 = (_IMG - _K + 1) // 2      # 12 : pooled rows/cols after conv1
_P2 = (_P1 - _K + 1) // 2       # 4  : pooled rows/cols after conv2
_SPAN1 = (_K + 1) * _IMG        # 168: flattened x rows feeding one pooled row
_SPAN2 = (_K + 1) * _C1 * _P1   # 720: y1 rows feeding one pooled row of conv2
_BLK1 = _C1 * _P1               # 120: rows per pool-corner block (conv1)
_BLK2 = _C2 * _P2               # 80 : rows per pool-corner block (conv2)
_Y1_ROWS = _P1 * _BLK1          # 1440
_Y2_ROWS = _P2 * _BLK2          # 320 (== fc1 input size)
_FC_H = 50
_NCLS = 10


def _round_up(x, m):
    return ((x + m - 1) // m) * m


# ---------------------------------------------------------------------------
# The single fused kernel
# ---------------------------------------------------------------------------
def _net_fused_kernel(x_ref, m1_ref, b1_ref, m2_ref, b2_ref,
                      fw1_ref, fb1_ref, fw2_ref, fb2_ref,
                      o_ref, y1_s, y2_s):
    # x_ref : (784, TB) bf16   -- row = h*28 + w, column = image in batch tile
    # m1    : (480, 168) bf16  -- rows (corner, c1, pooled-col), cols (u, w)
    # m2    : (320, 720) bf16  -- rows (corner, c2, pooled-col), cols (u, cin, w)
    # fw1   : (50, 320) bf16, fw2: (10, 50) bf16, biases f32 column vectors
    # o_ref : (10, TB)  f32    -- log-probs, class-major (batch on lanes)
    # y1_s  : (1440, TB) bf16 scratch, row = h*120 + c1*12 + w
    # y2_s  : (320,  TB) bf16 scratch, row = h*80  + c2*4  + w

    # ---- conv1 + bias + 2x2 max-pool + ReLU ------------------------------
    m1 = m1_ref[...]
    b1 = b1_ref[...]
    for ph in range(_P1):                                    # 12 pooled rows
        rhs = x_ref[2 * _IMG * ph: 2 * _IMG * ph + _SPAN1, :]      # (168, TB)
        r = jnp.dot(m1, rhs, preferred_element_type=jnp.float32)   # (480, TB)
        m = jnp.maximum(
            jnp.maximum(r[0 * _BLK1:1 * _BLK1], r[1 * _BLK1:2 * _BLK1]),
            jnp.maximum(r[2 * _BLK1:3 * _BLK1], r[3 * _BLK1:4 * _BLK1]))
        y1_s[_BLK1 * ph:_BLK1 * (ph + 1), :] = (
            jnp.maximum(m + b1, 0.0).astype(jnp.bfloat16))

    # ---- conv2 (+dropout2d identity) + bias + 2x2 max-pool + ReLU --------
    m2 = m2_ref[...]
    b2 = b2_ref[...]
    for ph in range(_P2):                                    # 4 pooled rows
        rhs = y1_s[2 * _BLK1 * ph: 2 * _BLK1 * ph + _SPAN2, :]     # (720, TB)
        r = jnp.dot(m2, rhs, preferred_element_type=jnp.float32)   # (320, TB)
        m = jnp.maximum(
            jnp.maximum(r[0 * _BLK2:1 * _BLK2], r[1 * _BLK2:2 * _BLK2]),
            jnp.maximum(r[2 * _BLK2:3 * _BLK2], r[3 * _BLK2:4 * _BLK2]))
        y2_s[_BLK2 * ph:_BLK2 * (ph + 1), :] = (
            jnp.maximum(m + b2, 0.0).astype(jnp.bfloat16))

    # ---- fc1 + ReLU (+dropout identity), fc2, log_softmax ----------------
    h = jnp.dot(fw1_ref[...], y2_s[...],
                preferred_element_type=jnp.float32)                # (50, TB)
    h = jnp.maximum(h + fb1_ref[...], 0.0).astype(jnp.bfloat16)
    logits = jnp.dot(fw2_ref[...], h,
                     preferred_element_type=jnp.float32) + fb2_ref[...]  # (10,TB)
    mx = jnp.max(logits, axis=0, keepdims=True)
    s = logits - mx
    lse = jnp.log(jnp.sum(jnp.exp(s), axis=0, keepdims=True))
    o_ref[...] = s - lse


# ---------------------------------------------------------------------------
# Host-side, one-time weight preparation (block-Toeplitz expansion)
# ---------------------------------------------------------------------------
def _pooled_conv_matrix(w, in_w):
    """Expand a 5x5 conv + 2x2 max-pool into one matmul per pooled output row.

    Rows are indexed (pool-corner(hp,wp), cout, pooled-col); columns are
    indexed (input-row-within-window u in [0,6), cin, input-col).
    """
    w = np.asarray(w, np.float32)
    cout, cin, kh, kw = w.shape
    pw_n = (in_w - kw + 1) // 2
    span_h = kh + 1                       # 2x2 pool -> kh+1 input rows needed
    mat = np.zeros((4 * cout * pw_n, span_h * cin * in_w), np.float32)
    cin_idx = np.arange(cin)
    for hp in range(2):
        for wp in range(2):
            corner = hp * 2 + wp
            for c in range(cout):
                for pw in range(pw_n):
                    row = (corner * cout + c) * pw_n + pw
                    for i in range(kh):
                        for j in range(kw):
                            u = hp + i
                            col0 = 2 * pw + wp + j
                            cols = (u * cin + cin_idx) * in_w + col0
                            mat[row, cols] = w[c, :, i, j]
    return mat


def init_params(key):
    ks = jax.random.split(key, 8)
    s = 0.1
    return {
        "conv1_w": s * jax.random.normal(ks[0], (10, 1, 5, 5), jnp.float32),
        "conv1_b": s * jax.random.normal(ks[1], (10,), jnp.float32),
        "conv2_w": s * jax.random.normal(ks[2], (20, 10, 5, 5), jnp.float32),
        "conv2_b": s * jax.random.normal(ks[3], (20,), jnp.float32),
        "fc1_w": s * jax.random.normal(ks[4], (50, 320), jnp.float32),
        "fc1_b": s * jax.random.normal(ks[5], (50,), jnp.float32),
        "fc2_w": s * jax.random.normal(ks[6], (10, 50), jnp.float32),
        "fc2_b": s * jax.random.normal(ks[7], (10,), jnp.float32),
    }


def prepare_params(p):
    """One-time weight expansion / reorder / cast, hoisted out of the hot path."""
    m1 = _pooled_conv_matrix(p["conv1_w"], in_w=_IMG)          # (480, 168)
    m2 = _pooled_conv_matrix(p["conv2_w"], in_w=_P1)           # (320, 720)
    b1r = np.repeat(np.asarray(p["conv1_b"], np.float32), _P1)[:, None]  # (120,1)
    b2r = np.repeat(np.asarray(p["conv2_b"], np.float32), _P2)[:, None]  # (80,1)

    # fc1 columns permuted from torch's (c, h, w) flatten order to the
    # kernel's (h, c, w) activation row order.
    perm = np.zeros(_Y2_ROWS, np.int32)
    for h in range(_P2):
        for c in range(_C2):
            for w in range(_P2):
                perm[h * _BLK2 + c * _P2 + w] = c * (_P2 * _P2) + h * _P2 + w
    f1w = np.asarray(p["fc1_w"], np.float32)[:, perm]          # (50, 320)

    return {
        "m1": jnp.asarray(m1, jnp.bfloat16),
        "b1": jnp.asarray(b1r, jnp.float32),
        "m2": jnp.asarray(m2, jnp.bfloat16),
        "b2": jnp.asarray(b2r, jnp.float32),
        "f1w": jnp.asarray(f1w, jnp.bfloat16),
        "f1b": jnp.asarray(np.asarray(p["fc1_b"], np.float32)[:, None]),
        "f2w": jnp.asarray(np.asarray(p["fc2_w"], np.float32), jnp.bfloat16),
        "f2b": jnp.asarray(np.asarray(p["fc2_b"], np.float32)[:, None]),
    }


# ---------------------------------------------------------------------------
# Forward pass (matches PyTorch Net.forward, eval mode)
# ---------------------------------------------------------------------------
def _choose_batch_tile(n):
    """Lane tile for the batch dim: multiple of 128, >=2 grid steps when the
    batch allows it (v7x megacore), capped at 512 lanes."""
    n128 = _round_up(max(n, 1), 128)
    if n128 <= 128:
        return 128
    for tile in (512, 384, 256, 128):
        if n128 % tile == 0 and n128 // tile >= 2:
            return tile
    return 128


@jax.jit
def net_forward(x_nchw, pp):
    n = x_nchw.shape[0]
    assert x_nchw.shape[1:] == (1, _IMG, _IMG)

    n_pad = _round_up(max(n, 1), 128)
    tile = _choose_batch_tile(n)
    grid = n_pad // tile

    # (N,1,28,28) -> (784, N) pixel-rows x batch-lanes (free reshape + tiny T)
    xc = x_nchw.reshape(n, _IMG * _IMG).T.astype(jnp.bfloat16)
    if n_pad != n:
        xc = jnp.pad(xc, ((0, 0), (0, n_pad - n)))

    macs = (_P1 * 4 * _BLK1 * _SPAN1 + _P2 * 4 * _BLK2 * _SPAN2
            + _FC_H * _Y2_ROWS + _NCLS * _FC_H)
    wbytes = 2 * (4 * _BLK1 * _SPAN1 + 4 * _BLK2 * _SPAN2
                  + _FC_H * _Y2_ROWS + _NCLS * _FC_H)
    wbytes += 4 * (_BLK1 + _BLK2 + _FC_H + _NCLS)
    cost = pl.CostEstimate(
        flops=2 * macs * n_pad,
        transcendentals=(_NCLS + 1) * n_pad,
        bytes_accessed=_IMG * _IMG * n_pad * 2 + wbytes + _NCLS * n_pad * 4)

    out = pl.pallas_call(
        _net_fused_kernel,
        out_shape=jax.ShapeDtypeStruct((_NCLS, n_pad), jnp.float32),
        grid_spec=pltpu.PrefetchScalarGridSpec(
            num_scalar_prefetch=0,
            grid=(grid,),
            in_specs=[
                pl.BlockSpec((_IMG * _IMG, tile), lambda b: (0, b)),
                pl.BlockSpec((4 * _BLK1, _SPAN1), lambda b: (0, 0)),
                pl.BlockSpec((_BLK1, 1), lambda b: (0, 0)),
                pl.BlockSpec((4 * _BLK2, _SPAN2), lambda b: (0, 0)),
                pl.BlockSpec((_BLK2, 1), lambda b: (0, 0)),
                pl.BlockSpec((_FC_H, _Y2_ROWS), lambda b: (0, 0)),
                pl.BlockSpec((_FC_H, 1), lambda b: (0, 0)),
                pl.BlockSpec((_NCLS, _FC_H), lambda b: (0, 0)),
                pl.BlockSpec((_NCLS, 1), lambda b: (0, 0)),
            ],
            out_specs=pl.BlockSpec((_NCLS, tile), lambda b: (0, b)),
            scratch_shapes=[
                pltpu.VMEM((_Y1_ROWS, tile), jnp.bfloat16),
                pltpu.VMEM((_Y2_ROWS, tile), jnp.bfloat16),
            ],
        ),
        compiler_params=pltpu.CompilerParams(
            dimension_semantics=("parallel",)),
        cost_estimate=cost,
    )(xc, pp["m1"], pp["b1"], pp["m2"], pp["b2"],
      pp["f1w"], pp["f1b"], pp["f2w"], pp["f2b"])

    return out[:, :n].T                                        # (N, 10) f32


# ---------------------------------------------------------------------------
# Pure-JAX reference (f32) for correctness checking
# ---------------------------------------------------------------------------
def _maxpool2x2(y):
    nb, c, hh, ww = y.shape
    return jnp.max(y.reshape(nb, c, hh // 2, 2, ww // 2, 2), axis=(3, 5))


def _reference_forward(x, p):
    dn = ("NCHW", "OIHW", "NCHW")
    y = jax.lax.conv_general_dilated(x, p["conv1_w"], (1, 1), "VALID",
                                     dimension_numbers=dn)
    y = y + p["conv1_b"][None, :, None, None]
    y = jax.nn.relu(_maxpool2x2(y))
    y = jax.lax.conv_general_dilated(y, p["conv2_w"], (1, 1), "VALID",
                                     dimension_numbers=dn)
    y = y + p["conv2_b"][None, :, None, None]
    y = jax.nn.relu(_maxpool2x2(y))
    y = y.reshape(y.shape[0], -1)                  # torch .view(-1, 320) order
    y = jax.nn.relu(y @ p["fc1_w"].T + p["fc1_b"])
    y = y @ p["fc2_w"].T + p["fc2_b"]
    return jax.nn.log_softmax(y, axis=1)


if __name__ == "__main__":
    key = jax.random.PRNGKey(0)
    k_x, k_p = jax.random.split(key)
    # MNIST-style input: batch=2, 1 channel, 28x28 (required so flatten -> 320)
    x = jax.random.normal(k_x, (2, 1, 28, 28), jnp.float32)
    params = init_params(k_p)
    pp = prepare_params(params)

    out = jax.block_until_ready(net_forward(x, pp))

    assert out.shape == (2, 10)
    assert out.dtype == jnp.float32
    assert bool(jnp.all(jnp.isfinite(out)))
    # log_softmax rows must (log-)normalize to ~1
    assert bool(jnp.all(jnp.abs(jnp.sum(jnp.exp(out), axis=1) - 1.0) < 1e-3))
    # Compare against the pure-JAX f32 reference (bf16 MXU inputs -> loose tol)
    ref = _reference_forward(x, params)
    err = float(jnp.max(jnp.abs(out - ref)))
    assert err < 0.1, f"max |out - ref| = {err}"
    print("KERNEL_OK")
</pallas_src>

<mosaic_0001>
module attributes {stable_mosaic.version = 11 : i64} {
  func.func @_net_fused_kernel(%arg0: i32, %arg1: memref<784x128xbf16, #tpu.memory_space<vmem>>, %arg2: memref<480x168xbf16, #tpu.memory_space<vmem>>, %arg3: memref<120x1xf32, #tpu.memory_space<vmem>>, %arg4: memref<320x720xbf16, #tpu.memory_space<vmem>>, %arg5: memref<80x1xf32, #tpu.memory_space<vmem>>, %arg6: memref<50x320xbf16, #tpu.memory_space<vmem>>, %arg7: memref<50x1xf32, #tpu.memory_space<vmem>>, %arg8: memref<10x50xbf16, #tpu.memory_space<vmem>>, %arg9: memref<10x1xf32, #tpu.memory_space<vmem>>, %arg10: memref<10x128xf32, #tpu.memory_space<vmem>>, %arg11: memref<1440x128xbf16, #tpu.memory_space<vmem>>, %arg12: memref<320x128xbf16, #tpu.memory_space<vmem>>) attributes {dimension_semantics = [#tpu.dimension_semantics<parallel>], iteration_bounds = array<i64: 1>, scalar_prefetch = 0 : i64, scratch_operands = 2 : i64, tpu.core_type = #tpu.core_type<tc>, window_params = [{transform_indices = @transform_0, window_bounds = array<i64: 784, 128>}, {pipeline_mode = #tpu.pipeline_mode<synchronous>, transform_indices = @transform_1, window_bounds = array<i64: 480, 168>}, {pipeline_mode = #tpu.pipeline_mode<synchronous>, transform_indices = @transform_2, window_bounds = array<i64: 120, 1>}, {pipeline_mode = #tpu.pipeline_mode<synchronous>, transform_indices = @transform_3, window_bounds = array<i64: 320, 720>}, {pipeline_mode = #tpu.pipeline_mode<synchronous>, transform_indices = @transform_4, window_bounds = array<i64: 80, 1>}, {pipeline_mode = #tpu.pipeline_mode<synchronous>, transform_indices = @transform_5, window_bounds = array<i64: 50, 320>}, {pipeline_mode = #tpu.pipeline_mode<synchronous>, transform_indices = @transform_6, window_bounds = array<i64: 50, 1>}, {pipeline_mode = #tpu.pipeline_mode<synchronous>, transform_indices = @transform_7, window_bounds = array<i64: 10, 50>}, {pipeline_mode = #tpu.pipeline_mode<synchronous>, transform_indices = @transform_8, window_bounds = array<i64: 10, 1>}, {transform_indices = @transform_9, window_bounds = array<i64: 10, 128>}]} {
    %c0 = arith.constant 0 : index
    %c0_0 = arith.constant 0 : index
    %0 = vector.load %arg2[%c0, %c0_0] : memref<480x168xbf16, #tpu.memory_space<vmem>>, vector<480x168xbf16>
    %c0_1 = arith.constant 0 : index
    %c0_2 = arith.constant 0 : index
    %1 = vector.load %arg3[%c0_1, %c0_2] : memref<120x1xf32, #tpu.memory_space<vmem>>, vector<120x1xf32>
    %c0_3 = arith.constant 0 : index
    %c0_4 = arith.constant 0 : index
    %2 = vector.load %arg1[%c0_3, %c0_4] : memref<784x128xbf16, #tpu.memory_space<vmem>>, vector<168x128xbf16>
    %cst = arith.constant dense<0.000000e+00> : vector<480x128xf32>
    %3 = tpu.matmul %0, %2, %cst {dimension_numbers = #tpu.dot_dimension_numbers<[1], [0], [0], [1], [0, 0, 1, 1], [], []>} : vector<480x168xbf16>, vector<168x128xbf16>, vector<480x128xf32> -> vector<480x128xf32>
    %4 = vector.extract_strided_slice %3 {offsets = [0, 0], sizes = [120, 128], strides = [1, 1]} : vector<480x128xf32> to vector<120x128xf32>
    %5 = vector.extract_strided_slice %3 {offsets = [120, 0], sizes = [120, 128], strides = [1, 1]} : vector<480x128xf32> to vector<120x128xf32>
    %6 = arith.maximumf %4, %5 : vector<120x128xf32>
    %7 = vector.extract_strided_slice %3 {offsets = [240, 0], sizes = [120, 128], strides = [1, 1]} : vector<480x128xf32> to vector<120x128xf32>
    %8 = vector.extract_strided_slice %3 {offsets = [360, 0], sizes = [120, 128], strides = [1, 1]} : vector<480x128xf32> to vector<120x128xf32>
    %9 = arith.maximumf %7, %8 : vector<120x128xf32>
    %10 = arith.maximumf %6, %9 : vector<120x128xf32>
    %11 = vector.broadcast %1 : vector<120x1xf32> to vector<120x128xf32>
    %12 = arith.addf %10, %11 : vector<120x128xf32>
    %cst_5 = arith.constant 0.000000e+00 : f32
    %13 = vector.broadcast %cst_5 : f32 to vector<120x128xf32>
    %14 = arith.maximumf %12, %13 : vector<120x128xf32>
    %15 = arith.truncf %14 : vector<120x128xf32> to vector<120x128xbf16>
    %c0_6 = arith.constant 0 : index
    %c0_7 = arith.constant 0 : index
    %16 = vector.load %arg11[%c0_6, %c0_7] : memref<1440x128xbf16, #tpu.memory_space<vmem>>, vector<120x128xbf16>
    tpu.vector_store %arg11[%c0_6, %c0_7], %15 {strides = array<i32>} : memref<1440x128xbf16, #tpu.memory_space<vmem>>, vector<120x128xbf16>,
    %c56 = arith.constant 56 : index
    %c0_8 = arith.constant 0 : index
    %17 = vector.load %arg1[%c56, %c0_8] : memref<784x128xbf16, #tpu.memory_space<vmem>>, vector<168x128xbf16>
    %cst_9 = arith.constant dense<0.000000e+00> : vector<480x128xf32>
    %18 = tpu.matmul %0, %17, %cst_9 {dimension_numbers = #tpu.dot_dimension_numbers<[1], [0], [0], [1], [0, 0, 1, 1], [], []>} : vector<480x168xbf16>, vector<168x128xbf16>, vector<480x128xf32> -> vector<480x128xf32>
    %19 = vector.extract_strided_slice %18 {offsets = [0, 0], sizes = [120, 128], strides = [1, 1]} : vector<480x128xf32> to vector<120x128xf32>
    %20 = vector.extract_strided_slice %18 {offsets = [120, 0], sizes = [120, 128], strides = [1, 1]} : vector<480x128xf32> to vector<120x128xf32>
    %21 = arith.maximumf %19, %20 : vector<120x128xf32>
    %22 = vector.extract_strided_slice %18 {offsets = [240, 0], sizes = [120, 128], strides = [1, 1]} : vector<480x128xf32> to vector<120x128xf32>
    %23 = vector.extract_strided_slice %18 {offsets = [360, 0], sizes = [120, 128], strides = [1, 1]} : vector<480x128xf32> to vector<120x128xf32>
    %24 = arith.maximumf %22, %23 : vector<120x128xf32>
    %25 = arith.maximumf %21, %24 : vector<120x128xf32>
    %26 = vector.broadcast %1 : vector<120x1xf32> to vector<120x128xf32>
    %27 = arith.addf %25, %26 : vector<120x128xf32>
    %cst_10 = arith.constant 0.000000e+00 : f32
    %28 = vector.broadcast %cst_10 : f32 to vector<120x128xf32>
    %29 = arith.maximumf %27, %28 : vector<120x128xf32>
    %30 = arith.truncf %29 : vector<120x128xf32> to vector<120x128xbf16>
    %c120 = arith.constant 120 : index
    %c0_11 = arith.constant 0 : index
    %31 = vector.load %arg11[%c120, %c0_11] : memref<1440x128xbf16, #tpu.memory_space<vmem>>, vector<120x128xbf16>
    tpu.vector_store %arg11[%c120, %c0_11], %30 {strides = array<i32>} : memref<1440x128xbf16, #tpu.memory_space<vmem>>, vector<120x128xbf16>,
    %c112 = arith.constant 112 : index
    %c0_12 = arith.constant 0 : index
    %32 = vector.load %arg1[%c112, %c0_12] : memref<784x128xbf16, #tpu.memory_space<vmem>>, vector<168x128xbf16>
    %cst_13 = arith.constant dense<0.000000e+00> : vector<480x128xf32>
    %33 = tpu.matmul %0, %32, %cst_13 {dimension_numbers = #tpu.dot_dimension_numbers<[1], [0], [0], [1], [0, 0, 1, 1], [], []>} : vector<480x168xbf16>, vector<168x128xbf16>, vector<480x128xf32> -> vector<480x128xf32>
    %34 = vector.extract_strided_slice %33 {offsets = [0, 0], sizes = [120, 128], strides = [1, 1]} : vector<480x128xf32> to vector<120x128xf32>
    %35 = vector.extract_strided_slice %33 {offsets = [120, 0], sizes = [120, 128], strides = [1, 1]} : vector<480x128xf32> to vector<120x128xf32>
    %36 = arith.maximumf %34, %35 : vector<120x128xf32>
    %37 = vector.extract_strided_slice %33 {offsets = [240, 0], sizes = [120, 128], strides = [1, 1]} : vector<480x128xf32> to vector<120x128xf32>
    %38 = vector.extract_strided_slice %33 {offsets = [360, 0], sizes = [120, 128], strides = [1, 1]} : vector<480x128xf32> to vector<120x128xf32>
    %39 = arith.maximumf %37, %38 : vector<120x128xf32>
    %40 = arith.maximumf %36, %39 : vector<120x128xf32>
    %41 = vector.broadcast %1 : vector<120x1xf32> to vector<120x128xf32>
    %42 = arith.addf %40, %41 : vector<120x128xf32>
    %cst_14 = arith.constant 0.000000e+00 : f32
    %43 = vector.broadcast %cst_14 : f32 to vector<120x128xf32>
    %44 = arith.maximumf %42, %43 : vector<120x128xf32>
    %45 = arith.truncf %44 : vector<120x128xf32> to vector<120x128xbf16>
    %c240 = arith.constant 240 : index
    %c0_15 = arith.constant 0 : index
    %46 = vector.load %arg11[%c240, %c0_15] : memref<1440x128xbf16, #tpu.memory_space<vmem>>, vector<120x128xbf16>
    tpu.vector_store %arg11[%c240, %c0_15], %45 {strides = array<i32>} : memref<1440x128xbf16, #tpu.memory_space<vmem>>, vector<120x128xbf16>,
    %c168 = arith.constant 168 : index
    %c0_16 = arith.constant 0 : index
    %47 = vector.load %arg1[%c168, %c0_16] : memref<784x128xbf16, #tpu.memory_space<vmem>>, vector<168x128xbf16>
    %cst_17 = arith.constant dense<0.000000e+00> : vector<480x128xf32>
    %48 = tpu.matmul %0, %47, %cst_17 {dimension_numbers = #tpu.dot_dimension_numbers<[1], [0], [0], [1], [0, 0, 1, 1], [], []>} : vector<480x168xbf16>, vector<168x128xbf16>, vector<480x128xf32> -> vector<480x128xf32>
    %49 = vector.extract_strided_slice %48 {offsets = [0, 0], sizes = [120, 128], strides = [1, 1]} : vector<480x128xf32> to vector<120x128xf32>
    %50 = vector.extract_strided_slice %48 {offsets = [120, 0], sizes = [120, 128], strides = [1, 1]} : vector<480x128xf32> to vector<120x128xf32>
    %51 = arith.maximumf %49, %50 : vector<120x128xf32>
    %52 = vector.extract_strided_slice %48 {offsets = [240, 0], sizes = [120, 128], strides = [1, 1]} : vector<480x128xf32> to vector<120x128xf32>
    %53 = vector.extract_strided_slice %48 {offsets = [360, 0], sizes = [120, 128], strides = [1, 1]} : vector<480x128xf32> to vector<120x128xf32>
    %54 = arith.maximumf %52, %53 : vector<120x128xf32>
    %55 = arith.maximumf %51, %54 : vector<120x128xf32>
    %56 = vector.broadcast %1 : vector<120x1xf32> to vector<120x128xf32>
    %57 = arith.addf %55, %56 : vector<120x128xf32>
    %cst_18 = arith.constant 0.000000e+00 : f32
    %58 = vector.broadcast %cst_18 : f32 to vector<120x128xf32>
    %59 = arith.maximumf %57, %58 : vector<120x128xf32>
    %60 = arith.truncf %59 : vector<120x128xf32> to vector<120x128xbf16>
    %c360 = arith.constant 360 : index
    %c0_19 = arith.constant 0 : index
    %61 = vector.load %arg11[%c360, %c0_19] : memref<1440x128xbf16, #tpu.memory_space<vmem>>, vector<120x128xbf16>
    tpu.vector_store %arg11[%c360, %c0_19], %60 {strides = array<i32>} : memref<1440x128xbf16, #tpu.memory_space<vmem>>, vector<120x128xbf16>,
    %c224 = arith.constant 224 : index
    %c0_20 = arith.constant 0 : index
    %62 = vector.load %arg1[%c224, %c0_20] : memref<784x128xbf16, #tpu.memory_space<vmem>>, vector<168x128xbf16>
    %cst_21 = arith.constant dense<0.000000e+00> : vector<480x128xf32>
    %63 = tpu.matmul %0, %62, %cst_21 {dimension_numbers = #tpu.dot_dimension_numbers<[1], [0], [0], [1], [0, 0, 1, 1], [], []>} : vector<480x168xbf16>, vector<168x128xbf16>, vector<480x128xf32> -> vector<480x128xf32>
    %64 = vector.extract_strided_slice %63 {offsets = [0, 0], sizes = [120, 128], strides = [1, 1]} : vector<480x128xf32> to vector<120x128xf32>
    %65 = vector.extract_strided_slice %63 {offsets = [120, 0], sizes = [120, 128], strides = [1, 1]} : vector<480x128xf32> to vector<120x128xf32>
    %66 = arith.maximumf %64, %65 : vector<120x128xf32>
    %67 = vector.extract_strided_slice %63 {offsets = [240, 0], sizes = [120, 128], strides = [1, 1]} : vector<480x128xf32> to vector<120x128xf32>
    %68 = vector.extract_strided_slice %63 {offsets = [360, 0], sizes = [120, 128], strides = [1, 1]} : vector<480x128xf32> to vector<120x128xf32>
    %69 = arith.maximumf %67, %68 : vector<120x128xf32>
    %70 = arith.maximumf %66, %69 : vector<120x128xf32>
    %71 = vector.broadcast %1 : vector<120x1xf32> to vector<120x128xf32>
    %72 = arith.addf %70, %71 : vector<120x128xf32>
    %cst_22 = arith.constant 0.000000e+00 : f32
    %73 = vector.broadcast %cst_22 : f32 to vector<120x128xf32>
    %74 = arith.maximumf %72, %73 : vector<120x128xf32>
    %75 = arith.truncf %74 : vector<120x128xf32> to vector<120x128xbf16>
    %c480 = arith.constant 480 : index
    %c0_23 = arith.constant 0 : index
    %76 = vector.load %arg11[%c480, %c0_23] : memref<1440x128xbf16, #tpu.memory_space<vmem>>, vector<120x128xbf16>
    tpu.vector_store %arg11[%c480, %c0_23], %75 {strides = array<i32>} : memref<1440x128xbf16, #tpu.memory_space<vmem>>, vector<120x128xbf16>,
    %c280 = arith.constant 280 : index
    %c0_24 = arith.constant 0 : index
    %77 = vector.load %arg1[%c280, %c0_24] : memref<784x128xbf16, #tpu.memory_space<vmem>>, vector<168x128xbf16>
    %cst_25 = arith.constant dense<0.000000e+00> : vector<480x128xf32>
    %78 = tpu.matmul %0, %77, %cst_25 {dimension_numbers = #tpu.dot_dimension_numbers<[1], [0], [0], [1], [0, 0, 1, 1], [], []>} : vector<480x168xbf16>, vector<168x128xbf16>, vector<480x128xf32> -> vector<480x128xf32>
    %79 = vector.extract_strided_slice %78 {offsets = [0, 0], sizes = [120, 128], strides = [1, 1]} : vector<480x128xf32> to vector<120x128xf32>
    %80 = vector.extract_strided_slice %78 {offsets = [120, 0], sizes = [120, 128], strides = [1, 1]} : vector<480x128xf32> to vector<120x128xf32>
    %81 = arith.maximumf %79, %80 : vector<120x128xf32>
    %82 = vector.extract_strided_slice %78 {offsets = [240, 0], sizes = [120, 128], strides = [1, 1]} : vector<480x128xf32> to vector<120x128xf32>
    %83 = vector.extract_strided_slice %78 {offsets = [360, 0], sizes = [120, 128], strides = [1, 1]} : vector<480x128xf32> to vector<120x128xf32>
    %84 = arith.maximumf %82, %83 : vector<120x128xf32>
    %85 = arith.maximumf %81, %84 : vector<120x128xf32>
    %86 = vector.broadcast %1 : vector<120x1xf32> to vector<120x128xf32>
    %87 = arith.addf %85, %86 : vector<120x128xf32>
    %cst_26 = arith.constant 0.000000e+00 : f32
    %88 = vector.broadcast %cst_26 : f32 to vector<120x128xf32>
    %89 = arith.maximumf %87, %88 : vector<120x128xf32>
    %90 = arith.truncf %89 : vector<120x128xf32> to vector<120x128xbf16>
    %c600 = arith.constant 600 : index
    %c0_27 = arith.constant 0 : index
    %91 = vector.load %arg11[%c600, %c0_27] : memref<1440x128xbf16, #tpu.memory_space<vmem>>, vector<120x128xbf16>
    tpu.vector_store %arg11[%c600, %c0_27], %90 {strides = array<i32>} : memref<1440x128xbf16, #tpu.memory_space<vmem>>, vector<120x128xbf16>,
    %c336 = arith.constant 336 : index
    %c0_28 = arith.constant 0 : index
    %92 = vector.load %arg1[%c336, %c0_28] : memref<784x128xbf16, #tpu.memory_space<vmem>>, vector<168x128xbf16>
    %cst_29 = arith.constant dense<0.000000e+00> : vector<480x128xf32>
    %93 = tpu.matmul %0, %92, %cst_29 {dimension_numbers = #tpu.dot_dimension_numbers<[1], [0], [0], [1], [0, 0, 1, 1], [], []>} : vector<480x168xbf16>, vector<168x128xbf16>, vector<480x128xf32> -> vector<480x128xf32>
    %94 = vector.extract_strided_slice %93 {offsets = [0, 0], sizes = [120, 128], strides = [1, 1]} : vector<480x128xf32> to vector<120x128xf32>
    %95 = vector.extract_strided_slice %93 {offsets = [120, 0], sizes = [120, 128], strides = [1, 1]} : vector<480x128xf32> to vector<120x128xf32>
    %96 = arith.maximumf %94, %95 : vector<120x128xf32>
    %97 = vector.extract_strided_slice %93 {offsets = [240, 0], sizes = [120, 128], strides = [1, 1]} : vector<480x128xf32> to vector<120x128xf32>
    %98 = vector.extract_strided_slice %93 {offsets = [360, 0], sizes = [120, 128], strides = [1, 1]} : vector<480x128xf32> to vector<120x128xf32>
    %99 = arith.maximumf %97, %98 : vector<120x128xf32>
    %100 = arith.maximumf %96, %99 : vector<120x128xf32>
    %101 = vector.broadcast %1 : vector<120x1xf32> to vector<120x128xf32>
    %102 = arith.addf %100, %101 : vector<120x128xf32>
    %cst_30 = arith.constant 0.000000e+00 : f32
    %103 = vector.broadcast %cst_30 : f32 to vector<120x128xf32>
    %104 = arith.maximumf %102, %103 : vector<120x128xf32>
    %105 = arith.truncf %104 : vector<120x128xf32> to vector<120x128xbf16>
    %c720 = arith.constant 720 : index
    %c0_31 = arith.constant 0 : index
    %106 = vector.load %arg11[%c720, %c0_31] : memref<1440x128xbf16, #tpu.memory_space<vmem>>, vector<120x128xbf16>
    tpu.vector_store %arg11[%c720, %c0_31], %105 {strides = array<i32>} : memref<1440x128xbf16, #tpu.memory_space<vmem>>, vector<120x128xbf16>,
    %c392 = arith.constant 392 : index
    %c0_32 = arith.constant 0 : index
    %107 = vector.load %arg1[%c392, %c0_32] : memref<784x128xbf16, #tpu.memory_space<vmem>>, vector<168x128xbf16>
    %cst_33 = arith.constant dense<0.000000e+00> : vector<480x128xf32>
    %108 = tpu.matmul %0, %107, %cst_33 {dimension_numbers = #tpu.dot_dimension_numbers<[1], [0], [0], [1], [0, 0, 1, 1], [], []>} : vector<480x168xbf16>, vector<168x128xbf16>, vector<480x128xf32> -> vector<480x128xf32>
    %109 = vector.extract_strided_slice %108 {offsets = [0, 0], sizes = [120, 128], strides = [1, 1]} : vector<480x128xf32> to vector<120x128xf32>
    %110 = vector.extract_strided_slice %108 {offsets = [120, 0], sizes = [120, 128], strides = [1, 1]} : vector<480x128xf32> to vector<120x128xf32>
    %111 = arith.maximumf %109, %110 : vector<120x128xf32>
    %112 = vector.extract_strided_slice %108 {offsets = [240, 0], sizes = [120, 128], strides = [1, 1]} : vector<480x128xf32> to vector<120x128xf32>
    %113 = vector.extract_strided_slice %108 {offsets = [360, 0], sizes = [120, 128], strides = [1, 1]} : vector<480x128xf32> to vector<120x128xf32>
    %114 = arith.maximumf %112, %113 : vector<120x128xf32>
    %115 = arith.maximumf %111, %114 : vector<120x128xf32>
    %116 = vector.broadcast %1 : vector<120x1xf32> to vector<120x128xf32>
    %117 = arith.addf %115, %116 : vector<120x128xf32>
    %cst_34 = arith.constant 0.000000e+00 : f32
    %118 = vector.broadcast %cst_34 : f32 to vector<120x128xf32>
    %119 = arith.maximumf %117, %118 : vector<120x128xf32>
    %120 = arith.truncf %119 : vector<120x128xf32> to vector<120x128xbf16>
    %c840 = arith.constant 840 : index
    %c0_35 = arith.constant 0 : index
    %121 = vector.load %arg11[%c840, %c0_35] : memref<1440x128xbf16, #tpu.memory_space<vmem>>, vector<120x128xbf16>
    tpu.vector_store %arg11[%c840, %c0_35], %120 {strides = array<i32>} : memref<1440x128xbf16, #tpu.memory_space<vmem>>, vector<120x128xbf16>,
    %c448 = arith.constant 448 : index
    %c0_36 = arith.constant 0 : index
    %122 = vector.load %arg1[%c448, %c0_36] : memref<784x128xbf16, #tpu.memory_space<vmem>>, vector<168x128xbf16>
    %cst_37 = arith.constant dense<0.000000e+00> : vector<480x128xf32>
    %123 = tpu.matmul %0, %122, %cst_37 {dimension_numbers = #tpu.dot_dimension_numbers<[1], [0], [0], [1], [0, 0, 1, 1], [], []>} : vector<480x168xbf16>, vector<168x128xbf16>, vector<480x128xf32> -> vector<480x128xf32>
    %124 = vector.extract_strided_slice %123 {offsets = [0, 0], sizes = [120, 128], strides = [1, 1]} : vector<480x128xf32> to vector<120x128xf32>
    %125 = vector.extract_strided_slice %123 {offsets = [120, 0], sizes = [120, 128], strides = [1, 1]} : vector<480x128xf32> to vector<120x128xf32>
    %126 = arith.maximumf %124, %125 : vector<120x128xf32>
    %127 = vector.extract_strided_slice %123 {offsets = [240, 0], sizes = [120, 128], strides = [1, 1]} : vector<480x128xf32> to vector<120x128xf32>
    %128 = vector.extract_strided_slice %123 {offsets = [360, 0], sizes = [120, 128], strides = [1, 1]} : vector<480x128xf32> to vector<120x128xf32>
    %129 = arith.maximumf %127, %128 : vector<120x128xf32>
    %130 = arith.maximumf %126, %129 : vector<120x128xf32>
    %131 = vector.broadcast %1 : vector<120x1xf32> to vector<120x128xf32>
    %132 = arith.addf %130, %131 : vector<120x128xf32>
    %cst_38 = arith.constant 0.000000e+00 : f32
    %133 = vector.broadcast %cst_38 : f32 to vector<120x128xf32>
    %134 = arith.maximumf %132, %133 : vector<120x128xf32>
    %135 = arith.truncf %134 : vector<120x128xf32> to vector<120x128xbf16>
    %c960 = arith.constant 960 : index
    %c0_39 = arith.constant 0 : index
    %136 = vector.load %arg11[%c960, %c0_39] : memref<1440x128xbf16, #tpu.memory_space<vmem>>, vector<120x128xbf16>
    tpu.vector_store %arg11[%c960, %c0_39], %135 {strides = array<i32>} : memref<1440x128xbf16, #tpu.memory_space<vmem>>, vector<120x128xbf16>,
    %c504 = arith.constant 504 : index
    %c0_40 = arith.constant 0 : index
    %137 = vector.load %arg1[%c504, %c0_40] : memref<784x128xbf16, #tpu.memory_space<vmem>>, vector<168x128xbf16>
    %cst_41 = arith.constant dense<0.000000e+00> : vector<480x128xf32>
    %138 = tpu.matmul %0, %137, %cst_41 {dimension_numbers = #tpu.dot_dimension_numbers<[1], [0], [0], [1], [0, 0, 1, 1], [], []>} : vector<480x168xbf16>, vector<168x128xbf16>, vector<480x128xf32> -> vector<480x128xf32>
    %139 = vector.extract_strided_slice %138 {offsets = [0, 0], sizes = [120, 128], strides = [1, 1]} : vector<480x128xf32> to vector<120x128xf32>
    %140 = vector.extract_strided_slice %138 {offsets = [120, 0], sizes = [120, 128], strides = [1, 1]} : vector<480x128xf32> to vector<120x128xf32>
    %141 = arith.maximumf %139, %140 : vector<120x128xf32>
    %142 = vector.extract_strided_slice %138 {offsets = [240, 0], sizes = [120, 128], strides = [1, 1]} : vector<480x128xf32> to vector<120x128xf32>
    %143 = vector.extract_strided_slice %138 {offsets = [360, 0], sizes = [120, 128], strides = [1, 1]} : vector<480x128xf32> to vector<120x128xf32>
    %144 = arith.maximumf %142, %143 : vector<120x128xf32>
    %145 = arith.maximumf %141, %144 : vector<120x128xf32>
    %146 = vector.broadcast %1 : vector<120x1xf32> to vector<120x128xf32>
    %147 = arith.addf %145, %146 : vector<120x128xf32>
    %cst_42 = arith.constant 0.000000e+00 : f32
    %148 = vector.broadcast %cst_42 : f32 to vector<120x128xf32>
    %149 = arith.maximumf %147, %148 : vector<120x128xf32>
    %150 = arith.truncf %149 : vector<120x128xf32> to vector<120x128xbf16>
    %c1080 = arith.constant 1080 : index
    %c0_43 = arith.constant 0 : index
    %151 = vector.load %arg11[%c1080, %c0_43] : memref<1440x128xbf16, #tpu.memory_space<vmem>>, vector<120x128xbf16>
    tpu.vector_store %arg11[%c1080, %c0_43], %150 {strides = array<i32>} : memref<1440x128xbf16, #tpu.memory_space<vmem>>, vector<120x128xbf16>,
    %c560 = arith.constant 560 : index
    %c0_44 = arith.constant 0 : index
    %152 = vector.load %arg1[%c560, %c0_44] : memref<784x128xbf16, #tpu.memory_space<vmem>>, vector<168x128xbf16>
    %cst_45 = arith.constant dense<0.000000e+00> : vector<480x128xf32>
    %153 = tpu.matmul %0, %152, %cst_45 {dimension_numbers = #tpu.dot_dimension_numbers<[1], [0], [0], [1], [0, 0, 1, 1], [], []>} : vector<480x168xbf16>, vector<168x128xbf16>, vector<480x128xf32> -> vector<480x128xf32>
    %154 = vector.extract_strided_slice %153 {offsets = [0, 0], sizes = [120, 128], strides = [1, 1]} : vector<480x128xf32> to vector<120x128xf32>
    %155 = vector.extract_strided_slice %153 {offsets = [120, 0], sizes = [120, 128], strides = [1, 1]} : vector<480x128xf32> to vector<120x128xf32>
    %156 = arith.maximumf %154, %155 : vector<120x128xf32>
    %157 = vector.extract_strided_slice %153 {offsets = [240, 0], sizes = [120, 128], strides = [1, 1]} : vector<480x128xf32> to vector<120x128xf32>
    %158 = vector.extract_strided_slice %153 {offsets = [360, 0], sizes = [120, 128], strides = [1, 1]} : vector<480x128xf32> to vector<120x128xf32>
    %159 = arith.maximumf %157, %158 : vector<120x128xf32>
    %160 = arith.maximumf %156, %159 : vector<120x128xf32>
    %161 = vector.broadcast %1 : vector<120x1xf32> to vector<120x128xf32>
    %162 = arith.addf %160, %161 : vector<120x128xf32>
    %cst_46 = arith.constant 0.000000e+00 : f32
    %163 = vector.broadcast %cst_46 : f32 to vector<120x128xf32>
    %164 = arith.maximumf %162, %163 : vector<120x128xf32>
    %165 = arith.truncf %164 : vector<120x128xf32> to vector<120x128xbf16>
    %c1200 = arith.constant 1200 : index
    %c0_47 = arith.constant 0 : index
    %166 = vector.load %arg11[%c1200, %c0_47] : memref<1440x128xbf16, #tpu.memory_space<vmem>>, vector<120x128xbf16>
    tpu.vector_store %arg11[%c1200, %c0_47], %165 {strides = array<i32>} : memref<1440x128xbf16, #tpu.memory_space<vmem>>, vector<120x128xbf16>,
    %c616 = arith.constant 616 : index
    %c0_48 = arith.constant 0 : index
    %167 = vector.load %arg1[%c616, %c0_48] : memref<784x128xbf16, #tpu.memory_space<vmem>>, vector<168x128xbf16>
    %cst_49 = arith.constant dense<0.000000e+00> : vector<480x128xf32>
    %168 = tpu.matmul %0, %167, %cst_49 {dimension_numbers = #tpu.dot_dimension_numbers<[1], [0], [0], [1], [0, 0, 1, 1], [], []>} : vector<480x168xbf16>, vector<168x128xbf16>, vector<480x128xf32> -> vector<480x128xf32>
    %169 = vector.extract_strided_slice %168 {offsets = [0, 0], sizes = [120, 128], strides = [1, 1]} : vector<480x128xf32> to vector<120x128xf32>
    %170 = vector.extract_strided_slice %168 {offsets = [120, 0], sizes = [120, 128], strides = [1, 1]} : vector<480x128xf32> to vector<120x128xf32>
    %171 = arith.maximumf %169, %170 : vector<120x128xf32>
    %172 = vector.extract_strided_slice %168 {offsets = [240, 0], sizes = [120, 128], strides = [1, 1]} : vector<480x128xf32> to vector<120x128xf32>
    %173 = vector.extract_strided_slice %168 {offsets = [360, 0], sizes = [120, 128], strides = [1, 1]} : vector<480x128xf32> to vector<120x128xf32>
    %174 = arith.maximumf %172, %173 : vector<120x128xf32>
    %175 = arith.maximumf %171, %174 : vector<120x128xf32>
    %176 = vector.broadcast %1 : vector<120x1xf32> to vector<120x128xf32>
    %177 = arith.addf %175, %176 : vector<120x128xf32>
    %cst_50 = arith.constant 0.000000e+00 : f32
    %178 = vector.broadcast %cst_50 : f32 to vector<120x128xf32>
    %179 = arith.maximumf %177, %178 : vector<120x128xf32>
    %180 = arith.truncf %179 : vector<120x128xf32> to vector<120x128xbf16>
    %c1320 = arith.constant 1320 : index
    %c0_51 = arith.constant 0 : index
    %181 = vector.load %arg11[%c1320, %c0_51] : memref<1440x128xbf16, #tpu.memory_space<vmem>>, vector<120x128xbf16>
    tpu.vector_store %arg11[%c1320, %c0_51], %180 {strides = array<i32>} : memref<1440x128xbf16, #tpu.memory_space<vmem>>, vector<120x128xbf16>,
    %c0_52 = arith.constant 0 : index
    %c0_53 = arith.constant 0 : index
    %182 = vector.load %arg4[%c0_52, %c0_53] : memref<320x720xbf16, #tpu.memory_space<vmem>>, vector<320x720xbf16>
    %c0_54 = arith.constant 0 : index
    %c0_55 = arith.constant 0 : index
    %183 = vector.load %arg5[%c0_54, %c0_55] : memref<80x1xf32, #tpu.memory_space<vmem>>, vector<80x1xf32>
    %c0_56 = arith.constant 0 : index
    %c0_57 = arith.constant 0 : index
    %184 = vector.load %arg11[%c0_56, %c0_57] : memref<1440x128xbf16, #tpu.memory_space<vmem>>, vector<720x128xbf16>
    %cst_58 = arith.constant dense<0.000000e+00> : vector<320x128xf32>
    %185 = tpu.matmul %182, %184, %cst_58 {dimension_numbers = #tpu.dot_dimension_numbers<[1], [0], [0], [1], [0, 0, 1, 1], [], []>} : vector<320x720xbf16>, vector<720x128xbf16>, vector<320x128xf32> -> vector<320x128xf32>
    %186 = vector.extract_strided_slice %185 {offsets = [0, 0], sizes = [80, 128], strides = [1, 1]} : vector<320x128xf32> to vector<80x128xf32>
    %187 = vector.extract_strided_slice %185 {offsets = [80, 0], sizes = [80, 128], strides = [1, 1]} : vector<320x128xf32> to vector<80x128xf32>
    %188 = arith.maximumf %186, %187 : vector<80x128xf32>
    %189 = vector.extract_strided_slice %185 {offsets = [160, 0], sizes = [80, 128], strides = [1, 1]} : vector<320x128xf32> to vector<80x128xf32>
    %190 = vector.extract_strided_slice %185 {offsets = [240, 0], sizes = [80, 128], strides = [1, 1]} : vector<320x128xf32> to vector<80x128xf32>
    %191 = arith.maximumf %189, %190 : vector<80x128xf32>
    %192 = arith.maximumf %188, %191 : vector<80x128xf32>
    %193 = vector.broadcast %183 : vector<80x1xf32> to vector<80x128xf32>
    %194 = arith.addf %192, %193 : vector<80x128xf32>
    %cst_59 = arith.constant 0.000000e+00 : f32
    %195 = vector.broadcast %cst_59 : f32 to vector<80x128xf32>
    %196 = arith.maximumf %194, %195 : vector<80x128xf32>
    %197 = arith.truncf %196 : vector<80x128xf32> to vector<80x128xbf16>
    %c0_60 = arith.constant 0 : index
    %c0_61 = arith.constant 0 : index
    %198 = vector.load %arg12[%c0_60, %c0_61] : memref<320x128xbf16, #tpu.memory_space<vmem>>, vector<80x128xbf16>
    tpu.vector_store %arg12[%c0_60, %c0_61], %197 {strides = array<i32>} : memref<320x128xbf16, #tpu.memory_space<vmem>>, vector<80x128xbf16>,
    %c240_62 = arith.constant 240 : index
    %c0_63 = arith.constant 0 : index
    %199 = vector.load %arg11[%c240_62, %c0_63] : memref<1440x128xbf16, #tpu.memory_space<vmem>>, vector<720x128xbf16>
    %cst_64 = arith.constant dense<0.000000e+00> : vector<320x128xf32>
    %200 = tpu.matmul %182, %199, %cst_64 {dimension_numbers = #tpu.dot_dimension_numbers<[1], [0], [0], [1], [0, 0, 1, 1], [], []>} : vector<320x720xbf16>, vector<720x128xbf16>, vector<320x128xf32> -> vector<320x128xf32>
    %201 = vector.extract_strided_slice %200 {offsets = [0, 0], sizes = [80, 128], strides = [1, 1]} : vector<320x128xf32> to vector<80x128xf32>
    %202 = vector.extract_strided_slice %200 {offsets = [80, 0], sizes = [80, 128], strides = [1, 1]} : vector<320x128xf32> to vector<80x128xf32>
    %203 = arith.maximumf %201, %202 : vector<80x128xf32>
    %204 = vector.extract_strided_slice %200 {offsets = [160, 0], sizes = [80, 128], strides = [1, 1]} : vector<320x128xf32> to vector<80x128xf32>
    %205 = vector.extract_strided_slice %200 {offsets = [240, 0], sizes = [80, 128], strides = [1, 1]} : vector<320x128xf32> to vector<80x128xf32>
    %206 = arith.maximumf %204, %205 : vector<80x128xf32>
    %207 = arith.maximumf %203, %206 : vector<80x128xf32>
    %208 = vector.broadcast %183 : vector<80x1xf32> to vector<80x128xf32>
    %209 = arith.addf %207, %208 : vector<80x128xf32>
    %cst_65 = arith.constant 0.000000e+00 : f32
    %210 = vector.broadcast %cst_65 : f32 to vector<80x128xf32>
    %211 = arith.maximumf %209, %210 : vector<80x128xf32>
    %212 = arith.truncf %211 : vector<80x128xf32> to vector<80x128xbf16>
    %c80 = arith.constant 80 : index
    %c0_66 = arith.constant 0 : index
    %213 = vector.load %arg12[%c80, %c0_66] : memref<320x128xbf16, #tpu.memory_space<vmem>>, vector<80x128xbf16>
    tpu.vector_store %arg12[%c80, %c0_66], %212 {strides = array<i32>} : memref<320x128xbf16, #tpu.memory_space<vmem>>, vector<80x128xbf16>,
    %c480_67 = arith.constant 480 : index
    %c0_68 = arith.constant 0 : index
    %214 = vector.load %arg11[%c480_67, %c0_68] : memref<1440x128xbf16, #tpu.memory_space<vmem>>, vector<720x128xbf16>
    %cst_69 = arith.constant dense<0.000000e+00> : vector<320x128xf32>
    %215 = tpu.matmul %182, %214, %cst_69 {dimension_numbers = #tpu.dot_dimension_numbers<[1], [0], [0], [1], [0, 0, 1, 1], [], []>} : vector<320x720xbf16>, vector<720x128xbf16>, vector<320x128xf32> -> vector<320x128xf32>
    %216 = vector.extract_strided_slice %215 {offsets = [0, 0], sizes = [80, 128], strides = [1, 1]} : vector<320x128xf32> to vector<80x128xf32>
    %217 = vector.extract_strided_slice %215 {offsets = [80, 0], sizes = [80, 128], strides = [1, 1]} : vector<320x128xf32> to vector<80x128xf32>
    %218 = arith.maximumf %216, %217 : vector<80x128xf32>
    %219 = vector.extract_strided_slice %215 {offsets = [160, 0], sizes = [80, 128], strides = [1, 1]} : vector<320x128xf32> to vector<80x128xf32>
    %220 = vector.extract_strided_slice %215 {offsets = [240, 0], sizes = [80, 128], strides = [1, 1]} : vector<320x128xf32> to vector<80x128xf32>
    %221 = arith.maximumf %219, %220 : vector<80x128xf32>
    %222 = arith.maximumf %218, %221 : vector<80x128xf32>
    %223 = vector.broadcast %183 : vector<80x1xf32> to vector<80x128xf32>
    %224 = arith.addf %222, %223 : vector<80x128xf32>
    %cst_70 = arith.constant 0.000000e+00 : f32
    %225 = vector.broadcast %cst_70 : f32 to vector<80x128xf32>
    %226 = arith.maximumf %224, %225 : vector<80x128xf32>
    %227 = arith.truncf %226 : vector<80x128xf32> to vector<80x128xbf16>
    %c160 = arith.constant 160 : index
    %c0_71 = arith.constant 0 : index
    %228 = vector.load %arg12[%c160, %c0_71] : memref<320x128xbf16, #tpu.memory_space<vmem>>, vector<80x128xbf16>
    tpu.vector_store %arg12[%c160, %c0_71], %227 {strides = array<i32>} : memref<320x128xbf16, #tpu.memory_space<vmem>>, vector<80x128xbf16>,
    %c720_72 = arith.constant 720 : index
    %c0_73 = arith.constant 0 : index
    %229 = vector.load %arg11[%c720_72, %c0_73] : memref<1440x128xbf16, #tpu.memory_space<vmem>>, vector<720x128xbf16>
    %cst_74 = arith.constant dense<0.000000e+00> : vector<320x128xf32>
    %230 = tpu.matmul %182, %229, %cst_74 {dimension_numbers = #tpu.dot_dimension_numbers<[1], [0], [0], [1], [0, 0, 1, 1], [], []>} : vector<320x720xbf16>, vector<720x128xbf16>, vector<320x128xf32> -> vector<320x128xf32>
    %231 = vector.extract_strided_slice %230 {offsets = [0, 0], sizes = [80, 128], strides = [1, 1]} : vector<320x128xf32> to vector<80x128xf32>
    %232 = vector.extract_strided_slice %230 {offsets = [80, 0], sizes = [80, 128], strides = [1, 1]} : vector<320x128xf32> to vector<80x128xf32>
    %233 = arith.maximumf %231, %232 : vector<80x128xf32>
    %234 = vector.extract_strided_slice %230 {offsets = [160, 0], sizes = [80, 128], strides = [1, 1]} : vector<320x128xf32> to vector<80x128xf32>
    %235 = vector.extract_strided_slice %230 {offsets = [240, 0], sizes = [80, 128], strides = [1, 1]} : vector<320x128xf32> to vector<80x128xf32>
    %236 = arith.maximumf %234, %235 : vector<80x128xf32>
    %237 = arith.maximumf %233, %236 : vector<80x128xf32>
    %238 = vector.broadcast %183 : vector<80x1xf32> to vector<80x128xf32>
    %239 = arith.addf %237, %238 : vector<80x128xf32>
    %cst_75 = arith.constant 0.000000e+00 : f32
    %240 = vector.broadcast %cst_75 : f32 to vector<80x128xf32>
    %241 = arith.maximumf %239, %240 : vector<80x128xf32>
    %242 = arith.truncf %241 : vector<80x128xf32> to vector<80x128xbf16>
    %c240_76 = arith.constant 240 : index
    %c0_77 = arith.constant 0 : index
    %243 = vector.load %arg12[%c240_76, %c0_77] : memref<320x128xbf16, #tpu.memory_space<vmem>>, vector<80x128xbf16>
    tpu.vector_store %arg12[%c240_76, %c0_77], %242 {strides = array<i32>} : memref<320x128xbf16, #tpu.memory_space<vmem>>, vector<80x128xbf16>,
    %c0_78 = arith.constant 0 : index
    %c0_79 = arith.constant 0 : index
    %244 = vector.load %arg6[%c0_78, %c0_79] : memref<50x320xbf16, #tpu.memory_space<vmem>>, vector<50x320xbf16>
    %c0_80 = arith.constant 0 : index
    %c0_81 = arith.constant 0 : index
    %245 = vector.load %arg12[%c0_80, %c0_81] : memref<320x128xbf16, #tpu.memory_space<vmem>>, vector<320x128xbf16>
    %cst_82 = arith.constant dense<0.000000e+00> : vector<50x128xf32>
    %246 = tpu.matmul %244, %245, %cst_82 {dimension_numbers = #tpu.dot_dimension_numbers<[1], [0], [0], [1], [0, 0, 1, 1], [], []>} : vector<50x320xbf16>, vector<320x128xbf16>, vector<50x128xf32> -> vector<50x128xf32>
    %c0_83 = arith.constant 0 : index
    %c0_84 = arith.constant 0 : index
    %247 = vector.load %arg7[%c0_83, %c0_84] : memref<50x1xf32, #tpu.memory_space<vmem>>, vector<50x1xf32>
    %248 = vector.broadcast %247 : vector<50x1xf32> to vector<50x128xf32>
    %249 = arith.addf %246, %248 : vector<50x128xf32>
    %cst_85 = arith.constant 0.000000e+00 : f32
    %250 = vector.broadcast %cst_85 : f32 to vector<50x128xf32>
    %251 = arith.maximumf %249, %250 : vector<50x128xf32>
    %252 = arith.truncf %251 : vector<50x128xf32> to vector<50x128xbf16>
    %c0_86 = arith.constant 0 : index
    %c0_87 = arith.constant 0 : index
    %253 = vector.load %arg8[%c0_86, %c0_87] : memref<10x50xbf16, #tpu.memory_space<vmem>>, vector<10x50xbf16>
    %cst_88 = arith.constant dense<0.000000e+00> : vector<10x128xf32>
    %254 = tpu.matmul %253, %252, %cst_88 {dimension_numbers = #tpu.dot_dimension_numbers<[1], [0], [0], [1], [0, 0, 1, 1], [], []>} : vector<10x50xbf16>, vector<50x128xbf16>, vector<10x128xf32> -> vector<10x128xf32>
    %c0_89 = arith.constant 0 : index
    %c0_90 = arith.constant 0 : index
    %255 = vector.load %arg9[%c0_89, %c0_90] : memref<10x1xf32, #tpu.memory_space<vmem>>, vector<10x1xf32>
    %256 = vector.broadcast %255 : vector<10x1xf32> to vector<10x128xf32>
    %257 = arith.addf %254, %256 : vector<10x128xf32>
    %cst_91 = arith.constant dense<0xFF800000> : vector<128xf32>
    %258 = vector.multi_reduction <maximumf>, %257, %cst_91 [0] : vector<10x128xf32> to vector<128xf32>
    %259 = vector.shape_cast %258 : vector<128xf32> to vector<1x128xf32>
    %260 = vector.broadcast %259 : vector<1x128xf32> to vector<10x128xf32>
    %261 = arith.subf %257, %260 : vector<10x128xf32>
    %262 = math.exp %261 : vector<10x128xf32>
    %cst_92 = arith.constant dense<0.000000e+00> : vector<128xf32>
    %263 = vector.multi_reduction <add>, %262, %cst_92 [0] : vector<10x128xf32> to vector<128xf32>
    %264 = vector.shape_cast %263 : vector<128xf32> to vector<1x128xf32>
    %265 = math.log %264 : vector<1x128xf32>
    %266 = vector.broadcast %265 : vector<1x128xf32> to vector<10x128xf32>
    %267 = arith.subf %261, %266 : vector<10x128xf32>
    %c0_93 = arith.constant 0 : index
    %c0_94 = arith.constant 0 : index
    %268 = vector.load %arg10[%c0_93, %c0_94] : memref<10x128xf32, #tpu.memory_space<vmem>>, vector<10x128xf32>
    tpu.vector_store %arg10[%c0_93, %c0_94], %267 {strides = array<i32>} : memref<10x128xf32, #tpu.memory_space<vmem>>, vector<10x128xf32>,
    return
  }
  func.func @transform_0(%arg0: i32) -> (i32, i32) {
    %c0_i32 = arith.constant 0 : i32
    %c0_i32_0 = arith.constant 0 : i32
    return %c0_i32, %arg0 : i32, i32
  }
  func.func @transform_1(%arg0: i32) -> (i32, i32) {
    %c0_i32 = arith.constant 0 : i32
    %c0_i32_0 = arith.constant 0 : i32
    %c0_i32_1 = arith.constant 0 : i32
    return %c0_i32, %c0_i32_0 : i32, i32
  }
  func.func @transform_2(%arg0: i32) -> (i32, i32) {
    %c0_i32 = arith.constant 0 : i32
    %c0_i32_0 = arith.constant 0 : i32
    %c0_i32_1 = arith.constant 0 : i32
    return %c0_i32, %c0_i32_0 : i32, i32
  }
  func.func @transform_3(%arg0: i32) -> (i32, i32) {
    %c0_i32 = arith.constant 0 : i32
    %c0_i32_0 = arith.constant 0 : i32
    %c0_i32_1 = arith.constant 0 : i32
    return %c0_i32, %c0_i32_0 : i32, i32
  }
  func.func @transform_4(%arg0: i32) -> (i32, i32) {
    %c0_i32 = arith.constant 0 : i32
    %c0_i32_0 = arith.constant 0 : i32
    %c0_i32_1 = arith.constant 0 : i32
    return %c0_i32, %c0_i32_0 : i32, i32
  }
  func.func @transform_5(%arg0: i32) -> (i32, i32) {
    %c0_i32 = arith.constant 0 : i32
    %c0_i32_0 = arith.constant 0 : i32
    %c0_i32_1 = arith.constant 0 : i32
    return %c0_i32, %c0_i32_0 : i32, i32
  }
  func.func @transform_6(%arg0: i32) -> (i32, i32) {
    %c0_i32 = arith.constant 0 : i32
    %c0_i32_0 = arith.constant 0 : i32
    %c0_i32_1 = arith.constant 0 : i32
    return %c0_i32, %c0_i32_0 : i32, i32
  }
  func.func @transform_7(%arg0: i32) -> (i32, i32) {
    %c0_i32 = arith.constant 0 : i32
    %c0_i32_0 = arith.constant 0 : i32
    %c0_i32_1 = arith.constant 0 : i32
    return %c0_i32, %c0_i32_0 : i32, i32
  }
  func.func @transform_8(%arg0: i32) -> (i32, i32) {
    %c0_i32 = arith.constant 0 : i32
    %c0_i32_0 = arith.constant 0 : i32
    %c0_i32_1 = arith.constant 0 : i32
    return %c0_i32, %c0_i32_0 : i32, i32
  }
  func.func @transform_9(%arg0: i32) -> (i32, i32) {
    %c0_i32 = arith.constant 0 : i32
    %c0_i32_0 = arith.constant 0 : i32
    return %c0_i32, %arg0 : i32, i32
  }
}

</mosaic_0001>

<llo_original>
// kernel: net_forward.1
$region0: #{net_forward.1}
  #allocation0 [shape = 'u32[]', space=smem, size = 0x4, offset = 0x4, fixed_abs, tag = 'smem constant byte address 0x4 - core index']
  #allocation1 [shape = 'u32[144,128]{1,0:T(1,128)}', space=vmem, size = 0x12000, scoped, tag = 'internal scratch']
  #allocation2 [shape = 'bf16[1440,128]{1,0:T(16,128)(2,1)}', space=vmem, size = 0x5a000, scoped, tag = 'scratch operand']
  #allocation3 [shape = 'bf16[320,128]{1,0:T(16,128)(2,1)}', space=vmem, size = 0x14000, scoped, tag = 'scratch operand']
  %s0 = inlined_call_operand.vmem [shape: bf16[784,128], index: 0, kind: input, shape index: {}]
  %s1 = inlined_call_operand.vmem [shape: bf16[480,168], index: 1, kind: input, shape index: {}]
  %s2 = inlined_call_operand.vmem [shape: f32[120,1], index: 2, kind: input, shape index: {}]
  %s3 = inlined_call_operand.vmem [shape: bf16[320,720], index: 3, kind: input, shape index: {}]
  %s4 = inlined_call_operand.vmem [shape: f32[80,1], index: 4, kind: input, shape index: {}]
  %s5 = inlined_call_operand.vmem [shape: bf16[50,320], index: 5, kind: input, shape index: {}]
  %s6 = inlined_call_operand.vmem [shape: f32[50,1], index: 6, kind: input, shape index: {}]
  %s7 = inlined_call_operand.vmem [shape: bf16[10,50], index: 7, kind: input, shape index: {}]
  %s8 = inlined_call_operand.vmem [shape: f32[10,1], index: 8, kind: input, shape index: {}]
  %s9 = inlined_call_operand.vmem [shape: f32[10,128], index: 9, kind: output, shape index: {}]
  %s10 = sld [smem:[#allocation0]]
  $region46: #{net_forward.1} parent=0
    _
  %s12 = ssub.s32 1, %s10
  %s13 = scalar_select 0, %s12, %s10
  // Predicated region
  $region2: #{net_forward.1} parent=0 // pred_check
    _
  $region3: #{net_forward.1} parent=0 // pred_check_branch
    %15 = sbr.rel (0) target = $region5
  $region4: #{net_forward.1} parent=0 // pred_region
    _
  $region5: #{net_forward.1} parent=0 // pred_fallthru
    _
  // Predicated region
  $region6: #{net_forward.1} parent=0 // pred_check
    _
  $region7: #{net_forward.1} parent=0 // pred_check_branch
    %17 = sbr.rel (0) target = $region9
  $region8: #{net_forward.1} parent=0 // pred_region
    _
  $region9: #{net_forward.1} parent=0 // pred_fallthru
    _
  // Predicated region
  $region10: #{net_forward.1} parent=0 // pred_check
    _
  $region11: #{net_forward.1} parent=0 // pred_check_branch
    %19 = sbr.rel (0) target = $region13
  $region12: #{net_forward.1} parent=0 // pred_region
    _
  $region13: #{net_forward.1} parent=0 // pred_fallthru
    _
  // Predicated region
  $region14: #{net_forward.1} parent=0 // pred_check
    _
  $region15: #{net_forward.1} parent=0 // pred_check_branch
    %21 = sbr.rel (0) target = $region17
  $region16: #{net_forward.1} parent=0 // pred_region
    _
  $region17: #{net_forward.1} parent=0 // pred_fallthru
    _
  // Predicated region
  $region18: #{net_forward.1} parent=0 // pred_check
    _
  $region19: #{net_forward.1} parent=0 // pred_check_branch
    %23 = sbr.rel (0) target = $region21
  $region20: #{net_forward.1} parent=0 // pred_region
    _
  $region21: #{net_forward.1} parent=0 // pred_fallthru
    _
  // Predicated region
  $region22: #{net_forward.1} parent=0 // pred_check
    _
  $region23: #{net_forward.1} parent=0 // pred_check_branch
    %25 = sbr.rel (0) target = $region25
  $region24: #{net_forward.1} parent=0 // pred_region
    _
  $region25: #{net_forward.1} parent=0 // pred_fallthru
    _
  // Predicated region
  $region26: #{net_forward.1} parent=0 // pred_check
    _
  $region27: #{net_forward.1} parent=0 // pred_check_branch
    %27 = sbr.rel (0) target = $region29
  $region28: #{net_forward.1} parent=0 // pred_region
    _
  $region29: #{net_forward.1} parent=0 // pred_fallthru
    _
  // Predicated region
  $region30: #{net_forward.1} parent=0 // pred_check
    _
  $region31: #{net_forward.1} parent=0 // pred_check_branch
    %29 = sbr.rel (0) target = $region33
  $region32: #{net_forward.1} parent=0 // pred_region
    _
  $region33: #{net_forward.1} parent=0 // pred_fallthru
    _
  // Predicated region
  $region34: #{net_forward.1} parent=0 // pred_check
    _
  $region35: #{net_forward.1} parent=0 // pred_check_branch
    %31 = sbr.rel (0) target = $region37
  $region36: #{net_forward.1} parent=0 // pred_region
    _
  $region37: #{net_forward.1} parent=0 // pred_fallthru
    _
  %v33 = vld [vmem:[%s1] sm:$0xff]
  %v34 = vld [vmem:[%s1 + $0x8] sm:$0xff]
  %v35 = vld [vmem:[%s1 + $0x10] sm:$0xff]
  %v36 = vld [vmem:[%s1 + $0x18] sm:$0xff]
  %v37 = vld [vmem:[%s1 + $0x20] sm:$0xff]
  %v38 = vld [vmem:[%s1 + $0x28] sm:$0xff]
  %v39 = vld [vmem:[%s1 + $0x30] sm:$0xff]
  %v40 = vld [vmem:[%s1 + $0x38] sm:$0xff]
  %v41 = vld [vmem:[%s1 + $0x40] sm:$0xff]
  %v42 = vld [vmem:[%s1 + $0x48] sm:$0xff]
  %v43 = vld [vmem:[%s1 + $0x50] sm:$0xff]
  %v44 = vld [vmem:[%s1 + $0x58] sm:$0xff]
  %v45 = vld [vmem:[%s1 + $0x60] sm:$0xff]
  %v46 = vld [vmem:[%s1 + $0x68] sm:$0xff]
  %v47 = vld [vmem:[%s1 + $0x70] sm:$0xff]
  %v48 = vld [vmem:[%s1 + $0x78] sm:$0xff]
  %v49 = vld [vmem:[%s1 + $0x80] sm:$0xff]
  %v50 = vld [vmem:[%s1 + $0x88] sm:$0xff]
  %v51 = vld [vmem:[%s1 + $0x90] sm:$0xff]
  %v52 = vld [vmem:[%s1 + $0x98] sm:$0xff]
  %v53 = vld [vmem:[%s1 + $0xa0] sm:$0xff]
  %v54 = vld [vmem:[%s1 + $0xa8] sm:$0xff]
  %v55 = vld [vmem:[%s1 + $0xb0] sm:$0xff]
  %v56 = vld [vmem:[%s1 + $0xb8] sm:$0xff]
  %v57 = vld [vmem:[%s1 + $0xc0] sm:$0xff]
  %v58 = vld [vmem:[%s1 + $0xc8] sm:$0xff]
  %v59 = vld [vmem:[%s1 + $0xd0] sm:$0xff]
  %v60 = vld [vmem:[%s1 + $0xd8] sm:$0xff]
  %v61 = vld [vmem:[%s1 + $0xe0] sm:$0xff]
  %v62 = vld [vmem:[%s1 + $0xe8] sm:$0xff]
  %v63 = vld [vmem:[%s1 + $0xf0] sm:$0xff]
  %v64 = vld [vmem:[%s1 + $0xf8] sm:$0xff]
  %v65 = vld [vmem:[%s1 + $0x100] sm:$0xff]
  %v66 = vld [vmem:[%s1 + $0x108] sm:$0xff]
  %v67 = vld [vmem:[%s1 + $0x110] sm:$0xff]
  %v68 = vld [vmem:[%s1 + $0x118] sm:$0xff]
  %v69 = vld [vmem:[%s1 + $0x120] sm:$0xff]
  %v70 = vld [vmem:[%s1 + $0x128] sm:$0xff]
  %v71 = vld [vmem:[%s1 + $0x130] sm:$0xff]
  %v72 = vld [vmem:[%s1 + $0x138] sm:$0xff]
  %v73 = vld [vmem:[%s1 + $0x140] sm:$0xff]
  %v74 = vld [vmem:[%s1 + $0x148] sm:$0xff]
  %v75 = vld [vmem:[%s1 + $0x150] sm:$0xff]
  %v76 = vld [vmem:[%s1 + $0x158] sm:$0xff]
  %v77 = vld [vmem:[%s1 + $0x160] sm:$0xff]
  %v78 = vld [vmem:[%s1 + $0x168] sm:$0xff]
  %v79 = vld [vmem:[%s1 + $0x170] sm:$0xff]
  %v80 = vld [vmem:[%s1 + $0x178] sm:$0xff]
  %v81 = vld [vmem:[%s1 + $0x180] sm:$0xff]
  %v82 = vld [vmem:[%s1 + $0x188] sm:$0xff]
  %v83 = vld [vmem:[%s1 + $0x190] sm:$0xff]
  %v84 = vld [vmem:[%s1 + $0x198] sm:$0xff]
  %v85 = vld [vmem:[%s1 + $0x1a0] sm:$0xff]
  %v86 = vld [vmem:[%s1 + $0x1a8] sm:$0xff]
  %v87 = vld [vmem:[%s1 + $0x1b0] sm:$0xff]
  %v88 = vld [vmem:[%s1 + $0x1b8] sm:$0xff]
  %v89 = vld [vmem:[%s1 + $0x1c0] sm:$0xff]
  %v90 = vld [vmem:[%s1 + $0x1c8] sm:$0xff]
  %v91 = vld [vmem:[%s1 + $0x1d0] sm:$0xff]
  %v92 = vld [vmem:[%s1 + $0x1d8] sm:$0xff]
  %v93 = vld [vmem:[%s2] sm:$0xff]
  %v94 = vld [vmem:[%s2 + $0x8] sm:$0xff]
  %v95 = vld [vmem:[%s2 + $0x10] sm:$0xff]
  %v96 = vld [vmem:[%s2 + $0x18] sm:$0xff]
  %v97 = vld [vmem:[%s2 + $0x20] sm:$0xff]
  %v98 = vld [vmem:[%s2 + $0x28] sm:$0xff]
  %v99 = vld [vmem:[%s2 + $0x30] sm:$0xff]
  %v100 = vld [vmem:[%s2 + $0x38] sm:$0xff]
  %v101 = vld [vmem:[%s2 + $0x40] sm:$0xff]
  %v102 = vld [vmem:[%s2 + $0x48] sm:$0xff]
  %v103 = vld [vmem:[%s2 + $0x50] sm:$0xff]
  %v104 = vld [vmem:[%s2 + $0x58] sm:$0xff]
  %v105 = vld [vmem:[%s2 + $0x60] sm:$0xff]
  %v106 = vld [vmem:[%s2 + $0x68] sm:$0xff]
  %v107 = vld [vmem:[%s2 + $0x70] sm:$0xff]
  %v108 = vld [vmem:[%s0] sm:$0xf]
  %v109 = vld [vmem:[%s0 + $0x4] sm:$0xf]
  %v110 = vld [vmem:[%s0 + $0x8] sm:$0xf]
  %v111 = vld [vmem:[%s0 + $0xc] sm:$0xf]
  %v112 = vld [vmem:[%s0 + $0x10] sm:$0xf]
  %v113 = vld [vmem:[%s0 + $0x14] sm:$0xf]
  %v114 = vld [vmem:[%s0 + $0x18] sm:$0xf]
  %v115 = vld [vmem:[%s0 + $0x1c] sm:$0xf]
  %v116 = vld [vmem:[%s0 + $0x20] sm:$0xf]
  %v117 = vld [vmem:[%s0 + $0x24] sm:$0xf]
  %v118 = vld [vmem:[%s0 + $0x28] sm:$0xf]
  %v119 = vld [vmem:[%s0 + $0x2c] sm:$0xf]
  %v120 = vld [vmem:[%s0 + $0x30] sm:$0xf]
  %v121 = vld [vmem:[%s0 + $0x34] sm:$0xf]
  %v122 = vld [vmem:[%s0 + $0x38] sm:$0xf]
  %v123 = vld [vmem:[%s0 + $0x3c] sm:$0xf]
  %v124 = vld [vmem:[%s0 + $0x40] sm:$0xf]
  %v125 = vld [vmem:[%s0 + $0x44] sm:$0xf]
  %v126 = vld [vmem:[%s0 + $0x48] sm:$0xf]
  %v127 = vld [vmem:[%s0 + $0x4c] sm:$0xf]
  %v128 = vld [vmem:[%s0 + $0x50] sm:$0xf]
  %v189 = vunpack.c.l.b16 %v33
  %v190 = vunpack.c.h.b16 %v33
  %v191 = vunpack.c.l.b16 %v34
  %v192 = vunpack.c.h.b16 %v34
  %v193 = vunpack.c.l.b16 %v35
  %v194 = vunpack.c.h.b16 %v35
  %v195 = vunpack.c.l.b16 %v36
  %v196 = vunpack.c.h.b16 %v36
  %v197 = vunpack.c.l.b16 %v37
  %v198 = vunpack.c.h.b16 %v37
  %v199 = vunpack.c.l.b16 %v38
  %v200 = vunpack.c.h.b16 %v38
  %v201 = vunpack.c.l.b16 %v39
  %v202 = vunpack.c.h.b16 %v39
  %v203 = vunpack.c.l.b16 %v40
  %v204 = vunpack.c.h.b16 %v40
  %v205 = vunpack.c.l.b16 %v41
  %v206 = vunpack.c.h.b16 %v41
  %v207 = vunpack.c.l.b16 %v42
  %v208 = vunpack.c.h.b16 %v42
  %v209 = vunpack.c.l.b16 %v43
  %v210 = vunpack.c.h.b16 %v43
  %v211 = vunpack.c.l.b16 %v44
  %v212 = vunpack.c.h.b16 %v44
  %v213 = vunpack.c.l.b16 %v45
  %v214 = vunpack.c.h.b16 %v45
  %v215 = vunpack.c.l.b16 %v46
  %v216 = vunpack.c.h.b16 %v46
  %v217 = vunpack.c.l.b16 %v47
  %v218 = vunpack.c.h.b16 %v47
  %v219 = vunpack.c.l.b16 %v48
  %v220 = vunpack.c.h.b16 %v48
  %v221 = vunpack.c.l.b16 %v49
  %v222 = vunpack.c.h.b16 %v49
  %v223 = vunpack.c.l.b16 %v50
  %v224 = vunpack.c.h.b16 %v50
  %v225 = vunpack.c.l.b16 %v51
  %v226 = vunpack.c.h.b16 %v51
  %v227 = vunpack.c.l.b16 %v52
  %v228 = vunpack.c.h.b16 %v52
  %v229 = vunpack.c.l.b16 %v53
  %v230 = vunpack.c.h.b16 %v53
  %v231 = vunpack.c.l.b16 %v54
  %v232 = vunpack.c.h.b16 %v54
  %v233 = vunpack.c.l.b16 %v55
  %v234 = vunpack.c.h.b16 %v55
  %v235 = vunpack.c.l.b16 %v56
  %v236 = vunpack.c.h.b16 %v56
  %v237 = vunpack.c.l.b16 %v57
  %v238 = vunpack.c.h.b16 %v57
  %v239 = vunpack.c.l.b16 %v58
  %v240 = vunpack.c.h.b16 %v58
  %v241 = vunpack.c.l.b16 %v59
  %v242 = vunpack.c.h.b16 %v59
  %v243 = vunpack.c.l.b16 %v60
  %v244 = vunpack.c.h.b16 %v60
  %v245 = vunpack.c.l.b16 %v61
  %v246 = vunpack.c.h.b16 %v61
  %v247 = vunpack.c.l.b16 %v62
  %v248 = vunpack.c.h.b16 %v62
  %v249 = vunpack.c.l.b16 %v63
  %v250 = vunpack.c.h.b16 %v63
  %v251 = vunpack.c.l.b16 %v64
  %v252 = vunpack.c.h.b16 %v64
  %v253 = vunpack.c.l.b16 %v65
  %v254 = vunpack.c.h.b16 %v65
  %v255 = vunpack.c.l.b16 %v66
  %v256 = vunpack.c.h.b16 %v66
  %v257 = vunpack.c.l.b16 %v67
  %v258 = vunpack.c.h.b16 %v67
  %v259 = vunpack.c.l.b16 %v68
  %v260 = vunpack.c.h.b16 %v68
  %v261 = vunpack.c.l.b16 %v69
  %v262 = vunpack.c.h.b16 %v69
  %v263 = vunpack.c.l.b16 %v70
  %v264 = vunpack.c.h.b16 %v70
  %v265 = vunpack.c.l.b16 %v71
  %v266 = vunpack.c.h.b16 %v71
  %v267 = vunpack.c.l.b16 %v72
  %v268 = vunpack.c.h.b16 %v72
  %v269 = vunpack.c.l.b16 %v73
  %v270 = vunpack.c.h.b16 %v73
  %v271 = vunpack.c.l.b16 %v74
  %v272 = vunpack.c.h.b16 %v74
  %v273 = vunpack.c.l.b16 %v75
  %v274 = vunpack.c.h.b16 %v75
  %v275 = vunpack.c.l.b16 %v76
  %v276 = vunpack.c.h.b16 %v76
  %v277 = vunpack.c.l.b16 %v77
  %v278 = vunpack.c.h.b16 %v77
  %v279 = vunpack.c.l.b16 %v78
  %v280 = vunpack.c.h.b16 %v78
  %v281 = vunpack.c.l.b16 %v79
  %v282 = vunpack.c.h.b16 %v79
  %v283 = vunpack.c.l.b16 %v80
  %v284 = vunpack.c.h.b16 %v80
  %v285 = vunpack.c.l.b16 %v81
  %v286 = vunpack.c.h.b16 %v81
  %v287 = vunpack.c.l.b16 %v82
  %v288 = vunpack.c.h.b16 %v82
  %v289 = vunpack.c.l.b16 %v83
  %v290 = vunpack.c.h.b16 %v83
  %v291 = vunpack.c.l.b16 %v84
  %v292 = vunpack.c.h.b16 %v84
  %v293 = vunpack.c.l.b16 %v85
  %v294 = vunpack.c.h.b16 %v85
  %v295 = vunpack.c.l.b16 %v86
  %v296 = vunpack.c.h.b16 %v86
  %v297 = vunpack.c.l.b16 %v87
  %v298 = vunpack.c.h.b16 %v87
  %v299 = vunpack.c.l.b16 %v88
  %v300 = vunpack.c.h.b16 %v88
  %v301 = vunpack.c.l.b16 %v89
  %v302 = vunpack.c.h.b16 %v89
  %v303 = vunpack.c.l.b16 %v90
  %v304 = vunpack.c.h.b16 %v90
  %v305 = vunpack.c.l.b16 %v91
  %v306 = vunpack.c.h.b16 %v91
  %v307 = vunpack.c.l.b16 %v92
  %v308 = vunpack.c.h.b16 %v92
  %v309 = vpack.c.b16 %v191, %v189
  %v310 = vpack.c.b16 %v192, %v190
  %v311 = vpack.c.b16 %v195, %v193
  %v312 = vpack.c.b16 %v196, %v194
  %v313 = vpack.c.b16 %v199, %v197
  %v314 = vpack.c.b16 %v200, %v198
  %v315 = vpack.c.b16 %v203, %v201
  %v316 = vpack.c.b16 %v204, %v202
  %v317 = vpack.c.b16 %v207, %v205
  %v318 = vpack.c.b16 %v208, %v206
  %v319 = vpack.c.b16 %v211, %v209
  %v320 = vpack.c.b16 %v212, %v210
  %v321 = vpack.c.b16 %v215, %v213
  %v322 = vpack.c.b16 %v216, %v214
  %v323 = vpack.c.b16 %v219, %v217
  %v324 = vpack.c.b16 %v220, %v218
  %v325 = vpack.c.b16 %v223, %v221
  %v326 = vpack.c.b16 %v224, %v222
  %v327 = vpack.c.b16 %v227, %v225
  %v328 = vpack.c.b16 %v228, %v226
  %v329 = vpack.c.b16 %v231, %v229
  %v330 = vpack.c.b16 %v232, %v230
  %v331 = vpack.c.b16 %v235, %v233
  %v332 = vpack.c.b16 %v236, %v234
  %v333 = vpack.c.b16 %v239, %v237
  %v334 = vpack.c.b16 %v240, %v238
  %v335 = vpack.c.b16 %v243, %v241
  %v336 = vpack.c.b16 %v244, %v242
  %v337 = vpack.c.b16 %v247, %v245
  %v338 = vpack.c.b16 %v248, %v246
  %v339 = vpack.c.b16 %v251, %v249
  %v340 = vpack.c.b16 %v252, %v250
  %v341 = vpack.c.b16 %v255, %v253
  %v342 = vpack.c.b16 %v256, %v254
  %v343 = vpack.c.b16 %v259, %v257
  %v344 = vpack.c.b16 %v260, %v258
  %v345 = vpack.c.b16 %v263, %v261
  %v346 = vpack.c.b16 %v264, %v262
  %v347 = vpack.c.b16 %v267, %v265
  %v348 = vpack.c.b16 %v268, %v266
  %v349 = vpack.c.b16 %v271, %v269
  %v350 = vpack.c.b16 %v272, %v270
  %v351 = vpack.c.b16 %v275, %v273
  %v352 = vpack.c.b16 %v276, %v274
  %v353 = vpack.c.b16 %v279, %v277
  %v354 = vpack.c.b16 %v280, %v278
  %v355 = vpack.c.b16 %v283, %v281
  %v356 = vpack.c.b16 %v284, %v282
  %v357 = vpack.c.b16 %v287, %v285
  %v358 = vpack.c.b16 %v288, %v286
  %v359 = vpack.c.b16 %v291, %v289
  %v360 = vpack.c.b16 %v292, %v290
  %v361 = vpack.c.b16 %v295, %v293
  %v362 = vpack.c.b16 %v296, %v294
  %v363 = vpack.c.b16 %v299, %v297
  %v364 = vpack.c.b16 %v300, %v298
  %v365 = vpack.c.b16 %v303, %v301
  %v366 = vpack.c.b16 %v304, %v302
  %v367 = vpack.c.b16 %v307, %v305
  %v368 = vpack.c.b16 %v308, %v306
  %v420 = vunpack.c.l.b16 %v108
  %v421 = vunpack.c.l.b16 %v109
  %v422 = vunpack.c.l.b16 %v110
  %v423 = vunpack.c.l.b16 %v111
  %v424 = vunpack.c.l.b16 %v112
  %v425 = vunpack.c.l.b16 %v113
  %v426 = vunpack.c.l.b16 %v114
  %v427 = vunpack.c.l.b16 %v115
  %v428 = vunpack.c.l.b16 %v116
  %v429 = vunpack.c.l.b16 %v117
  %v430 = vunpack.c.l.b16 %v118
  %v431 = vunpack.c.l.b16 %v119
  %v432 = vunpack.c.l.b16 %v120
  %v433 = vunpack.c.l.b16 %v121
  %v434 = vunpack.c.l.b16 %v122
  %v435 = vunpack.c.l.b16 %v123
  %v436 = vunpack.c.l.b16 %v124
  %v437 = vunpack.c.l.b16 %v125
  %v438 = vunpack.c.l.b16 %v126
  %v439 = vunpack.c.l.b16 %v127
  %v440 = vunpack.c.l.b16 %v128
  %v441 = vpack.c.b16 %v421, %v420
  %v442 = vpack.c.b16 %v423, %v422
  %v443 = vpack.c.b16 %v425, %v424
  %v444 = vpack.c.b16 %v427, %v426
  %v445 = vpack.c.b16 %v429, %v428
  %v446 = vpack.c.b16 %v431, %v430
  %v447 = vpack.c.b16 %v433, %v432
  %v448 = vpack.c.b16 %v435, %v434
  %v449 = vpack.c.b16 %v437, %v436
  %v450 = vpack.c.b16 %v439, %v438
  %v451 = vpack.c.b16 %v440, %v440
  %vm462 = vcmask 326656
  %v464 = vsel %vm462, %v310, 0
  %v467 = vsel %vm462, %v312, 0
  %v470 = vsel %vm462, %v314, 0
  %v473 = vsel %vm462, %v316, 0
  %v476 = vsel %vm462, %v318, 0
  %v479 = vsel %vm462, %v320, 0
  %v482 = vsel %vm462, %v322, 0
  %v485 = vsel %vm462, %v324, 0
  %v488 = vsel %vm462, %v326, 0
  %v491 = vsel %vm462, %v328, 0
  %v494 = vsel %vm462, %v330, 0
  %v497 = vsel %vm462, %v332, 0
  %v500 = vsel %vm462, %v334, 0
  %v503 = vsel %vm462, %v336, 0
  %v506 = vsel %vm462, %v338, 0
  %v509 = vsel %vm462, %v340, 0
  %v512 = vsel %vm462, %v342, 0
  %v515 = vsel %vm462, %v344, 0
  %v518 = vsel %vm462, %v346, 0
  %v521 = vsel %vm462, %v348, 0
  %v524 = vsel %vm462, %v350, 0
  %v527 = vsel %vm462, %v352, 0
  %v530 = vsel %vm462, %v354, 0
  %v533 = vsel %vm462, %v356, 0
  %v536 = vsel %vm462, %v358, 0
  %v539 = vsel %vm462, %v360, 0
  %v542 = vsel %vm462, %v362, 0
  %v545 = vsel %vm462, %v364, 0
  %v548 = vsel %vm462, %v366, 0
  %v551 = vsel %vm462, %v368, 0
  %vm553 = vcmask 1043456
  %v555 = vsel %vm553, %v451, 0
  %557 = vmatprep.subr.bf16.mxu0 0
  %558 = vmatpush1.bf16.msra.mxu0 %v441
  %559 = vmatprep.subr.bf16.mxu0 0
  %560 = vmatpush1.bf16.msra.mxu0 %v442
  %561 = vmatprep.subr.bf16.mxu0 0
  %562 = vmatpush1.bf16.msra.mxu0 %v443
  %563 = vmatprep.subr.bf16.mxu0 0
  %564 = vmatpush1.bf16.msra.mxu0 %v444
  %565 = vmatprep.subr.bf16.mxu0 0
  %566 = vmatpush1.bf16.msra.mxu0 %v445
  %567 = vmatprep.subr.bf16.mxu0 0
  %568 = vmatpush1.bf16.msra.mxu0 %v446
  %569 = vmatprep.subr.bf16.mxu0 0
  %570 = vmatpush1.bf16.msra.mxu0 %v447
  %571 = vmatprep.subr.bf16.mxu0 0
  %572 = vmatpush1.bf16.msra.mxu0 %v448
  %573 = vmatprep.subr.bf16.mxu0 0
  %574 = vmatpush1.bf16.msra.mxu0 %v449
  %575 = vmatprep.subr.bf16.mxu0 0
  %576 = vmatpush1.bf16.msra.mxu0 %v450
  %577 = vmatprep.subr.bf16.mxu0 0
  %578 = vmatpush1.bf16.msra.mxu0 %v555
  %579 = vmatprep.subr.bf16.mxu0 0
  %580 = vmatpush1.bf16.msra.mxu0 0
  %581 = vmatprep.subr.bf16.mxu0 0
  %582 = vmatpush1.bf16.msra.mxu0 0
  %583 = vmatprep.subr.bf16.mxu0 0
  %584 = vmatpush1.bf16.msra.mxu0 0
  %585 = vmatprep.subr.bf16.mxu0 0
  %586 = vmatpush1.bf16.msra.mxu0 0
  %587 = vmatprep.subr.bf16.mxu0 0
  %588 = vmatpush1.bf16.msra.mxu0 0
  %589 = vmatprep.mubr.bf16.mxu0 %v464
  %590 = vmatmul.mubr.bf16.gmra.mrb[0].mxu0 %v309
  %v591 = vpop.f32.mrb[0].mxu0
  %v592 = vadd.f32 0.0, %v591
  %v593 = vpop.f32.mrb[0].mxu0
  %v594 = vpop.f32.mrb[0].mxu0
  %v595 = vadd.f32 0.0, %v594
  %v596 = vpop.f32.mrb[0].mxu0
  %597 = vmatprep.mubr.bf16.mxu0 %v467
  %598 = vmatmul.mubr.bf16.gmra.mrb[0].mxu0 %v311
  %v599 = vpop.f32.mrb[0].mxu0
  %v600 = vadd.f32 0.0, %v599
  %v601 = vpop.f32.mrb[0].mxu0
  %v602 = vpop.f32.mrb[0].mxu0
  %v603 = vadd.f32 0.0, %v602
  %v604 = vpop.f32.mrb[0].mxu0
  %605 = vmatprep.mubr.bf16.mxu0 %v470
  %606 = vmatmul.mubr.bf16.gmra.mrb[0].mxu0 %v313
  %v607 = vpop.f32.mrb[0].mxu0
  %v608 = vadd.f32 0.0, %v607
  %v609 = vpop.f32.mrb[0].mxu0
  %v610 = vpop.f32.mrb[0].mxu0
  %v611 = vadd.f32 0.0, %v610
  %v612 = vpop.f32.mrb[0].mxu0
  %613 = vmatprep.mubr.bf16.mxu0 %v473
  %614 = vmatmul.mubr.bf16.gmra.mrb[0].mxu0 %v315
  %v615 = vpop.f32.mrb[0].mxu0
  %v616 = vadd.f32 0.0, %v615
  %v617 = vpop.f32.mrb[0].mxu0
  %v618 = vpop.f32.mrb[0].mxu0
  %v619 = vadd.f32 0.0, %v618
  %v620 = vpop.f32.mrb[0].mxu0
  %621 = vmatprep.mubr.bf16.mxu0 %v476
  %622 = vmatmul.mubr.bf16.gmra.mrb[0].mxu0 %v317
  %v623 = vpop.f32.mrb[0].mxu0
  %v624 = vadd.f32 0.0, %v623
  %v625 = vpop.f32.mrb[0].mxu0
  %v626 = vpop.f32.mrb[0].mxu0
  %v627 = vadd.f32 0.0, %v626
  %v628 = vpop.f32.mrb[0].mxu0
  %629 = vmatprep.mubr.bf16.mxu0 %v479
  %630 = vmatmul.mubr.bf16.gmra.mrb[0].mxu0 %v319
  %v631 = vpop.f32.mrb[0].mxu0
  %v632 = vadd.f32 0.0, %v631
  %v633 = vpop.f32.mrb[0].mxu0
  %v634 = vpop.f32.mrb[0].mxu0
  %v635 = vadd.f32 0.0, %v634
  %v636 = vpop.f32.mrb[0].mxu0
  %637 = vmatprep.mubr.bf16.mxu0 %v482
  %638 = vmatmul.mubr.bf16.gmra.mrb[0].mxu0 %v321
  %v639 = vpop.f32.mrb[0].mxu0
  %v640 = vadd.f32 0.0, %v639
  %v641 = vpop.f32.mrb[0].mxu0
  %v642 = vpop.f32.mrb[0].mxu0
  %v643 = vadd.f32 0.0, %v642
  %v644 = vpop.f32.mrb[0].mxu0
  %645 = vmatprep.mubr.bf16.mxu0 %v485
  %646 = vmatmul.mubr.bf16.gmra.mrb[0].mxu0 %v323
  %v647 = vpop.f32.mrb[0].mxu0
  %v648 = vadd.f32 0.0, %v647
  %v649 = vpop.f32.mrb[0].mxu0
  %v650 = vpop.f32.mrb[0].mxu0
  %v651 = vadd.f32 0.0, %v650
  %v652 = vpop.f32.mrb[0].mxu0
  %653 = vmatprep.mubr.bf16.mxu0 %v488
  %654 = vmatmul.mubr.bf16.gmra.mrb[0].mxu0 %v325
  %v655 = vpop.f32.mrb[0].mxu0
  %v656 = vadd.f32 0.0, %v655
  %v657 = vpop.f32.mrb[0].mxu0
  %v658 = vpop.f32.mrb[0].mxu0
  %v659 = vadd.f32 0.0, %v658
  %v660 = vpop.f32.mrb[0].mxu0
  %661 = vmatprep.mubr.bf16.mxu0 %v491
  %662 = vmatmul.mubr.bf16.gmra.mrb[0].mxu0 %v327
  %v663 = vpop.f32.mrb[0].mxu0
  %v664 = vadd.f32 0.0, %v663
  %v665 = vpop.f32.mrb[0].mxu0
  %v666 = vpop.f32.mrb[0].mxu0
  %v667 = vadd.f32 0.0, %v666
  %v668 = vpop.f32.mrb[0].mxu0
  %669 = vmatprep.mubr.bf16.mxu0 %v494
  %670 = vmatmul.mubr.bf16.gmra.mrb[0].mxu0 %v329
  %v671 = vpop.f32.mrb[0].mxu0
  %v672 = vadd.f32 0.0, %v671
  %v673 = vpop.f32.mrb[0].mxu0
  %v674 = vpop.f32.mrb[0].mxu0
  %v675 = vadd.f32 0.0, %v674
  %v676 = vpop.f32.mrb[0].mxu0
  %677 = vmatprep.mubr.bf16.mxu0 %v497
  %678 = vmatmul.mubr.bf16.gmra.mrb[0].mxu0 %v331
  %v679 = vpop.f32.mrb[0].mxu0
  %v680 = vadd.f32 0.0, %v679
  %v681 = vpop.f32.mrb[0].mxu0
  %v682 = vpop.f32.mrb[0].mxu0
  %v683 = vadd.f32 0.0, %v682
  %v684 = vpop.f32.mrb[0].mxu0
  %685 = vmatprep.mubr.bf16.mxu0 %v500
  %686 = vmatmul.mubr.bf16.gmra.mrb[0].mxu0 %v333
  %v687 = vpop.f32.mrb[0].mxu0
  %v688 = vadd.f32 0.0, %v687
  %v689 = vpop.f32.mrb[0].mxu0
  %v690 = vpop.f32.mrb[0].mxu0
  %v691 = vadd.f32 0.0, %v690
  %v692 = vpop.f32.mrb[0].mxu0
  %693 = vmatprep.mubr.bf16.mxu0 %v503
  %694 = vmatmul.mubr.bf16.gmra.mrb[0].mxu0 %v335
  %v695 = vpop.f32.mrb[0].mxu0
  %v696 = vadd.f32 0.0, %v695
  %v697 = vpop.f32.mrb[0].mxu0
  %v698 = vpop.f32.mrb[0].mxu0
  %v699 = vadd.f32 0.0, %v698
  %v700 = vpop.f32.mrb[0].mxu0
  %701 = vmatprep.mubr.bf16.mxu0 %v506
  %702 = vmatmul.mubr.bf16.gmra.mrb[0].mxu0 %v337
  %v703 = vpop.f32.mrb[0].mxu0
  %v704 = vadd.f32 0.0, %v703
  %v705 = vpop.f32.mrb[0].mxu0
  %v706 = vpop.f32.mrb[0].mxu0
  %v707 = vadd.f32 0.0, %v706
  %v708 = vpop.f32.mrb[0].mxu0
  %709 = vmatprep.mubr.bf16.mxu0 %v509
  %710 = vmatmul.mubr.bf16.gmra.mrb[0].mxu0 %v339
  %v711 = vpop.f32.mrb[0].mxu0
  %v712 = vadd.f32 0.0, %v711
  %v713 = vpop.f32.mrb[0].mxu0
  %v714 = vpop.f32.mrb[0].mxu0
  %v715 = vadd.f32 0.0, %v714
  %v716 = vpop.f32.mrb[0].mxu0
  %717 = vmatprep.mubr.bf16.mxu0 %v512
  %718 = vmatmul.mubr.bf16.gmra.mrb[0].mxu0 %v341
  %v719 = vpop.f32.mrb[0].mxu0
  %v720 = vadd.f32 0.0, %v719
  %v721 = vpop.f32.mrb[0].mxu0
  %v722 = vpop.f32.mrb[0].mxu0
  %v723 = vadd.f32 0.0, %v722
  %v724 = vpop.f32.mrb[0].mxu0
  %725 = vmatprep.mubr.bf16.mxu0 %v515
  %726 = vmatmul.mubr.bf16.gmra.mrb[0].mxu0 %v343
  %v727 = vpop.f32.mrb[0].mxu0
  %v728 = vadd.f32 0.0, %v727
  %v729 = vpop.f32.mrb[0].mxu0
  %v730 = vpop.f32.mrb[0].mxu0
  %v731 = vadd.f32 0.0, %v730
  %v732 = vpop.f32.mrb[0].mxu0
  %733 = vmatprep.mubr.bf16.mxu0 %v518
  %734 = vmatmul.mubr.bf16.gmra.mrb[0].mxu0 %v345
  %v735 = vpop.f32.mrb[0].mxu0
  %v736 = vadd.f32 0.0, %v735
  %v737 = vpop.f32.mrb[0].mxu0
  %v738 = vpop.f32.mrb[0].mxu0
  %v739 = vadd.f32 0.0, %v738
  %v740 = vpop.f32.mrb[0].mxu0
  %741 = vmatprep.mubr.bf16.mxu0 %v521
  %742 = vmatmul.mubr.bf16.gmra.mrb[0].mxu0 %v347
  %v743 = vpop.f32.mrb[0].mxu0
  %v744 = vadd.f32 0.0, %v743
  %v745 = vpop.f32.mrb[0].mxu0
  %v746 = vpop.f32.mrb[0].mxu0
  %v747 = vadd.f32 0.0, %v746
  %v748 = vpop.f32.mrb[0].mxu0
  %749 = vmatprep.mubr.bf16.mxu0 %v524
  %750 = vmatmul.mubr.bf16.gmra.mrb[0].mxu0 %v349
  %v751 = vpop.f32.mrb[0].mxu0
  %v752 = vadd.f32 0.0, %v751
  %v753 = vpop.f32.mrb[0].mxu0
  %v754 = vpop.f32.mrb[0].mxu0
  %v755 = vadd.f32 0.0, %v754
  %v756 = vpop.f32.mrb[0].mxu0
  %757 = vmatprep.mubr.bf16.mxu0 %v527
  %758 = vmatmul.mubr.bf16.gmra.mrb[0].mxu0 %v351
  %v759 = vpop.f32.mrb[0].mxu0
  %v760 = vadd.f32 0.0, %v759
  %v761 = vpop.f32.mrb[0].mxu0
  %v762 = vpop.f32.mrb[0].mxu0
  %v763 = vadd.f32 0.0, %v762
  %v764 = vpop.f32.mrb[0].mxu0
  %765 = vmatprep.mubr.bf16.mxu0 %v530
  %766 = vmatmul.mubr.bf16.gmra.mrb[0].mxu0 %v353
  %v767 = vpop.f32.mrb[0].mxu0
  %v768 = vadd.f32 0.0, %v767
  %v769 = vpop.f32.mrb[0].mxu0
  %v770 = vpop.f32.mrb[0].mxu0
  %v771 = vadd.f32 0.0, %v770
  %v772 = vpop.f32.mrb[0].mxu0
  %773 = vmatprep.mubr.bf16.mxu0 %v533
  %774 = vmatmul.mubr.bf16.gmra.mrb[0].mxu0 %v355
  %v775 = vpop.f32.mrb[0].mxu0
  %v776 = vadd.f32 0.0, %v775
  %v777 = vpop.f32.mrb[0].mxu0
  %v778 = vpop.f32.mrb[0].mxu0
  %v779 = vadd.f32 0.0, %v778
  %v780 = vpop.f32.mrb[0].mxu0
  %781 = vmatprep.mubr.bf16.mxu0 %v536
  %782 = vmatmul.mubr.bf16.gmra.mrb[0].mxu0 %v357
  %v783 = vpop.f32.mrb[0].mxu0
  %v784 = vadd.f32 0.0, %v783
  %v785 = vpop.f32.mrb[0].mxu0
  %v786 = vpop.f32.mrb[0].mxu0
  %v787 = vadd.f32 0.0, %v786
  %v788 = vpop.f32.mrb[0].mxu0
  %789 = vmatprep.mubr.bf16.mxu0 %v539
  %790 = vmatmul.mubr.bf16.gmra.mrb[0].mxu0 %v359
  %v791 = vpop.f32.mrb[0].mxu0
  %v792 = vadd.f32 0.0, %v791
  %v793 = vpop.f32.mrb[0].mxu0
  %v794 = vpop.f32.mrb[0].mxu0
  %v795 = vadd.f32 0.0, %v794
  %v796 = vpop.f32.mrb[0].mxu0
  %797 = vmatprep.mubr.bf16.mxu0 %v542
  %798 = vmatmul.mubr.bf16.gmra.mrb[0].mxu0 %v361
  %v799 = vpop.f32.mrb[0].mxu0
  %v800 = vadd.f32 0.0, %v799
  %v801 = vpop.f32.mrb[0].mxu0
  %v802 = vpop.f32.mrb[0].mxu0
  %v803 = vadd.f32 0.0, %v802
  %v804 = vpop.f32.mrb[0].mxu0
  %805 = vmatprep.mubr.bf16.mxu0 %v545
  %806 = vmatmul.mubr.bf16.gmra.mrb[0].mxu0 %v363
  %v807 = vpop.f32.mrb[0].mxu0
  %v808 = vadd.f32 0.0, %v807
  %v809 = vpop.f32.mrb[0].mxu0
  %v810 = vpop.f32.mrb[0].mxu0
  %v811 = vadd.f32 0.0, %v810
  %v812 = vpop.f32.mrb[0].mxu0
  %813 = vmatprep.mubr.bf16.mxu0 %v548
  %814 = vmatmul.mubr.bf16.gmra.mrb[0].mxu0 %v365
  %v815 = vpop.f32.mrb[0].mxu0
  %v816 = vadd.f32 0.0, %v815
  %v817 = vpop.f32.mrb[0].mxu0
  %v818 = vpop.f32.mrb[0].mxu0
  %v819 = vadd.f32 0.0, %v818
  %v820 = vpop.f32.mrb[0].mxu0
  %821 = vmatprep.mubr.bf16.mxu0 %v551
  %822 = vmatmul.mubr.bf16.gmra.mrb[0].mxu0 %v367
  %v823 = vpop.f32.mrb[0].mxu0
  %v824 = vadd.f32 0.0, %v823
  %v825 = vpop.f32.mrb[0].mxu0
  %v826 = vpop.f32.mrb[0].mxu0
  %v827 = vadd.f32 0.0, %v826
  %v828 = vpop.f32.mrb[0].mxu0
  %829 = vdwg.mxu0
  %v830 = vmax.f32 %v592, %v651
  %v831 = vmax.f32 %v595, %v656
  %v832 = vmax.f32 %v600, %v659
  %v833 = vmax.f32 %v603, %v664
  %v834 = vmax.f32 %v608, %v667
  %v835 = vmax.f32 %v611, %v672
  %v836 = vmax.f32 %v616, %v675
  %v837 = vmax.f32 %v619, %v680
  %v838 = vmax.f32 %v624, %v683
  %v839 = vmax.f32 %v627, %v688
  %v840 = vmax.f32 %v632, %v691
  %v841 = vmax.f32 %v635, %v696
  %v842 = vmax.f32 %v640, %v699
  %v843 = vmax.f32 %v643, %v704
  %v844 = vmax.f32 %v648, %v707
  %v845 = vmax.f32 %v712, %v771
  %v846 = vmax.f32 %v715, %v776
  %v847 = vmax.f32 %v720, %v779
  %v848 = vmax.f32 %v723, %v784
  %v849 = vmax.f32 %v728, %v787
  %v850 = vmax.f32 %v731, %v792
  %v851 = vmax.f32 %v736, %v795
  %v852 = vmax.f32 %v739, %v800
  %v853 = vmax.f32 %v744, %v803
  %v854 = vmax.f32 %v747, %v808
  %v855 = vmax.f32 %v752, %v811
  %v856 = vmax.f32 %v755, %v816
  %v857 = vmax.f32 %v760, %v819
  %v858 = vmax.f32 %v763, %v824
  %v859 = vmax.f32 %v768, %v827
  %v860 = vmax.f32 %v830, %v845
  %v861 = vmax.f32 %v831, %v846
  %v862 = vmax.f32 %v832, %v847
  %v863 = vmax.f32 %v833, %v848
  %v864 = vmax.f32 %v834, %v849
  %v865 = vmax.f32 %v835, %v850
  %v866 = vmax.f32 %v836, %v851
  %v867 = vmax.f32 %v837, %v852
  %v868 = vmax.f32 %v838, %v853
  %v869 = vmax.f32 %v839, %v854
  %v870 = vmax.f32 %v840, %v855
  %v871 = vmax.f32 %v841, %v856
  %v872 = vmax.f32 %v842, %v857
  %v873 = vmax.f32 %v843, %v858
  %v874 = vmax.f32 %v844, %v859
  %876 = vset.pattern.permute.xlu0 0
  %877 = vperm.xlu0 %876, %v93
  %v878 = vpop.permute.xlu0 %877
  %881 = vset.pattern.permute.xlu0 0
  %882 = vperm.xlu0 %881, %v94
  %v883 = vpop.permute.xlu0 %882
  %886 = vset.pattern.permute.xlu0 0
  %887 = vperm.xlu0 %886, %v95
  %v888 = vpop.permute.xlu0 %887
  %891 = vset.pattern.permute.xlu0 0
  %892 = vperm.xlu0 %891, %v96
  %v893 = vpop.permute.xlu0 %892
  %896 = vset.pattern.permute.xlu0 0
  %897 = vperm.xlu0 %896, %v97
  %v898 = vpop.permute.xlu0 %897
  %901 = vset.pattern.permute.xlu0 0
  %902 = vperm.xlu0 %901, %v98
  %v903 = vpop.permute.xlu0 %902
  %906 = vset.pattern.permute.xlu0 0
  %907 = vperm.xlu0 %906, %v99
  %v908 = vpop.permute.xlu0 %907
  %911 = vset.pattern.permute.xlu0 0
  %912 = vperm.xlu0 %911, %v100
  %v913 = vpop.permute.xlu0 %912
  %916 = vset.pattern.permute.xlu0 0
  %917 = vperm.xlu0 %916, %v101
  %v918 = vpop.permute.xlu0 %917
  %921 = vset.pattern.permute.xlu0 0
  %922 = vperm.xlu0 %921, %v102
  %v923 = vpop.permute.xlu0 %922
  %926 = vset.pattern.permute.xlu0 0
  %927 = vperm.xlu0 %926, %v103
  %v928 = vpop.permute.xlu0 %927
  %931 = vset.pattern.permute.xlu0 0
  %932 = vperm.xlu0 %931, %v104
  %v933 = vpop.permute.xlu0 %932
  %936 = vset.pattern.permute.xlu0 0
  %937 = vperm.xlu0 %936, %v105
  %v938 = vpop.permute.xlu0 %937
  %941 = vset.pattern.permute.xlu0 0
  %942 = vperm.xlu0 %941, %v106
  %v943 = vpop.permute.xlu0 %942
  %946 = vset.pattern.permute.xlu0 0
  %947 = vperm.xlu0 %946, %v107
  %v948 = vpop.permute.xlu0 %947
  %v950 = vadd.f32 %v860, %v878
  %v951 = vadd.f32 %v861, %v883
  %v952 = vadd.f32 %v862, %v888
  %v953 = vadd.f32 %v863, %v893
  %v954 = vadd.f32 %v864, %v898
  %v955 = vadd.f32 %v865, %v903
  %v956 = vadd.f32 %v866, %v908
  %v957 = vadd.f32 %v867, %v913
  %v958 = vadd.f32 %v868, %v918
  %v959 = vadd.f32 %v869, %v923
  %v960 = vadd.f32 %v870, %v928
  %v961 = vadd.f32 %v871, %v933
  %v962 = vadd.f32 %v872, %v938
  %v963 = vadd.f32 %v873, %v943
  %v964 = vadd.f32 %v874, %v948
  %v965 = vmax.f32 %v950, 0.0
  %v966 = vmax.f32 %v951, 0.0
  %v967 = vmax.f32 %v952, 0.0
  %v968 = vmax.f32 %v953, 0.0
  %v969 = vmax.f32 %v954, 0.0
  %v970 = vmax.f32 %v955, 0.0
  %v971 = vmax.f32 %v956, 0.0
  %v972 = vmax.f32 %v957, 0.0
  %v973 = vmax.f32 %v958, 0.0
  %v974 = vmax.f32 %v959, 0.0
  %v975 = vmax.f32 %v960, 0.0
  %v976 = vmax.f32 %v961, 0.0
  %v977 = vmax.f32 %v962, 0.0
  %v978 = vmax.f32 %v963, 0.0
  %v979 = vmax.f32 %v964, 0.0
  %v980 = vpack.c.bf16 %v966, %v965
  %v981 = vpack.c.bf16 %v968, %v967
  %v982 = vpack.c.bf16 %v970, %v969
  %v983 = vpack.c.bf16 %v972, %v971
  %v984 = vpack.c.bf16 %v974, %v973
  %v985 = vpack.c.bf16 %v976, %v975
  %v986 = vpack.c.bf16 %v978, %v977
  %v987 = vpack.c.bf16 %v979, %v979
  %988 = vst [vmem:[#allocation2] sm:$0xff] %v980
  %989 = vst [vmem:[#allocation2 + $0x8] sm:$0xff] %v981
  %990 = vst [vmem:[#allocation2 + $0x10] sm:$0xff] %v982
  %991 = vst [vmem:[#allocation2 + $0x18] sm:$0xff] %v983
  %992 = vst [vmem:[#allocation2 + $0x20] sm:$0xff] %v984
  %993 = vst [vmem:[#allocation2 + $0x28] sm:$0xff] %v985
  %994 = vst [vmem:[#allocation2 + $0x30] sm:$0xff] %v986
  %995 = vst [vmem:[#allocation2 + $0x38] sm:$0xf] %v987
  %v996 = vld [vmem:[%s0 + $0x1c] sm:$0xf]
  %v997 = vld [vmem:[%s0 + $0x20] sm:$0xf]
  %v998 = vld [vmem:[%s0 + $0x24] sm:$0xf]
  %v999 = vld [vmem:[%s0 + $0x28] sm:$0xf]
  %v1000 = vld [vmem:[%s0 + $0x2c] sm:$0xf]
  %v1001 = vld [vmem:[%s0 + $0x30] sm:$0xf]
  %v1002 = vld [vmem:[%s0 + $0x34] sm:$0xf]
  %v1003 = vld [vmem:[%s0 + $0x38] sm:$0xf]
  %v1004 = vld [vmem:[%s0 + $0x3c] sm:$0xf]
  %v1005 = vld [vmem:[%s0 + $0x40] sm:$0xf]
  %v1006 = vld [vmem:[%s0 + $0x44] sm:$0xf]
  %v1007 = vld [vmem:[%s0 + $0x48] sm:$0xf]
  %v1008 = vld [vmem:[%s0 + $0x4c] sm:$0xf]
  %v1009 = vld [vmem:[%s0 + $0x50] sm:$0xf]
  %v1010 = vld [vmem:[%s0 + $0x54] sm:$0xf]
  %v1011 = vld [vmem:[%s0 + $0x58] sm:$0xf]
  %v1012 = vld [vmem:[%s0 + $0x5c] sm:$0xf]
  %v1013 = vld [vmem:[%s0 + $0x60] sm:$0xf]
  %v1014 = vld [vmem:[%s0 + $0x64] sm:$0xf]
  %v1015 = vld [vmem:[%s0 + $0x68] sm:$0xf]
  %v1016 = vld [vmem:[%s0 + $0x6c] sm:$0xf]
  %v1038 = vunpack.c.l.b16 %v996
  %v1039 = vunpack.c.l.b16 %v997
  %v1040 = vunpack.c.l.b16 %v998
  %v1041 = vunpack.c.l.b16 %v999
  %v1042 = vunpack.c.l.b16 %v1000
  %v1043 = vunpack.c.l.b16 %v1001
  %v1044 = vunpack.c.l.b16 %v1002
  %v1045 = vunpack.c.l.b16 %v1003
  %v1046 = vunpack.c.l.b16 %v1004
  %v1047 = vunpack.c.l.b16 %v1005
  %v1048 = vunpack.c.l.b16 %v1006
  %v1049 = vunpack.c.l.b16 %v1007
  %v1050 = vunpack.c.l.b16 %v1008
  %v1051 = vunpack.c.l.b16 %v1009
  %v1052 = vunpack.c.l.b16 %v1010
  %v1053 = vunpack.c.l.b16 %v1011
  %v1054 = vunpack.c.l.b16 %v1012
  %v1055 = vunpack.c.l.b16 %v1013
  %v1056 = vunpack.c.l.b16 %v1014
  %v1057 = vunpack.c.l.b16 %v1015
  %v1058 = vunpack.c.l.b16 %v1016
  %v1059 = vpack.c.b16 %v1039, %v1038
  %v1060 = vpack.c.b16 %v1041, %v1040
  %v1061 = vpack.c.b16 %v1043, %v1042
  %v1062 = vpack.c.b16 %v1045, %v1044
  %v1063 = vpack.c.b16 %v1047, %v1046
  %v1064 = vpack.c.b16 %v1049, %v1048
  %v1065 = vpack.c.b16 %v1051, %v1050
  %v1066 = vpack.c.b16 %v1053, %v1052
  %v1067 = vpack.c.b16 %v1055, %v1054
  %v1068 = vpack.c.b16 %v1057, %v1056
  %v1069 = vpack.c.b16 %v1058, %v1058
  %v1081 = vsel %vm553, %v1069, 0
  %1083 = vmatprep.subr.bf16.mxu0 0
  %1084 = vmatpush1.bf16.msra.mxu0 %v1059
  %1085 = vmatprep.subr.bf16.mxu0 0
  %1086 = vmatpush1.bf16.msra.mxu0 %v1060
  %1087 = vmatprep.subr.bf16.mxu0 0
  %1088 = vmatpush1.bf16.msra.mxu0 %v1061
  %1089 = vmatprep.subr.bf16.mxu0 0
  %1090 = vmatpush1.bf16.msra.mxu0 %v1062
  %1091 = vmatprep.subr.bf16.mxu0 0
  %1092 = vmatpush1.bf16.msra.mxu0 %v1063
  %1093 = vmatprep.subr.bf16.mxu0 0
  %1094 = vmatpush1.bf16.msra.mxu0 %v1064
  %1095 = vmatprep.subr.bf16.mxu0 0
  %1096 = vmatpush1.bf16.msra.mxu0 %v1065
  %1097 = vmatprep.subr.bf16.mxu0 0
  %1098 = vmatpush1.bf16.msra.mxu0 %v1066
  %1099 = vmatprep.subr.bf16.mxu0 0
  %1100 = vmatpush1.bf16.msra.mxu0 %v1067
  %1101 = vmatprep.subr.bf16.mxu0 0
  %1102 = vmatpush1.bf16.msra.mxu0 %v1068
  %1103 = vmatprep.subr.bf16.mxu0 0
  %1104 = vmatpush1.bf16.msra.mxu0 %v1081
  %1105 = vmatprep.subr.bf16.mxu0 0
  %1106 = vmatpush1.bf16.msra.mxu0 0
  %1107 = vmatprep.subr.bf16.mxu0 0
  %1108 = vmatpush1.bf16.msra.mxu0 0
  %1109 = vmatprep.subr.bf16.mxu0 0
  %1110 = vmatpush1.bf16.msra.mxu0 0
  %1111 = vmatprep.subr.bf16.mxu0 0
  %1112 = vmatpush1.bf16.msra.mxu0 0
  %1113 = vmatprep.subr.bf16.mxu0 0
  %1114 = vmatpush1.bf16.msra.mxu0 0
  %1115 = vmatprep.mubr.bf16.mxu0 %v464
  %1116 = vmatmul.mubr.bf16.gmra.mrb[0].mxu0 %v309
  %v1117 = vpop.f32.mrb[0].mxu0
  %v1118 = vadd.f32 0.0, %v1117
  %v1119 = vpop.f32.mrb[0].mxu0
  %v1120 = vpop.f32.mrb[0].mxu0
  %v1121 = vadd.f32 0.0, %v1120
  %v1122 = vpop.f32.mrb[0].mxu0
  %1123 = vmatprep.mubr.bf16.mxu0 %v467
  %1124 = vmatmul.mubr.bf16.gmra.mrb[0].mxu0 %v311
  %v1125 = vpop.f32.mrb[0].mxu0
  %v1126 = vadd.f32 0.0, %v1125
  %v1127 = vpop.f32.mrb[0].mxu0
  %v1128 = vpop.f32.mrb[0].mxu0
  %v1129 = vadd.f32 0.0, %v1128
  %v1130 = vpop.f32.mrb[0].mxu0
  %1131 = vmatprep.mubr.bf16.mxu0 %v470
  %1132 = vmatmul.mubr.bf16.gmra.mrb[0].mxu0 %v313
  %v1133 = vpop.f32.mrb[0].mxu0
  %v1134 = vadd.f32 0.0, %v1133
  %v1135 = vpop.f32.mrb[0].mxu0
  %v1136 = vpop.f32.mrb[0].mxu0
  %v1137 = vadd.f32 0.0, %v1136
  %v1138 = vpop.f32.mrb[0].mxu0
  %1139 = vmatprep.mubr.bf16.mxu0 %v473
  %1140 = vmatmul.mubr.bf16.gmra.mrb[0].mxu0 %v315
  %v1141 = vpop.f32.mrb[0].mxu0
  %v1142 = vadd.f32 0.0, %v1141
  %v1143 = vpop.f32.mrb[0].mxu0
  %v1144 = vpop.f32.mrb[0].mxu0
  %v1145 = vadd.f32 0.0, %v1144
  %v1146 = vpop.f32.mrb[0].mxu0
  %1147 = vmatprep.mubr.bf16.mxu0 %v476
  %1148 = vmatmul.mubr.bf16.gmra.mrb[0].mxu0 %v317
  %v1149 = vpop.f32.mrb[0].mxu0
  %v1150 = vadd.f32 0.0, %v1149
  %v1151 = vpop.f32.mrb[0].mxu0
  %v1152 = vpop.f32.mrb[0].mxu0
  %v1153 = vadd.f32 0.0, %v1152
  %v1154 = vpop.f32.mrb[0].mxu0
  %1155 = vmatprep.mubr.bf16.mxu0 %v479
  %1156 = vmatmul.mubr.bf16.gmra.mrb[0].mxu0 %v319
  %v1157 = vpop.f32.mrb[0].mxu0
  %v1158 = vadd.f32 0.0, %v1157
  %v1159 = vpop.f32.mrb[0].mxu0
  %v1160 = vpop.f32.mrb[0].mxu0
  %v1161 = vadd.f32 0.0, %v1160
  %v1162 = vpop.f32.mrb[0].mxu0
  %1163 = vmatprep.mubr.bf16.mxu0 %v482
  %1164 = vmatmul.mubr.bf16.gmra.mrb[0].mxu0 %v321
  %v1165 = vpop.f32.mrb[0].mxu0
  %v1166 = vadd.f32 0.0, %v1165
  %v1167 = vpop.f32.mrb[0].mxu0
  %v1168 = vpop.f32.mrb[0].mxu0
  %v1169 = vadd.f32 0.0, %v1168
  %v1170 = vpop.f32.mrb[0].mxu0
  %1171 = vmatprep.mubr.bf16.mxu0 %v485
  %1172 = vmatmul.mubr.bf16.gmra.mrb[0].mxu0 %v323
  %v1173 = vpop.f32.mrb[0].mxu0
  %v1174 = vadd.f32 0.0, %v1173
  %v1175 = vpop.f32.mrb[0].mxu0
  %v1176 = vpop.f32.mrb[0].mxu0
  %v1177 = vadd.f32 0.0, %v1176
  %v1178 = vpop.f32.mrb[0].mxu0
  %1179 = vmatprep.mubr.bf16.mxu0 %v488
  %1180 = vmatmul.mubr.bf16.gmra.mrb[0].mxu0 %v325
  %v1181 = vpop.f32.mrb[0].mxu0
  %v1182 = vadd.f32 0.0, %v1181
  %v1183 = vpop.f32.mrb[0].mxu0
  %v1184 = vpop.f32.mrb[0].mxu0
  %v1185 = vadd.f32 0.0, %v1184
  %v1186 = vpop.f32.mrb[0].mxu0
  %1187 = vmatprep.mubr.bf16.mxu0 %v491
  %1188 = vmatmul.mubr.bf16.gmra.mrb[0].mxu0 %v327
  %v1189 = vpop.f32.mrb[0].mxu0
  %v1190 = vadd.f32 0.0, %v1189
  %v1191 = vpop.f32.mrb[0].mxu0
  %v1192 = vpop.f32.mrb[0].mxu0
  %v1193 = vadd.f32 0.0, %v1192
  %v1194 = vpop.f32.mrb[0].mxu0
  %1195 = vmatprep.mubr.bf16.mxu0 %v494
  %1196 = vmatmul.mubr.bf16.gmra.mrb[0].mxu0 %v329
  %v1197 = vpop.f32.mrb[0].mxu0
  %v1198 = vadd.f32 0.0, %v1197
  %v1199 = vpop.f32.mrb[0].mxu0
  %v1200 = vpop.f32.mrb[0].mxu0
  %v1201 = vadd.f32 0.0, %v1200
  %v1202 = vpop.f32.mrb[0].mxu0
  %1203 = vmatprep.mubr.bf16.mxu0 %v497
  %1204 = vmatmul.mubr.bf16.gmra.mrb[0].mxu0 %v331
  %v1205 = vpop.f32.mrb[0].mxu0
  %v1206 = vadd.f32 0.0, %v1205
  %v1207 = vpop.f32.mrb[0].mxu0
  %v1208 = vpop.f32.mrb[0].mxu0
  %v1209 = vadd.f32 0.0, %v1208
  %v1210 = vpop.f32.mrb[0].mxu0
  %1211 = vmatprep.mubr.bf16.mxu0 %v500
  %1212 = vmatmul.mubr.bf16.gmra.mrb[0].mxu0 %v333
  %v1213 = vpop.f32.mrb[0].mxu0
  %v1214 = vadd.f32 0.0, %v1213
  %v1215 = vpop.f32.mrb[0].mxu0
  %v1216 = vpop.f32.mrb[0].mxu0
  %v1217 = vadd.f32 0.0, %v1216
  %v1218 = vpop.f32.mrb[0].mxu0
  %1219 = vmatprep.mubr.bf16.mxu0 %v503
  %1220 = vmatmul.mubr.bf16.gmra.mrb[0].mxu0 %v335
  %v1221 = vpop.f32.mrb[0].mxu0
  %v1222 = vadd.f32 0.0, %v1221
  %v1223 = vpop.f32.mrb[0].mxu0
  %v1224 = vpop.f32.mrb[0].mxu0
  %v1225 = vadd.f32 0.0, %v1224
  %v1226 = vpop.f32.mrb[0].mxu0
  %1227 = vmatprep.mubr.bf16.mxu0 %v506
  %1228 = vmatmul.mubr.bf16.gmra.mrb[0].mxu0 %v337
  %v1229 = vpop.f32.mrb[0].mxu0
  %v1230 = vadd.f32 0.0, %v1229
  %v1231 = vpop.f32.mrb[0].mxu0
  %v1232 = vpop.f32.mrb[0].mxu0
  %v1233 = vadd.f32 0.0, %v1232
  %v1234 = vpop.f32.mrb[0].mxu0
  %1235 = vmatprep.mubr.bf16.mxu0 %v509
  %1236 = vmatmul.mubr.bf16.gmra.mrb[0].mxu0 %v339
  %v1237 = vpop.f32.mrb[0].mxu0
  %v1238 = vadd.f32 0.0, %v1237
  %v1239 = vpop.f32.mrb[0].mxu0
  %v1240 = vpop.f32.mrb[0].mxu0
  %v1241 = vadd.f32 0.0, %v1240
  %v1242 = vpop.f32.mrb[0].mxu0
  %1243 = vmatprep.mubr.bf16.mxu0 %v512
  %1244 = vmatmul.mubr.bf16.gmra.mrb[0].mxu0 %v341
  %v1245 = vpop.f32.mrb[0].mxu0
  %v1246 = vadd.f32 0.0, %v1245
  %v1247 = vpop.f32.mrb[0].mxu0
  %v1248 = vpop.f32.mrb[0].mxu0
  %v1249 = vadd.f32 0.0, %v1248
  %v1250 = vpop.f32.mrb[0].mxu0
  %1251 = vmatprep.mubr.bf16.mxu0 %v515
  %1252 = vmatmul.mubr.bf16.gmra.mrb[0].mxu0 %v343
  %v1253 = vpop.f32.mrb[0].mxu0
  %v1254 = vadd.f32 0.0, %v1253
  %v1255 = vpop.f32.mrb[0].mxu0
  %v1256 = vpop.f32.mrb[0].mxu0
  %v1257 = vadd.f32 0.0, %v1256
  %v1258 = vpop.f32.mrb[0].mxu0
  %1259 = vmatprep.mubr.bf16.mxu0 %v518
  %1260 = vmatmul.mubr.bf16.gmra.mrb[0].mxu0 %v345
  %v1261 = vpop.f32.mrb[0].mxu0
  %v1262 = vadd.f32 0.0, %v1261
  %v1263 = vpop.f32.mrb[0].mxu0
  %v1264 = vpop.f32.mrb[0].mxu0
  %v1265 = vadd.f32 0.0, %v1264
  %v1266 = vpop.f32.mrb[0].mxu0
  %1267 = vmatprep.mubr.bf16.mxu0 %v521
  %1268 = vmatmul.mubr.bf16.gmra.mrb[0].mxu0 %v347
  %v1269 = vpop.f32.mrb[0].mxu0
  %v1270 = vadd.f32 0.0, %v1269
  %v1271 = vpop.f32.mrb[0].mxu0
  %v1272 = vpop.f32.mrb[0].mxu0
  %v1273 = vadd.f32 0.0, %v1272
  %v1274 = vpop.f32.mrb[0].mxu0
  %1275 = vmatprep.mubr.bf16.mxu0 %v524
  %1276 = vmatmul.mubr.bf16.gmra.mrb[0].mxu0 %v349
  %v1277 = vpop.f32.mrb[0].mxu0
  %v1278 = vadd.f32 0.0, %v1277
  %v1279 = vpop.f32.mrb[0].mxu0
  %v1280 = vpop.f32.mrb[0].mxu0
  %v1281 = vadd.f32 0.0, %v1280
  %v1282 = vpop.f32.mrb[0].mxu0
  %1283 = vmatprep.mubr.bf16.mxu0 %v527
  %1284 = vmatmul.mubr.bf16.gmra.mrb[0].mxu0 %v351
  %v1285 = vpop.f32.mrb[0].mxu0
  %v1286 = vadd.f32 0.0, %v1285
  %v1287 = vpop.f32.mrb[0].mxu0
  %v1288 = vpop.f32.mrb[0].mxu0
  %v1289 = vadd.f32 0.0, %v1288
  %v1290 = vpop.f32.mrb[0].mxu0
  %1291 = vmatprep.mubr.bf16.mxu0 %v530
  %1292 = vmatmul.mubr.bf16.gmra.mrb[0].mxu0 %v353
  %v1293 = vpop.f32.mrb[0].mxu0
  %v1294 = vadd.f32 0.0, %v1293
  %v1295 = vpop.f32.mrb[0].mxu0
  %v1296 = vpop.f32.mrb[0].mxu0
  %v1297 = vadd.f32 0.0, %v1296
  %v1298 = vpop.f32.mrb[0].mxu0
  %1299 = vmatprep.mubr.bf16.mxu0 %v533
  %1300 = vmatmul.mubr.bf16.gmra.mrb[0].mxu0 %v355
  %v1301 = vpop.f32.mrb[0].mxu0
  %v1302 = vadd.f32 0.0, %v1301
  %v1303 = vpop.f32.mrb[0].mxu0
  %v1304 = vpop.f32.mrb[0].mxu0
  %v1305 = vadd.f32 0.0, %v1304
  %v1306 = vpop.f32.mrb[0].mxu0
  %1307 = vmatprep.mubr.bf16.mxu0 %v536
  %1308 = vmatmul.mubr.bf16.gmra.mrb[0].mxu0 %v357
  %v1309 = vpop.f32.mrb[0].mxu0
  %v1310 = vadd.f32 0.0, %v1309
  %v1311 = vpop.f32.mrb[0].mxu0
  %v1312 = vpop.f32.mrb[0].mxu0
  %v1313 = vadd.f32 0.0, %v1312
  %v1314 = vpop.f32.mrb[0].mxu0
  %1315 = vmatprep.mubr.bf16.mxu0 %v539
  %1316 = vmatmul.mubr.bf16.gmra.mrb[0].mxu0 %v359
  %v1317 = vpop.f32.mrb[0].mxu0
  %v1318 = vadd.f32 0.0, %v1317
  %v1319 = vpop.f32.mrb[0].mxu0
  %v1320 = vpop.f32.mrb[0].mxu0
  %v1321 = vadd.f32 0.0, %v1320
  %v1322 = vpop.f32.mrb[0].mxu0
  %1323 = vmatprep.mubr.bf16.mxu0 %v542
  %1324 = vmatmul.mubr.bf16.gmra.mrb[0].mxu0 %v361
  %v1325 = vpop.f32.mrb[0].mxu0
  %v1326 = vadd.f32 0.0, %v1325
  %v1327 = vpop.f32.mrb[0].mxu0
  %v1328 = vpop.f32.mrb[0].mxu0
  %v1329 = vadd.f32 0.0, %v1328
  %v1330 = vpop.f32.mrb[0].mxu0
  %1331 = vmatprep.mubr.bf16.mxu0 %v545
  %1332 = vmatmul.mubr.bf16.gmra.mrb[0].mxu0 %v363
  %v1333 = vpop.f32.mrb[0].mxu0
  %v1334 = vadd.f32 0.0, %v1333
  %v1335 = vpop.f32.mrb[0].mxu0
  %v1336 = vpop.f32.mrb[0].mxu0
  %v1337 = vadd.f32 0.0, %v1336
  %v1338 = vpop.f32.mrb[0].mxu0
  %1339 = vmatprep.mubr.bf16.mxu0 %v548
  %1340 = vmatmul.mubr.bf16.gmra.mrb[0].mxu0 %v365
  %v1341 = vpop.f32.mrb[0].mxu0
  %v1342 = vadd.f32 0.0, %v1341
  %v1343 = vpop.f32.mrb[0].mxu0
  %v1344 = vpop.f32.mrb[0].mxu0
  %v1345 = vadd.f32 0.0, %v1344
  %v1346 = vpop.f32.mrb[0].mxu0
  %1347 = vmatprep.mubr.bf16.mxu0 %v551
  %1348 = vmatmul.mubr.bf16.gmra.mrb[0].mxu0 %v367
  %v1349 = vpop.f32.mrb[0].mxu0
  %v1350 = vadd.f32 0.0, %v1349
  %v1351 = vpop.f32.mrb[0].mxu0
  %v1352 = vpop.f32.mrb[0].mxu0
  %v1353 = vadd.f32 0.0, %v1352
  %v1354 = vpop.f32.mrb[0].mxu0
  %1355 = vdwg.mxu0
  %v1356 = vmax.f32 %v1118, %v1177
  %v1357 = vmax.f32 %v1121, %v1182
  %v1358 = vmax.f32 %v1126, %v1185
  %v1359 = vmax.f32 %v1129, %v1190
  %v1360 = vmax.f32 %v1134, %v1193
  %v1361 = vmax.f32 %v1137, %v1198
  %v1362 = vmax.f32 %v1142, %v1201
  %v1363 = vmax.f32 %v1145, %v1206
  %v1364 = vmax.f32 %v1150, %v1209
  %v1365 = vmax.f32 %v1153, %v1214
  %v1366 = vmax.f32 %v1158, %v1217
  %v1367 = vmax.f32 %v1161, %v1222
  %v1368 = vmax.f32 %v1166, %v1225
  %v1369 = vmax.f32 %v1169, %v1230
  %v1370 = vmax.f32 %v1174, %v1233
  %v1371 = vmax.f32 %v1238, %v1297
  %v1372 = vmax.f32 %v1241, %v1302
  %v1373 = vmax.f32 %v1246, %v1305
  %v1374 = vmax.f32 %v1249, %v1310
  %v1375 = vmax.f32 %v1254, %v1313
  %v1376 = vmax.f32 %v1257, %v1318
  %v1377 = vmax.f32 %v1262, %v1321
  %v1378 = vmax.f32 %v1265, %v1326
  %v1379 = vmax.f32 %v1270, %v1329
  %v1380 = vmax.f32 %v1273, %v1334
  %v1381 = vmax.f32 %v1278, %v1337
  %v1382 = vmax.f32 %v1281, %v1342
  %v1383 = vmax.f32 %v1286, %v1345
  %v1384 = vmax.f32 %v1289, %v1350
  %v1385 = vmax.f32 %v1294, %v1353
  %v1386 = vmax.f32 %v1356, %v1371
  %v1387 = vmax.f32 %v1357, %v1372
  %v1388 = vmax.f32 %v1358, %v1373
  %v1389 = vmax.f32 %v1359, %v1374
  %v1390 = vmax.f32 %v1360, %v1375
  %v1391 = vmax.f32 %v1361, %v1376
  %v1392 = vmax.f32 %v1362, %v1377
  %v1393 = vmax.f32 %v1363, %v1378
  %v1394 = vmax.f32 %v1364, %v1379
  %v1395 = vmax.f32 %v1365, %v1380
  %v1396 = vmax.f32 %v1366, %v1381
  %v1397 = vmax.f32 %v1367, %v1382
  %v1398 = vmax.f32 %v1368, %v1383
  %v1399 = vmax.f32 %v1369, %v1384
  %v1400 = vmax.f32 %v1370, %v1385
  %v1401 = vadd.f32 %v1386, %v878
  %v1402 = vadd.f32 %v1387, %v883
  %v1403 = vadd.f32 %v1388, %v888
  %v1404 = vadd.f32 %v1389, %v893
  %v1405 = vadd.f32 %v1390, %v898
  %v1406 = vadd.f32 %v1391, %v903
  %v1407 = vadd.f32 %v1392, %v908
  %v1408 = vadd.f32 %v1393, %v913
  %v1409 = vadd.f32 %v1394, %v918
  %v1410 = vadd.f32 %v1395, %v923
  %v1411 = vadd.f32 %v1396, %v928
  %v1412 = vadd.f32 %v1397, %v933
  %v1413 = vadd.f32 %v1398, %v938
  %v1414 = vadd.f32 %v1399, %v943
  %v1415 = vadd.f32 %v1400, %v948
  %v1416 = vmax.f32 %v1401, 0.0
  %v1417 = vmax.f32 %v1402, 0.0
  %v1418 = vmax.f32 %v1403, 0.0
  %v1419 = vmax.f32 %v1404, 0.0
  %v1420 = vmax.f32 %v1405, 0.0
  %v1421 = vmax.f32 %v1406, 0.0
  %v1422 = vmax.f32 %v1407, 0.0
  %v1423 = vmax.f32 %v1408, 0.0
  %v1424 = vmax.f32 %v1409, 0.0
  %v1425 = vmax.f32 %v1410, 0.0
  %v1426 = vmax.f32 %v1411, 0.0
  %v1427 = vmax.f32 %v1412, 0.0
  %v1428 = vmax.f32 %v1413, 0.0
  %v1429 = vmax.f32 %v1414, 0.0
  %v1430 = vmax.f32 %v1415, 0.0
  %v1431 = vpack.c.bf16 %v1417, %v1416
  %v1432 = vpack.c.bf16 %v1419, %v1418
  %v1433 = vpack.c.bf16 %v1421, %v1420
  %v1434 = vpack.c.bf16 %v1423, %v1422
  %v1435 = vpack.c.bf16 %v1425, %v1424
  %v1436 = vpack.c.bf16 %v1427, %v1426
  %v1437 = vpack.c.bf16 %v1429, %v1428
  %v1438 = vpack.c.bf16 %v1430, %v1430
  %vm1447 = vcmask 1043456
  %v1448 = vrot.slane %v1431, 4
  %v1449 = vrot.slane %v1432, 4
  %v1450 = vsel %vm1447, %v1448, %v1449
  %v1451 = vrot.slane %v1433, 4
  %v1452 = vsel %vm1447, %v1449, %v1451
  %v1453 = vrot.slane %v1434, 4
  %v1454 = vsel %vm1447, %v1451, %v1453
  %v1455 = vrot.slane %v1435, 4
  %v1456 = vsel %vm1447, %v1453, %v1455
  %v1457 = vrot.slane %v1436, 4
  %v1458 = vsel %vm1447, %v1455, %v1457
  %v1459 = vrot.slane %v1437, 4
  %v1460 = vsel %vm1447, %v1457, %v1459
  %v1461 = vrot.slane %v1438, 4
  %v1462 = vsel %vm1447, %v1459, %v1461
  %1471 = vst [vmem:[#allocation2 + $0x38] sm:$0xf0] %v1448
  %1472 = vst [vmem:[#allocation2 + $0x40] sm:$0xff] %v1450
  %1473 = vst [vmem:[#allocation2 + $0x48] sm:$0xff] %v1452
  %1474 = vst [vmem:[#allocation2 + $0x50] sm:$0xff] %v1454
  %1475 = vst [vmem:[#allocation2 + $0x58] sm:$0xff] %v1456
  %1476 = vst [vmem:[#allocation2 + $0x60] sm:$0xff] %v1458
  %1477 = vst [vmem:[#allocation2 + $0x68] sm:$0xff] %v1460
  %1478 = vst [vmem:[#allocation2 + $0x70] sm:$0xff] %v1462
  %v1479 = vld [vmem:[%s0 + $0x38] sm:$0xf]
  %v1480 = vld [vmem:[%s0 + $0x3c] sm:$0xf]
  %v1481 = vld [vmem:[%s0 + $0x40] sm:$0xf]
  %v1482 = vld [vmem:[%s0 + $0x44] sm:$0xf]
  %v1483 = vld [vmem:[%s0 + $0x48] sm:$0xf]
  %v1484 = vld [vmem:[%s0 + $0x4c] sm:$0xf]
  %v1485 = vld [vmem:[%s0 + $0x50] sm:$0xf]
  %v1486 = vld [vmem:[%s0 + $0x54] sm:$0xf]
  %v1487 = vld [vmem:[%s0 + $0x58] sm:$0xf]
  %v1488 = vld [vmem:[%s0 + $0x5c] sm:$0xf]
  %v1489 = vld [vmem:[%s0 + $0x60] sm:$0xf]
  %v1490 = vld [vmem:[%s0 + $0x64] sm:$0xf]
  %v1491 = vld [vmem:[%s0 + $0x68] sm:$0xf]
  %v1492 = vld [vmem:[%s0 + $0x6c] sm:$0xf]
  %v1493 = vld [vmem:[%s0 + $0x70] sm:$0xf]
  %v1494 = vld [vmem:[%s0 + $0x74] sm:$0xf]
  %v1495 = vld [vmem:[%s0 + $0x78] sm:$0xf]
  %v1496 = vld [vmem:[%s0 + $0x7c] sm:$0xf]
  %v1497 = vld [vmem:[%s0 + $0x80] sm:$0xf]
  %v1498 = vld [vmem:[%s0 + $0x84] sm:$0xf]
  %v1499 = vld [vmem:[%s0 + $0x88] sm:$0xf]
  %v1521 = vunpack.c.l.b16 %v1479
  %v1522 = vunpack.c.l.b16 %v1480
  %v1523 = vunpack.c.l.b16 %v1481
  %v1524 = vunpack.c.l.b16 %v1482
  %v1525 = vunpack.c.l.b16 %v1483
  %v1526 = vunpack.c.l.b16 %v1484
  %v1527 = vunpack.c.l.b16 %v1485
  %v1528 = vunpack.c.l.b16 %v1486
  %v1529 = vunpack.c.l.b16 %v1487
  %v1530 = vunpack.c.l.b16 %v1488
  %v1531 = vunpack.c.l.b16 %v1489
  %v1532 = vunpack.c.l.b16 %v1490
  %v1533 = vunpack.c.l.b16 %v1491
  %v1534 = vunpack.c.l.b16 %v1492
  %v1535 = vunpack.c.l.b16 %v1493
  %v1536 = vunpack.c.l.b16 %v1494
  %v1537 = vunpack.c.l.b16 %v1495
  %v1538 = vunpack.c.l.b16 %v1496
  %v1539 = vunpack.c.l.b16 %v1497
  %v1540 = vunpack.c.l.b16 %v1498
  %v1541 = vunpack.c.l.b16 %v1499
  %v1542 = vpack.c.b16 %v1522, %v1521
  %v1543 = vpack.c.b16 %v1524, %v1523
  %v1544 = vpack.c.b16 %v1526, %v1525
  %v1545 = vpack.c.b16 %v1528, %v1527
  %v1546 = vpack.c.b16 %v1530, %v1529
  %v1547 = vpack.c.b16 %v1532, %v1531
  %v1548 = vpack.c.b16 %v1534, %v1533
  %v1549 = vpack.c.b16 %v1536, %v1535
  %v1550 = vpack.c.b16 %v1538, %v1537
  %v1551 = vpack.c.b16 %v1540, %v1539
  %v1552 = vpack.c.b16 %v1541, %v1541
  %v1564 = vsel %vm553, %v1552, 0
  %1566 = vmatprep.subr.bf16.mxu0 0
  %1567 = vmatpush1.bf16.msra.mxu0 %v1542
  %1568 = vmatprep.subr.bf16.mxu0 0
  %1569 = vmatpush1.bf16.msra.mxu0 %v1543
  %1570 = vmatprep.subr.bf16.mxu0 0
  %1571 = vmatpush1.bf16.msra.mxu0 %v1544
  %1572 = vmatprep.subr.bf16.mxu0 0
  %1573 = vmatpush1.bf16.msra.mxu0 %v1545
  %1574 = vmatprep.subr.bf16.mxu0 0
  %1575 = vmatpush1.bf16.msra.mxu0 %v1546
  %1576 = vmatprep.subr.bf16.mxu0 0
  %1577 = vmatpush1.bf16.msra.mxu0 %v1547
  %1578 = vmatprep.subr.bf16.mxu0 0
  %1579 = vmatpush1.bf16.msra.mxu0 %v1548
  %1580 = vmatprep.subr.bf16.mxu0 0
  %1581 = vmatpush1.bf16.msra.mxu0 %v1549
  %1582 = vmatprep.subr.bf16.mxu0 0
  %1583 = vmatpush1.bf16.msra.mxu0 %v1550
  %1584 = vmatprep.subr.bf16.mxu0 0
  %1585 = vmatpush1.bf16.msra.mxu0 %v1551
  %1586 = vmatprep.subr.bf16.mxu0 0
  %1587 = vmatpush1.bf16.msra.mxu0 %v1564
  %1588 = vmatprep.subr.bf16.mxu0 0
  %1589 = vmatpush1.bf16.msra.mxu0 0
  %1590 = vmatprep.subr.bf16.mxu0 0
  %1591 = vmatpush1.bf16.msra.mxu0 0
  %1592 = vmatprep.subr.bf16.mxu0 0
  %1593 = vmatpush1.bf16.msra.mxu0 0
  %1594 = vmatprep.subr.bf16.mxu0 0
  %1595 = vmatpush1.bf16.msra.mxu0 0
  %1596 = vmatprep.subr.bf16.mxu0 0
  %1597 = vmatpush1.bf16.msra.mxu0 0
  %1598 = vmatprep.mubr.bf16.mxu0 %v464
  %1599 = vmatmul.mubr.bf16.gmra.mrb[0].mxu0 %v309
  %v1600 = vpop.f32.mrb[0].mxu0
  %v1601 = vadd.f32 0.0, %v1600
  %v1602 = vpop.f32.mrb[0].mxu0
  %v1603 = vpop.f32.mrb[0].mxu0
  %v1604 = vadd.f32 0.0, %v1603
  %v1605 = vpop.f32.mrb[0].mxu0
  %1606 = vmatprep.mubr.bf16.mxu0 %v467
  %1607 = vmatmul.mubr.bf16.gmra.mrb[0].mxu0 %v311
  %v1608 = vpop.f32.mrb[0].mxu0
  %v1609 = vadd.f32 0.0, %v1608
  %v1610 = vpop.f32.mrb[0].mxu0
  %v1611 = vpop.f32.mrb[0].mxu0
  %v1612 = vadd.f32 0.0, %v1611
  %v1613 = vpop.f32.mrb[0].mxu0
  %1614 = vmatprep.mubr.bf16.mxu0 %v470
  %1615 = vmatmul.mubr.bf16.gmra.mrb[0].mxu0 %v313
  %v1616 = vpop.f32.mrb[0].mxu0
  %v1617 = vadd.f32 0.0, %v1616
  %v1618 = vpop.f32.mrb[0].mxu0
  %v1619 = vpop.f32.mrb[0].mxu0
  %v1620 = vadd.f32 0.0, %v1619
  %v1621 = vpop.f32.mrb[0].mxu0
  %1622 = vmatprep.mubr.bf16.mxu0 %v473
  %1623 = vmatmul.mubr.bf16.gmra.mrb[0].mxu0 %v315
  %v1624 = vpop.f32.mrb[0].mxu0
  %v1625 = vadd.f32 0.0, %v1624
  %v1626 = vpop.f32.mrb[0].mxu0
  %v1627 = vpop.f32.mrb[0].mxu0
  %v1628 = vadd.f32 0.0, %v1627
  %v1629 = vpop.f32.mrb[0].mxu0
  %1630 = vmatprep.mubr.bf16.mxu0 %v476
  %1631 = vmatmul.mubr.bf16.gmra.mrb[0].mxu0 %v317
  %v1632 = vpop.f32.mrb[0].mxu0
  %v1633 = vadd.f32 0.0, %v1632
  %v1634 = vpop.f32.mrb[0].mxu0
  %v1635 = vpop.f32.mrb[0].mxu0
  %v1636 = vadd.f32 0.0, %v1635
  %v1637 = vpop.f32.mrb[0].mxu0
  %1638 = vmatprep.mubr.bf16.mxu0 %v479
  %1639 = vmatmul.mubr.bf16.gmra.mrb[0].mxu0 %v319
  %v1640 = vpop.f32.mrb[0].mxu0
  %v1641 = vadd.f32 0.0, %v1640
  %v1642 = vpop.f32.mrb[0].mxu0
  %v1643 = vpop.f32.mrb[0].mxu0
  %v1644 = vadd.f32 0.0, %v1643
  %v1645 = vpop.f32.mrb[0].mxu0
  %1646 = vmatprep.mubr.bf16.mxu0 %v482
  %1647 = vmatmul.mubr.bf16.gmra.mrb[0].mxu0 %v321
  %v1648 = vpop.f32.mrb[0].mxu0
  %v1649 = vadd.f32 0.0, %v1648
  %v1650 = vpop.f32.mrb[0].mxu0
  %v1651 = vpop.f32.mrb[0].mxu0
  %v1652 = vadd.f32 0.0, %v1651
  %v1653 = vpop.f32.mrb[0].mxu0
  %1654 = vmatprep.mubr.bf16.mxu0 %v485
  %1655 = vmatmul.mubr.bf16.gmra.mrb[0].mxu0 %v323
  %v1656 = vpop.f32.mrb[0].mxu0
  %v1657 = vadd.f32 0.0, %v1656
  %v1658 = vpop.f32.mrb[0].mxu0
  %v1659 = vpop.f32.mrb[0].mxu0
  %v1660 = vadd.f32 0.0, %v1659
  %v1661 = vpop.f32.mrb[0].mxu0
  %1662 = vmatprep.mubr.bf16.mxu0 %v488
  %1663 = vmatmul.mubr.bf16.gmra.mrb[0].mxu0 %v325
  %v1664 = vpop.f32.mrb[0].mxu0
  %v1665 = vadd.f32 0.0, %v1664
  %v1666 = vpop.f32.mrb[0].mxu0
  %v1667 = vpop.f32.mrb[0].mxu0
  %v1668 = vadd.f32 0.0, %v1667
  %v1669 = vpop.f32.mrb[0].mxu0
  %1670 = vmatprep.mubr.bf16.mxu0 %v491
  %1671 = vmatmul.mubr.bf16.gmra.mrb[0].mxu0 %v327
  %v1672 = vpop.f32.mrb[0].mxu0
  %v1673 = vadd.f32 0.0, %v1672
  %v1674 = vpop.f32.mrb[0].mxu0
  %v1675 = vpop.f32.mrb[0].mxu0
  %v1676 = vadd.f32 0.0, %v1675
  %v1677 = vpop.f32.mrb[0].mxu0
  %1678 = vmatprep.mubr.bf16.mxu0 %v494
  %1679 = vmatmul.mubr.bf16.gmra.mrb[0].mxu0 %v329
  %v1680 = vpop.f32.mrb[0].mxu0
  %v1681 = vadd.f32 0.0, %v1680
  %v1682 = vpop.f32.mrb[0].mxu0
  %v1683 = vpop.f32.mrb[0].mxu0
  %v1684 = vadd.f32 0.0, %v1683
  %v1685 = vpop.f32.mrb[0].mxu0
  %1686 = vmatprep.mubr.bf16.mxu0 %v497
  %1687 = vmatmul.mubr.bf16.gmra.mrb[0].mxu0 %v331
  %v1688 = vpop.f32.mrb[0].mxu0
  %v1689 = vadd.f32 0.0, %v1688
  %v1690 = vpop.f32.mrb[0].mxu0
  %v1691 = vpop.f32.mrb[0].mxu0
  %v1692 = vadd.f32 0.0, %v1691
  %v1693 = vpop.f32.mrb[0].mxu0
  %1694 = vmatprep.mubr.bf16.mxu0 %v500
  %1695 = vmatmul.mubr.bf16.gmra.mrb[0].mxu0 %v333
  %v1696 = vpop.f32.mrb[0].mxu0
  %v1697 = vadd.f32 0.0, %v1696
  %v1698 = vpop.f32.mrb[0].mxu0
  %v1699 = vpop.f32.mrb[0].mxu0
  %v1700 = vadd.f32 0.0, %v1699
  %v1701 = vpop.f32.mrb[0].mxu0
  %1702 = vmatprep.mubr.bf16.mxu0 %v503
  %1703 = vmatmul.mubr.bf16.gmra.mrb[0].mxu0 %v335
  %v1704 = vpop.f32.mrb[0].mxu0
  %v1705 = vadd.f32 0.0, %v1704
  %v1706 = vpop.f32.mrb[0].mxu0
  %v1707 = vpop.f32.mrb[0].mxu0
  %v1708 = vadd.f32 0.0, %v1707
  %v1709 = vpop.f32.mrb[0].mxu0
  %1710 = vmatprep.mubr.bf16.mxu0 %v506
  %1711 = vmatmul.mubr.bf16.gmra.mrb[0].mxu0 %v337
  %v1712 = vpop.f32.mrb[0].mxu0
  %v1713 = vadd.f32 0.0, %v1712
  %v1714 = vpop.f32.mrb[0].mxu0
  %v1715 = vpop.f32.mrb[0].mxu0
  %v1716 = vadd.f32 0.0, %v1715
  %v1717 = vpop.f32.mrb[0].mxu0
  %1718 = vmatprep.mubr.bf16.mxu0 %v509
  %1719 = vmatmul.mubr.bf16.gmra.mrb[0].mxu0 %v339
  %v1720 = vpop.f32.mrb[0].mxu0
  %v1721 = vadd.f32 0.0, %v1720
  %v1722 = vpop.f32.mrb[0].mxu0
  %v1723 = vpop.f32.mrb[0].mxu0
  %v1724 = vadd.f32 0.0, %v1723
  %v1725 = vpop.f32.mrb[0].mxu0
  %1726 = vmatprep.mubr.bf16.mxu0 %v512
  %1727 = vmatmul.mubr.bf16.gmra.mrb[0].mxu0 %v341
  %v1728 = vpop.f32.mrb[0].mxu0
  %v1729 = vadd.f32 0.0, %v1728
  %v1730 = vpop.f32.mrb[0].mxu0
  %v1731 = vpop.f32.mrb[0].mxu0
  %v1732 = vadd.f32 0.0, %v1731
  %v1733 = vpop.f32.mrb[0].mxu0
  %1734 = vmatprep.mubr.bf16.mxu0 %v515
  %1735 = vmatmul.mubr.bf16.gmra.mrb[0].mxu0 %v343
  %v1736 = vpop.f32.mrb[0].mxu0
  %v1737 = vadd.f32 0.0, %v1736
  %v1738 = vpop.f32.mrb[0].mxu0
  %v1739 = vpop.f32.mrb[0].mxu0
  %v1740 = vadd.f32 0.0, %v1739
  %v1741 = vpop.f32.mrb[0].mxu0
  %1742 = vmatprep.mubr.bf16.mxu0 %v518
  %1743 = vmatmul.mubr.bf16.gmra.mrb[0].mxu0 %v345
  %v1744 = vpop.f32.mrb[0].mxu0
  %v1745 = vadd.f32 0.0, %v1744
  %v1746 = vpop.f32.mrb[0].mxu0
  %v1747 = vpop.f32.mrb[0].mxu0
  %v1748 = vadd.f32 0.0, %v1747
  %v1749 = vpop.f32.mrb[0].mxu0
  %1750 = vmatprep.mubr.bf16.mxu0 %v521
  %1751 = vmatmul.mubr.bf16.gmra.mrb[0].mxu0 %v347
  %v1752 = vpop.f32.mrb[0].mxu0
  %v1753 = vadd.f32 0.0, %v1752
  %v1754 = vpop.f32.mrb[0].mxu0
  %v1755 = vpop.f32.mrb[0].mxu0
  %v1756 = vadd.f32 0.0, %v1755
  %v1757 = vpop.f32.mrb[0].mxu0
  %1758 = vmatprep.mubr.bf16.mxu0 %v524
  %1759 = vmatmul.mubr.bf16.gmra.mrb[0].mxu0 %v349
  %v1760 = vpop.f32.mrb[0].mxu0
  %v1761 = vadd.f32 0.0, %v1760
  %v1762 = vpop.f32.mrb[0].mxu0
  %v1763 = vpop.f32.mrb[0].mxu0
  %v1764 = vadd.f32 0.0, %v1763
  %v1765 = vpop.f32.mrb[0].mxu0
  %1766 = vmatprep.mubr.bf16.mxu0 %v527
  %1767 = vmatmul.mubr.bf16.gmra.mrb[0].mxu0 %v351
  %v1768 = vpop.f32.mrb[0].mxu0
  %v1769 = vadd.f32 0.0, %v1768
  %v1770 = vpop.f32.mrb[0].mxu0
  %v1771 = vpop.f32.mrb[0].mxu0
  %v1772 = vadd.f32 0.0, %v1771
  %v1773 = vpop.f32.mrb[0].mxu0
  %1774 = vmatprep.mubr.bf16.mxu0 %v530
  %1775 = vmatmul.mubr.bf16.gmra.mrb[0].mxu0 %v353
  %v1776 = vpop.f32.mrb[0].mxu0
  %v1777 = vadd.f32 0.0, %v1776
  %v1778 = vpop.f32.mrb[0].mxu0
  %v1779 = vpop.f32.mrb[0].mxu0
  %v1780 = vadd.f32 0.0, %v1779
  %v1781 = vpop.f32.mrb[0].mxu0
  %1782 = vmatprep.mubr.bf16.mxu0 %v533
  %1783 = vmatmul.mubr.bf16.gmra.mrb[0].mxu0 %v355
  %v1784 = vpop.f32.mrb[0].mxu0
  %v1785 = vadd.f32 0.0, %v1784
  %v1786 = vpop.f32.mrb[0].mxu0
  %v1787 = vpop.f32.mrb[0].mxu0
  %v1788 = vadd.f32 0.0, %v1787
  %v1789 = vpop.f32.mrb[0].mxu0
  %1790 = vmatprep.mubr.bf16.mxu0 %v536
  %1791 = vmatmul.mubr.bf16.gmra.mrb[0].mxu0 %v357
  %v1792 = vpop.f32.mrb[0].mxu0
  %v1793 = vadd.f32 0.0, %v1792
  %v1794 = vpop.f32.mrb[0].mxu0
  %v1795 = vpop.f32.mrb[0].mxu0
  %v1796 = vadd.f32 0.0, %v1795
  %v1797 = vpop.f32.mrb[0].mxu0
  %1798 = vmatprep.mubr.bf16.mxu0 %v539
  %1799 = vmatmul.mubr.bf16.gmra.mrb[0].mxu0 %v359
  %v1800 = vpop.f32.mrb[0].mxu0
  %v1801 = vadd.f32 0.0, %v1800
  %v1802 = vpop.f32.mrb[0].mxu0
  %v1803 = vpop.f32.mrb[0].mxu0
  %v1804 = vadd.f32 0.0, %v1803
  %v1805 = vpop.f32.mrb[0].mxu0
  %1806 = vmatprep.mubr.bf16.mxu0 %v542
  %1807 = vmatmul.mubr.bf16.gmra.mrb[0].mxu0 %v361
  %v1808 = vpop.f32.mrb[0].mxu0
  %v1809 = vadd.f32 0.0, %v1808
  %v1810 = vpop.f32.mrb[0].mxu0
  %v1811 = vpop.f32.mrb[0].mxu0
  %v1812 = vadd.f32 0.0, %v1811
  %v1813 = vpop.f32.mrb[0].mxu0
  %1814 = vmatprep.mubr.bf16.mxu0 %v545
  %1815 = vmatmul.mubr.bf16.gmra.mrb[0].mxu0 %v363
  %v1816 = vpop.f32.mrb[0].mxu0
  %v1817 = vadd.f32 0.0, %v1816
  %v1818 = vpop.f32.mrb[0].mxu0
  %v1819 = vpop.f32.mrb[0].mxu0
  %v1820 = vadd.f32 0.0, %v1819
  %v1821 = vpop.f32.mrb[0].mxu0
  %1822 = vmatprep.mubr.bf16.mxu0 %v548
  %1823 = vmatmul.mubr.bf16.gmra.mrb[0].mxu0 %v365
  %v1824 = vpop.f32.mrb[0].mxu0
  %v1825 = vadd.f32 0.0, %v1824
  %v1826 = vpop.f32.mrb[0].mxu0
  %v1827 = vpop.f32.mrb[0].mxu0
  %v1828 = vadd.f32 0.0, %v1827
  %v1829 = vpop.f32.mrb[0].mxu0
  %1830 = vmatprep.mubr.bf16.mxu0 %v551
  %1831 = vmatmul.mubr.bf16.gmra.mrb[0].mxu0 %v367
  %v1832 = vpop.f32.mrb[0].mxu0
  %v1833 = vadd.f32 0.0, %v1832
  %v1834 = vpop.f32.mrb[0].mxu0
  %v1835 = vpop.f32.mrb[0].mxu0
  %v1836 = vadd.f32 0.0, %v1835
  %v1837 = vpop.f32.mrb[0].mxu0
  %1838 = vdwg.mxu0
  %v1839 = vmax.f32 %v1601, %v1660
  %v1840 = vmax.f32 %v1604, %v1665
  %v1841 = vmax.f32 %v1609, %v1668
  %v1842 = vmax.f32 %v1612, %v1673
  %v1843 = vmax.f32 %v1617, %v1676
  %v1844 = vmax.f32 %v1620, %v1681
  %v1845 = vmax.f32 %v1625, %v1684
  %v1846 = vmax.f32 %v1628, %v1689
  %v1847 = vmax.f32 %v1633, %v1692
  %v1848 = vmax.f32 %v1636, %v1697
  %v1849 = vmax.f32 %v1641, %v1700
  %v1850 = vmax.f32 %v1644, %v1705
  %v1851 = vmax.f32 %v1649, %v1708
  %v1852 = vmax.f32 %v1652, %v1713
  %v1853 = vmax.f32 %v1657, %v1716
  %v1854 = vmax.f32 %v1721, %v1780
  %v1855 = vmax.f32 %v1724, %v1785
  %v1856 = vmax.f32 %v1729, %v1788
  %v1857 = vmax.f32 %v1732, %v1793
  %v1858 = vmax.f32 %v1737, %v1796
  %v1859 = vmax.f32 %v1740, %v1801
  %v1860 = vmax.f32 %v1745, %v1804
  %v1861 = vmax.f32 %v1748, %v1809
  %v1862 = vmax.f32 %v1753, %v1812
  %v1863 = vmax.f32 %v1756, %v1817
  %v1864 = vmax.f32 %v1761, %v1820
  %v1865 = vmax.f32 %v1764, %v1825
  %v1866 = vmax.f32 %v1769, %v1828
  %v1867 = vmax.f32 %v1772, %v1833
  %v1868 = vmax.f32 %v1777, %v1836
  %v1869 = vmax.f32 %v1839, %v1854
  %v1870 = vmax.f32 %v1840, %v1855
  %v1871 = vmax.f32 %v1841, %v1856
  %v1872 = vmax.f32 %v1842, %v1857
  %v1873 = vmax.f32 %v1843, %v1858
  %v1874 = vmax.f32 %v1844, %v1859
  %v1875 = vmax.f32 %v1845, %v1860
  %v1876 = vmax.f32 %v1846, %v1861
  %v1877 = vmax.f32 %v1847, %v1862
  %v1878 = vmax.f32 %v1848, %v1863
  %v1879 = vmax.f32 %v1849, %v1864
  %v1880 = vmax.f32 %v1850, %v1865
  %v1881 = vmax.f32 %v1851, %v1866
  %v1882 = vmax.f32 %v1852, %v1867
  %v1883 = vmax.f32 %v1853, %v1868
  %v1884 = vadd.f32 %v1869, %v878
  %v1885 = vadd.f32 %v1870, %v883
  %v1886 = vadd.f32 %v1871, %v888
  %v1887 = vadd.f32 %v1872, %v893
  %v1888 = vadd.f32 %v1873, %v898
  %v1889 = vadd.f32 %v1874, %v903
  %v1890 = vadd.f32 %v1875, %v908
  %v1891 = vadd.f32 %v1876, %v913
  %v1892 = vadd.f32 %v1877, %v918
  %v1893 = vadd.f32 %v1878, %v923
  %v1894 = vadd.f32 %v1879, %v928
  %v1895 = vadd.f32 %v1880, %v933
  %v1896 = vadd.f32 %v1881, %v938
  %v1897 = vadd.f32 %v1882, %v943
  %v1898 = vadd.f32 %v1883, %v948
  %v1899 = vmax.f32 %v1884, 0.0
  %v1900 = vmax.f32 %v1885, 0.0
  %v1901 = vmax.f32 %v1886, 0.0
  %v1902 = vmax.f32 %v1887, 0.0
  %v1903 = vmax.f32 %v1888, 0.0
  %v1904 = vmax.f32 %v1889, 0.0
  %v1905 = vmax.f32 %v1890, 0.0
  %v1906 = vmax.f32 %v1891, 0.0
  %v1907 = vmax.f32 %v1892, 0.0
  %v1908 = vmax.f32 %v1893, 0.0
  %v1909 = vmax.f32 %v1894, 0.0
  %v1910 = vmax.f32 %v1895, 0.0
  %v1911 = vmax.f32 %v1896, 0.0
  %v1912 = vmax.f32 %v1897, 0.0
  %v1913 = vmax.f32 %v1898, 0.0
  %v1914 = vpack.c.bf16 %v1900, %v1899
  %v1915 = vpack.c.bf16 %v1902, %v1901
  %v1916 = vpack.c.bf16 %v1904, %v1903
  %v1917 = vpack.c.bf16 %v1906, %v1905
  %v1918 = vpack.c.bf16 %v1908, %v1907
  %v1919 = vpack.c.bf16 %v1910, %v1909
  %v1920 = vpack.c.bf16 %v1912, %v1911
  %v1921 = vpack.c.bf16 %v1913, %v1913
  %1922 = vst [vmem:[#allocation2 + $0x78] sm:$0xff] %v1914
  %1923 = vst [vmem:[#allocation2 + $0x80] sm:$0xff] %v1915
  %1924 = vst [vmem:[#allocation2 + $0x88] sm:$0xff] %v1916
  %1925 = vst [vmem:[#allocation2 + $0x90] sm:$0xff] %v1917
  %1926 = vst [vmem:[#allocation2 + $0x98] sm:$0xff] %v1918
  %1927 = vst [vmem:[#allocation2 + $0xa0] sm:$0xff] %v1919
  %1928 = vst [vmem:[#allocation2 + $0xa8] sm:$0xff] %v1920
  %1929 = vst [vmem:[#allocation2 + $0xb0] sm:$0xf] %v1921
  %v1930 = vld [vmem:[%s0 + $0x54] sm:$0xf]
  %v1931 = vld [vmem:[%s0 + $0x58] sm:$0xf]
  %v1932 = vld [vmem:[%s0 + $0x5c] sm:$0xf]
  %v1933 = vld [vmem:[%s0 + $0x60] sm:$0xf]
  %v1934 = vld [vmem:[%s0 + $0x64] sm:$0xf]
  %v1935 = vld [vmem:[%s0 + $0x68] sm:$0xf]
  %v1936 = vld [vmem:[%s0 + $0x6c] sm:$0xf]
  %v1937 = vld [vmem:[%s0 + $0x70] sm:$0xf]
  %v1938 = vld [vmem:[%s0 + $0x74] sm:$0xf]
  %v1939 = vld [vmem:[%s0 + $0x78] sm:$0xf]
  %v1940 = vld [vmem:[%s0 + $0x7c] sm:$0xf]
  %v1941 = vld [vmem:[%s0 + $0x80] sm:$0xf]
  %v1942 = vld [vmem:[%s0 + $0x84] sm:$0xf]
  %v1943 = vld [vmem:[%s0 + $0x88] sm:$0xf]
  %v1944 = vld [vmem:[%s0 + $0x8c] sm:$0xf]
  %v1945 = vld [vmem:[%s0 + $0x90] sm:$0xf]
  %v1946 = vld [vmem:[%s0 + $0x94] sm:$0xf]
  %v1947 = vld [vmem:[%s0 + $0x98] sm:$0xf]
  %v1948 = vld [vmem:[%s0 + $0x9c] sm:$0xf]
  %v1949 = vld [vmem:[%s0 + $0xa0] sm:$0xf]
  %v1950 = vld [vmem:[%s0 + $0xa4] sm:$0xf]
  %v1972 = vunpack.c.l.b16 %v1930
  %v1973 = vunpack.c.l.b16 %v1931
  %v1974 = vunpack.c.l.b16 %v1932
  %v1975 = vunpack.c.l.b16 %v1933
  %v1976 = vunpack.c.l.b16 %v1934
  %v1977 = vunpack.c.l.b16 %v1935
  %v1978 = vunpack.c.l.b16 %v1936
  %v1979 = vunpack.c.l.b16 %v1937
  %v1980 = vunpack.c.l.b16 %v1938
  %v1981 = vunpack.c.l.b16 %v1939
  %v1982 = vunpack.c.l.b16 %v1940
  %v1983 = vunpack.c.l.b16 %v1941
  %v1984 = vunpack.c.l.b16 %v1942
  %v1985 = vunpack.c.l.b16 %v1943
  %v1986 = vunpack.c.l.b16 %v1944
  %v1987 = vunpack.c.l.b16 %v1945
  %v1988 = vunpack.c.l.b16 %v1946
  %v1989 = vunpack.c.l.b16 %v1947
  %v1990 = vunpack.c.l.b16 %v1948
  %v1991 = vunpack.c.l.b16 %v1949
  %v1992 = vunpack.c.l.b16 %v1950
  %v1993 = vpack.c.b16 %v1973, %v1972
  %v1994 = vpack.c.b16 %v1975, %v1974
  %v1995 = vpack.c.b16 %v1977, %v1976
  %v1996 = vpack.c.b16 %v1979, %v1978
  %v1997 = vpack.c.b16 %v1981, %v1980
  %v1998 = vpack.c.b16 %v1983, %v1982
  %v1999 = vpack.c.b16 %v1985, %v1984
  %v2000 = vpack.c.b16 %v1987, %v1986
  %v2001 = vpack.c.b16 %v1989, %v1988
  %v2002 = vpack.c.b16 %v1991, %v1990
  %v2003 = vpack.c.b16 %v1992, %v1992
  %v2015 = vsel %vm553, %v2003, 0
  %2017 = vmatprep.subr.bf16.mxu0 0
  %2018 = vmatpush1.bf16.msra.mxu0 %v1993
  %2019 = vmatprep.subr.bf16.mxu0 0
  %2020 = vmatpush1.bf16.msra.mxu0 %v1994
  %2021 = vmatprep.subr.bf16.mxu0 0
  %2022 = vmatpush1.bf16.msra.mxu0 %v1995
  %2023 = vmatprep.subr.bf16.mxu0 0
  %2024 = vmatpush1.bf16.msra.mxu0 %v1996
  %2025 = vmatprep.subr.bf16.mxu0 0
  %2026 = vmatpush1.bf16.msra.mxu0 %v1997
  %2027 = vmatprep.subr.bf16.mxu0 0
  %2028 = vmatpush1.bf16.msra.mxu0 %v1998
  %2029 = vmatprep.subr.bf16.mxu0 0
  %2030 = vmatpush1.bf16.msra.mxu0 %v1999
  %2031 = vmatprep.subr.bf16.mxu0 0
  %2032 = vmatpush1.bf16.msra.mxu0 %v2000
  %2033 = vmatprep.subr.bf16.mxu0 0
  %2034 = vmatpush1.bf16.msra.mxu0 %v2001
  %2035 = vmatprep.subr.bf16.mxu0 0
  %2036 = vmatpush1.bf16.msra.mxu0 %v2002
  %2037 = vmatprep.subr.bf16.mxu0 0
  %2038 = vmatpush1.bf16.msra.mxu0 %v2015
  %2039 = vmatprep.subr.bf16.mxu0 0
  %2040 = vmatpush1.bf16.msra.mxu0 0
  %2041 = vmatprep.subr.bf16.mxu0 0
  %2042 = vmatpush1.bf16.msra.mxu0 0
  %2043 = vmatprep.subr.bf16.mxu0 0
  %2044 = vmatpush1.bf16.msra.mxu0 0
  %2045 = vmatprep.subr.bf16.mxu0 0
  %2046 = vmatpush1.bf16.msra.mxu0 0
  %2047 = vmatprep.subr.bf16.mxu0 0
  %2048 = vmatpush1.bf16.msra.mxu0 0
  %2049 = vmatprep.mubr.bf16.mxu0 %v464
  %2050 = vmatmul.mubr.bf16.gmra.mrb[0].mxu0 %v309
  %v2051 = vpop.f32.mrb[0].mxu0
  %v2052 = vadd.f32 0.0, %v2051
  %v2053 = vpop.f32.mrb[0].mxu0
  %v2054 = vpop.f32.mrb[0].mxu0
  %v2055 = vadd.f32 0.0, %v2054
  %v2056 = vpop.f32.mrb[0].mxu0
  %2057 = vmatprep.mubr.bf16.mxu0 %v467
  %2058 = vmatmul.mubr.bf16.gmra.mrb[0].mxu0 %v311
  %v2059 = vpop.f32.mrb[0].mxu0
  %v2060 = vadd.f32 0.0, %v2059
  %v2061 = vpop.f32.mrb[0].mxu0
  %v2062 = vpop.f32.mrb[0].mxu0
  %v2063 = vadd.f32 0.0, %v2062
  %v2064 = vpop.f32.mrb[0].mxu0
  %2065 = vmatprep.mubr.bf16.mxu0 %v470
  %2066 = vmatmul.mubr.bf16.gmra.mrb[0].mxu0 %v313
  %v2067 = vpop.f32.mrb[0].mxu0
  %v2068 = vadd.f32 0.0, %v2067
  %v2069 = vpop.f32.mrb[0].mxu0
  %v2070 = vpop.f32.mrb[0].mxu0
  %v2071 = vadd.f32 0.0, %v2070
  %v2072 = vpop.f32.mrb[0].mxu0
  %2073 = vmatprep.mubr.bf16.mxu0 %v473
  %2074 = vmatmul.mubr.bf16.gmra.mrb[0].mxu0 %v315
  %v2075 = vpop.f32.mrb[0].mxu0
  %v2076 = vadd.f32 0.0, %v2075
  %v2077 = vpop.f32.mrb[0].mxu0
  %v2078 = vpop.f32.mrb[0].mxu0
  %v2079 = vadd.f32 0.0, %v2078
  %v2080 = vpop.f32.mrb[0].mxu0
  %2081 = vmatprep.mubr.bf16.mxu0 %v476
  %2082 = vmatmul.mubr.bf16.gmra.mrb[0].mxu0 %v317
  %v2083 = vpop.f32.mrb[0].mxu0
  %v2084 = vadd.f32 0.0, %v2083
  %v2085 = vpop.f32.mrb[0].mxu0
  %v2086 = vpop.f32.mrb[0].mxu0
  %v2087 = vadd.f32 0.0, %v2086
  %v2088 = vpop.f32.mrb[0].mxu0
  %2089 = vmatprep.mubr.bf16.mxu0 %v479
  %2090 = vmatmul.mubr.bf16.gmra.mrb[0].mxu0 %v319
  %v2091 = vpop.f32.mrb[0].mxu0
  %v2092 = vadd.f32 0.0, %v2091
  %v2093 = vpop.f32.mrb[0].mxu0
  %v2094 = vpop.f32.mrb[0].mxu0
  %v2095 = vadd.f32 0.0, %v2094
  %v2096 = vpop.f32.mrb[0].mxu0
  %2097 = vmatprep.mubr.bf16.mxu0 %v482
  %2098 = vmatmul.mubr.bf16.gmra.mrb[0].mxu0 %v321
  %v2099 = vpop.f32.mrb[0].mxu0
  %v2100 = vadd.f32 0.0, %v2099
  %v2101 = vpop.f32.mrb[0].mxu0
  %v2102 = vpop.f32.mrb[0].mxu0
  %v2103 = vadd.f32 0.0, %v2102
  %v2104 = vpop.f32.mrb[0].mxu0
  %2105 = vmatprep.mubr.bf16.mxu0 %v485
  %2106 = vmatmul.mubr.bf16.gmra.mrb[0].mxu0 %v323
  %v2107 = vpop.f32.mrb[0].mxu0
  %v2108 = vadd.f32 0.0, %v2107
  %v2109 = vpop.f32.mrb[0].mxu0
  %v2110 = vpop.f32.mrb[0].mxu0
  %v2111 = vadd.f32 0.0, %v2110
  %v2112 = vpop.f32.mrb[0].mxu0
  %2113 = vmatprep.mubr.bf16.mxu0 %v488
  %2114 = vmatmul.mubr.bf16.gmra.mrb[0].mxu0 %v325
  %v2115 = vpop.f32.mrb[0].mxu0
  %v2116 = vadd.f32 0.0, %v2115
  %v2117 = vpop.f32.mrb[0].mxu0
  %v2118 = vpop.f32.mrb[0].mxu0
  %v2119 = vadd.f32 0.0, %v2118
  %v2120 = vpop.f32.mrb[0].mxu0
  %2121 = vmatprep.mubr.bf16.mxu0 %v491
  %2122 = vmatmul.mubr.bf16.gmra.mrb[0].mxu0 %v327
  %v2123 = vpop.f32.mrb[0].mxu0
  %v2124 = vadd.f32 0.0, %v2123
  %v2125 = vpop.f32.mrb[0].mxu0
  %v2126 = vpop.f32.mrb[0].mxu0
  %v2127 = vadd.f32 0.0, %v2126
  %v2128 = vpop.f32.mrb[0].mxu0
  %2129 = vmatprep.mubr.bf16.mxu0 %v494
  %2130 = vmatmul.mubr.bf16.gmra.mrb[0].mxu0 %v329
  %v2131 = vpop.f32.mrb[0].mxu0
  %v2132 = vadd.f32 0.0, %v2131
  %v2133 = vpop.f32.mrb[0].mxu0
  %v2134 = vpop.f32.mrb[0].mxu0
  %v2135 = vadd.f32 0.0, %v2134
  %v2136 = vpop.f32.mrb[0].mxu0
  %2137 = vmatprep.mubr.bf16.mxu0 %v497
  %2138 = vmatmul.mubr.bf16.gmra.mrb[0].mxu0 %v331
  %v2139 = vpop.f32.mrb[0].mxu0
  %v2140 = vadd.f32 0.0, %v2139
  %v2141 = vpop.f32.mrb[0].mxu0
  %v2142 = vpop.f32.mrb[0].mxu0
  %v2143 = vadd.f32 0.0, %v2142
  %v2144 = vpop.f32.mrb[0].mxu0
  %2145 = vmatprep.mubr.bf16.mxu0 %v500
  %2146 = vmatmul.mubr.bf16.gmra.mrb[0].mxu0 %v333
  %v2147 = vpop.f32.mrb[0].mxu0
  %v2148 = vadd.f32 0.0, %v2147
  %v2149 = vpop.f32.mrb[0].mxu0
  %v2150 = vpop.f32.mrb[0].mxu0
  %v2151 = vadd.f32 0.0, %v2150
  %v2152 = vpop.f32.mrb[0].mxu0
  %2153 = vmatprep.mubr.bf16.mxu0 %v503
  %2154 = vmatmul.mubr.bf16.gmra.mrb[0].mxu0 %v335
  %v2155 = vpop.f32.mrb[0].mxu0
  %v2156 = vadd.f32 0.0, %v2155
  %v2157 = vpop.f32.mrb[0].mxu0
  %v2158 = vpop.f32.mrb[0].mxu0
  %v2159 = vadd.f32 0.0, %v2158
  %v2160 = vpop.f32.mrb[0].mxu0
  %2161 = vmatprep.mubr.bf16.mxu0 %v506
  %2162 = vmatmul.mubr.bf16.gmra.mrb[0].mxu0 %v337
  %v2163 = vpop.f32.mrb[0].mxu0
  %v2164 = vadd.f32 0.0, %v2163
  %v2165 = vpop.f32.mrb[0].mxu0
  %v2166 = vpop.f32.mrb[0].mxu0
  %v2167 = vadd.f32 0.0, %v2166
  %v2168 = vpop.f32.mrb[0].mxu0
  %2169 = vmatprep.mubr.bf16.mxu0 %v509
  %2170 = vmatmul.mubr.bf16.gmra.mrb[0].mxu0 %v339
  %v2171 = vpop.f32.mrb[0].mxu0
  %v2172 = vadd.f32 0.0, %v2171
  %v2173 = vpop.f32.mrb[0].mxu0
  %v2174 = vpop.f32.mrb[0].mxu0
  %v2175 = vadd.f32 0.0, %v2174
  %v2176 = vpop.f32.mrb[0].mxu0
  %2177 = vmatprep.mubr.bf16.mxu0 %v512
  %2178 = vmatmul.mubr.bf16.gmra.mrb[0].mxu0 %v341
  %v2179 = vpop.f32.mrb[0].mxu0
  %v2180 = vadd.f32 0.0, %v2179
  %v2181 = vpop.f32.mrb[0].mxu0
  %v2182 = vpop.f32.mrb[0].mxu0
  %v2183 = vadd.f32 0.0, %v2182
  %v2184 = vpop.f32.mrb[0].mxu0
  %2185 = vmatprep.mubr.bf16.mxu0 %v515
  %2186 = vmatmul.mubr.bf16.gmra.mrb[0].mxu0 %v343
  %v2187 = vpop.f32.mrb[0].mxu0
  %v2188 = vadd.f32 0.0, %v2187
  %v2189 = vpop.f32.mrb[0].mxu0
  %v2190 = vpop.f32.mrb[0].mxu0
  %v2191 = vadd.f32 0.0, %v2190
  %v2192 = vpop.f32.mrb[0].mxu0
  %2193 = vmatprep.mubr.bf16.mxu0 %v518
  %2194 = vmatmul.mubr.bf16.gmra.mrb[0].mxu0 %v345
  %v2195 = vpop.f32.mrb[0].mxu0
  %v2196 = vadd.f32 0.0, %v2195
  %v2197 = vpop.f32.mrb[0].mxu0
  %v2198 = vpop.f32.mrb[0].mxu0
  %v2199 = vadd.f32 0.0, %v2198
  %v2200 = vpop.f32.mrb[0].mxu0
  %2201 = vmatprep.mubr.bf16.mxu0 %v521
  %2202 = vmatmul.mubr.bf16.gmra.mrb[0].mxu0 %v347
  %v2203 = vpop.f32.mrb[0].mxu0
  %v2204 = vadd.f32 0.0, %v2203
  %v2205 = vpop.f32.mrb[0].mxu0
  %v2206 = vpop.f32.mrb[0].mxu0
  %v2207 = vadd.f32 0.0, %v2206
  %v2208 = vpop.f32.mrb[0].mxu0
  %2209 = vmatprep.mubr.bf16.mxu0 %v524
  %2210 = vmatmul.mubr.bf16.gmra.mrb[0].mxu0 %v349
  %v2211 = vpop.f32.mrb[0].mxu0
  %v2212 = vadd.f32 0.0, %v2211
  %v2213 = vpop.f32.mrb[0].mxu0
  %v2214 = vpop.f32.mrb[0].mxu0
  %v2215 = vadd.f32 0.0, %v2214
  %v2216 = vpop.f32.mrb[0].mxu0
  %2217 = vmatprep.mubr.bf16.mxu0 %v527
  %2218 = vmatmul.mubr.bf16.gmra.mrb[0].mxu0 %v351
  %v2219 = vpop.f32.mrb[0].mxu0
  %v2220 = vadd.f32 0.0, %v2219
  %v2221 = vpop.f32.mrb[0].mxu0
  %v2222 = vpop.f32.mrb[0].mxu0
  %v2223 = vadd.f32 0.0, %v2222
  %v2224 = vpop.f32.mrb[0].mxu0
  %2225 = vmatprep.mubr.bf16.mxu0 %v530
  %2226 = vmatmul.mubr.bf16.gmra.mrb[0].mxu0 %v353
  %v2227 = vpop.f32.mrb[0].mxu0
  %v2228 = vadd.f32 0.0, %v2227
  %v2229 = vpop.f32.mrb[0].mxu0
  %v2230 = vpop.f32.mrb[0].mxu0
  %v2231 = vadd.f32 0.0, %v2230
  %v2232 = vpop.f32.mrb[0].mxu0
  %2233 = vmatprep.mubr.bf16.mxu0 %v533
  %2234 = vmatmul.mubr.bf16.gmra.mrb[0].mxu0 %v355
  %v2235 = vpop.f32.mrb[0].mxu0
  %v2236 = vadd.f32 0.0, %v2235
  %v2237 = vpop.f32.mrb[0].mxu0
  %v2238 = vpop.f32.mrb[0].mxu0
  %v2239 = vadd.f32 0.0, %v2238
  %v2240 = vpop.f32.mrb[0].mxu0
  %2241 = vmatprep.mubr.bf16.mxu0 %v536
  %2242 = vmatmul.mubr.bf16.gmra.mrb[0].mxu0 %v357
  %v2243 = vpop.f32.mrb[0].mxu0
  %v2244 = vadd.f32 0.0, %v2243
  %v2245 = vpop.f32.mrb[0].mxu0
  %v2246 = vpop.f32.mrb[0].mxu0
  %v2247 = vadd.f32 0.0, %v2246
  %v2248 = vpop.f32.mrb[0].mxu0
  %2249 = vmatprep.mubr.bf16.mxu0 %v539
  %2250 = vmatmul.mubr.bf16.gmra.mrb[0].mxu0 %v359
  %v2251 = vpop.f32.mrb[0].mxu0
  %v2252 = vadd.f32 0.0, %v2251
  %v2253 = vpop.f32.mrb[0].mxu0
  %v2254 = vpop.f32.mrb[0].mxu0
  %v2255 = vadd.f32 0.0, %v2254
  %v2256 = vpop.f32.mrb[0].mxu0
  %2257 = vmatprep.mubr.bf16.mxu0 %v542
  %2258 = vmatmul.mubr.bf16.gmra.mrb[0].mxu0 %v361
  %v2259 = vpop.f32.mrb[0].mxu0
  %v2260 = vadd.f32 0.0, %v2259
  %v2261 = vpop.f32.mrb[0].mxu0
  %v2262 = vpop.f32.mrb[0].mxu0
  %v2263 = vadd.f32 0.0, %v2262
  %v2264 = vpop.f32.mrb[0].mxu0
  %2265 = vmatprep.mubr.bf16.mxu0 %v545
  %2266 = vmatmul.mubr.bf16.gmra.mrb[0].mxu0 %v363
  %v2267 = vpop.f32.mrb[0].mxu0
  %v2268 = vadd.f32 0.0, %v2267
  %v2269 = vpop.f32.mrb[0].mxu0
  %v2270 = vpop.f32.mrb[0].mxu0
  %v2271 = vadd.f32 0.0, %v2270
  %v2272 = vpop.f32.mrb[0].mxu0
  %2273 = vmatprep.mubr.bf16.mxu0 %v548
  %2274 = vmatmul.mubr.bf16.gmra.mrb[0].mxu0 %v365
  %v2275 = vpop.f32.mrb[0].mxu0
  %v2276 = vadd.f32 0.0, %v2275
  %v2277 = vpop.f32.mrb[0].mxu0
  %v2278 = vpop.f32.mrb[0].mxu0
  %v2279 = vadd.f32 0.0, %v2278
  %v2280 = vpop.f32.mrb[0].mxu0
  %2281 = vmatprep.mubr.bf16.mxu0 %v551
  %2282 = vmatmul.mubr.bf16.gmra.mrb[0].mxu0 %v367
  %v2283 = vpop.f32.mrb[0].mxu0
  %v2284 = vadd.f32 0.0, %v2283
  %v2285 = vpop.f32.mrb[0].mxu0
  %v2286 = vpop.f32.mrb[0].mxu0
  %v2287 = vadd.f32 0.0, %v2286
  %v2288 = vpop.f32.mrb[0].mxu0
  %2289 = vdwg.mxu0
  %v2290 = vmax.f32 %v2052, %v2111
  %v2291 = vmax.f32 %v2055, %v2116
  %v2292 = vmax.f32 %v2060, %v2119
  %v2293 = vmax.f32 %v2063, %v2124
  %v2294 = vmax.f32 %v2068, %v2127
  %v2295 = vmax.f32 %v2071, %v2132
  %v2296 = vmax.f32 %v2076, %v2135
  %v2297 = vmax.f32 %v2079, %v2140
  %v2298 = vmax.f32 %v2084, %v2143
  %v2299 = vmax.f32 %v2087, %v2148
  %v2300 = vmax.f32 %v2092, %v2151
  %v2301 = vmax.f32 %v2095, %v2156
  %v2302 = vmax.f32 %v2100, %v2159
  %v2303 = vmax.f32 %v2103, %v2164
  %v2304 = vmax.f32 %v2108, %v2167
  %v2305 = vmax.f32 %v2172, %v2231
  %v2306 = vmax.f32 %v2175, %v2236
  %v2307 = vmax.f32 %v2180, %v2239
  %v2308 = vmax.f32 %v2183, %v2244
  %v2309 = vmax.f32 %v2188, %v2247
  %v2310 = vmax.f32 %v2191, %v2252
  %v2311 = vmax.f32 %v2196, %v2255
  %v2312 = vmax.f32 %v2199, %v2260
  %v2313 = vmax.f32 %v2204, %v2263
  %v2314 = vmax.f32 %v2207, %v2268
  %v2315 = vmax.f32 %v2212, %v2271
  %v2316 = vmax.f32 %v2215, %v2276
  %v2317 = vmax.f32 %v2220, %v2279
  %v2318 = vmax.f32 %v2223, %v2284
  %v2319 = vmax.f32 %v2228, %v2287
  %v2320 = vmax.f32 %v2290, %v2305
  %v2321 = vmax.f32 %v2291, %v2306
  %v2322 = vmax.f32 %v2292, %v2307
  %v2323 = vmax.f32 %v2293, %v2308
  %v2324 = vmax.f32 %v2294, %v2309
  %v2325 = vmax.f32 %v2295, %v2310
  %v2326 = vmax.f32 %v2296, %v2311
  %v2327 = vmax.f32 %v2297, %v2312
  %v2328 = vmax.f32 %v2298, %v2313
  %v2329 = vmax.f32 %v2299, %v2314
  %v2330 = vmax.f32 %v2300, %v2315
  %v2331 = vmax.f32 %v2301, %v2316
  %v2332 = vmax.f32 %v2302, %v2317
  %v2333 = vmax.f32 %v2303, %v2318
  %v2334 = vmax.f32 %v2304, %v2319
  %v2335 = vadd.f32 %v2320, %v878
  %v2336 = vadd.f32 %v2321, %v883
  %v2337 = vadd.f32 %v2322, %v888
  %v2338 = vadd.f32 %v2323, %v893
  %v2339 = vadd.f32 %v2324, %v898
  %v2340 = vadd.f32 %v2325, %v903
  %v2341 = vadd.f32 %v2326, %v908
  %v2342 = vadd.f32 %v2327, %v913
  %v2343 = vadd.f32 %v2328, %v918
  %v2344 = vadd.f32 %v2329, %v923
  %v2345 = vadd.f32 %v2330, %v928
  %v2346 = vadd.f32 %v2331, %v933
  %v2347 = vadd.f32 %v2332, %v938
  %v2348 = vadd.f32 %v2333, %v943
  %v2349 = vadd.f32 %v2334, %v948
  %v2350 = vmax.f32 %v2335, 0.0
  %v2351 = vmax.f32 %v2336, 0.0
  %v2352 = vmax.f32 %v2337, 0.0
  %v2353 = vmax.f32 %v2338, 0.0
  %v2354 = vmax.f32 %v2339, 0.0
  %v2355 = vmax.f32 %v2340, 0.0
  %v2356 = vmax.f32 %v2341, 0.0
  %v2357 = vmax.f32 %v2342, 0.0
  %v2358 = vmax.f32 %v2343, 0.0
  %v2359 = vmax.f32 %v2344, 0.0
  %v2360 = vmax.f32 %v2345, 0.0
  %v2361 = vmax.f32 %v2346, 0.0
  %v2362 = vmax.f32 %v2347, 0.0
  %v2363 = vmax.f32 %v2348, 0.0
  %v2364 = vmax.f32 %v2349, 0.0
  %v2365 = vpack.c.bf16 %v2351, %v2350
  %v2366 = vpack.c.bf16 %v2353, %v2352
  %v2367 = vpack.c.bf16 %v2355, %v2354
  %v2368 = vpack.c.bf16 %v2357, %v2356
  %v2369 = vpack.c.bf16 %v2359, %v2358
  %v2370 = vpack.c.bf16 %v2361, %v2360
  %v2371 = vpack.c.bf16 %v2363, %v2362
  %v2372 = vpack.c.bf16 %v2364, %v2364
  %v2381 = vrot.slane %v2365, 4
  %v2382 = vrot.slane %v2366, 4
  %v2383 = vsel %vm1447, %v2381, %v2382
  %v2384 = vrot.slane %v2367, 4
  %v2385 = vsel %vm1447, %v2382, %v2384
  %v2386 = vrot.slane %v2368, 4
  %v2387 = vsel %vm1447, %v2384, %v2386
  %v2388 = vrot.slane %v2369, 4
  %v2389 = vsel %vm1447, %v2386, %v2388
  %v2390 = vrot.slane %v2370, 4
  %v2391 = vsel %vm1447, %v2388, %v2390
  %v2392 = vrot.slane %v2371, 4
  %v2393 = vsel %vm1447, %v2390, %v2392
  %v2394 = vrot.slane %v2372, 4
  %v2395 = vsel %vm1447, %v2392, %v2394
  %2404 = vst [vmem:[#allocation2 + $0xb0] sm:$0xf0] %v2381
  %2405 = vst [vmem:[#allocation2 + $0xb8] sm:$0xff] %v2383
  %2406 = vst [vmem:[#allocation2 + $0xc0] sm:$0xff] %v2385
  %2407 = vst [vmem:[#allocation2 + $0xc8] sm:$0xff] %v2387
  %2408 = vst [vmem:[#allocation2 + $0xd0] sm:$0xff] %v2389
  %2409 = vst [vmem:[#allocation2 + $0xd8] sm:$0xff] %v2391
  %2410 = vst [vmem:[#allocation2 + $0xe0] sm:$0xff] %v2393
  %2411 = vst [vmem:[#allocation2 + $0xe8] sm:$0xff] %v2395
  %v2412 = vld [vmem:[%s0 + $0x70] sm:$0xf]
  %v2413 = vld [vmem:[%s0 + $0x74] sm:$0xf]
  %v2414 = vld [vmem:[%s0 + $0x78] sm:$0xf]
  %v2415 = vld [vmem:[%s0 + $0x7c] sm:$0xf]
  %v2416 = vld [vmem:[%s0 + $0x80] sm:$0xf]
  %v2417 = vld [vmem:[%s0 + $0x84] sm:$0xf]
  %v2418 = vld [vmem:[%s0 + $0x88] sm:$0xf]
  %v2419 = vld [vmem:[%s0 + $0x8c] sm:$0xf]
  %v2420 = vld [vmem:[%s0 + $0x90] sm:$0xf]
  %v2421 = vld [vmem:[%s0 + $0x94] sm:$0xf]
  %v2422 = vld [vmem:[%s0 + $0x98] sm:$0xf]
  %v2423 = vld [vmem:[%s0 + $0x9c] sm:$0xf]
  %v2424 = vld [vmem:[%s0 + $0xa0] sm:$0xf]
  %v2425 = vld [vmem:[%s0 + $0xa4] sm:$0xf]
  %v2426 = vld [vmem:[%s0 + $0xa8] sm:$0xf]
  %v2427 = vld [vmem:[%s0 + $0xac] sm:$0xf]
  %v2428 = vld [vmem:[%s0 + $0xb0] sm:$0xf]
  %v2429 = vld [vmem:[%s0 + $0xb4] sm:$0xf]
  %v2430 = vld [vmem:[%s0 + $0xb8] sm:$0xf]
  %v2431 = vld [vmem:[%s0 + $0xbc] sm:$0xf]
  %v2432 = vld [vmem:[%s0 + $0xc0] sm:$0xf]
  %v2454 = vunpack.c.l.b16 %v2412
  %v2455 = vunpack.c.l.b16 %v2413
  %v2456 = vunpack.c.l.b16 %v2414
  %v2457 = vunpack.c.l.b16 %v2415
  %v2458 = vunpack.c.l.b16 %v2416
  %v2459 = vunpack.c.l.b16 %v2417
  %v2460 = vunpack.c.l.b16 %v2418
  %v2461 = vunpack.c.l.b16 %v2419
  %v2462 = vunpack.c.l.b16 %v2420
  %v2463 = vunpack.c.l.b16 %v2421
  %v2464 = vunpack.c.l.b16 %v2422
  %v2465 = vunpack.c.l.b16 %v2423
  %v2466 = vunpack.c.l.b16 %v2424
  %v2467 = vunpack.c.l.b16 %v2425
  %v2468 = vunpack.c.l.b16 %v2426
  %v2469 = vunpack.c.l.b16 %v2427
  %v2470 = vunpack.c.l.b16 %v2428
  %v2471 = vunpack.c.l.b16 %v2429
  %v2472 = vunpack.c.l.b16 %v2430
  %v2473 = vunpack.c.l.b16 %v2431
  %v2474 = vunpack.c.l.b16 %v2432
  %v2475 = vpack.c.b16 %v2455, %v2454
  %v2476 = vpack.c.b16 %v2457, %v2456
  %v2477 = vpack.c.b16 %v2459, %v2458
  %v2478 = vpack.c.b16 %v2461, %v2460
  %v2479 = vpack.c.b16 %v2463, %v2462
  %v2480 = vpack.c.b16 %v2465, %v2464
  %v2481 = vpack.c.b16 %v2467, %v2466
  %v2482 = vpack.c.b16 %v2469, %v2468
  %v2483 = vpack.c.b16 %v2471, %v2470
  %v2484 = vpack.c.b16 %v2473, %v2472
  %v2485 = vpack.c.b16 %v2474, %v2474
  %v2497 = vsel %vm553, %v2485, 0
  %2499 = vmatprep.subr.bf16.mxu0 0
  %2500 = vmatpush1.bf16.msra.mxu0 %v2475
  %2501 = vmatprep.subr.bf16.mxu0 0
  %2502 = vmatpush1.bf16.msra.mxu0 %v2476
  %2503 = vmatprep.subr.bf16.mxu0 0
  %2504 = vmatpush1.bf16.msra.mxu0 %v2477
  %2505 = vmatprep.subr.bf16.mxu0 0
  %2506 = vmatpush1.bf16.msra.mxu0 %v2478
  %2507 = vmatprep.subr.bf16.mxu0 0
  %2508 = vmatpush1.bf16.msra.mxu0 %v2479
  %2509 = vmatprep.subr.bf16.mxu0 0
  %2510 = vmatpush1.bf16.msra.mxu0 %v2480
  %2511 = vmatprep.subr.bf16.mxu0 0
  %2512 = vmatpush1.bf16.msra.mxu0 %v2481
  %2513 = vmatprep.subr.bf16.mxu0 0
  %2514 = vmatpush1.bf16.msra.mxu0 %v2482
  %2515 = vmatprep.subr.bf16.mxu0 0
  %2516 = vmatpush1.bf16.msra.mxu0 %v2483
  %2517 = vmatprep.subr.bf16.mxu0 0
  %2518 = vmatpush1.bf16.msra.mxu0 %v2484
  %2519 = vmatprep.subr.bf16.mxu0 0
  %2520 = vmatpush1.bf16.msra.mxu0 %v2497
  %2521 = vmatprep.subr.bf16.mxu0 0
  %2522 = vmatpush1.bf16.msra.mxu0 0
  %2523 = vmatprep.subr.bf16.mxu0 0
  %2524 = vmatpush1.bf16.msra.mxu0 0
  %2525 = vmatprep.subr.bf16.mxu0 0
  %2526 = vmatpush1.bf16.msra.mxu0 0
  %2527 = vmatprep.subr.bf16.mxu0 0
  %2528 = vmatpush1.bf16.msra.mxu0 0
  %2529 = vmatprep.subr.bf16.mxu0 0
  %2530 = vmatpush1.bf16.msra.mxu0 0
  %2531 = vmatprep.mubr.bf16.mxu0 %v464
  %2532 = vmatmul.mubr.bf16.gmra.mrb[0].mxu0 %v309
  %v2533 = vpop.f32.mrb[0].mxu0
  %v2534 = vadd.f32 0.0, %v2533
  %v2535 = vpop.f32.mrb[0].mxu0
  %v2536 = vpop.f32.mrb[0].mxu0
  %v2537 = vadd.f32 0.0, %v2536
  %v2538 = vpop.f32.mrb[0].mxu0
  %2539 = vmatprep.mubr.bf16.mxu0 %v467
  %2540 = vmatmul.mubr.bf16.gmra.mrb[0].mxu0 %v311
  %v2541 = vpop.f32.mrb[0].mxu0
  %v2542 = vadd.f32 0.0, %v2541
  %v2543 = vpop.f32.mrb[0].mxu0
  %v2544 = vpop.f32.mrb[0].mxu0
  %v2545 = vadd.f32 0.0, %v2544
  %v2546 = vpop.f32.mrb[0].mxu0
  %2547 = vmatprep.mubr.bf16.mxu0 %v470
  %2548 = vmatmul.mubr.bf16.gmra.mrb[0].mxu0 %v313
  %v2549 = vpop.f32.mrb[0].mxu0
  %v2550 = vadd.f32 0.0, %v2549
  %v2551 = vpop.f32.mrb[0].mxu0
  %v2552 = vpop.f32.mrb[0].mxu0
  %v2553 = vadd.f32 0.0, %v2552
  %v2554 = vpop.f32.mrb[0].mxu0
  %2555 = vmatprep.mubr.bf16.mxu0 %v473
  %2556 = vmatmul.mubr.bf16.gmra.mrb[0].mxu0 %v315
  %v2557 = vpop.f32.mrb[0].mxu0
  %v2558 = vadd.f32 0.0, %v2557
  %v2559 = vpop.f32.mrb[0].mxu0
  %v2560 = vpop.f32.mrb[0].mxu0
  %v2561 = vadd.f32 0.0, %v2560
  %v2562 = vpop.f32.mrb[0].mxu0
  %2563 = vmatprep.mubr.bf16.mxu0 %v476
  %2564 = vmatmul.mubr.bf16.gmra.mrb[0].mxu0 %v317
  %v2565 = vpop.f32.mrb[0].mxu0
  %v2566 = vadd.f32 0.0, %v2565
  %v2567 = vpop.f32.mrb[0].mxu0
  %v2568 = vpop.f32.mrb[0].mxu0
  %v2569 = vadd.f32 0.0, %v2568
  %v2570 = vpop.f32.mrb[0].mxu0
  %2571 = vmatprep.mubr.bf16.mxu0 %v479
  %2572 = vmatmul.mubr.bf16.gmra.mrb[0].mxu0 %v319
  %v2573 = vpop.f32.mrb[0].mxu0
  %v2574 = vadd.f32 0.0, %v2573
  %v2575 = vpop.f32.mrb[0].mxu0
  %v2576 = vpop.f32.mrb[0].mxu0
  %v2577 = vadd.f32 0.0, %v2576
  %v2578 = vpop.f32.mrb[0].mxu0
  %2579 = vmatprep.mubr.bf16.mxu0 %v482
  %2580 = vmatmul.mubr.bf16.gmra.mrb[0].mxu0 %v321
  %v2581 = vpop.f32.mrb[0].mxu0
  %v2582 = vadd.f32 0.0, %v2581
  %v2583 = vpop.f32.mrb[0].mxu0
  %v2584 = vpop.f32.mrb[0].mxu0
  %v2585 = vadd.f32 0.0, %v2584
  %v2586 = vpop.f32.mrb[0].mxu0
  %2587 = vmatprep.mubr.bf16.mxu0 %v485
  %2588 = vmatmul.mubr.bf16.gmra.mrb[0].mxu0 %v323
  %v2589 = vpop.f32.mrb[0].mxu0
  %v2590 = vadd.f32 0.0, %v2589
  %v2591 = vpop.f32.mrb[0].mxu0
  %v2592 = vpop.f32.mrb[0].mxu0
  %v2593 = vadd.f32 0.0, %v2592
  %v2594 = vpop.f32.mrb[0].mxu0
  %2595 = vmatprep.mubr.bf16.mxu0 %v488
  %2596 = vmatmul.mubr.bf16.gmra.mrb[0].mxu0 %v325
  %v2597 = vpop.f32.mrb[0].mxu0
  %v2598 = vadd.f32 0.0, %v2597
  %v2599 = vpop.f32.mrb[0].mxu0
  %v2600 = vpop.f32.mrb[0].mxu0
  %v2601 = vadd.f32 0.0, %v2600
  %v2602 = vpop.f32.mrb[0].mxu0
  %2603 = vmatprep.mubr.bf16.mxu0 %v491
  %2604 = vmatmul.mubr.bf16.gmra.mrb[0].mxu0 %v327
  %v2605 = vpop.f32.mrb[0].mxu0
  %v2606 = vadd.f32 0.0, %v2605
  %v2607 = vpop.f32.mrb[0].mxu0
  %v2608 = vpop.f32.mrb[0].mxu0
  %v2609 = vadd.f32 0.0, %v2608
  %v2610 = vpop.f32.mrb[0].mxu0
  %2611 = vmatprep.mubr.bf16.mxu0 %v494
  %2612 = vmatmul.mubr.bf16.gmra.mrb[0].mxu0 %v329
  %v2613 = vpop.f32.mrb[0].mxu0
  %v2614 = vadd.f32 0.0, %v2613
  %v2615 = vpop.f32.mrb[0].mxu0
  %v2616 = vpop.f32.mrb[0].mxu0
  %v2617 = vadd.f32 0.0, %v2616
  %v2618 = vpop.f32.mrb[0].mxu0
  %2619 = vmatprep.mubr.bf16.mxu0 %v497
  %2620 = vmatmul.mubr.bf16.gmra.mrb[0].mxu0 %v331
  %v2621 = vpop.f32.mrb[0].mxu0
  %v2622 = vadd.f32 0.0, %v2621
  %v2623 = vpop.f32.mrb[0].mxu0
  %v2624 = vpop.f32.mrb[0].mxu0
  %v2625 = vadd.f32 0.0, %v2624
  %v2626 = vpop.f32.mrb[0].mxu0
  %2627 = vmatprep.mubr.bf16.mxu0 %v500
  %2628 = vmatmul.mubr.bf16.gmra.mrb[0].mxu0 %v333
  %v2629 = vpop.f32.mrb[0].mxu0
  %v2630 = vadd.f32 0.0, %v2629
  %v2631 = vpop.f32.mrb[0].mxu0
  %v2632 = vpop.f32.mrb[0].mxu0
  %v2633 = vadd.f32 0.0, %v2632
  %v2634 = vpop.f32.mrb[0].mxu0
  %2635 = vmatprep.mubr.bf16.mxu0 %v503
  %2636 = vmatmul.mubr.bf16.gmra.mrb[0].mxu0 %v335
  %v2637 = vpop.f32.mrb[0].mxu0
  %v2638 = vadd.f32 0.0, %v2637
  %v2639 = vpop.f32.mrb[0].mxu0
  %v2640 = vpop.f32.mrb[0].mxu0
  %v2641 = vadd.f32 0.0, %v2640
  %v2642 = vpop.f32.mrb[0].mxu0
  %2643 = vmatprep.mubr.bf16.mxu0 %v506
  %2644 = vmatmul.mubr.bf16.gmra.mrb[0].mxu0 %v337
  %v2645 = vpop.f32.mrb[0].mxu0
  %v2646 = vadd.f32 0.0, %v2645
  %v2647 = vpop.f32.mrb[0].mxu0
  %v2648 = vpop.f32.mrb[0].mxu0
  %v2649 = vadd.f32 0.0, %v2648
  %v2650 = vpop.f32.mrb[0].mxu0
  %2651 = vmatprep.mubr.bf16.mxu0 %v509
  %2652 = vmatmul.mubr.bf16.gmra.mrb[0].mxu0 %v339
  %v2653 = vpop.f32.mrb[0].mxu0
  %v2654 = vadd.f32 0.0, %v2653
  %v2655 = vpop.f32.mrb[0].mxu0
  %v2656 = vpop.f32.mrb[0].mxu0
  %v2657 = vadd.f32 0.0, %v2656
  %v2658 = vpop.f32.mrb[0].mxu0
  %2659 = vmatprep.mubr.bf16.mxu0 %v512
  %2660 = vmatmul.mubr.bf16.gmra.mrb[0].mxu0 %v341
  %v2661 = vpop.f32.mrb[0].mxu0
  %v2662 = vadd.f32 0.0, %v2661
  %v2663 = vpop.f32.mrb[0].mxu0
  %v2664 = vpop.f32.mrb[0].mxu0
  %v2665 = vadd.f32 0.0, %v2664
  %v2666 = vpop.f32.mrb[0].mxu0
  %2667 = vmatprep.mubr.bf16.mxu0 %v515
  %2668 = vmatmul.mubr.bf16.gmra.mrb[0].mxu0 %v343
  %v2669 = vpop.f32.mrb[0].mxu0
  %v2670 = vadd.f32 0.0, %v2669
  %v2671 = vpop.f32.mrb[0].mxu0
  %v2672 = vpop.f32.mrb[0].mxu0
  %v2673 = vadd.f32 0.0, %v2672
  %v2674 = vpop.f32.mrb[0].mxu0
  %2675 = vmatprep.mubr.bf16.mxu0 %v518
  %2676 = vmatmul.mubr.bf16.gmra.mrb[0].mxu0 %v345
  %v2677 = vpop.f32.mrb[0].mxu0
  %v2678 = vadd.f32 0.0, %v2677
  %v2679 = vpop.f32.mrb[0].mxu0
  %v2680 = vpop.f32.mrb[0].mxu0
  %v2681 = vadd.f32 0.0, %v2680
  %v2682 = vpop.f32.mrb[0].mxu0
  %2683 = vmatprep.mubr.bf16.mxu0 %v521
  %2684 = vmatmul.mubr.bf16.gmra.mrb[0].mxu0 %v347
  %v2685 = vpop.f32.mrb[0].mxu0
  %v2686 = vadd.f32 0.0, %v2685
  %v2687 = vpop.f32.mrb[0].mxu0
  %v2688 = vpop.f32.mrb[0].mxu0
  %v2689 = vadd.f32 0.0, %v2688
  %v2690 = vpop.f32.mrb[0].mxu0
  %2691 = vmatprep.mubr.bf16.mxu0 %v524
  %2692 = vmatmul.mubr.bf16.gmra.mrb[0].mxu0 %v349
  %v2693 = vpop.f32.mrb[0].mxu0
  %v2694 = vadd.f32 0.0, %v2693
  %v2695 = vpop.f32.mrb[0].mxu0
  %v2696 = vpop.f32.mrb[0].mxu0
  %v2697 = vadd.f32 0.0, %v2696
  %v2698 = vpop.f32.mrb[0].mxu0
  %2699 = vmatprep.mubr.bf16.mxu0 %v527
  %2700 = vmatmul.mubr.bf16.gmra.mrb[0].mxu0 %v351
  %v2701 = vpop.f32.mrb[0].mxu0
  %v2702 = vadd.f32 0.0, %v2701
  %v2703 = vpop.f32.mrb[0].mxu0
  %v2704 = vpop.f32.mrb[0].mxu0
  %v2705 = vadd.f32 0.0, %v2704
  %v2706 = vpop.f32.mrb[0].mxu0
  %2707 = vmatprep.mubr.bf16.mxu0 %v530
  %2708 = vmatmul.mubr.bf16.gmra.mrb[0].mxu0 %v353
  %v2709 = vpop.f32.mrb[0].mxu0
  %v2710 = vadd.f32 0.0, %v2709
  %v2711 = vpop.f32.mrb[0].mxu0
  %v2712 = vpop.f32.mrb[0].mxu0
  %v2713 = vadd.f32 0.0, %v2712
  %v2714 = vpop.f32.mrb[0].mxu0
  %2715 = vmatprep.mubr.bf16.mxu0 %v533
  %2716 = vmatmul.mubr.bf16.gmra.mrb[0].mxu0 %v355
  %v2717 = vpop.f32.mrb[0].mxu0
  %v2718 = vadd.f32 0.0, %v2717
  %v2719 = vpop.f32.mrb[0].mxu0
  %v2720 = vpop.f32.mrb[0].mxu0
  %v2721 = vadd.f32 0.0, %v2720
  %v2722 = vpop.f32.mrb[0].mxu0
  %2723 = vmatprep.mubr.bf16.mxu0 %v536
  %2724 = vmatmul.mubr.bf16.gmra.mrb[0].mxu0 %v357
  %v2725 = vpop.f32.mrb[0].mxu0
  %v2726 = vadd.f32 0.0, %v2725
  %v2727 = vpop.f32.mrb[0].mxu0
  %v2728 = vpop.f32.mrb[0].mxu0
  %v2729 = vadd.f32 0.0, %v2728
  %v2730 = vpop.f32.mrb[0].mxu0
  %2731 = vmatprep.mubr.bf16.mxu0 %v539
  %2732 = vmatmul.mubr.bf16.gmra.mrb[0].mxu0 %v359
  %v2733 = vpop.f32.mrb[0].mxu0
  %v2734 = vadd.f32 0.0, %v2733
  %v2735 = vpop.f32.mrb[0].mxu0
  %v2736 = vpop.f32.mrb[0].mxu0
  %v2737 = vadd.f32 0.0, %v2736
  %v2738 = vpop.f32.mrb[0].mxu0
  %2739 = vmatprep.mubr.bf16.mxu0 %v542
  %2740 = vmatmul.mubr.bf16.gmra.mrb[0].mxu0 %v361
  %v2741 = vpop.f32.mrb[0].mxu0
  %v2742 = vadd.f32 0.0, %v2741
  %v2743 = vpop.f32.mrb[0].mxu0
  %v2744 = vpop.f32.mrb[0].mxu0
  %v2745 = vadd.f32 0.0, %v2744
  %v2746 = vpop.f32.mrb[0].mxu0
  %2747 = vmatprep.mubr.bf16.mxu0 %v545
  %2748 = vmatmul.mubr.bf16.gmra.mrb[0].mxu0 %v363
  %v2749 = vpop.f32.mrb[0].mxu0
  %v2750 = vadd.f32 0.0, %v2749
  %v2751 = vpop.f32.mrb[0].mxu0
  %v2752 = vpop.f32.mrb[0].mxu0
  %v2753 = vadd.f32 0.0, %v2752
  %v2754 = vpop.f32.mrb[0].mxu0
  %2755 = vmatprep.mubr.bf16.mxu0 %v548
  %2756 = vmatmul.mubr.bf16.gmra.mrb[0].mxu0 %v365
  %v2757 = vpop.f32.mrb[0].mxu0
  %v2758 = vadd.f32 0.0, %v2757
  %v2759 = vpop.f32.mrb[0].mxu0
  %v2760 = vpop.f32.mrb[0].mxu0
  %v2761 = vadd.f32 0.0, %v2760
  %v2762 = vpop.f32.mrb[0].mxu0
  %2763 = vmatprep.mubr.bf16.mxu0 %v551
  %2764 = vmatmul.mubr.bf16.gmra.mrb[0].mxu0 %v367
  %v2765 = vpop.f32.mrb[0].mxu0
  %v2766 = vadd.f32 0.0, %v2765
  %v2767 = vpop.f32.mrb[0].mxu0
  %v2768 = vpop.f32.mrb[0].mxu0
  %v2769 = vadd.f32 0.0, %v2768
  %v2770 = vpop.f32.mrb[0].mxu0
  %2771 = vdwg.mxu0
  %v2772 = vmax.f32 %v2534, %v2593
  %v2773 = vmax.f32 %v2537, %v2598
  %v2774 = vmax.f32 %v2542, %v2601
  %v2775 = vmax.f32 %v2545, %v2606
  %v2776 = vmax.f32 %v2550, %v2609
  %v2777 = vmax.f32 %v2553, %v2614
  %v2778 = vmax.f32 %v2558, %v2617
  %v2779 = vmax.f32 %v2561, %v2622
  %v2780 = vmax.f32 %v2566, %v2625
  %v2781 = vmax.f32 %v2569, %v2630
  %v2782 = vmax.f32 %v2574, %v2633
  %v2783 = vmax.f32 %v2577, %v2638
  %v2784 = vmax.f32 %v2582, %v2641
  %v2785 = vmax.f32 %v2585, %v2646
  %v2786 = vmax.f32 %v2590, %v2649
  %v2787 = vmax.f32 %v2654, %v2713
  %v2788 = vmax.f32 %v2657, %v2718
  %v2789 = vmax.f32 %v2662, %v2721
  %v2790 = vmax.f32 %v2665, %v2726
  %v2791 = vmax.f32 %v2670, %v2729
  %v2792 = vmax.f32 %v2673, %v2734
  %v2793 = vmax.f32 %v2678, %v2737
  %v2794 = vmax.f32 %v2681, %v2742
  %v2795 = vmax.f32 %v2686, %v2745
  %v2796 = vmax.f32 %v2689, %v2750
  %v2797 = vmax.f32 %v2694, %v2753
  %v2798 = vmax.f32 %v2697, %v2758
  %v2799 = vmax.f32 %v2702, %v2761
  %v2800 = vmax.f32 %v2705, %v2766
  %v2801 = vmax.f32 %v2710, %v2769
  %v2802 = vmax.f32 %v2772, %v2787
  %v2803 = vmax.f32 %v2773, %v2788
  %v2804 = vmax.f32 %v2774, %v2789
  %v2805 = vmax.f32 %v2775, %v2790
  %v2806 = vmax.f32 %v2776, %v2791
  %v2807 = vmax.f32 %v2777, %v2792
  %v2808 = vmax.f32 %v2778, %v2793
  %v2809 = vmax.f32 %v2779, %v2794
  %v2810 = vmax.f32 %v2780, %v2795
  %v2811 = vmax.f32 %v2781, %v2796
  %v2812 = vmax.f32 %v2782, %v2797
  %v2813 = vmax.f32 %v2783, %v2798
  %v2814 = vmax.f32 %v2784, %v2799
  %v2815 = vmax.f32 %v2785, %v2800
  %v2816 = vmax.f32 %v2786, %v2801
  %v2817 = vadd.f32 %v2802, %v878
  %v2818 = vadd.f32 %v2803, %v883
  %v2819 = vadd.f32 %v2804, %v888
  %v2820 = vadd.f32 %v2805, %v893
  %v2821 = vadd.f32 %v2806, %v898
  %v2822 = vadd.f32 %v2807, %v903
  %v2823 = vadd.f32 %v2808, %v908
  %v2824 = vadd.f32 %v2809, %v913
  %v2825 = vadd.f32 %v2810, %v918
  %v2826 = vadd.f32 %v2811, %v923
  %v2827 = vadd.f32 %v2812, %v928
  %v2828 = vadd.f32 %v2813, %v933
  %v2829 = vadd.f32 %v2814, %v938
  %v2830 = vadd.f32 %v2815, %v943
  %v2831 = vadd.f32 %v2816, %v948
  %v2832 = vmax.f32 %v2817, 0.0
  %v2833 = vmax.f32 %v2818, 0.0
  %v2834 = vmax.f32 %v2819, 0.0
  %v2835 = vmax.f32 %v2820, 0.0
  %v2836 = vmax.f32 %v2821, 0.0
  %v2837 = vmax.f32 %v2822, 0.0
  %v2838 = vmax.f32 %v2823, 0.0
  %v2839 = vmax.f32 %v2824, 0.0
  %v2840 = vmax.f32 %v2825, 0.0
  %v2841 = vmax.f32 %v2826, 0.0
  %v2842 = vmax.f32 %v2827, 0.0
  %v2843 = vmax.f32 %v2828, 0.0
  %v2844 = vmax.f32 %v2829, 0.0
  %v2845 = vmax.f32 %v2830, 0.0
  %v2846 = vmax.f32 %v2831, 0.0
  %v2847 = vpack.c.bf16 %v2833, %v2832
  %v2848 = vpack.c.bf16 %v2835, %v2834
  %v2849 = vpack.c.bf16 %v2837, %v2836
  %v2850 = vpack.c.bf16 %v2839, %v2838
  %v2851 = vpack.c.bf16 %v2841, %v2840
  %v2852 = vpack.c.bf16 %v2843, %v2842
  %v2853 = vpack.c.bf16 %v2845, %v2844
  %v2854 = vpack.c.bf16 %v2846, %v2846
  %2855 = vst [vmem:[#allocation2 + $0xf0] sm:$0xff] %v2847
  %2856 = vst [vmem:[#allocation2 + $0xf8] sm:$0xff] %v2848
  %2857 = vst [vmem:[#allocation2 + $0x100] sm:$0xff] %v2849
  %2858 = vst [vmem:[#allocation2 + $0x108] sm:$0xff] %v2850
  %2859 = vst [vmem:[#allocation2 + $0x110] sm:$0xff] %v2851
  %2860 = vst [vmem:[#allocation2 + $0x118] sm:$0xff] %v2852
  %2861 = vst [vmem:[#allocation2 + $0x120] sm:$0xff] %v2853
  %2862 = vst [vmem:[#allocation2 + $0x128] sm:$0xf] %v2854
  %v2863 = vld [vmem:[%s0 + $0x8c] sm:$0xf]
  %v2864 = vld [vmem:[%s0 + $0x90] sm:$0xf]
  %v2865 = vld [vmem:[%s0 + $0x94] sm:$0xf]
  %v2866 = vld [vmem:[%s0 + $0x98] sm:$0xf]
  %v2867 = vld [vmem:[%s0 + $0x9c] sm:$0xf]
  %v2868 = vld [vmem:[%s0 + $0xa0] sm:$0xf]
  %v2869 = vld [vmem:[%s0 + $0xa4] sm:$0xf]
  %v2870 = vld [vmem:[%s0 + $0xa8] sm:$0xf]
  %v2871 = vld [vmem:[%s0 + $0xac] sm:$0xf]
  %v2872 = vld [vmem:[%s0 + $0xb0] sm:$0xf]
  %v2873 = vld [vmem:[%s0 + $0xb4] sm:$0xf]
  %v2874 = vld [vmem:[%s0 + $0xb8] sm:$0xf]
  %v2875 = vld [vmem:[%s0 + $0xbc] sm:$0xf]
  %v2876 = vld [vmem:[%s0 + $0xc0] sm:$0xf]
  %v2877 = vld [vmem:[%s0 + $0xc4] sm:$0xf]
  %v2878 = vld [vmem:[%s0 + $0xc8] sm:$0xf]
  %v2879 = vld [vmem:[%s0 + $0xcc] sm:$0xf]
  %v2880 = vld [vmem:[%s0 + $0xd0] sm:$0xf]
  %v2881 = vld [vmem:[%s0 + $0xd4] sm:$0xf]
  %v2882 = vld [vmem:[%s0 + $0xd8] sm:$0xf]
  %v2883 = vld [vmem:[%s0 + $0xdc] sm:$0xf]
  %v2905 = vunpack.c.l.b16 %v2863
  %v2906 = vunpack.c.l.b16 %v2864
  %v2907 = vunpack.c.l.b16 %v2865
  %v2908 = vunpack.c.l.b16 %v2866
  %v2909 = vunpack.c.l.b16 %v2867
  %v2910 = vunpack.c.l.b16 %v2868
  %v2911 = vunpack.c.l.b16 %v2869
  %v2912 = vunpack.c.l.b16 %v2870
  %v2913 = vunpack.c.l.b16 %v2871
  %v2914 = vunpack.c.l.b16 %v2872
  %v2915 = vunpack.c.l.b16 %v2873
  %v2916 = vunpack.c.l.b16 %v2874
  %v2917 = vunpack.c.l.b16 %v2875
  %v2918 = vunpack.c.l.b16 %v2876
  %v2919 = vunpack.c.l.b16 %v2877
  %v2920 = vunpack.c.l.b16 %v2878
  %v2921 = vunpack.c.l.b16 %v2879
  %v2922 = vunpack.c.l.b16 %v2880
  %v2923 = vunpack.c.l.b16 %v2881
  %v2924 = vunpack.c.l.b16 %v2882
  %v2925 = vunpack.c.l.b16 %v2883
  %v2926 = vpack.c.b16 %v2906, %v2905
  %v2927 = vpack.c.b16 %v2908, %v2907
  %v2928 = vpack.c.b16 %v2910, %v2909
  %v2929 = vpack.c.b16 %v2912, %v2911
  %v2930 = vpack.c.b16 %v2914, %v2913
  %v2931 = vpack.c.b16 %v2916, %v2915
  %v2932 = vpack.c.b16 %v2918, %v2917
  %v2933 = vpack.c.b16 %v2920, %v2919
  %v2934 = vpack.c.b16 %v2922, %v2921
  %v2935 = vpack.c.b16 %v2924, %v2923
  %v2936 = vpack.c.b16 %v2925, %v2925
  %v2948 = vsel %vm553, %v2936, 0
  %2950 = vmatprep.subr.bf16.mxu0 0
  %2951 = vmatpush1.bf16.msra.mxu0 %v2926
  %2952 = vmatprep.subr.bf16.mxu0 0
  %2953 = vmatpush1.bf16.msra.mxu0 %v2927
  %2954 = vmatprep.subr.bf16.mxu0 0
  %2955 = vmatpush1.bf16.msra.mxu0 %v2928
  %2956 = vmatprep.subr.bf16.mxu0 0
  %2957 = vmatpush1.bf16.msra.mxu0 %v2929
  %2958 = vmatprep.subr.bf16.mxu0 0
  %2959 = vmatpush1.bf16.msra.mxu0 %v2930
  %2960 = vmatprep.subr.bf16.mxu0 0
  %2961 = vmatpush1.bf16.msra.mxu0 %v2931
  %2962 = vmatprep.subr.bf16.mxu0 0
  %2963 = vmatpush1.bf16.msra.mxu0 %v2932
  %2964 = vmatprep.subr.bf16.mxu0 0
  %2965 = vmatpush1.bf16.msra.mxu0 %v2933
  %2966 = vmatprep.subr.bf16.mxu0 0
  %2967 = vmatpush1.bf16.msra.mxu0 %v2934
  %2968 = vmatprep.subr.bf16.mxu0 0
  %2969 = vmatpush1.bf16.msra.mxu0 %v2935
  %2970 = vmatprep.subr.bf16.mxu0 0
  %2971 = vmatpush1.bf16.msra.mxu0 %v2948
  %2972 = vmatprep.subr.bf16.mxu0 0
  %2973 = vmatpush1.bf16.msra.mxu0 0
  %2974 = vmatprep.subr.bf16.mxu0 0
  %2975 = vmatpush1.bf16.msra.mxu0 0
  %2976 = vmatprep.subr.bf16.mxu0 0
  %2977 = vmatpush1.bf16.msra.mxu0 0
  %2978 = vmatprep.subr.bf16.mxu0 0
  %2979 = vmatpush1.bf16.msra.mxu0 0
  %2980 = vmatprep.subr.bf16.mxu0 0
  %2981 = vmatpush1.bf16.msra.mxu0 0
  %2982 = vmatprep.mubr.bf16.mxu0 %v464
  %2983 = vmatmul.mubr.bf16.gmra.mrb[0].mxu0 %v309
  %v2984 = vpop.f32.mrb[0].mxu0
  %v2985 = vadd.f32 0.0, %v2984
  %v2986 = vpop.f32.mrb[0].mxu0
  %v2987 = vpop.f32.mrb[0].mxu0
  %v2988 = vadd.f32 0.0, %v2987
  %v2989 = vpop.f32.mrb[0].mxu0
  %2990 = vmatprep.mubr.bf16.mxu0 %v467
  %2991 = vmatmul.mubr.bf16.gmra.mrb[0].mxu0 %v311
  %v2992 = vpop.f32.mrb[0].mxu0
  %v2993 = vadd.f32 0.0, %v2992
  %v2994 = vpop.f32.mrb[0].mxu0
  %v2995 = vpop.f32.mrb[0].mxu0
  %v2996 = vadd.f32 0.0, %v2995
  %v2997 = vpop.f32.mrb[0].mxu0
  %2998 = vmatprep.mubr.bf16.mxu0 %v470
  %2999 = vmatmul.mubr.bf16.gmra.mrb[0].mxu0 %v313
  %v3000 = vpop.f32.mrb[0].mxu0
  %v3001 = vadd.f32 0.0, %v3000
  %v3002 = vpop.f32.mrb[0].mxu0
  %v3003 = vpop.f32.mrb[0].mxu0
  %v3004 = vadd.f32 0.0, %v3003
  %v3005 = vpop.f32.mrb[0].mxu0
  %3006 = vmatprep.mubr.bf16.mxu0 %v473
  %3007 = vmatmul.mubr.bf16.gmra.mrb[0].mxu0 %v315
  %v3008 = vpop.f32.mrb[0].mxu0
  %v3009 = vadd.f32 0.0, %v3008
  %v3010 = vpop.f32.mrb[0].mxu0
  %v3011 = vpop.f32.mrb[0].mxu0
  %v3012 = vadd.f32 0.0, %v3011
  %v3013 = vpop.f32.mrb[0].mxu0
  %3014 = vmatprep.mubr.bf16.mxu0 %v476
  %3015 = vmatmul.mubr.bf16.gmra.mrb[0].mxu0 %v317
  %v3016 = vpop.f32.mrb[0].mxu0
  %v3017 = vadd.f32 0.0, %v3016
  %v3018 = vpop.f32.mrb[0].mxu0
  %v3019 = vpop.f32.mrb[0].mxu0
  %v3020 = vadd.f32 0.0, %v3019
  %v3021 = vpop.f32.mrb[0].mxu0
  %3022 = vmatprep.mubr.bf16.mxu0 %v479
  %3023 = vmatmul.mubr.bf16.gmra.mrb[0].mxu0 %v319
  %v3024 = vpop.f32.mrb[0].mxu0
  %v3025 = vadd.f32 0.0, %v3024
  %v3026 = vpop.f32.mrb[0].mxu0
  %v3027 = vpop.f32.mrb[0].mxu0
  %v3028 = vadd.f32 0.0, %v3027
  %v3029 = vpop.f32.mrb[0].mxu0
  %3030 = vmatprep.mubr.bf16.mxu0 %v482
  %3031 = vmatmul.mubr.bf16.gmra.mrb[0].mxu0 %v321
  %v3032 = vpop.f32.mrb[0].mxu0
  %v3033 = vadd.f32 0.0, %v3032
  %v3034 = vpop.f32.mrb[0].mxu0
  %v3035 = vpop.f32.mrb[0].mxu0
  %v3036 = vadd.f32 0.0, %v3035
  %v3037 = vpop.f32.mrb[0].mxu0
  %3038 = vmatprep.mubr.bf16.mxu0 %v485
  %3039 = vmatmul.mubr.bf16.gmra.mrb[0].mxu0 %v323
  %v3040 = vpop.f32.mrb[0].mxu0
  %v3041 = vadd.f32 0.0, %v3040
  %v3042 = vpop.f32.mrb[0].mxu0
  %v3043 = vpop.f32.mrb[0].mxu0
  %v3044 = vadd.f32 0.0, %v3043
  %v3045 = vpop.f32.mrb[0].mxu0
  %3046 = vmatprep.mubr.bf16.mxu0 %v488
  %3047 = vmatmul.mubr.bf16.gmra.mrb[0].mxu0 %v325
  %v3048 = vpop.f32.mrb[0].mxu0
  %v3049 = vadd.f32 0.0, %v3048
  %v3050 = vpop.f32.mrb[0].mxu0
  %v3051 = vpop.f32.mrb[0].mxu0
  %v3052 = vadd.f32 0.0, %v3051
  %v3053 = vpop.f32.mrb[0].mxu0
  %3054 = vmatprep.mubr.bf16.mxu0 %v491
  %3055 = vmatmul.mubr.bf16.gmra.mrb[0].mxu0 %v327
  %v3056 = vpop.f32.mrb[0].mxu0
  %v3057 = vadd.f32 0.0, %v3056
  %v3058 = vpop.f32.mrb[0].mxu0
  %v3059 = vpop.f32.mrb[0].mxu0
  %v3060 = vadd.f32 0.0, %v3059
  %v3061 = vpop.f32.mrb[0].mxu0
  %3062 = vmatprep.mubr.bf16.mxu0 %v494
  %3063 = vmatmul.mubr.bf16.gmra.mrb[0].mxu0 %v329
  %v3064 = vpop.f32.mrb[0].mxu0
  %v3065 = vadd.f32 0.0, %v3064
  %v3066 = vpop.f32.mrb[0].mxu0
  %v3067 = vpop.f32.mrb[0].mxu0
  %v3068 = vadd.f32 0.0, %v3067
  %v3069 = vpop.f32.mrb[0].mxu0
  %3070 = vmatprep.mubr.bf16.mxu0 %v497
  %3071 = vmatmul.mubr.bf16.gmra.mrb[0].mxu0 %v331
  %v3072 = vpop.f32.mrb[0].mxu0
  %v3073 = vadd.f32 0.0, %v3072
  %v3074 = vpop.f32.mrb[0].mxu0
  %v3075 = vpop.f32.mrb[0].mxu0
  %v3076 = vadd.f32 0.0, %v3075
  %v3077 = vpop.f32.mrb[0].mxu0
  %3078 = vmatprep.mubr.bf16.mxu0 %v500
  %3079 = vmatmul.mubr.bf16.gmra.mrb[0].mxu0 %v333
  %v3080 = vpop.f32.mrb[0].mxu0
  %v3081 = vadd.f32 0.0, %v3080
  %v3082 = vpop.f32.mrb[0].mxu0
  %v3083 = vpop.f32.mrb[0].mxu0
  %v3084 = vadd.f32 0.0, %v3083
  %v3085 = vpop.f32.mrb[0].mxu0
  %3086 = vmatprep.mubr.bf16.mxu0 %v503
  %3087 = vmatmul.mubr.bf16.gmra.mrb[0].mxu0 %v335
  %v3088 = vpop.f32.mrb[0].mxu0
  %v3089 = vadd.f32 0.0, %v3088
  %v3090 = vpop.f32.mrb[0].mxu0
  %v3091 = vpop.f32.mrb[0].mxu0
  %v3092 = vadd.f32 0.0, %v3091
  %v3093 = vpop.f32.mrb[0].mxu0
  %3094 = vmatprep.mubr.bf16.mxu0 %v506
  %3095 = vmatmul.mubr.bf16.gmra.mrb[0].mxu0 %v337
  %v3096 = vpop.f32.mrb[0].mxu0
  %v3097 = vadd.f32 0.0, %v3096
  %v3098 = vpop.f32.mrb[0].mxu0
  %v3099 = vpop.f32.mrb[0].mxu0
  %v3100 = vadd.f32 0.0, %v3099
  %v3101 = vpop.f32.mrb[0].mxu0
  %3102 = vmatprep.mubr.bf16.mxu0 %v509
  %3103 = vmatmul.mubr.bf16.gmra.mrb[0].mxu0 %v339
  %v3104 = vpop.f32.mrb[0].mxu0
  %v3105 = vadd.f32 0.0, %v3104
  %v3106 = vpop.f32.mrb[0].mxu0
  %v3107 = vpop.f32.mrb[0].mxu0
  %v3108 = vadd.f32 0.0, %v3107
  %v3109 = vpop.f32.mrb[0].mxu0
  %3110 = vmatprep.mubr.bf16.mxu0 %v512
  %3111 = vmatmul.mubr.bf16.gmra.mrb[0].mxu0 %v341
  %v3112 = vpop.f32.mrb[0].mxu0
  %v3113 = vadd.f32 0.0, %v3112
  %v3114 = vpop.f32.mrb[0].mxu0
  %v3115 = vpop.f32.mrb[0].mxu0
  %v3116 = vadd.f32 0.0, %v3115
  %v3117 = vpop.f32.mrb[0].mxu0
  %3118 = vmatprep.mubr.bf16.mxu0 %v515
  %3119 = vmatmul.mubr.bf16.gmra.mrb[0].mxu0 %v343
  %v3120 = vpop.f32.mrb[0].mxu0
  %v3121 = vadd.f32 0.0, %v3120
  %v3122 = vpop.f32.mrb[0].mxu0
  %v3123 = vpop.f32.mrb[0].mxu0
  %v3124 = vadd.f32 0.0, %v3123
  %v3125 = vpop.f32.mrb[0].mxu0
  %3126 = vmatprep.mubr.bf16.mxu0 %v518
  %3127 = vmatmul.mubr.bf16.gmra.mrb[0].mxu0 %v345
  %v3128 = vpop.f32.mrb[0].mxu0
  %v3129 = vadd.f32 0.0, %v3128
  %v3130 = vpop.f32.mrb[0].mxu0
  %v3131 = vpop.f32.mrb[0].mxu0
  %v3132 = vadd.f32 0.0, %v3131
  %v3133 = vpop.f32.mrb[0].mxu0
  %3134 = vmatprep.mubr.bf16.mxu0 %v521
  %3135 = vmatmul.mubr.bf16.gmra.mrb[0].mxu0 %v347
  %v3136 = vpop.f32.mrb[0].mxu0
  %v3137 = vadd.f32 0.0, %v3136
  %v3138 = vpop.f32.mrb[0].mxu0
  %v3139 = vpop.f32.mrb[0].mxu0
  %v3140 = vadd.f32 0.0, %v3139
  %v3141 = vpop.f32.mrb[0].mxu0
  %3142 = vmatprep.mubr.bf16.mxu0 %v524
  %3143 = vmatmul.mubr.bf16.gmra.mrb[0].mxu0 %v349
  %v3144 = vpop.f32.mrb[0].mxu0
  %v3145 = vadd.f32 0.0, %v3144
  %v3146 = vpop.f32.mrb[0].mxu0
  %v3147 = vpop.f32.mrb[0].mxu0
  %v3148 = vadd.f32 0.0, %v3147
  %v3149 = vpop.f32.mrb[0].mxu0
  %3150 = vmatprep.mubr.bf16.mxu0 %v527
  %3151 = vmatmul.mubr.bf16.gmra.mrb[0].mxu0 %v351
  %v3152 = vpop.f32.mrb[0].mxu0
  %v3153 = vadd.f32 0.0, %v3152
  %v3154 = vpop.f32.mrb[0].mxu0
  %v3155 = vpop.f32.mrb[0].mxu0
  %v3156 = vadd.f32 0.0, %v3155
  %v3157 = vpop.f32.mrb[0].mxu0
  %3158 = vmatprep.mubr.bf16.mxu0 %v530
  %3159 = vmatmul.mubr.bf16.gmra.mrb[0].mxu0 %v353
  %v3160 = vpop.f32.mrb[0].mxu0
  %v3161 = vadd.f32 0.0, %v3160
  %v3162 = vpop.f32.mrb[0].mxu0
  %v3163 = vpop.f32.mrb[0].mxu0
  %v3164 = vadd.f32 0.0, %v3163
  %v3165 = vpop.f32.mrb[0].mxu0
  %3166 = vmatprep.mubr.bf16.mxu0 %v533
  %3167 = vmatmul.mubr.bf16.gmra.mrb[0].mxu0 %v355
  %v3168 = vpop.f32.mrb[0].mxu0
  %v3169 = vadd.f32 0.0, %v3168
  %v3170 = vpop.f32.mrb[0].mxu0
  %v3171 = vpop.f32.mrb[0].mxu0
  %v3172 = vadd.f32 0.0, %v3171
  %v3173 = vpop.f32.mrb[0].mxu0
  %3174 = vmatprep.mubr.bf16.mxu0 %v536
  %3175 = vmatmul.mubr.bf16.gmra.mrb[0].mxu0 %v357
  %v3176 = vpop.f32.mrb[0].mxu0
  %v3177 = vadd.f32 0.0, %v3176
  %v3178 = vpop.f32.mrb[0].mxu0
  %v3179 = vpop.f32.mrb[0].mxu0
  %v3180 = vadd.f32 0.0, %v3179
  %v3181 = vpop.f32.mrb[0].mxu0
  %3182 = vmatprep.mubr.bf16.mxu0 %v539
  %3183 = vmatmul.mubr.bf16.gmra.mrb[0].mxu0 %v359
  %v3184 = vpop.f32.mrb[0].mxu0
  %v3185 = vadd.f32 0.0, %v3184
  %v3186 = vpop.f32.mrb[0].mxu0
  %v3187 = vpop.f32.mrb[0].mxu0
  %v3188 = vadd.f32 0.0, %v3187
  %v3189 = vpop.f32.mrb[0].mxu0
  %3190 = vmatprep.mubr.bf16.mxu0 %v542
  %3191 = vmatmul.mubr.bf16.gmra.mrb[0].mxu0 %v361
  %v3192 = vpop.f32.mrb[0].mxu0
  %v3193 = vadd.f32 0.0, %v3192
  %v3194 = vpop.f32.mrb[0].mxu0
  %v3195 = vpop.f32.mrb[0].mxu0
  %v3196 = vadd.f32 0.0, %v3195
  %v3197 = vpop.f32.mrb[0].mxu0
  %3198 = vmatprep.mubr.bf16.mxu0 %v545
  %3199 = vmatmul.mubr.bf16.gmra.mrb[0].mxu0 %v363
  %v3200 = vpop.f32.mrb[0].mxu0
  %v3201 = vadd.f32 0.0, %v3200
  %v3202 = vpop.f32.mrb[0].mxu0
  %v3203 = vpop.f32.mrb[0].mxu0
  %v3204 = vadd.f32 0.0, %v3203
  %v3205 = vpop.f32.mrb[0].mxu0
  %3206 = vmatprep.mubr.bf16.mxu0 %v548
  %3207 = vmatmul.mubr.bf16.gmra.mrb[0].mxu0 %v365
  %v3208 = vpop.f32.mrb[0].mxu0
  %v3209 = vadd.f32 0.0, %v3208
  %v3210 = vpop.f32.mrb[0].mxu0
  %v3211 = vpop.f32.mrb[0].mxu0
  %v3212 = vadd.f32 0.0, %v3211
  %v3213 = vpop.f32.mrb[0].mxu0
  %3214 = vmatprep.mubr.bf16.mxu0 %v551
  %3215 = vmatmul.mubr.bf16.gmra.mrb[0].mxu0 %v367
  %v3216 = vpop.f32.mrb[0].mxu0
  %v3217 = vadd.f32 0.0, %v3216
  %v3218 = vpop.f32.mrb[0].mxu0
  %v3219 = vpop.f32.mrb[0].mxu0
  %v3220 = vadd.f32 0.0, %v3219
  %v3221 = vpop.f32.mrb[0].mxu0
  %3222 = vdwg.mxu0
  %v3223 = vmax.f32 %v2985, %v3044
  %v3224 = vmax.f32 %v2988, %v3049
  %v3225 = vmax.f32 %v2993, %v3052
  %v3226 = vmax.f32 %v2996, %v3057
  %v3227 = vmax.f32 %v3001, %v3060
  %v3228 = vmax.f32 %v3004, %v3065
  %v3229 = vmax.f32 %v3009, %v3068
  %v3230 = vmax.f32 %v3012, %v3073
  %v3231 = vmax.f32 %v3017, %v3076
  %v3232 = vmax.f32 %v3020, %v3081
  %v3233 = vmax.f32 %v3025, %v3084
  %v3234 = vmax.f32 %v3028, %v3089
  %v3235 = vmax.f32 %v3033, %v3092
  %v3236 = vmax.f32 %v3036, %v3097
  %v3237 = vmax.f32 %v3041, %v3100
  %v3238 = vmax.f32 %v3105, %v3164
  %v3239 = vmax.f32 %v3108, %v3169
  %v3240 = vmax.f32 %v3113, %v3172
  %v3241 = vmax.f32 %v3116, %v3177
  %v3242 = vmax.f32 %v3121, %v3180
  %v3243 = vmax.f32 %v3124, %v3185
  %v3244 = vmax.f32 %v3129, %v3188
  %v3245 = vmax.f32 %v3132, %v3193
  %v3246 = vmax.f32 %v3137, %v3196
  %v3247 = vmax.f32 %v3140, %v3201
  %v3248 = vmax.f32 %v3145, %v3204
  %v3249 = vmax.f32 %v3148, %v3209
  %v3250 = vmax.f32 %v3153, %v3212
  %v3251 = vmax.f32 %v3156, %v3217
  %v3252 = vmax.f32 %v3161, %v3220
  %v3253 = vmax.f32 %v3223, %v3238
  %v3254 = vmax.f32 %v3224, %v3239
  %v3255 = vmax.f32 %v3225, %v3240
  %v3256 = vmax.f32 %v3226, %v3241
  %v3257 = vmax.f32 %v3227, %v3242
  %v3258 = vmax.f32 %v3228, %v3243
  %v3259 = vmax.f32 %v3229, %v3244
  %v3260 = vmax.f32 %v3230, %v3245
  %v3261 = vmax.f32 %v3231, %v3246
  %v3262 = vmax.f32 %v3232, %v3247
  %v3263 = vmax.f32 %v3233, %v3248
  %v3264 = vmax.f32 %v3234, %v3249
  %v3265 = vmax.f32 %v3235, %v3250
  %v3266 = vmax.f32 %v3236, %v3251
  %v3267 = vmax.f32 %v3237, %v3252
  %v3268 = vadd.f32 %v3253, %v878
  %v3269 = vadd.f32 %v3254, %v883
  %v3270 = vadd.f32 %v3255, %v888
  %v3271 = vadd.f32 %v3256, %v893
  %v3272 = vadd.f32 %v3257, %v898
  %v3273 = vadd.f32 %v3258, %v903
  %v3274 = vadd.f32 %v3259, %v908
  %v3275 = vadd.f32 %v3260, %v913
  %v3276 = vadd.f32 %v3261, %v918
  %v3277 = vadd.f32 %v3262, %v923
  %v3278 = vadd.f32 %v3263, %v928
  %v3279 = vadd.f32 %v3264, %v933
  %v3280 = vadd.f32 %v3265, %v938
  %v3281 = vadd.f32 %v3266, %v943
  %v3282 = vadd.f32 %v3267, %v948
  %v3283 = vmax.f32 %v3268, 0.0
  %v3284 = vmax.f32 %v3269, 0.0
  %v3285 = vmax.f32 %v3270, 0.0
  %v3286 = vmax.f32 %v3271, 0.0
  %v3287 = vmax.f32 %v3272, 0.0
  %v3288 = vmax.f32 %v3273, 0.0
  %v3289 = vmax.f32 %v3274, 0.0
  %v3290 = vmax.f32 %v3275, 0.0
  %v3291 = vmax.f32 %v3276, 0.0
  %v3292 = vmax.f32 %v3277, 0.0
  %v3293 = vmax.f32 %v3278, 0.0
  %v3294 = vmax.f32 %v3279, 0.0
  %v3295 = vmax.f32 %v3280, 0.0
  %v3296 = vmax.f32 %v3281, 0.0
  %v3297 = vmax.f32 %v3282, 0.0
  %v3298 = vpack.c.bf16 %v3284, %v3283
  %v3299 = vpack.c.bf16 %v3286, %v3285
  %v3300 = vpack.c.bf16 %v3288, %v3287
  %v3301 = vpack.c.bf16 %v3290, %v3289
  %v3302 = vpack.c.bf16 %v3292, %v3291
  %v3303 = vpack.c.bf16 %v3294, %v3293
  %v3304 = vpack.c.bf16 %v3296, %v3295
  %v3305 = vpack.c.bf16 %v3297, %v3297
  %v3314 = vrot.slane %v3298, 4
  %v3315 = vrot.slane %v3299, 4
  %v3316 = vsel %vm1447, %v3314, %v3315
  %v3317 = vrot.slane %v3300, 4
  %v3318 = vsel %vm1447, %v3315, %v3317
  %v3319 = vrot.slane %v3301, 4
  %v3320 = vsel %vm1447, %v3317, %v3319
  %v3321 = vrot.slane %v3302, 4
  %v3322 = vsel %vm1447, %v3319, %v3321
  %v3323 = vrot.slane %v3303, 4
  %v3324 = vsel %vm1447, %v3321, %v3323
  %v3325 = vrot.slane %v3304, 4
  %v3326 = vsel %vm1447, %v3323, %v3325
  %v3327 = vrot.slane %v3305, 4
  %v3328 = vsel %vm1447, %v3325, %v3327
  %3337 = vst [vmem:[#allocation2 + $0x128] sm:$0xf0] %v3314
  %3338 = vst [vmem:[#allocation2 + $0x130] sm:$0xff] %v3316
  %3339 = vst [vmem:[#allocation2 + $0x138] sm:$0xff] %v3318
  %3340 = vst [vmem:[#allocation2 + $0x140] sm:$0xff] %v3320
  %3341 = vst [vmem:[#allocation2 + $0x148] sm:$0xff] %v3322
  %3342 = vst [vmem:[#allocation2 + $0x150] sm:$0xff] %v3324
  %3343 = vst [vmem:[#allocation2 + $0x158] sm:$0xff] %v3326
  %3344 = vst [vmem:[#allocation2 + $0x160] sm:$0xff] %v3328
  %v3345 = vld [vmem:[%s0 + $0xa8] sm:$0xf]
  %v3346 = vld [vmem:[%s0 + $0xac] sm:$0xf]
  %v3347 = vld [vmem:[%s0 + $0xb0] sm:$0xf]
  %v3348 = vld [vmem:[%s0 + $0xb4] sm:$0xf]
  %v3349 = vld [vmem:[%s0 + $0xb8] sm:$0xf]
  %v3350 = vld [vmem:[%s0 + $0xbc] sm:$0xf]
  %v3351 = vld [vmem:[%s0 + $0xc0] sm:$0xf]
  %v3352 = vld [vmem:[%s0 + $0xc4] sm:$0xf]
  %v3353 = vld [vmem:[%s0 + $0xc8] sm:$0xf]
  %v3354 = vld [vmem:[%s0 + $0xcc] sm:$0xf]
  %v3355 = vld [vmem:[%s0 + $0xd0] sm:$0xf]
  %v3356 = vld [vmem:[%s0 + $0xd4] sm:$0xf]
  %v3357 = vld [vmem:[%s0 + $0xd8] sm:$0xf]
  %v3358 = vld [vmem:[%s0 + $0xdc] sm:$0xf]
  %v3359 = vld [vmem:[%s0 + $0xe0] sm:$0xf]
  %v3360 = vld [vmem:[%s0 + $0xe4] sm:$0xf]
  %v3361 = vld [vmem:[%s0 + $0xe8] sm:$0xf]
  %v3362 = vld [vmem:[%s0 + $0xec] sm:$0xf]
  %v3363 = vld [vmem:[%s0 + $0xf0] sm:$0xf]
  %v3364 = vld [vmem:[%s0 + $0xf4] sm:$0xf]
  %v3365 = vld [vmem:[%s0 + $0xf8] sm:$0xf]
  %v3387 = vunpack.c.l.b16 %v3345
  %v3388 = vunpack.c.l.b16 %v3346
  %v3389 = vunpack.c.l.b16 %v3347
  %v3390 = vunpack.c.l.b16 %v3348
  %v3391 = vunpack.c.l.b16 %v3349
  %v3392 = vunpack.c.l.b16 %v3350
  %v3393 = vunpack.c.l.b16 %v3351
  %v3394 = vunpack.c.l.b16 %v3352
  %v3395 = vunpack.c.l.b16 %v3353
  %v3396 = vunpack.c.l.b16 %v3354
  %v3397 = vunpack.c.l.b16 %v3355
  %v3398 = vunpack.c.l.b16 %v3356
  %v3399 = vunpack.c.l.b16 %v3357
  %v3400 = vunpack.c.l.b16 %v3358
  %v3401 = vunpack.c.l.b16 %v3359
  %v3402 = vunpack.c.l.b16 %v3360
  %v3403 = vunpack.c.l.b16 %v3361
  %v3404 = vunpack.c.l.b16 %v3362
  %v3405 = vunpack.c.l.b16 %v3363
  %v3406 = vunpack.c.l.b16 %v3364
  %v3407 = vunpack.c.l.b16 %v3365
  %v3408 = vpack.c.b16 %v3388, %v3387
  %v3409 = vpack.c.b16 %v3390, %v3389
  %v3410 = vpack.c.b16 %v3392, %v3391
  %v3411 = vpack.c.b16 %v3394, %v3393
  %v3412 = vpack.c.b16 %v3396, %v3395
  %v3413 = vpack.c.b16 %v3398, %v3397
  %v3414 = vpack.c.b16 %v3400, %v3399
  %v3415 = vpack.c.b16 %v3402, %v3401
  %v3416 = vpack.c.b16 %v3404, %v3403
  %v3417 = vpack.c.b16 %v3406, %v3405
  %v3418 = vpack.c.b16 %v3407, %v3407
  %v3430 = vsel %vm553, %v3418, 0
  %3432 = vmatprep.subr.bf16.mxu0 0
  %3433 = vmatpush1.bf16.msra.mxu0 %v3408
  %3434 = vmatprep.subr.bf16.mxu0 0
  %3435 = vmatpush1.bf16.msra.mxu0 %v3409
  %3436 = vmatprep.subr.bf16.mxu0 0
  %3437 = vmatpush1.bf16.msra.mxu0 %v3410
  %3438 = vmatprep.subr.bf16.mxu0 0
  %3439 = vmatpush1.bf16.msra.mxu0 %v3411
  %3440 = vmatprep.subr.bf16.mxu0 0
  %3441 = vmatpush1.bf16.msra.mxu0 %v3412
  %3442 = vmatprep.subr.bf16.mxu0 0
  %3443 = vmatpush1.bf16.msra.mxu0 %v3413
  %3444 = vmatprep.subr.bf16.mxu0 0
  %3445 = vmatpush1.bf16.msra.mxu0 %v3414
  %3446 = vmatprep.subr.bf16.mxu0 0
  %3447 = vmatpush1.bf16.msra.mxu0 %v3415
  %3448 = vmatprep.subr.bf16.mxu0 0
  %3449 = vmatpush1.bf16.msra.mxu0 %v3416
  %3450 = vmatprep.subr.bf16.mxu0 0
  %3451 = vmatpush1.bf16.msra.mxu0 %v3417
  %3452 = vmatprep.subr.bf16.mxu0 0
  %3453 = vmatpush1.bf16.msra.mxu0 %v3430
  %3454 = vmatprep.subr.bf16.mxu0 0
  %3455 = vmatpush1.bf16.msra.mxu0 0
  %3456 = vmatprep.subr.bf16.mxu0 0
  %3457 = vmatpush1.bf16.msra.mxu0 0
  %3458 = vmatprep.subr.bf16.mxu0 0
  %3459 = vmatpush1.bf16.msra.mxu0 0
  %3460 = vmatprep.subr.bf16.mxu0 0
  %3461 = vmatpush1.bf16.msra.mxu0 0
  %3462 = vmatprep.subr.bf16.mxu0 0
  %3463 = vmatpush1.bf16.msra.mxu0 0
  %3464 = vmatprep.mubr.bf16.mxu0 %v464
  %3465 = vmatmul.mubr.bf16.gmra.mrb[0].mxu0 %v309
  %v3466 = vpop.f32.mrb[0].mxu0
  %v3467 = vadd.f32 0.0, %v3466
  %v3468 = vpop.f32.mrb[0].mxu0
  %v3469 = vpop.f32.mrb[0].mxu0
  %v3470 = vadd.f32 0.0, %v3469
  %v3471 = vpop.f32.mrb[0].mxu0
  %3472 = vmatprep.mubr.bf16.mxu0 %v467
  %3473 = vmatmul.mubr.bf16.gmra.mrb[0].mxu0 %v311
  %v3474 = vpop.f32.mrb[0].mxu0
  %v3475 = vadd.f32 0.0, %v3474
  %v3476 = vpop.f32.mrb[0].mxu0
  %v3477 = vpop.f32.mrb[0].mxu0
  %v3478 = vadd.f32 0.0, %v3477
  %v3479 = vpop.f32.mrb[0].mxu0
  %3480 = vmatprep.mubr.bf16.mxu0 %v470
  %3481 = vmatmul.mubr.bf16.gmra.mrb[0].mxu0 %v313
  %v3482 = vpop.f32.mrb[0].mxu0
  %v3483 = vadd.f32 0.0, %v3482
  %v3484 = vpop.f32.mrb[0].mxu0
  %v3485 = vpop.f32.mrb[0].mxu0
  %v3486 = vadd.f32 0.0, %v3485
  %v3487 = vpop.f32.mrb[0].mxu0
  %3488 = vmatprep.mubr.bf16.mxu0 %v473
  %3489 = vmatmul.mubr.bf16.gmra.mrb[0].mxu0 %v315
  %v3490 = vpop.f32.mrb[0].mxu0
  %v3491 = vadd.f32 0.0, %v3490
  %v3492 = vpop.f32.mrb[0].mxu0
  %v3493 = vpop.f32.mrb[0].mxu0
  %v3494 = vadd.f32 0.0, %v3493
  %v3495 = vpop.f32.mrb[0].mxu0
  %3496 = vmatprep.mubr.bf16.mxu0 %v476
  %3497 = vmatmul.mubr.bf16.gmra.mrb[0].mxu0 %v317
  %v3498 = vpop.f32.mrb[0].mxu0
  %v3499 = vadd.f32 0.0, %v3498
  %v3500 = vpop.f32.mrb[0].mxu0
  %v3501 = vpop.f32.mrb[0].mxu0
  %v3502 = vadd.f32 0.0, %v3501
  %v3503 = vpop.f32.mrb[0].mxu0
  %3504 = vmatprep.mubr.bf16.mxu0 %v479
  %3505 = vmatmul.mubr.bf16.gmra.mrb[0].mxu0 %v319
  %v3506 = vpop.f32.mrb[0].mxu0
  %v3507 = vadd.f32 0.0, %v3506
  %v3508 = vpop.f32.mrb[0].mxu0
  %v3509 = vpop.f32.mrb[0].mxu0
  %v3510 = vadd.f32 0.0, %v3509
  %v3511 = vpop.f32.mrb[0].mxu0
  %3512 = vmatprep.mubr.bf16.mxu0 %v482
  %3513 = vmatmul.mubr.bf16.gmra.mrb[0].mxu0 %v321
  %v3514 = vpop.f32.mrb[0].mxu0
  %v3515 = vadd.f32 0.0, %v3514
  %v3516 = vpop.f32.mrb[0].mxu0
  %v3517 = vpop.f32.mrb[0].mxu0
  %v3518 = vadd.f32 0.0, %v3517
  %v3519 = vpop.f32.mrb[0].mxu0
  %3520 = vmatprep.mubr.bf16.mxu0 %v485
  %3521 = vmatmul.mubr.bf16.gmra.mrb[0].mxu0 %v323
  %v3522 = vpop.f32.mrb[0].mxu0
  %v3523 = vadd.f32 0.0, %v3522
  %v3524 = vpop.f32.mrb[0].mxu0
  %v3525 = vpop.f32.mrb[0].mxu0
  %v3526 = vadd.f32 0.0, %v3525
  %v3527 = vpop.f32.mrb[0].mxu0
  %3528 = vmatprep.mubr.bf16.mxu0 %v488
  %3529 = vmatmul.mubr.bf16.gmra.mrb[0].mxu0 %v325
  %v3530 = vpop.f32.mrb[0].mxu0
  %v3531 = vadd.f32 0.0, %v3530
  %v3532 = vpop.f32.mrb[0].mxu0
  %v3533 = vpop.f32.mrb[0].mxu0
  %v3534 = vadd.f32 0.0, %v3533
  %v3535 = vpop.f32.mrb[0].mxu0
  %3536 = vmatprep.mubr.bf16.mxu0 %v491
  %3537 = vmatmul.mubr.bf16.gmra.mrb[0].mxu0 %v327
  %v3538 = vpop.f32.mrb[0].mxu0
  %v3539 = vadd.f32 0.0, %v3538
  %v3540 = vpop.f32.mrb[0].mxu0
  %v3541 = vpop.f32.mrb[0].mxu0
  %v3542 = vadd.f32 0.0, %v3541
  %v3543 = vpop.f32.mrb[0].mxu0
  %3544 = vmatprep.mubr.bf16.mxu0 %v494
  %3545 = vmatmul.mubr.bf16.gmra.mrb[0].mxu0 %v329
  %v3546 = vpop.f32.mrb[0].mxu0
  %v3547 = vadd.f32 0.0, %v3546
  %v3548 = vpop.f32.mrb[0].mxu0
  %v3549 = vpop.f32.mrb[0].mxu0
  %v3550 = vadd.f32 0.0, %v3549
  %v3551 = vpop.f32.mrb[0].mxu0
  %3552 = vmatprep.mubr.bf16.mxu0 %v497
  %3553 = vmatmul.mubr.bf16.gmra.mrb[0].mxu0 %v331
  %v3554 = vpop.f32.mrb[0].mxu0
  %v3555 = vadd.f32 0.0, %v3554
  %v3556 = vpop.f32.mrb[0].mxu0
  %v3557 = vpop.f32.mrb[0].mxu0
  %v3558 = vadd.f32 0.0, %v3557
  %v3559 = vpop.f32.mrb[0].mxu0
  %3560 = vmatprep.mubr.bf16.mxu0 %v500
  %3561 = vmatmul.mubr.bf16.gmra.mrb[0].mxu0 %v333
  %v3562 = vpop.f32.mrb[0].mxu0
  %v3563 = vadd.f32 0.0, %v3562
  %v3564 = vpop.f32.mrb[0].mxu0
  %v3565 = vpop.f32.mrb[0].mxu0
  %v3566 = vadd.f32 0.0, %v3565
  %v3567 = vpop.f32.mrb[0].mxu0
  %3568 = vmatprep.mubr.bf16.mxu0 %v503
  %3569 = vmatmul.mubr.bf16.gmra.mrb[0].mxu0 %v335
  %v3570 = vpop.f32.mrb[0].mxu0
  %v3571 = vadd.f32 0.0, %v3570
  %v3572 = vpop.f32.mrb[0].mxu0
  %v3573 = vpop.f32.mrb[0].mxu0
  %v3574 = vadd.f32 0.0, %v3573
  %v3575 = vpop.f32.mrb[0].mxu0
  %3576 = vmatprep.mubr.bf16.mxu0 %v506
  %3577 = vmatmul.mubr.bf16.gmra.mrb[0].mxu0 %v337
  %v3578 = vpop.f32.mrb[0].mxu0
  %v3579 = vadd.f32 0.0, %v3578
  %v3580 = vpop.f32.mrb[0].mxu0
  %v3581 = vpop.f32.mrb[0].mxu0
  %v3582 = vadd.f32 0.0, %v3581
  %v3583 = vpop.f32.mrb[0].mxu0
  %3584 = vmatprep.mubr.bf16.mxu0 %v509
  %3585 = vmatmul.mubr.bf16.gmra.mrb[0].mxu0 %v339
  %v3586 = vpop.f32.mrb[0].mxu0
  %v3587 = vadd.f32 0.0, %v3586
  %v3588 = vpop.f32.mrb[0].mxu0
  %v3589 = vpop.f32.mrb[0].mxu0
  %v3590 = vadd.f32 0.0, %v3589
  %v3591 = vpop.f32.mrb[0].mxu0
  %3592 = vmatprep.mubr.bf16.mxu0 %v512
  %3593 = vmatmul.mubr.bf16.gmra.mrb[0].mxu0 %v341
  %v3594 = vpop.f32.mrb[0].mxu0
  %v3595 = vadd.f32 0.0, %v3594
  %v3596 = vpop.f32.mrb[0].mxu0
  %v3597 = vpop.f32.mrb[0].mxu0
  %v3598 = vadd.f32 0.0, %v3597
  %v3599 = vpop.f32.mrb[0].mxu0
  %3600 = vmatprep.mubr.bf16.mxu0 %v515
  %3601 = vmatmul.mubr.bf16.gmra.mrb[0].mxu0 %v343
  %v3602 = vpop.f32.mrb[0].mxu0
  %v3603 = vadd.f32 0.0, %v3602
  %v3604 = vpop.f32.mrb[0].mxu0
  %v3605 = vpop.f32.mrb[0].mxu0
  %v3606 = vadd.f32 0.0, %v3605
  %v3607 = vpop.f32.mrb[0].mxu0
  %3608 = vmatprep.mubr.bf16.mxu0 %v518
  %3609 = vmatmul.mubr.bf16.gmra.mrb[0].mxu0 %v345
  %v3610 = vpop.f32.mrb[0].mxu0
  %v3611 = vadd.f32 0.0, %v3610
  %v3612 = vpop.f32.mrb[0].mxu0
  %v3613 = vpop.f32.mrb[0].mxu0
  %v3614 = vadd.f32 0.0, %v3613
  %v3615 = vpop.f32.mrb[0].mxu0
  %3616 = vmatprep.mubr.bf16.mxu0 %v521
  %3617 = vmatmul.mubr.bf16.gmra.mrb[0].mxu0 %v347
  %v3618 = vpop.f32.mrb[0].mxu0
  %v3619 = vadd.f32 0.0, %v3618
  %v3620 = vpop.f32.mrb[0].mxu0
  %v3621 = vpop.f32.mrb[0].mxu0
  %v3622 = vadd.f32 0.0, %v3621
  %v3623 = vpop.f32.mrb[0].mxu0
  %3624 = vmatprep.mubr.bf16.mxu0 %v524
  %3625 = vmatmul.mubr.bf16.gmra.mrb[0].mxu0 %v349
  %v3626 = vpop.f32.mrb[0].mxu0
  %v3627 = vadd.f32 0.0, %v3626
  %v3628 = vpop.f32.mrb[0].mxu0
  %v3629 = vpop.f32.mrb[0].mxu0
  %v3630 = vadd.f32 0.0, %v3629
  %v3631 = vpop.f32.mrb[0].mxu0
  %3632 = vmatprep.mubr.bf16.mxu0 %v527
  %3633 = vmatmul.mubr.bf16.gmra.mrb[0].mxu0 %v351
  %v3634 = vpop.f32.mrb[0].mxu0
  %v3635 = vadd.f32 0.0, %v3634
  %v3636 = vpop.f32.mrb[0].mxu0
  %v3637 = vpop.f32.mrb[0].mxu0
  %v3638 = vadd.f32 0.0, %v3637
  %v3639 = vpop.f32.mrb[0].mxu0
  %3640 = vmatprep.mubr.bf16.mxu0 %v530
  %3641 = vmatmul.mubr.bf16.gmra.mrb[0].mxu0 %v353
  %v3642 = vpop.f32.mrb[0].mxu0
  %v3643 = vadd.f32 0.0, %v3642
  %v3644 = vpop.f32.mrb[0].mxu0
  %v3645 = vpop.f32.mrb[0].mxu0
  %v3646 = vadd.f32 0.0, %v3645
  %v3647 = vpop.f32.mrb[0].mxu0
  %3648 = vmatprep.mubr.bf16.mxu0 %v533
  %3649 = vmatmul.mubr.bf16.gmra.mrb[0].mxu0 %v355
  %v3650 = vpop.f32.mrb[0].mxu0
  %v3651 = vadd.f32 0.0, %v3650
  %v3652 = vpop.f32.mrb[0].mxu0
  %v3653 = vpop.f32.mrb[0].mxu0
  %v3654 = vadd.f32 0.0, %v3653
  %v3655 = vpop.f32.mrb[0].mxu0
  %3656 = vmatprep.mubr.bf16.mxu0 %v536
  %3657 = vmatmul.mubr.bf16.gmra.mrb[0].mxu0 %v357
  %v3658 = vpop.f32.mrb[0].mxu0
  %v3659 = vadd.f32 0.0, %v3658
  %v3660 = vpop.f32.mrb[0].mxu0
  %v3661 = vpop.f32.mrb[0].mxu0
  %v3662 = vadd.f32 0.0, %v3661
  %v3663 = vpop.f32.mrb[0].mxu0
  %3664 = vmatprep.mubr.bf16.mxu0 %v539
  %3665 = vmatmul.mubr.bf16.gmra.mrb[0].mxu0 %v359
  %v3666 = vpop.f32.mrb[0].mxu0
  %v3667 = vadd.f32 0.0, %v3666
  %v3668 = vpop.f32.mrb[0].mxu0
  %v3669 = vpop.f32.mrb[0].mxu0
  %v3670 = vadd.f32 0.0, %v3669
  %v3671 = vpop.f32.mrb[0].mxu0
  %3672 = vmatprep.mubr.bf16.mxu0 %v542
  %3673 = vmatmul.mubr.bf16.gmra.mrb[0].mxu0 %v361
  %v3674 = vpop.f32.mrb[0].mxu0
  %v3675 = vadd.f32 0.0, %v3674
  %v3676 = vpop.f32.mrb[0].mxu0
  %v3677 = vpop.f32.mrb[0].mxu0
  %v3678 = vadd.f32 0.0, %v3677
  %v3679 = vpop.f32.mrb[0].mxu0
  %3680 = vmatprep.mubr.bf16.mxu0 %v545
  %3681 = vmatmul.mubr.bf16.gmra.mrb[0].mxu0 %v363
  %v3682 = vpop.f32.mrb[0].mxu0
  %v3683 = vadd.f32 0.0, %v3682
  %v3684 = vpop.f32.mrb[0].mxu0
  %v3685 = vpop.f32.mrb[0].mxu0
  %v3686 = vadd.f32 0.0, %v3685
  %v3687 = vpop.f32.mrb[0].mxu0
  %3688 = vmatprep.mubr.bf16.mxu0 %v548
  %3689 = vmatmul.mubr.bf16.gmra.mrb[0].mxu0 %v365
  %v3690 = vpop.f32.mrb[0].mxu0
  %v3691 = vadd.f32 0.0, %v3690
  %v3692 = vpop.f32.mrb[0].mxu0
  %v3693 = vpop.f32.mrb[0].mxu0
  %v3694 = vadd.f32 0.0, %v3693
  %v3695 = vpop.f32.mrb[0].mxu0
  %3696 = vmatprep.mubr.bf16.mxu0 %v551
  %3697 = vmatmul.mubr.bf16.gmra.mrb[0].mxu0 %v367
  %v3698 = vpop.f32.mrb[0].mxu0
  %v3699 = vadd.f32 0.0, %v3698
  %v3700 = vpop.f32.mrb[0].mxu0
  %v3701 = vpop.f32.mrb[0].mxu0
  %v3702 = vadd.f32 0.0, %v3701
  %v3703 = vpop.f32.mrb[0].mxu0
  %3704 = vdwg.mxu0
  %v3705 = vmax.f32 %v3467, %v3526
  %v3706 = vmax.f32 %v3470, %v3531
  %v3707 = vmax.f32 %v3475, %v3534
  %v3708 = vmax.f32 %v3478, %v3539
  %v3709 = vmax.f32 %v3483, %v3542
  %v3710 = vmax.f32 %v3486, %v3547
  %v3711 = vmax.f32 %v3491, %v3550
  %v3712 = vmax.f32 %v3494, %v3555
  %v3713 = vmax.f32 %v3499, %v3558
  %v3714 = vmax.f32 %v3502, %v3563
  %v3715 = vmax.f32 %v3507, %v3566
  %v3716 = vmax.f32 %v3510, %v3571
  %v3717 = vmax.f32 %v3515, %v3574
  %v3718 = vmax.f32 %v3518, %v3579
  %v3719 = vmax.f32 %v3523, %v3582
  %v3720 = vmax.f32 %v3587, %v3646
  %v3721 = vmax.f32 %v3590, %v3651
  %v3722 = vmax.f32 %v3595, %v3654
  %v3723 = vmax.f32 %v3598, %v3659
  %v3724 = vmax.f32 %v3603, %v3662
  %v3725 = vmax.f32 %v3606, %v3667
  %v3726 = vmax.f32 %v3611, %v3670
  %v3727 = vmax.f32 %v3614, %v3675
  %v3728 = vmax.f32 %v3619, %v3678
  %v3729 = vmax.f32 %v3622, %v3683
  %v3730 = vmax.f32 %v3627, %v3686
  %v3731 = vmax.f32 %v3630, %v3691
  %v3732 = vmax.f32 %v3635, %v3694
  %v3733 = vmax.f32 %v3638, %v3699
  %v3734 = vmax.f32 %v3643, %v3702
  %v3735 = vmax.f32 %v3705, %v3720
  %v3736 = vmax.f32 %v3706, %v3721
  %v3737 = vmax.f32 %v3707, %v3722
  %v3738 = vmax.f32 %v3708, %v3723
  %v3739 = vmax.f32 %v3709, %v3724
  %v3740 = vmax.f32 %v3710, %v3725
  %v3741 = vmax.f32 %v3711, %v3726
  %v3742 = vmax.f32 %v3712, %v3727
  %v3743 = vmax.f32 %v3713, %v3728
  %v3744 = vmax.f32 %v3714, %v3729
  %v3745 = vmax.f32 %v3715, %v3730
  %v3746 = vmax.f32 %v3716, %v3731
  %v3747 = vmax.f32 %v3717, %v3732
  %v3748 = vmax.f32 %v3718, %v3733
  %v3749 = vmax.f32 %v3719, %v3734
  %v3750 = vadd.f32 %v3735, %v878
  %v3751 = vadd.f32 %v3736, %v883
  %v3752 = vadd.f32 %v3737, %v888
  %v3753 = vadd.f32 %v3738, %v893
  %v3754 = vadd.f32 %v3739, %v898
  %v3755 = vadd.f32 %v3740, %v903
  %v3756 = vadd.f32 %v3741, %v908
  %v3757 = vadd.f32 %v3742, %v913
  %v3758 = vadd.f32 %v3743, %v918
  %v3759 = vadd.f32 %v3744, %v923
  %v3760 = vadd.f32 %v3745, %v928
  %v3761 = vadd.f32 %v3746, %v933
  %v3762 = vadd.f32 %v3747, %v938
  %v3763 = vadd.f32 %v3748, %v943
  %v3764 = vadd.f32 %v3749, %v948
  %v3765 = vmax.f32 %v3750, 0.0
  %v3766 = vmax.f32 %v3751, 0.0
  %v3767 = vmax.f32 %v3752, 0.0
  %v3768 = vmax.f32 %v3753, 0.0
  %v3769 = vmax.f32 %v3754, 0.0
  %v3770 = vmax.f32 %v3755, 0.0
  %v3771 = vmax.f32 %v3756, 0.0
  %v3772 = vmax.f32 %v3757, 0.0
  %v3773 = vmax.f32 %v3758, 0.0
  %v3774 = vmax.f32 %v3759, 0.0
  %v3775 = vmax.f32 %v3760, 0.0
  %v3776 = vmax.f32 %v3761, 0.0
  %v3777 = vmax.f32 %v3762, 0.0
  %v3778 = vmax.f32 %v3763, 0.0
  %v3779 = vmax.f32 %v3764, 0.0
  %v3780 = vpack.c.bf16 %v3766, %v3765
  %v3781 = vpack.c.bf16 %v3768, %v3767
  %v3782 = vpack.c.bf16 %v3770, %v3769
  %v3783 = vpack.c.bf16 %v3772, %v3771
  %v3784 = vpack.c.bf16 %v3774, %v3773
  %v3785 = vpack.c.bf16 %v3776, %v3775
  %v3786 = vpack.c.bf16 %v3778, %v3777
  %v3787 = vpack.c.bf16 %v3779, %v3779
  %3788 = vst [vmem:[#allocation2 + $0x168] sm:$0xff] %v3780
  %3789 = vst [vmem:[#allocation2 + $0x170] sm:$0xff] %v3781
  %3790 = vst [vmem:[#allocation2 + $0x178] sm:$0xff] %v3782
  %3791 = vst [vmem:[#allocation2 + $0x180] sm:$0xff] %v3783
  %3792 = vst [vmem:[#allocation2 + $0x188] sm:$0xff] %v3784
  %3793 = vst [vmem:[#allocation2 + $0x190] sm:$0xff] %v3785
  %3794 = vst [vmem:[#allocation2 + $0x198] sm:$0xff] %v3786
  %3795 = vst [vmem:[#allocation2 + $0x1a0] sm:$0xf] %v3787
  %v3796 = vld [vmem:[%s0 + $0xc4] sm:$0xf]
  %v3797 = vld [vmem:[%s0 + $0xc8] sm:$0xf]
  %v3798 = vld [vmem:[%s0 + $0xcc] sm:$0xf]
  %v3799 = vld [vmem:[%s0 + $0xd0] sm:$0xf]
  %v3800 = vld [vmem:[%s0 + $0xd4] sm:$0xf]
  %v3801 = vld [vmem:[%s0 + $0xd8] sm:$0xf]
  %v3802 = vld [vmem:[%s0 + $0xdc] sm:$0xf]
  %v3803 = vld [vmem:[%s0 + $0xe0] sm:$0xf]
  %v3804 = vld [vmem:[%s0 + $0xe4] sm:$0xf]
  %v3805 = vld [vmem:[%s0 + $0xe8] sm:$0xf]
  %v3806 = vld [vmem:[%s0 + $0xec] sm:$0xf]
  %v3807 = vld [vmem:[%s0 + $0xf0] sm:$0xf]
  %v3808 = vld [vmem:[%s0 + $0xf4] sm:$0xf]
  %v3809 = vld [vmem:[%s0 + $0xf8] sm:$0xf]
  %v3810 = vld [vmem:[%s0 + $0xfc] sm:$0xf]
  %v3811 = vld [vmem:[%s0 + $0x100] sm:$0xf]
  %v3812 = vld [vmem:[%s0 + $0x104] sm:$0xf]
  %v3813 = vld [vmem:[%s0 + $0x108] sm:$0xf]
  %v3814 = vld [vmem:[%s0 + $0x10c] sm:$0xf]
  %v3815 = vld [vmem:[%s0 + $0x110] sm:$0xf]
  %v3816 = vld [vmem:[%s0 + $0x114] sm:$0xf]
  %v3838 = vunpack.c.l.b16 %v3796
  %v3839 = vunpack.c.l.b16 %v3797
  %v3840 = vunpack.c.l.b16 %v3798
  %v3841 = vunpack.c.l.b16 %v3799
  %v3842 = vunpack.c.l.b16 %v3800
  %v3843 = vunpack.c.l.b16 %v3801
  %v3844 = vunpack.c.l.b16 %v3802
  %v3845 = vunpack.c.l.b16 %v3803
  %v3846 = vunpack.c.l.b16 %v3804
  %v3847 = vunpack.c.l.b16 %v3805
  %v3848 = vunpack.c.l.b16 %v3806
  %v3849 = vunpack.c.l.b16 %v3807
  %v3850 = vunpack.c.l.b16 %v3808
  %v3851 = vunpack.c.l.b16 %v3809
  %v3852 = vunpack.c.l.b16 %v3810
  %v3853 = vunpack.c.l.b16 %v3811
  %v3854 = vunpack.c.l.b16 %v3812
  %v3855 = vunpack.c.l.b16 %v3813
  %v3856 = vunpack.c.l.b16 %v3814
  %v3857 = vunpack.c.l.b16 %v3815
  %v3858 = vunpack.c.l.b16 %v3816
  %v3859 = vpack.c.b16 %v3839, %v3838
  %v3860 = vpack.c.b16 %v3841, %v3840
  %v3861 = vpack.c.b16 %v3843, %v3842
  %v3862 = vpack.c.b16 %v3845, %v3844
  %v3863 = vpack.c.b16 %v3847, %v3846
  %v3864 = vpack.c.b16 %v3849, %v3848
  %v3865 = vpack.c.b16 %v3851, %v3850
  %v3866 = vpack.c.b16 %v3853, %v3852
  %v3867 = vpack.c.b16 %v3855, %v3854
  %v3868 = vpack.c.b16 %v3857, %v3856
  %v3869 = vpack.c.b16 %v3858, %v3858
  %v3881 = vsel %vm553, %v3869, 0
  %3883 = vmatprep.subr.bf16.mxu0 0
  %3884 = vmatpush1.bf16.msra.mxu0 %v3859
  %3885 = vmatprep.subr.bf16.mxu0 0
  %3886 = vmatpush1.bf16.msra.mxu0 %v3860
  %3887 = vmatprep.subr.bf16.mxu0 0
  %3888 = vmatpush1.bf16.msra.mxu0 %v3861
  %3889 = vmatprep.subr.bf16.mxu0 0
  %3890 = vmatpush1.bf16.msra.mxu0 %v3862
  %3891 = vmatprep.subr.bf16.mxu0 0
  %3892 = vmatpush1.bf16.msra.mxu0 %v3863
  %3893 = vmatprep.subr.bf16.mxu0 0
  %3894 = vmatpush1.bf16.msra.mxu0 %v3864
  %3895 = vmatprep.subr.bf16.mxu0 0
  %3896 = vmatpush1.bf16.msra.mxu0 %v3865
  %3897 = vmatprep.subr.bf16.mxu0 0
  %3898 = vmatpush1.bf16.msra.mxu0 %v3866
  %3899 = vmatprep.subr.bf16.mxu0 0
  %3900 = vmatpush1.bf16.msra.mxu0 %v3867
  %3901 = vmatprep.subr.bf16.mxu0 0
  %3902 = vmatpush1.bf16.msra.mxu0 %v3868
  %3903 = vmatprep.subr.bf16.mxu0 0
  %3904 = vmatpush1.bf16.msra.mxu0 %v3881
  %3905 = vmatprep.subr.bf16.mxu0 0
  %3906 = vmatpush1.bf16.msra.mxu0 0
  %3907 = vmatprep.subr.bf16.mxu0 0
  %3908 = vmatpush1.bf16.msra.mxu0 0
  %3909 = vmatprep.subr.bf16.mxu0 0
  %3910 = vmatpush1.bf16.msra.mxu0 0
  %3911 = vmatprep.subr.bf16.mxu0 0
  %3912 = vmatpush1.bf16.msra.mxu0 0
  %3913 = vmatprep.subr.bf16.mxu0 0
  %3914 = vmatpush1.bf16.msra.mxu0 0
  %3915 = vmatprep.mubr.bf16.mxu0 %v464
  %3916 = vmatmul.mubr.bf16.gmra.mrb[0].mxu0 %v309
  %v3917 = vpop.f32.mrb[0].mxu0
  %v3918 = vadd.f32 0.0, %v3917
  %v3919 = vpop.f32.mrb[0].mxu0
  %v3920 = vpop.f32.mrb[0].mxu0
  %v3921 = vadd.f32 0.0, %v3920
  %v3922 = vpop.f32.mrb[0].mxu0
  %3923 = vmatprep.mubr.bf16.mxu0 %v467
  %3924 = vmatmul.mubr.bf16.gmra.mrb[0].mxu0 %v311
  %v3925 = vpop.f32.mrb[0].mxu0
  %v3926 = vadd.f32 0.0, %v3925
  %v3927 = vpop.f32.mrb[0].mxu0
  %v3928 = vpop.f32.mrb[0].mxu0
  %v3929 = vadd.f32 0.0, %v3928
  %v3930 = vpop.f32.mrb[0].mxu0
  %3931 = vmatprep.mubr.bf16.mxu0 %v470
  %3932 = vmatmul.mubr.bf16.gmra.mrb[0].mxu0 %v313
  %v3933 = vpop.f32.mrb[0].mxu0
  %v3934 = vadd.f32 0.0, %v3933
  %v3935 = vpop.f32.mrb[0].mxu0
  %v3936 = vpop.f32.mrb[0].mxu0
  %v3937 = vadd.f32 0.0, %v3936
  %v3938 = vpop.f32.mrb[0].mxu0
  %3939 = vmatprep.mubr.bf16.mxu0 %v473
  %3940 = vmatmul.mubr.bf16.gmra.mrb[0].mxu0 %v315
  %v3941 = vpop.f32.mrb[0].mxu0
  %v3942 = vadd.f32 0.0, %v3941
  %v3943 = vpop.f32.mrb[0].mxu0
  %v3944 = vpop.f32.mrb[0].mxu0
  %v3945 = vadd.f32 0.0, %v3944
  %v3946 = vpop.f32.mrb[0].mxu0
  %3947 = vmatprep.mubr.bf16.mxu0 %v476
  %3948 = vmatmul.mubr.bf16.gmra.mrb[0].mxu0 %v317
  %v3949 = vpop.f32.mrb[0].mxu0
  %v3950 = vadd.f32 0.0, %v3949
  %v3951 = vpop.f32.mrb[0].mxu0
  %v3952 = vpop.f32.mrb[0].mxu0
  %v3953 = vadd.f32 0.0, %v3952
  %v3954 = vpop.f32.mrb[0].mxu0
  %3955 = vmatprep.mubr.bf16.mxu0 %v479
  %3956 = vmatmul.mubr.bf16.gmra.mrb[0].mxu0 %v319
  %v3957 = vpop.f32.mrb[0].mxu0
  %v3958 = vadd.f32 0.0, %v3957
  %v3959 = vpop.f32.mrb[0].mxu0
  %v3960 = vpop.f32.mrb[0].mxu0
  %v3961 = vadd.f32 0.0, %v3960
  %v3962 = vpop.f32.mrb[0].mxu0
  %3963 = vmatprep.mubr.bf16.mxu0 %v482
  %3964 = vmatmul.mubr.bf16.gmra.mrb[0].mxu0 %v321
  %v3965 = vpop.f32.mrb[0].mxu0
  %v3966 = vadd.f32 0.0, %v3965
  %v3967 = vpop.f32.mrb[0].mxu0
  %v3968 = vpop.f32.mrb[0].mxu0
  %v3969 = vadd.f32 0.0, %v3968
  %v3970 = vpop.f32.mrb[0].mxu0
  %3971 = vmatprep.mubr.bf16.mxu0 %v485
  %3972 = vmatmul.mubr.bf16.gmra.mrb[0].mxu0 %v323
  %v3973 = vpop.f32.mrb[0].mxu0
  %v3974 = vadd.f32 0.0, %v3973
  %v3975 = vpop.f32.mrb[0].mxu0
  %v3976 = vpop.f32.mrb[0].mxu0
  %v3977 = vadd.f32 0.0, %v3976
  %v3978 = vpop.f32.mrb[0].mxu0
  %3979 = vmatprep.mubr.bf16.mxu0 %v488
  %3980 = vmatmul.mubr.bf16.gmra.mrb[0].mxu0 %v325
  %v3981 = vpop.f32.mrb[0].mxu0
  %v3982 = vadd.f32 0.0, %v3981
  %v3983 = vpop.f32.mrb[0].mxu0
  %v3984 = vpop.f32.mrb[0].mxu0
  %v3985 = vadd.f32 0.0, %v3984
  %v3986 = vpop.f32.mrb[0].mxu0
  %3987 = vmatprep.mubr.bf16.mxu0 %v491
  %3988 = vmatmul.mubr.bf16.gmra.mrb[0].mxu0 %v327
  %v3989 = vpop.f32.mrb[0].mxu0
  %v3990 = vadd.f32 0.0, %v3989
  %v3991 = vpop.f32.mrb[0].mxu0
  %v3992 = vpop.f32.mrb[0].mxu0
  %v3993 = vadd.f32 0.0, %v3992
  %v3994 = vpop.f32.mrb[0].mxu0
  %3995 = vmatprep.mubr.bf16.mxu0 %v494
  %3996 = vmatmul.mubr.bf16.gmra.mrb[0].mxu0 %v329
  %v3997 = vpop.f32.mrb[0].mxu0
  %v3998 = vadd.f32 0.0, %v3997
  %v3999 = vpop.f32.mrb[0].mxu0
  %v4000 = vpop.f32.mrb[0].mxu0
  %v4001 = vadd.f32 0.0, %v4000
  %v4002 = vpop.f32.mrb[0].mxu0
  %4003 = vmatprep.mubr.bf16.mxu0 %v497
  %4004 = vmatmul.mubr.bf16.gmra.mrb[0].mxu0 %v331
  %v4005 = vpop.f32.mrb[0].mxu0
  %v4006 = vadd.f32 0.0, %v4005
  %v4007 = vpop.f32.mrb[0].mxu0
  %v4008 = vpop.f32.mrb[0].mxu0
  %v4009 = vadd.f32 0.0, %v4008
  %v4010 = vpop.f32.mrb[0].mxu0
  %4011 = vmatprep.mubr.bf16.mxu0 %v500
  %4012 = vmatmul.mubr.bf16.gmra.mrb[0].mxu0 %v333
  %v4013 = vpop.f32.mrb[0].mxu0
  %v4014 = vadd.f32 0.0, %v4013
  %v4015 = vpop.f32.mrb[0].mxu0
  %v4016 = vpop.f32.mrb[0].mxu0
  %v4017 = vadd.f32 0.0, %v4016
  %v4018 = vpop.f32.mrb[0].mxu0
  %4019 = vmatprep.mubr.bf16.mxu0 %v503
  %4020 = vmatmul.mubr.bf16.gmra.mrb[0].mxu0 %v335
  %v4021 = vpop.f32.mrb[0].mxu0
  %v4022 = vadd.f32 0.0, %v4021
  %v4023 = vpop.f32.mrb[0].mxu0
  %v4024 = vpop.f32.mrb[0].mxu0
  %v4025 = vadd.f32 0.0, %v4024
  %v4026 = vpop.f32.mrb[0].mxu0
  %4027 = vmatprep.mubr.bf16.mxu0 %v506
  %4028 = vmatmul.mubr.bf16.gmra.mrb[0].mxu0 %v337
  %v4029 = vpop.f32.mrb[0].mxu0
  %v4030 = vadd.f32 0.0, %v4029
  %v4031 = vpop.f32.mrb[0].mxu0
  %v4032 = vpop.f32.mrb[0].mxu0
  %v4033 = vadd.f32 0.0, %v4032
  %v4034 = vpop.f32.mrb[0].mxu0
  %4035 = vmatprep.mubr.bf16.mxu0 %v509
  %4036 = vmatmul.mubr.bf16.gmra.mrb[0].mxu0 %v339
  %v4037 = vpop.f32.mrb[0].mxu0
  %v4038 = vadd.f32 0.0, %v4037
  %v4039 = vpop.f32.mrb[0].mxu0
  %v4040 = vpop.f32.mrb[0].mxu0
  %v4041 = vadd.f32 0.0, %v4040
  %v4042 = vpop.f32.mrb[0].mxu0
  %4043 = vmatprep.mubr.bf16.mxu0 %v512
  %4044 = vmatmul.mubr.bf16.gmra.mrb[0].mxu0 %v341
  %v4045 = vpop.f32.mrb[0].mxu0
  %v4046 = vadd.f32 0.0, %v4045
  %v4047 = vpop.f32.mrb[0].mxu0
  %v4048 = vpop.f32.mrb[0].mxu0
  %v4049 = vadd.f32 0.0, %v4048
  %v4050 = vpop.f32.mrb[0].mxu0
  %4051 = vmatprep.mubr.bf16.mxu0 %v515
  %4052 = vmatmul.mubr.bf16.gmra.mrb[0].mxu0 %v343
  %v4053 = vpop.f32.mrb[0].mxu0
  %v4054 = vadd.f32 0.0, %v4053
  %v4055 = vpop.f32.mrb[0].mxu0
  %v4056 = vpop.f32.mrb[0].mxu0
  %v4057 = vadd.f32 0.0, %v4056
  %v4058 = vpop.f32.mrb[0].mxu0
  %4059 = vmatprep.mubr.bf16.mxu0 %v518
  %4060 = vmatmul.mubr.bf16.gmra.mrb[0].mxu0 %v345
  %v4061 = vpop.f32.mrb[0].mxu0
  %v4062 = vadd.f32 0.0, %v4061
  %v4063 = vpop.f32.mrb[0].mxu0
  %v4064 = vpop.f32.mrb[0].mxu0
  %v4065 = vadd.f32 0.0, %v4064
  %v4066 = vpop.f32.mrb[0].mxu0
  %4067 = vmatprep.mubr.bf16.mxu0 %v521
  %4068 = vmatmul.mubr.bf16.gmra.mrb[0].mxu0 %v347
  %v4069 = vpop.f32.mrb[0].mxu0
  %v4070 = vadd.f32 0.0, %v4069
  %v4071 = vpop.f32.mrb[0].mxu0
  %v4072 = vpop.f32.mrb[0].mxu0
  %v4073 = vadd.f32 0.0, %v4072
  %v4074 = vpop.f32.mrb[0].mxu0
  %4075 = vmatprep.mubr.bf16.mxu0 %v524
  %4076 = vmatmul.mubr.bf16.gmra.mrb[0].mxu0 %v349
  %v4077 = vpop.f32.mrb[0].mxu0
  %v4078 = vadd.f32 0.0, %v4077
  %v4079 = vpop.f32.mrb[0].mxu0
  %v4080 = vpop.f32.mrb[0].mxu0
  %v4081 = vadd.f32 0.0, %v4080
  %v4082 = vpop.f32.mrb[0].mxu0
  %4083 = vmatprep.mubr.bf16.mxu0 %v527
  %4084 = vmatmul.mubr.bf16.gmra.mrb[0].mxu0 %v351
  %v4085 = vpop.f32.mrb[0].mxu0
  %v4086 = vadd.f32 0.0, %v4085
  %v4087 = vpop.f32.mrb[0].mxu0
  %v4088 = vpop.f32.mrb[0].mxu0
  %v4089 = vadd.f32 0.0, %v4088
  %v4090 = vpop.f32.mrb[0].mxu0
  %4091 = vmatprep.mubr.bf16.mxu0 %v530
  %4092 = vmatmul.mubr.bf16.gmra.mrb[0].mxu0 %v353
  %v4093 = vpop.f32.mrb[0].mxu0
  %v4094 = vadd.f32 0.0, %v4093
  %v4095 = vpop.f32.mrb[0].mxu0
  %v4096 = vpop.f32.mrb[0].mxu0
  %v4097 = vadd.f32 0.0, %v4096
  %v4098 = vpop.f32.mrb[0].mxu0
  %4099 = vmatprep.mubr.bf16.mxu0 %v533
  %4100 = vmatmul.mubr.bf16.gmra.mrb[0].mxu0 %v355
  %v4101 = vpop.f32.mrb[0].mxu0
  %v4102 = vadd.f32 0.0, %v4101
  %v4103 = vpop.f32.mrb[0].mxu0
  %v4104 = vpop.f32.mrb[0].mxu0
  %v4105 = vadd.f32 0.0, %v4104
  %v4106 = vpop.f32.mrb[0].mxu0
  %4107 = vmatprep.mubr.bf16.mxu0 %v536
  %4108 = vmatmul.mubr.bf16.gmra.mrb[0].mxu0 %v357
  %v4109 = vpop.f32.mrb[0].mxu0
  %v4110 = vadd.f32 0.0, %v4109
  %v4111 = vpop.f32.mrb[0].mxu0
  %v4112 = vpop.f32.mrb[0].mxu0
  %v4113 = vadd.f32 0.0, %v4112
  %v4114 = vpop.f32.mrb[0].mxu0
  %4115 = vmatprep.mubr.bf16.mxu0 %v539
  %4116 = vmatmul.mubr.bf16.gmra.mrb[0].mxu0 %v359
  %v4117 = vpop.f32.mrb[0].mxu0
  %v4118 = vadd.f32 0.0, %v4117
  %v4119 = vpop.f32.mrb[0].mxu0
  %v4120 = vpop.f32.mrb[0].mxu0
  %v4121 = vadd.f32 0.0, %v4120
  %v4122 = vpop.f32.mrb[0].mxu0
  %4123 = vmatprep.mubr.bf16.mxu0 %v542
  %4124 = vmatmul.mubr.bf16.gmra.mrb[0].mxu0 %v361
  %v4125 = vpop.f32.mrb[0].mxu0
  %v4126 = vadd.f32 0.0, %v4125
  %v4127 = vpop.f32.mrb[0].mxu0
  %v4128 = vpop.f32.mrb[0].mxu0
  %v4129 = vadd.f32 0.0, %v4128
  %v4130 = vpop.f32.mrb[0].mxu0
  %4131 = vmatprep.mubr.bf16.mxu0 %v545
  %4132 = vmatmul.mubr.bf16.gmra.mrb[0].mxu0 %v363
  %v4133 = vpop.f32.mrb[0].mxu0
  %v4134 = vadd.f32 0.0, %v4133
  %v4135 = vpop.f32.mrb[0].mxu0
  %v4136 = vpop.f32.mrb[0].mxu0
  %v4137 = vadd.f32 0.0, %v4136
  %v4138 = vpop.f32.mrb[0].mxu0
  %4139 = vmatprep.mubr.bf16.mxu0 %v548
  %4140 = vmatmul.mubr.bf16.gmra.mrb[0].mxu0 %v365
  %v4141 = vpop.f32.mrb[0].mxu0
  %v4142 = vadd.f32 0.0, %v4141
  %v4143 = vpop.f32.mrb[0].mxu0
  %v4144 = vpop.f32.mrb[0].mxu0
  %v4145 = vadd.f32 0.0, %v4144
  %v4146 = vpop.f32.mrb[0].mxu0
  %4147 = vmatprep.mubr.bf16.mxu0 %v551
  %4148 = vmatmul.mubr.bf16.gmra.mrb[0].mxu0 %v367
  %v4149 = vpop.f32.mrb[0].mxu0
  %v4150 = vadd.f32 0.0, %v4149
  %v4151 = vpop.f32.mrb[0].mxu0
  %v4152 = vpop.f32.mrb[0].mxu0
  %v4153 = vadd.f32 0.0, %v4152
  %v4154 = vpop.f32.mrb[0].mxu0
  %4155 = vdwg.mxu0
  %v4156 = vmax.f32 %v3918, %v3977
  %v4157 = vmax.f32 %v3921, %v3982
  %v4158 = vmax.f32 %v3926, %v3985
  %v4159 = vmax.f32 %v3929, %v3990
  %v4160 = vmax.f32 %v3934, %v3993
  %v4161 = vmax.f32 %v3937, %v3998
  %v4162 = vmax.f32 %v3942, %v4001
  %v4163 = vmax.f32 %v3945, %v4006
  %v4164 = vmax.f32 %v3950, %v4009
  %v4165 = vmax.f32 %v3953, %v4014
  %v4166 = vmax.f32 %v3958, %v4017
  %v4167 = vmax.f32 %v3961, %v4022
  %v4168 = vmax.f32 %v3966, %v4025
  %v4169 = vmax.f32 %v3969, %v4030
  %v4170 = vmax.f32 %v3974, %v4033
  %v4171 = vmax.f32 %v4038, %v4097
  %v4172 = vmax.f32 %v4041, %v4102
  %v4173 = vmax.f32 %v4046, %v4105
  %v4174 = vmax.f32 %v4049, %v4110
  %v4175 = vmax.f32 %v4054, %v4113
  %v4176 = vmax.f32 %v4057, %v4118
  %v4177 = vmax.f32 %v4062, %v4121
  %v4178 = vmax.f32 %v4065, %v4126
  %v4179 = vmax.f32 %v4070, %v4129
  %v4180 = vmax.f32 %v4073, %v4134
  %v4181 = vmax.f32 %v4078, %v4137
  %v4182 = vmax.f32 %v4081, %v4142
  %v4183 = vmax.f32 %v4086, %v4145
  %v4184 = vmax.f32 %v4089, %v4150
  %v4185 = vmax.f32 %v4094, %v4153
  %v4186 = vmax.f32 %v4156, %v4171
  %v4187 = vmax.f32 %v4157, %v4172
  %v4188 = vmax.f32 %v4158, %v4173
  %v4189 = vmax.f32 %v4159, %v4174
  %v4190 = vmax.f32 %v4160, %v4175
  %v4191 = vmax.f32 %v4161, %v4176
  %v4192 = vmax.f32 %v4162, %v4177
  %v4193 = vmax.f32 %v4163, %v4178
  %v4194 = vmax.f32 %v4164, %v4179
  %v4195 = vmax.f32 %v4165, %v4180
  %v4196 = vmax.f32 %v4166, %v4181
  %v4197 = vmax.f32 %v4167, %v4182
  %v4198 = vmax.f32 %v4168, %v4183
  %v4199 = vmax.f32 %v4169, %v4184
  %v4200 = vmax.f32 %v4170, %v4185
  %v4201 = vadd.f32 %v4186, %v878
  %v4202 = vadd.f32 %v4187, %v883
  %v4203 = vadd.f32 %v4188, %v888
  %v4204 = vadd.f32 %v4189, %v893
  %v4205 = vadd.f32 %v4190, %v898
  %v4206 = vadd.f32 %v4191, %v903
  %v4207 = vadd.f32 %v4192, %v908
  %v4208 = vadd.f32 %v4193, %v913
  %v4209 = vadd.f32 %v4194, %v918
  %v4210 = vadd.f32 %v4195, %v923
  %v4211 = vadd.f32 %v4196, %v928
  %v4212 = vadd.f32 %v4197, %v933
  %v4213 = vadd.f32 %v4198, %v938
  %v4214 = vadd.f32 %v4199, %v943
  %v4215 = vadd.f32 %v4200, %v948
  %v4216 = vmax.f32 %v4201, 0.0
  %v4217 = vmax.f32 %v4202, 0.0
  %v4218 = vmax.f32 %v4203, 0.0
  %v4219 = vmax.f32 %v4204, 0.0
  %v4220 = vmax.f32 %v4205, 0.0
  %v4221 = vmax.f32 %v4206, 0.0
  %v4222 = vmax.f32 %v4207, 0.0
  %v4223 = vmax.f32 %v4208, 0.0
  %v4224 = vmax.f32 %v4209, 0.0
  %v4225 = vmax.f32 %v4210, 0.0
  %v4226 = vmax.f32 %v4211, 0.0
  %v4227 = vmax.f32 %v4212, 0.0
  %v4228 = vmax.f32 %v4213, 0.0
  %v4229 = vmax.f32 %v4214, 0.0
  %v4230 = vmax.f32 %v4215, 0.0
  %v4231 = vpack.c.bf16 %v4217, %v4216
  %v4232 = vpack.c.bf16 %v4219, %v4218
  %v4233 = vpack.c.bf16 %v4221, %v4220
  %v4234 = vpack.c.bf16 %v4223, %v4222
  %v4235 = vpack.c.bf16 %v4225, %v4224
  %v4236 = vpack.c.bf16 %v4227, %v4226
  %v4237 = vpack.c.bf16 %v4229, %v4228
  %v4238 = vpack.c.bf16 %v4230, %v4230
  %v4247 = vrot.slane %v4231, 4
  %v4248 = vrot.slane %v4232, 4
  %v4249 = vsel %vm1447, %v4247, %v4248
  %v4250 = vrot.slane %v4233, 4
  %v4251 = vsel %vm1447, %v4248, %v4250
  %v4252 = vrot.slane %v4234, 4
  %v4253 = vsel %vm1447, %v4250, %v4252
  %v4254 = vrot.slane %v4235, 4
  %v4255 = vsel %vm1447, %v4252, %v4254
  %v4256 = vrot.slane %v4236, 4
  %v4257 = vsel %vm1447, %v4254, %v4256
  %v4258 = vrot.slane %v4237, 4
  %v4259 = vsel %vm1447, %v4256, %v4258
  %v4260 = vrot.slane %v4238, 4
  %v4261 = vsel %vm1447, %v4258, %v4260
  %4270 = vst [vmem:[#allocation2 + $0x1a0] sm:$0xf0] %v4247
  %4271 = vst [vmem:[#allocation2 + $0x1a8] sm:$0xff] %v4249
  %4272 = vst [vmem:[#allocation2 + $0x1b0] sm:$0xff] %v4251
  %4273 = vst [vmem:[#allocation2 + $0x1b8] sm:$0xff] %v4253
  %4274 = vst [vmem:[#allocation2 + $0x1c0] sm:$0xff] %v4255
  %4275 = vst [vmem:[#allocation2 + $0x1c8] sm:$0xff] %v4257
  %4276 = vst [vmem:[#allocation2 + $0x1d0] sm:$0xff] %v4259
  %4277 = vst [vmem:[#allocation2 + $0x1d8] sm:$0xff] %v4261
  %v4278 = vld [vmem:[%s0 + $0xe0] sm:$0xf]
  %v4279 = vld [vmem:[%s0 + $0xe4] sm:$0xf]
  %v4280 = vld [vmem:[%s0 + $0xe8] sm:$0xf]
  %v4281 = vld [vmem:[%s0 + $0xec] sm:$0xf]
  %v4282 = vld [vmem:[%s0 + $0xf0] sm:$0xf]
  %v4283 = vld [vmem:[%s0 + $0xf4] sm:$0xf]
  %v4284 = vld [vmem:[%s0 + $0xf8] sm:$0xf]
  %v4285 = vld [vmem:[%s0 + $0xfc] sm:$0xf]
  %v4286 = vld [vmem:[%s0 + $0x100] sm:$0xf]
  %v4287 = vld [vmem:[%s0 + $0x104] sm:$0xf]
  %v4288 = vld [vmem:[%s0 + $0x108] sm:$0xf]
  %v4289 = vld [vmem:[%s0 + $0x10c] sm:$0xf]
  %v4290 = vld [vmem:[%s0 + $0x110] sm:$0xf]
  %v4291 = vld [vmem:[%s0 + $0x114] sm:$0xf]
  %v4292 = vld [vmem:[%s0 + $0x118] sm:$0xf]
  %v4293 = vld [vmem:[%s0 + $0x11c] sm:$0xf]
  %v4294 = vld [vmem:[%s0 + $0x120] sm:$0xf]
  %v4295 = vld [vmem:[%s0 + $0x124] sm:$0xf]
  %v4296 = vld [vmem:[%s0 + $0x128] sm:$0xf]
  %v4297 = vld [vmem:[%s0 + $0x12c] sm:$0xf]
  %v4298 = vld [vmem:[%s0 + $0x130] sm:$0xf]
  %v4320 = vunpack.c.l.b16 %v4278
  %v4321 = vunpack.c.l.b16 %v4279
  %v4322 = vunpack.c.l.b16 %v4280
  %v4323 = vunpack.c.l.b16 %v4281
  %v4324 = vunpack.c.l.b16 %v4282
  %v4325 = vunpack.c.l.b16 %v4283
  %v4326 = vunpack.c.l.b16 %v4284
  %v4327 = vunpack.c.l.b16 %v4285
  %v4328 = vunpack.c.l.b16 %v4286
  %v4329 = vunpack.c.l.b16 %v4287
  %v4330 = vunpack.c.l.b16 %v4288
  %v4331 = vunpack.c.l.b16 %v4289
  %v4332 = vunpack.c.l.b16 %v4290
  %v4333 = vunpack.c.l.b16 %v4291
  %v4334 = vunpack.c.l.b16 %v4292
  %v4335 = vunpack.c.l.b16 %v4293
  %v4336 = vunpack.c.l.b16 %v4294
  %v4337 = vunpack.c.l.b16 %v4295
  %v4338 = vunpack.c.l.b16 %v4296
  %v4339 = vunpack.c.l.b16 %v4297
  %v4340 = vunpack.c.l.b16 %v4298
  %v4341 = vpack.c.b16 %v4321, %v4320
  %v4342 = vpack.c.b16 %v4323, %v4322
  %v4343 = vpack.c.b16 %v4325, %v4324
  %v4344 = vpack.c.b16 %v4327, %v4326
  %v4345 = vpack.c.b16 %v4329, %v4328
  %v4346 = vpack.c.b16 %v4331, %v4330
  %v4347 = vpack.c.b16 %v4333, %v4332
  %v4348 = vpack.c.b16 %v4335, %v4334
  %v4349 = vpack.c.b16 %v4337, %v4336
  %v4350 = vpack.c.b16 %v4339, %v4338
  %v4351 = vpack.c.b16 %v4340, %v4340
  %v4363 = vsel %vm553, %v4351, 0
  %4365 = vmatprep.subr.bf16.mxu0 0
  %4366 = vmatpush1.bf16.msra.mxu0 %v4341
  %4367 = vmatprep.subr.bf16.mxu0 0
  %4368 = vmatpush1.bf16.msra.mxu0 %v4342
  %4369 = vmatprep.subr.bf16.mxu0 0
  %4370 = vmatpush1.bf16.msra.mxu0 %v4343
  %4371 = vmatprep.subr.bf16.mxu0 0
  %4372 = vmatpush1.bf16.msra.mxu0 %v4344
  %4373 = vmatprep.subr.bf16.mxu0 0
  %4374 = vmatpush1.bf16.msra.mxu0 %v4345
  %4375 = vmatprep.subr.bf16.mxu0 0
  %4376 = vmatpush1.bf16.msra.mxu0 %v4346
  %4377 = vmatprep.subr.bf16.mxu0 0
  %4378 = vmatpush1.bf16.msra.mxu0 %v4347
  %4379 = vmatprep.subr.bf16.mxu0 0
  %4380 = vmatpush1.bf16.msra.mxu0 %v4348
  %4381 = vmatprep.subr.bf16.mxu0 0
  %4382 = vmatpush1.bf16.msra.mxu0 %v4349
  %4383 = vmatprep.subr.bf16.mxu0 0
  %4384 = vmatpush1.bf16.msra.mxu0 %v4350
  %4385 = vmatprep.subr.bf16.mxu0 0
  %4386 = vmatpush1.bf16.msra.mxu0 %v4363
  %4387 = vmatprep.subr.bf16.mxu0 0
  %4388 = vmatpush1.bf16.msra.mxu0 0
  %4389 = vmatprep.subr.bf16.mxu0 0
  %4390 = vmatpush1.bf16.msra.mxu0 0
  %4391 = vmatprep.subr.bf16.mxu0 0
  %4392 = vmatpush1.bf16.msra.mxu0 0
  %4393 = vmatprep.subr.bf16.mxu0 0
  %4394 = vmatpush1.bf16.msra.mxu0 0
  %4395 = vmatprep.subr.bf16.mxu0 0
  %4396 = vmatpush1.bf16.msra.mxu0 0
  %4397 = vmatprep.mubr.bf16.mxu0 %v464
  %4398 = vmatmul.mubr.bf16.gmra.mrb[0].mxu0 %v309
  %v4399 = vpop.f32.mrb[0].mxu0
  %v4400 = vadd.f32 0.0, %v4399
  %v4401 = vpop.f32.mrb[0].mxu0
  %v4402 = vpop.f32.mrb[0].mxu0
  %v4403 = vadd.f32 0.0, %v4402
  %v4404 = vpop.f32.mrb[0].mxu0
  %4405 = vmatprep.mubr.bf16.mxu0 %v467
  %4406 = vmatmul.mubr.bf16.gmra.mrb[0].mxu0 %v311
  %v4407 = vpop.f32.mrb[0].mxu0
  %v4408 = vadd.f32 0.0, %v4407
  %v4409 = vpop.f32.mrb[0].mxu0
  %v4410 = vpop.f32.mrb[0].mxu0
  %v4411 = vadd.f32 0.0, %v4410
  %v4412 = vpop.f32.mrb[0].mxu0
  %4413 = vmatprep.mubr.bf16.mxu0 %v470
  %4414 = vmatmul.mubr.bf16.gmra.mrb[0].mxu0 %v313
  %v4415 = vpop.f32.mrb[0].mxu0
  %v4416 = vadd.f32 0.0, %v4415
  %v4417 = vpop.f32.mrb[0].mxu0
  %v4418 = vpop.f32.mrb[0].mxu0
  %v4419 = vadd.f32 0.0, %v4418
  %v4420 = vpop.f32.mrb[0].mxu0
  %4421 = vmatprep.mubr.bf16.mxu0 %v473
  %4422 = vmatmul.mubr.bf16.gmra.mrb[0].mxu0 %v315
  %v4423 = vpop.f32.mrb[0].mxu0
  %v4424 = vadd.f32 0.0, %v4423
  %v4425 = vpop.f32.mrb[0].mxu0
  %v4426 = vpop.f32.mrb[0].mxu0
  %v4427 = vadd.f32 0.0, %v4426
  %v4428 = vpop.f32.mrb[0].mxu0
  %4429 = vmatprep.mubr.bf16.mxu0 %v476
  %4430 = vmatmul.mubr.bf16.gmra.mrb[0].mxu0 %v317
  %v4431 = vpop.f32.mrb[0].mxu0
  %v4432 = vadd.f32 0.0, %v4431
  %v4433 = vpop.f32.mrb[0].mxu0
  %v4434 = vpop.f32.mrb[0].mxu0
  %v4435 = vadd.f32 0.0, %v4434
  %v4436 = vpop.f32.mrb[0].mxu0
  %4437 = vmatprep.mubr.bf16.mxu0 %v479
  %4438 = vmatmul.mubr.bf16.gmra.mrb[0].mxu0 %v319
  %v4439 = vpop.f32.mrb[0].mxu0
  %v4440 = vadd.f32 0.0, %v4439
  %v4441 = vpop.f32.mrb[0].mxu0
  %v4442 = vpop.f32.mrb[0].mxu0
  %v4443 = vadd.f32 0.0, %v4442
  %v4444 = vpop.f32.mrb[0].mxu0
  %4445 = vmatprep.mubr.bf16.mxu0 %v482
  %4446 = vmatmul.mubr.bf16.gmra.mrb[0].mxu0 %v321
  %v4447 = vpop.f32.mrb[0].mxu0
  %v4448 = vadd.f32 0.0, %v4447
  %v4449 = vpop.f32.mrb[0].mxu0
  %v4450 = vpop.f32.mrb[0].mxu0
  %v4451 = vadd.f32 0.0, %v4450
  %v4452 = vpop.f32.mrb[0].mxu0
  %4453 = vmatprep.mubr.bf16.mxu0 %v485
  %4454 = vmatmul.mubr.bf16.gmra.mrb[0].mxu0 %v323
  %v4455 = vpop.f32.mrb[0].mxu0
  %v4456 = vadd.f32 0.0, %v4455
  %v4457 = vpop.f32.mrb[0].mxu0
  %v4458 = vpop.f32.mrb[0].mxu0
  %v4459 = vadd.f32 0.0, %v4458
  %v4460 = vpop.f32.mrb[0].mxu0
  %4461 = vmatprep.mubr.bf16.mxu0 %v488
  %4462 = vmatmul.mubr.bf16.gmra.mrb[0].mxu0 %v325
  %v4463 = vpop.f32.mrb[0].mxu0
  %v4464 = vadd.f32 0.0, %v4463
  %v4465 = vpop.f32.mrb[0].mxu0
  %v4466 = vpop.f32.mrb[0].mxu0
  %v4467 = vadd.f32 0.0, %v4466
  %v4468 = vpop.f32.mrb[0].mxu0
  %4469 = vmatprep.mubr.bf16.mxu0 %v491
  %4470 = vmatmul.mubr.bf16.gmra.mrb[0].mxu0 %v327
  %v4471 = vpop.f32.mrb[0].mxu0
  %v4472 = vadd.f32 0.0, %v4471
  %v4473 = vpop.f32.mrb[0].mxu0
  %v4474 = vpop.f32.mrb[0].mxu0
  %v4475 = vadd.f32 0.0, %v4474
  %v4476 = vpop.f32.mrb[0].mxu0
  %4477 = vmatprep.mubr.bf16.mxu0 %v494
  %4478 = vmatmul.mubr.bf16.gmra.mrb[0].mxu0 %v329
  %v4479 = vpop.f32.mrb[0].mxu0
  %v4480 = vadd.f32 0.0, %v4479
  %v4481 = vpop.f32.mrb[0].mxu0
  %v4482 = vpop.f32.mrb[0].mxu0
  %v4483 = vadd.f32 0.0, %v4482
  %v4484 = vpop.f32.mrb[0].mxu0
  %4485 = vmatprep.mubr.bf16.mxu0 %v497
  %4486 = vmatmul.mubr.bf16.gmra.mrb[0].mxu0 %v331
  %v4487 = vpop.f32.mrb[0].mxu0
  %v4488 = vadd.f32 0.0, %v4487
  %v4489 = vpop.f32.mrb[0].mxu0
  %v4490 = vpop.f32.mrb[0].mxu0
  %v4491 = vadd.f32 0.0, %v4490
  %v4492 = vpop.f32.mrb[0].mxu0
  %4493 = vmatprep.mubr.bf16.mxu0 %v500
  %4494 = vmatmul.mubr.bf16.gmra.mrb[0].mxu0 %v333
  %v4495 = vpop.f32.mrb[0].mxu0
  %v4496 = vadd.f32 0.0, %v4495
  %v4497 = vpop.f32.mrb[0].mxu0
  %v4498 = vpop.f32.mrb[0].mxu0
  %v4499 = vadd.f32 0.0, %v4498
  %v4500 = vpop.f32.mrb[0].mxu0
  %4501 = vmatprep.mubr.bf16.mxu0 %v503
  %4502 = vmatmul.mubr.bf16.gmra.mrb[0].mxu0 %v335
  %v4503 = vpop.f32.mrb[0].mxu0
  %v4504 = vadd.f32 0.0, %v4503
  %v4505 = vpop.f32.mrb[0].mxu0
  %v4506 = vpop.f32.mrb[0].mxu0
  %v4507 = vadd.f32 0.0, %v4506
  %v4508 = vpop.f32.mrb[0].mxu0
  %4509 = vmatprep.mubr.bf16.mxu0 %v506
  %4510 = vmatmul.mubr.bf16.gmra.mrb[0].mxu0 %v337
  %v4511 = vpop.f32.mrb[0].mxu0
  %v4512 = vadd.f32 0.0, %v4511
  %v4513 = vpop.f32.mrb[0].mxu0
  %v4514 = vpop.f32.mrb[0].mxu0
  %v4515 = vadd.f32 0.0, %v4514
  %v4516 = vpop.f32.mrb[0].mxu0
  %4517 = vmatprep.mubr.bf16.mxu0 %v509
  %4518 = vmatmul.mubr.bf16.gmra.mrb[0].mxu0 %v339
  %v4519 = vpop.f32.mrb[0].mxu0
  %v4520 = vadd.f32 0.0, %v4519
  %v4521 = vpop.f32.mrb[0].mxu0
  %v4522 = vpop.f32.mrb[0].mxu0
  %v4523 = vadd.f32 0.0, %v4522
  %v4524 = vpop.f32.mrb[0].mxu0
  %4525 = vmatprep.mubr.bf16.mxu0 %v512
  %4526 = vmatmul.mubr.bf16.gmra.mrb[0].mxu0 %v341
  %v4527 = vpop.f32.mrb[0].mxu0
  %v4528 = vadd.f32 0.0, %v4527
  %v4529 = vpop.f32.mrb[0].mxu0
  %v4530 = vpop.f32.mrb[0].mxu0
  %v4531 = vadd.f32 0.0, %v4530
  %v4532 = vpop.f32.mrb[0].mxu0
  %4533 = vmatprep.mubr.bf16.mxu0 %v515
  %4534 = vmatmul.mubr.bf16.gmra.mrb[0].mxu0 %v343
  %v4535 = vpop.f32.mrb[0].mxu0
  %v4536 = vadd.f32 0.0, %v4535
  %v4537 = vpop.f32.mrb[0].mxu0
  %v4538 = vpop.f32.mrb[0].mxu0
  %v4539 = vadd.f32 0.0, %v4538
  %v4540 = vpop.f32.mrb[0].mxu0
  %4541 = vmatprep.mubr.bf16.mxu0 %v518
  %4542 = vmatmul.mubr.bf16.gmra.mrb[0].mxu0 %v345
  %v4543 = vpop.f32.mrb[0].mxu0
  %v4544 = vadd.f32 0.0, %v4543
  %v4545 = vpop.f32.mrb[0].mxu0
  %v4546 = vpop.f32.mrb[0].mxu0
  %v4547 = vadd.f32 0.0, %v4546
  %v4548 = vpop.f32.mrb[0].mxu0
  %4549 = vmatprep.mubr.bf16.mxu0 %v521
  %4550 = vmatmul.mubr.bf16.gmra.mrb[0].mxu0 %v347
  %v4551 = vpop.f32.mrb[0].mxu0
  %v4552 = vadd.f32 0.0, %v4551
  %v4553 = vpop.f32.mrb[0].mxu0
  %v4554 = vpop.f32.mrb[0].mxu0
  %v4555 = vadd.f32 0.0, %v4554
  %v4556 = vpop.f32.mrb[0].mxu0
  %4557 = vmatprep.mubr.bf16.mxu0 %v524
  %4558 = vmatmul.mubr.bf16.gmra.mrb[0].mxu0 %v349
  %v4559 = vpop.f32.mrb[0].mxu0
  %v4560 = vadd.f32 0.0, %v4559
  %v4561 = vpop.f32.mrb[0].mxu0
  %v4562 = vpop.f32.mrb[0].mxu0
  %v4563 = vadd.f32 0.0, %v4562
  %v4564 = vpop.f32.mrb[0].mxu0
  %4565 = vmatprep.mubr.bf16.mxu0 %v527
  %4566 = vmatmul.mubr.bf16.gmra.mrb[0].mxu0 %v351
  %v4567 = vpop.f32.mrb[0].mxu0
  %v4568 = vadd.f32 0.0, %v4567
  %v4569 = vpop.f32.mrb[0].mxu0
  %v4570 = vpop.f32.mrb[0].mxu0
  %v4571 = vadd.f32 0.0, %v4570
  %v4572 = vpop.f32.mrb[0].mxu0
  %4573 = vmatprep.mubr.bf16.mxu0 %v530
  %4574 = vmatmul.mubr.bf16.gmra.mrb[0].mxu0 %v353
  %v4575 = vpop.f32.mrb[0].mxu0
  %v4576 = vadd.f32 0.0, %v4575
  %v4577 = vpop.f32.mrb[0].mxu0
  %v4578 = vpop.f32.mrb[0].mxu0
  %v4579 = vadd.f32 0.0, %v4578
  %v4580 = vpop.f32.mrb[0].mxu0
  %4581 = vmatprep.mubr.bf16.mxu0 %v533
  %4582 = vmatmul.mubr.bf16.gmra.mrb[0].mxu0 %v355
  %v4583 = vpop.f32.mrb[0].mxu0
  %v4584 = vadd.f32 0.0, %v4583
  %v4585 = vpop.f32.mrb[0].mxu0
  %v4586 = vpop.f32.mrb[0].mxu0
  %v4587 = vadd.f32 0.0, %v4586
  %v4588 = vpop.f32.mrb[0].mxu0
  %4589 = vmatprep.mubr.bf16.mxu0 %v536
  %4590 = vmatmul.mubr.bf16.gmra.mrb[0].mxu0 %v357
  %v4591 = vpop.f32.mrb[0].mxu0
  %v4592 = vadd.f32 0.0, %v4591
  %v4593 = vpop.f32.mrb[0].mxu0
  %v4594 = vpop.f32.mrb[0].mxu0
  %v4595 = vadd.f32 0.0, %v4594
  %v4596 = vpop.f32.mrb[0].mxu0
  %4597 = vmatprep.mubr.bf16.mxu0 %v539
  %4598 = vmatmul.mubr.bf16.gmra.mrb[0].mxu0 %v359
  %v4599 = vpop.f32.mrb[0].mxu0
  %v4600 = vadd.f32 0.0, %v4599
  %v4601 = vpop.f32.mrb[0].mxu0
  %v4602 = vpop.f32.mrb[0].mxu0
  %v4603 = vadd.f32 0.0, %v4602
  %v4604 = vpop.f32.mrb[0].mxu0
  %4605 = vmatprep.mubr.bf16.mxu0 %v542
  %4606 = vmatmul.mubr.bf16.gmra.mrb[0].mxu0 %v361
  %v4607 = vpop.f32.mrb[0].mxu0
  %v4608 = vadd.f32 0.0, %v4607
  %v4609 = vpop.f32.mrb[0].mxu0
  %v4610 = vpop.f32.mrb[0].mxu0
  %v4611 = vadd.f32 0.0, %v4610
  %v4612 = vpop.f32.mrb[0].mxu0
  %4613 = vmatprep.mubr.bf16.mxu0 %v545
  %4614 = vmatmul.mubr.bf16.gmra.mrb[0].mxu0 %v363
  %v4615 = vpop.f32.mrb[0].mxu0
  %v4616 = vadd.f32 0.0, %v4615
  %v4617 = vpop.f32.mrb[0].mxu0
  %v4618 = vpop.f32.mrb[0].mxu0
  %v4619 = vadd.f32 0.0, %v4618
  %v4620 = vpop.f32.mrb[0].mxu0
  %4621 = vmatprep.mubr.bf16.mxu0 %v548
  %4622 = vmatmul.mubr.bf16.gmra.mrb[0].mxu0 %v365
  %v4623 = vpop.f32.mrb[0].mxu0
  %v4624 = vadd.f32 0.0, %v4623
  %v4625 = vpop.f32.mrb[0].mxu0
  %v4626 = vpop.f32.mrb[0].mxu0
  %v4627 = vadd.f32 0.0, %v4626
  %v4628 = vpop.f32.mrb[0].mxu0
  %4629 = vmatprep.mubr.bf16.mxu0 %v551
  %4630 = vmatmul.mubr.bf16.gmra.mrb[0].mxu0 %v367
  %v4631 = vpop.f32.mrb[0].mxu0
  %v4632 = vadd.f32 0.0, %v4631
  %v4633 = vpop.f32.mrb[0].mxu0
  %v4634 = vpop.f32.mrb[0].mxu0
  %v4635 = vadd.f32 0.0, %v4634
  %v4636 = vpop.f32.mrb[0].mxu0
  %4637 = vdwg.mxu0
  %v4638 = vmax.f32 %v4400, %v4459
  %v4639 = vmax.f32 %v4403, %v4464
  %v4640 = vmax.f32 %v4408, %v4467
  %v4641 = vmax.f32 %v4411, %v4472
  %v4642 = vmax.f32 %v4416, %v4475
  %v4643 = vmax.f32 %v4419, %v4480
  %v4644 = vmax.f32 %v4424, %v4483
  %v4645 = vmax.f32 %v4427, %v4488
  %v4646 = vmax.f32 %v4432, %v4491
  %v4647 = vmax.f32 %v4435, %v4496
  %v4648 = vmax.f32 %v4440, %v4499
  %v4649 = vmax.f32 %v4443, %v4504
  %v4650 = vmax.f32 %v4448, %v4507
  %v4651 = vmax.f32 %v4451, %v4512
  %v4652 = vmax.f32 %v4456, %v4515
  %v4653 = vmax.f32 %v4520, %v4579
  %v4654 = vmax.f32 %v4523, %v4584
  %v4655 = vmax.f32 %v4528, %v4587
  %v4656 = vmax.f32 %v4531, %v4592
  %v4657 = vmax.f32 %v4536, %v4595
  %v4658 = vmax.f32 %v4539, %v4600
  %v4659 = vmax.f32 %v4544, %v4603
  %v4660 = vmax.f32 %v4547, %v4608
  %v4661 = vmax.f32 %v4552, %v4611
  %v4662 = vmax.f32 %v4555, %v4616
  %v4663 = vmax.f32 %v4560, %v4619
  %v4664 = vmax.f32 %v4563, %v4624
  %v4665 = vmax.f32 %v4568, %v4627
  %v4666 = vmax.f32 %v4571, %v4632
  %v4667 = vmax.f32 %v4576, %v4635
  %v4668 = vmax.f32 %v4638, %v4653
  %v4669 = vmax.f32 %v4639, %v4654
  %v4670 = vmax.f32 %v4640, %v4655
  %v4671 = vmax.f32 %v4641, %v4656
  %v4672 = vmax.f32 %v4642, %v4657
  %v4673 = vmax.f32 %v4643, %v4658
  %v4674 = vmax.f32 %v4644, %v4659
  %v4675 = vmax.f32 %v4645, %v4660
  %v4676 = vmax.f32 %v4646, %v4661
  %v4677 = vmax.f32 %v4647, %v4662
  %v4678 = vmax.f32 %v4648, %v4663
  %v4679 = vmax.f32 %v4649, %v4664
  %v4680 = vmax.f32 %v4650, %v4665
  %v4681 = vmax.f32 %v4651, %v4666
  %v4682 = vmax.f32 %v4652, %v4667
  %v4683 = vadd.f32 %v4668, %v878
  %v4684 = vadd.f32 %v4669, %v883
  %v4685 = vadd.f32 %v4670, %v888
  %v4686 = vadd.f32 %v4671, %v893
  %v4687 = vadd.f32 %v4672, %v898
  %v4688 = vadd.f32 %v4673, %v903
  %v4689 = vadd.f32 %v4674, %v908
  %v4690 = vadd.f32 %v4675, %v913
  %v4691 = vadd.f32 %v4676, %v918
  %v4692 = vadd.f32 %v4677, %v923
  %v4693 = vadd.f32 %v4678, %v928
  %v4694 = vadd.f32 %v4679, %v933
  %v4695 = vadd.f32 %v4680, %v938
  %v4696 = vadd.f32 %v4681, %v943
  %v4697 = vadd.f32 %v4682, %v948
  %v4698 = vmax.f32 %v4683, 0.0
  %v4699 = vmax.f32 %v4684, 0.0
  %v4700 = vmax.f32 %v4685, 0.0
  %v4701 = vmax.f32 %v4686, 0.0
  %v4702 = vmax.f32 %v4687, 0.0
  %v4703 = vmax.f32 %v4688, 0.0
  %v4704 = vmax.f32 %v4689, 0.0
  %v4705 = vmax.f32 %v4690, 0.0
  %v4706 = vmax.f32 %v4691, 0.0
  %v4707 = vmax.f32 %v4692, 0.0
  %v4708 = vmax.f32 %v4693, 0.0
  %v4709 = vmax.f32 %v4694, 0.0
  %v4710 = vmax.f32 %v4695, 0.0
  %v4711 = vmax.f32 %v4696, 0.0
  %v4712 = vmax.f32 %v4697, 0.0
  %v4713 = vpack.c.bf16 %v4699, %v4698
  %v4714 = vpack.c.bf16 %v4701, %v4700
  %v4715 = vpack.c.bf16 %v4703, %v4702
  %v4716 = vpack.c.bf16 %v4705, %v4704
  %v4717 = vpack.c.bf16 %v4707, %v4706
  %v4718 = vpack.c.bf16 %v4709, %v4708
  %v4719 = vpack.c.bf16 %v4711, %v4710
  %v4720 = vpack.c.bf16 %v4712, %v4712
  %4721 = vst [vmem:[#allocation2 + $0x1e0] sm:$0xff] %v4713
  %4722 = vst [vmem:[#allocation2 + $0x1e8] sm:$0xff] %v4714
  %4723 = vst [vmem:[#allocation2 + $0x1f0] sm:$0xff] %v4715
  %4724 = vst [vmem:[#allocation2 + $0x1f8] sm:$0xff] %v4716
  %4725 = vst [vmem:[#allocation2 + $0x200] sm:$0xff] %v4717
  %4726 = vst [vmem:[#allocation2 + $0x208] sm:$0xff] %v4718
  %4727 = vst [vmem:[#allocation2 + $0x210] sm:$0xff] %v4719
  %4728 = vst [vmem:[#allocation2 + $0x218] sm:$0xf] %v4720
  %v4729 = vld [vmem:[%s0 + $0xfc] sm:$0xf]
  %v4730 = vld [vmem:[%s0 + $0x100] sm:$0xf]
  %v4731 = vld [vmem:[%s0 + $0x104] sm:$0xf]
  %v4732 = vld [vmem:[%s0 + $0x108] sm:$0xf]
  %v4733 = vld [vmem:[%s0 + $0x10c] sm:$0xf]
  %v4734 = vld [vmem:[%s0 + $0x110] sm:$0xf]
  %v4735 = vld [vmem:[%s0 + $0x114] sm:$0xf]
  %v4736 = vld [vmem:[%s0 + $0x118] sm:$0xf]
  %v4737 = vld [vmem:[%s0 + $0x11c] sm:$0xf]
  %v4738 = vld [vmem:[%s0 + $0x120] sm:$0xf]
  %v4739 = vld [vmem:[%s0 + $0x124] sm:$0xf]
  %v4740 = vld [vmem:[%s0 + $0x128] sm:$0xf]
  %v4741 = vld [vmem:[%s0 + $0x12c] sm:$0xf]
  %v4742 = vld [vmem:[%s0 + $0x130] sm:$0xf]
  %v4743 = vld [vmem:[%s0 + $0x134] sm:$0xf]
  %v4744 = vld [vmem:[%s0 + $0x138] sm:$0xf]
  %v4745 = vld [vmem:[%s0 + $0x13c] sm:$0xf]
  %v4746 = vld [vmem:[%s0 + $0x140] sm:$0xf]
  %v4747 = vld [vmem:[%s0 + $0x144] sm:$0xf]
  %v4748 = vld [vmem:[%s0 + $0x148] sm:$0xf]
  %v4749 = vld [vmem:[%s0 + $0x14c] sm:$0xf]
  %v4771 = vunpack.c.l.b16 %v4729
  %v4772 = vunpack.c.l.b16 %v4730
  %v4773 = vunpack.c.l.b16 %v4731
  %v4774 = vunpack.c.l.b16 %v4732
  %v4775 = vunpack.c.l.b16 %v4733
  %v4776 = vunpack.c.l.b16 %v4734
  %v4777 = vunpack.c.l.b16 %v4735
  %v4778 = vunpack.c.l.b16 %v4736
  %v4779 = vunpack.c.l.b16 %v4737
  %v4780 = vunpack.c.l.b16 %v4738
  %v4781 = vunpack.c.l.b16 %v4739
  %v4782 = vunpack.c.l.b16 %v4740
  %v4783 = vunpack.c.l.b16 %v4741
  %v4784 = vunpack.c.l.b16 %v4742
  %v4785 = vunpack.c.l.b16 %v4743
  %v4786 = vunpack.c.l.b16 %v4744
  %v4787 = vunpack.c.l.b16 %v4745
  %v4788 = vunpack.c.l.b16 %v4746
  %v4789 = vunpack.c.l.b16 %v4747
  %v4790 = vunpack.c.l.b16 %v4748
  %v4791 = vunpack.c.l.b16 %v4749
  %v4792 = vpack.c.b16 %v4772, %v4771
  %v4793 = vpack.c.b16 %v4774, %v4773
  %v4794 = vpack.c.b16 %v4776, %v4775
  %v4795 = vpack.c.b16 %v4778, %v4777
  %v4796 = vpack.c.b16 %v4780, %v4779
  %v4797 = vpack.c.b16 %v4782, %v4781
  %v4798 = vpack.c.b16 %v4784, %v4783
  %v4799 = vpack.c.b16 %v4786, %v4785
  %v4800 = vpack.c.b16 %v4788, %v4787
  %v4801 = vpack.c.b16 %v4790, %v4789
  %v4802 = vpack.c.b16 %v4791, %v4791
  %v4814 = vsel %vm553, %v4802, 0
  %4816 = vmatprep.subr.bf16.mxu0 0
  %4817 = vmatpush1.bf16.msra.mxu0 %v4792
  %4818 = vmatprep.subr.bf16.mxu0 0
  %4819 = vmatpush1.bf16.msra.mxu0 %v4793
  %4820 = vmatprep.subr.bf16.mxu0 0
  %4821 = vmatpush1.bf16.msra.mxu0 %v4794
  %4822 = vmatprep.subr.bf16.mxu0 0
  %4823 = vmatpush1.bf16.msra.mxu0 %v4795
  %4824 = vmatprep.subr.bf16.mxu0 0
  %4825 = vmatpush1.bf16.msra.mxu0 %v4796
  %4826 = vmatprep.subr.bf16.mxu0 0
  %4827 = vmatpush1.bf16.msra.mxu0 %v4797
  %4828 = vmatprep.subr.bf16.mxu0 0
  %4829 = vmatpush1.bf16.msra.mxu0 %v4798
  %4830 = vmatprep.subr.bf16.mxu0 0
  %4831 = vmatpush1.bf16.msra.mxu0 %v4799
  %4832 = vmatprep.subr.bf16.mxu0 0
  %4833 = vmatpush1.bf16.msra.mxu0 %v4800
  %4834 = vmatprep.subr.bf16.mxu0 0
  %4835 = vmatpush1.bf16.msra.mxu0 %v4801
  %4836 = vmatprep.subr.bf16.mxu0 0
  %4837 = vmatpush1.bf16.msra.mxu0 %v4814
  %4838 = vmatprep.subr.bf16.mxu0 0
  %4839 = vmatpush1.bf16.msra.mxu0 0
  %4840 = vmatprep.subr.bf16.mxu0 0
  %4841 = vmatpush1.bf16.msra.mxu0 0
  %4842 = vmatprep.subr.bf16.mxu0 0
  %4843 = vmatpush1.bf16.msra.mxu0 0
  %4844 = vmatprep.subr.bf16.mxu0 0
  %4845 = vmatpush1.bf16.msra.mxu0 0
  %4846 = vmatprep.subr.bf16.mxu0 0
  %4847 = vmatpush1.bf16.msra.mxu0 0
  %4848 = vmatprep.mubr.bf16.mxu0 %v464
  %4849 = vmatmul.mubr.bf16.gmra.mrb[0].mxu0 %v309
  %v4850 = vpop.f32.mrb[0].mxu0
  %v4851 = vadd.f32 0.0, %v4850
  %v4852 = vpop.f32.mrb[0].mxu0
  %v4853 = vpop.f32.mrb[0].mxu0
  %v4854 = vadd.f32 0.0, %v4853
  %v4855 = vpop.f32.mrb[0].mxu0
  %4856 = vmatprep.mubr.bf16.mxu0 %v467
  %4857 = vmatmul.mubr.bf16.gmra.mrb[0].mxu0 %v311
  %v4858 = vpop.f32.mrb[0].mxu0
  %v4859 = vadd.f32 0.0, %v4858
  %v4860 = vpop.f32.mrb[0].mxu0
  %v4861 = vpop.f32.mrb[0].mxu0
  %v4862 = vadd.f32 0.0, %v4861
  %v4863 = vpop.f32.mrb[0].mxu0
  %4864 = vmatprep.mubr.bf16.mxu0 %v470
  %4865 = vmatmul.mubr.bf16.gmra.mrb[0].mxu0 %v313
  %v4866 = vpop.f32.mrb[0].mxu0
  %v4867 = vadd.f32 0.0, %v4866
  %v4868 = vpop.f32.mrb[0].mxu0
  %v4869 = vpop.f32.mrb[0].mxu0
  %v4870 = vadd.f32 0.0, %v4869
  %v4871 = vpop.f32.mrb[0].mxu0
  %4872 = vmatprep.mubr.bf16.mxu0 %v473
  %4873 = vmatmul.mubr.bf16.gmra.mrb[0].mxu0 %v315
  %v4874 = vpop.f32.mrb[0].mxu0
  %v4875 = vadd.f32 0.0, %v4874
  %v4876 = vpop.f32.mrb[0].mxu0
  %v4877 = vpop.f32.mrb[0].mxu0
  %v4878 = vadd.f32 0.0, %v4877
  %v4879 = vpop.f32.mrb[0].mxu0
  %4880 = vmatprep.mubr.bf16.mxu0 %v476
  %4881 = vmatmul.mubr.bf16.gmra.mrb[0].mxu0 %v317
  %v4882 = vpop.f32.mrb[0].mxu0
  %v4883 = vadd.f32 0.0, %v4882
  %v4884 = vpop.f32.mrb[0].mxu0
  %v4885 = vpop.f32.mrb[0].mxu0
  %v4886 = vadd.f32 0.0, %v4885
  %v4887 = vpop.f32.mrb[0].mxu0
  %4888 = vmatprep.mubr.bf16.mxu0 %v479
  %4889 = vmatmul.mubr.bf16.gmra.mrb[0].mxu0 %v319
  %v4890 = vpop.f32.mrb[0].mxu0
  %v4891 = vadd.f32 0.0, %v4890
  %v4892 = vpop.f32.mrb[0].mxu0
  %v4893 = vpop.f32.mrb[0].mxu0
  %v4894 = vadd.f32 0.0, %v4893
  %v4895 = vpop.f32.mrb[0].mxu0
  %4896 = vmatprep.mubr.bf16.mxu0 %v482
  %4897 = vmatmul.mubr.bf16.gmra.mrb[0].mxu0 %v321
  %v4898 = vpop.f32.mrb[0].mxu0
  %v4899 = vadd.f32 0.0, %v4898
  %v4900 = vpop.f32.mrb[0].mxu0
  %v4901 = vpop.f32.mrb[0].mxu0
  %v4902 = vadd.f32 0.0, %v4901
  %v4903 = vpop.f32.mrb[0].mxu0
  %4904 = vmatprep.mubr.bf16.mxu0 %v485
  %4905 = vmatmul.mubr.bf16.gmra.mrb[0].mxu0 %v323
  %v4906 = vpop.f32.mrb[0].mxu0
  %v4907 = vadd.f32 0.0, %v4906
  %v4908 = vpop.f32.mrb[0].mxu0
  %v4909 = vpop.f32.mrb[0].mxu0
  %v4910 = vadd.f32 0.0, %v4909
  %v4911 = vpop.f32.mrb[0].mxu0
  %4912 = vmatprep.mubr.bf16.mxu0 %v488
  %4913 = vmatmul.mubr.bf16.gmra.mrb[0].mxu0 %v325
  %v4914 = vpop.f32.mrb[0].mxu0
  %v4915 = vadd.f32 0.0, %v4914
  %v4916 = vpop.f32.mrb[0].mxu0
  %v4917 = vpop.f32.mrb[0].mxu0
  %v4918 = vadd.f32 0.0, %v4917
  %v4919 = vpop.f32.mrb[0].mxu0
  %4920 = vmatprep.mubr.bf16.mxu0 %v491
  %4921 = vmatmul.mubr.bf16.gmra.mrb[0].mxu0 %v327
  %v4922 = vpop.f32.mrb[0].mxu0
  %v4923 = vadd.f32 0.0, %v4922
  %v4924 = vpop.f32.mrb[0].mxu0
  %v4925 = vpop.f32.mrb[0].mxu0
  %v4926 = vadd.f32 0.0, %v4925
  %v4927 = vpop.f32.mrb[0].mxu0
  %4928 = vmatprep.mubr.bf16.mxu0 %v494
  %4929 = vmatmul.mubr.bf16.gmra.mrb[0].mxu0 %v329
  %v4930 = vpop.f32.mrb[0].mxu0
  %v4931 = vadd.f32 0.0, %v4930
  %v4932 = vpop.f32.mrb[0].mxu0
  %v4933 = vpop.f32.mrb[0].mxu0
  %v4934 = vadd.f32 0.0, %v4933
  %v4935 = vpop.f32.mrb[0].mxu0
  %4936 = vmatprep.mubr.bf16.mxu0 %v497
  %4937 = vmatmul.mubr.bf16.gmra.mrb[0].mxu0 %v331
  %v4938 = vpop.f32.mrb[0].mxu0
  %v4939 = vadd.f32 0.0, %v4938
  %v4940 = vpop.f32.mrb[0].mxu0
  %v4941 = vpop.f32.mrb[0].mxu0
  %v4942 = vadd.f32 0.0, %v4941
  %v4943 = vpop.f32.mrb[0].mxu0
  %4944 = vmatprep.mubr.bf16.mxu0 %v500
  %4945 = vmatmul.mubr.bf16.gmra.mrb[0].mxu0 %v333
  %v4946 = vpop.f32.mrb[0].mxu0
  %v4947 = vadd.f32 0.0, %v4946
  %v4948 = vpop.f32.mrb[0].mxu0
  %v4949 = vpop.f32.mrb[0].mxu0
  %v4950 = vadd.f32 0.0, %v4949
  %v4951 = vpop.f32.mrb[0].mxu0
  %4952 = vmatprep.mubr.bf16.mxu0 %v503
  %4953 = vmatmul.mubr.bf16.gmra.mrb[0].mxu0 %v335
  %v4954 = vpop.f32.mrb[0].mxu0
  %v4955 = vadd.f32 0.0, %v4954
  %v4956 = vpop.f32.mrb[0].mxu0
  %v4957 = vpop.f32.mrb[0].mxu0
  %v4958 = vadd.f32 0.0, %v4957
  %v4959 = vpop.f32.mrb[0].mxu0
  %4960 = vmatprep.mubr.bf16.mxu0 %v506
  %4961 = vmatmul.mubr.bf16.gmra.mrb[0].mxu0 %v337
  %v4962 = vpop.f32.mrb[0].mxu0
  %v4963 = vadd.f32 0.0, %v4962
  %v4964 = vpop.f32.mrb[0].mxu0
  %v4965 = vpop.f32.mrb[0].mxu0
  %v4966 = vadd.f32 0.0, %v4965
  %v4967 = vpop.f32.mrb[0].mxu0
  %4968 = vmatprep.mubr.bf16.mxu0 %v509
  %4969 = vmatmul.mubr.bf16.gmra.mrb[0].mxu0 %v339
  %v4970 = vpop.f32.mrb[0].mxu0
  %v4971 = vadd.f32 0.0, %v4970
  %v4972 = vpop.f32.mrb[0].mxu0
  %v4973 = vpop.f32.mrb[0].mxu0
  %v4974 = vadd.f32 0.0, %v4973
  %v4975 = vpop.f32.mrb[0].mxu0
  %4976 = vmatprep.mubr.bf16.mxu0 %v512
  %4977 = vmatmul.mubr.bf16.gmra.mrb[0].mxu0 %v341
  %v4978 = vpop.f32.mrb[0].mxu0
  %v4979 = vadd.f32 0.0, %v4978
  %v4980 = vpop.f32.mrb[0].mxu0
  %v4981 = vpop.f32.mrb[0].mxu0
  %v4982 = vadd.f32 0.0, %v4981
  %v4983 = vpop.f32.mrb[0].mxu0
  %4984 = vmatprep.mubr.bf16.mxu0 %v515
  %4985 = vmatmul.mubr.bf16.gmra.mrb[0].mxu0 %v343
  %v4986 = vpop.f32.mrb[0].mxu0
  %v4987 = vadd.f32 0.0, %v4986
  %v4988 = vpop.f32.mrb[0].mxu0
  %v4989 = vpop.f32.mrb[0].mxu0
  %v4990 = vadd.f32 0.0, %v4989
  %v4991 = vpop.f32.mrb[0].mxu0
  %4992 = vmatprep.mubr.bf16.mxu0 %v518
  %4993 = vmatmul.mubr.bf16.gmra.mrb[0].mxu0 %v345
  %v4994 = vpop.f32.mrb[0].mxu0
  %v4995 = vadd.f32 0.0, %v4994
  %v4996 = vpop.f32.mrb[0].mxu0
  %v4997 = vpop.f32.mrb[0].mxu0
  %v4998 = vadd.f32 0.0, %v4997
  %v4999 = vpop.f32.mrb[0].mxu0
  %5000 = vmatprep.mubr.bf16.mxu0 %v521
  %5001 = vmatmul.mubr.bf16.gmra.mrb[0].mxu0 %v347
  %v5002 = vpop.f32.mrb[0].mxu0
  %v5003 = vadd.f32 0.0, %v5002
  %v5004 = vpop.f32.mrb[0].mxu0
  %v5005 = vpop.f32.mrb[0].mxu0
  %v5006 = vadd.f32 0.0, %v5005
  %v5007 = vpop.f32.mrb[0].mxu0
  %5008 = vmatprep.mubr.bf16.mxu0 %v524
  %5009 = vmatmul.mubr.bf16.gmra.mrb[0].mxu0 %v349
  %v5010 = vpop.f32.mrb[0].mxu0
  %v5011 = vadd.f32 0.0, %v5010
  %v5012 = vpop.f32.mrb[0].mxu0
  %v5013 = vpop.f32.mrb[0].mxu0
  %v5014 = vadd.f32 0.0, %v5013
  %v5015 = vpop.f32.mrb[0].mxu0
  %5016 = vmatprep.mubr.bf16.mxu0 %v527
  %5017 = vmatmul.mubr.bf16.gmra.mrb[0].mxu0 %v351
  %v5018 = vpop.f32.mrb[0].mxu0
  %v5019 = vadd.f32 0.0, %v5018
  %v5020 = vpop.f32.mrb[0].mxu0
  %v5021 = vpop.f32.mrb[0].mxu0
  %v5022 = vadd.f32 0.0, %v5021
  %v5023 = vpop.f32.mrb[0].mxu0
  %5024 = vmatprep.mubr.bf16.mxu0 %v530
  %5025 = vmatmul.mubr.bf16.gmra.mrb[0].mxu0 %v353
  %v5026 = vpop.f32.mrb[0].mxu0
  %v5027 = vadd.f32 0.0, %v5026
  %v5028 = vpop.f32.mrb[0].mxu0
  %v5029 = vpop.f32.mrb[0].mxu0
  %v5030 = vadd.f32 0.0, %v5029
  %v5031 = vpop.f32.mrb[0].mxu0
  %5032 = vmatprep.mubr.bf16.mxu0 %v533
  %5033 = vmatmul.mubr.bf16.gmra.mrb[0].mxu0 %v355
  %v5034 = vpop.f32.mrb[0].mxu0
  %v5035 = vadd.f32 0.0, %v5034
  %v5036 = vpop.f32.mrb[0].mxu0
  %v5037 = vpop.f32.mrb[0].mxu0
  %v5038 = vadd.f32 0.0, %v5037
  %v5039 = vpop.f32.mrb[0].mxu0
  %5040 = vmatprep.mubr.bf16.mxu0 %v536
  %5041 = vmatmul.mubr.bf16.gmra.mrb[0].mxu0 %v357
  %v5042 = vpop.f32.mrb[0].mxu0
  %v5043 = vadd.f32 0.0, %v5042
  %v5044 = vpop.f32.mrb[0].mxu0
  %v5045 = vpop.f32.mrb[0].mxu0
  %v5046 = vadd.f32 0.0, %v5045
  %v5047 = vpop.f32.mrb[0].mxu0
  %5048 = vmatprep.mubr.bf16.mxu0 %v539
  %5049 = vmatmul.mubr.bf16.gmra.mrb[0].mxu0 %v359
  %v5050 = vpop.f32.mrb[0].mxu0
  %v5051 = vadd.f32 0.0, %v5050
  %v5052 = vpop.f32.mrb[0].mxu0
  %v5053 = vpop.f32.mrb[0].mxu0
  %v5054 = vadd.f32 0.0, %v5053
  %v5055 = vpop.f32.mrb[0].mxu0
  %5056 = vmatprep.mubr.bf16.mxu0 %v542
  %5057 = vmatmul.mubr.bf16.gmra.mrb[0].mxu0 %v361
  %v5058 = vpop.f32.mrb[0].mxu0
  %v5059 = vadd.f32 0.0, %v5058
  %v5060 = vpop.f32.mrb[0].mxu0
  %v5061 = vpop.f32.mrb[0].mxu0
  %v5062 = vadd.f32 0.0, %v5061
  %v5063 = vpop.f32.mrb[0].mxu0
  %5064 = vmatprep.mubr.bf16.mxu0 %v545
  %5065 = vmatmul.mubr.bf16.gmra.mrb[0].mxu0 %v363
  %v5066 = vpop.f32.mrb[0].mxu0
  %v5067 = vadd.f32 0.0, %v5066
  %v5068 = vpop.f32.mrb[0].mxu0
  %v5069 = vpop.f32.mrb[0].mxu0
  %v5070 = vadd.f32 0.0, %v5069
  %v5071 = vpop.f32.mrb[0].mxu0
  %5072 = vmatprep.mubr.bf16.mxu0 %v548
  %5073 = vmatmul.mubr.bf16.gmra.mrb[0].mxu0 %v365
  %v5074 = vpop.f32.mrb[0].mxu0
  %v5075 = vadd.f32 0.0, %v5074
  %v5076 = vpop.f32.mrb[0].mxu0
  %v5077 = vpop.f32.mrb[0].mxu0
  %v5078 = vadd.f32 0.0, %v5077
  %v5079 = vpop.f32.mrb[0].mxu0
  %5080 = vmatprep.mubr.bf16.mxu0 %v551
  %5081 = vmatmul.mubr.bf16.gmra.mrb[0].mxu0 %v367
  %v5082 = vpop.f32.mrb[0].mxu0
  %v5083 = vadd.f32 0.0, %v5082
  %v5084 = vpop.f32.mrb[0].mxu0
  %v5085 = vpop.f32.mrb[0].mxu0
  %v5086 = vadd.f32 0.0, %v5085
  %v5087 = vpop.f32.mrb[0].mxu0
  %5088 = vdwg.mxu0
  %v5089 = vmax.f32 %v4851, %v4910
  %v5090 = vmax.f32 %v4854, %v4915
  %v5091 = vmax.f32 %v4859, %v4918
  %v5092 = vmax.f32 %v4862, %v4923
  %v5093 = vmax.f32 %v4867, %v4926
  %v5094 = vmax.f32 %v4870, %v4931
  %v5095 = vmax.f32 %v4875, %v4934
  %v5096 = vmax.f32 %v4878, %v4939
  %v5097 = vmax.f32 %v4883, %v4942
  %v5098 = vmax.f32 %v4886, %v4947
  %v5099 = vmax.f32 %v4891, %v4950
  %v5100 = vmax.f32 %v4894, %v4955
  %v5101 = vmax.f32 %v4899, %v4958
  %v5102 = vmax.f32 %v4902, %v4963
  %v5103 = vmax.f32 %v4907, %v4966
  %v5104 = vmax.f32 %v4971, %v5030
  %v5105 = vmax.f32 %v4974, %v5035
  %v5106 = vmax.f32 %v4979, %v5038
  %v5107 = vmax.f32 %v4982, %v5043
  %v5108 = vmax.f32 %v4987, %v5046
  %v5109 = vmax.f32 %v4990, %v5051
  %v5110 = vmax.f32 %v4995, %v5054
  %v5111 = vmax.f32 %v4998, %v5059
  %v5112 = vmax.f32 %v5003, %v5062
  %v5113 = vmax.f32 %v5006, %v5067
  %v5114 = vmax.f32 %v5011, %v5070
  %v5115 = vmax.f32 %v5014, %v5075
  %v5116 = vmax.f32 %v5019, %v5078
  %v5117 = vmax.f32 %v5022, %v5083
  %v5118 = vmax.f32 %v5027, %v5086
  %v5119 = vmax.f32 %v5089, %v5104
  %v5120 = vmax.f32 %v5090, %v5105
  %v5121 = vmax.f32 %v5091, %v5106
  %v5122 = vmax.f32 %v5092, %v5107
  %v5123 = vmax.f32 %v5093, %v5108
  %v5124 = vmax.f32 %v5094, %v5109
  %v5125 = vmax.f32 %v5095, %v5110
  %v5126 = vmax.f32 %v5096, %v5111
  %v5127 = vmax.f32 %v5097, %v5112
  %v5128 = vmax.f32 %v5098, %v5113
  %v5129 = vmax.f32 %v5099, %v5114
  %v5130 = vmax.f32 %v5100, %v5115
  %v5131 = vmax.f32 %v5101, %v5116
  %v5132 = vmax.f32 %v5102, %v5117
  %v5133 = vmax.f32 %v5103, %v5118
  %v5134 = vadd.f32 %v5119, %v878
  %v5135 = vadd.f32 %v5120, %v883
  %v5136 = vadd.f32 %v5121, %v888
  %v5137 = vadd.f32 %v5122, %v893
  %v5138 = vadd.f32 %v5123, %v898
  %v5139 = vadd.f32 %v5124, %v903
  %v5140 = vadd.f32 %v5125, %v908
  %v5141 = vadd.f32 %v5126, %v913
  %v5142 = vadd.f32 %v5127, %v918
  %v5143 = vadd.f32 %v5128, %v923
  %v5144 = vadd.f32 %v5129, %v928
  %v5145 = vadd.f32 %v5130, %v933
  %v5146 = vadd.f32 %v5131, %v938
  %v5147 = vadd.f32 %v5132, %v943
  %v5148 = vadd.f32 %v5133, %v948
  %v5149 = vmax.f32 %v5134, 0.0
  %v5150 = vmax.f32 %v5135, 0.0
  %v5151 = vmax.f32 %v5136, 0.0
  %v5152 = vmax.f32 %v5137, 0.0
  %v5153 = vmax.f32 %v5138, 0.0
  %v5154 = vmax.f32 %v5139, 0.0
  %v5155 = vmax.f32 %v5140, 0.0
  %v5156 = vmax.f32 %v5141, 0.0
  %v5157 = vmax.f32 %v5142, 0.0
  %v5158 = vmax.f32 %v5143, 0.0
  %v5159 = vmax.f32 %v5144, 0.0
  %v5160 = vmax.f32 %v5145, 0.0
  %v5161 = vmax.f32 %v5146, 0.0
  %v5162 = vmax.f32 %v5147, 0.0
  %v5163 = vmax.f32 %v5148, 0.0
  %v5164 = vpack.c.bf16 %v5150, %v5149
  %v5165 = vpack.c.bf16 %v5152, %v5151
  %v5166 = vpack.c.bf16 %v5154, %v5153
  %v5167 = vpack.c.bf16 %v5156, %v5155
  %v5168 = vpack.c.bf16 %v5158, %v5157
  %v5169 = vpack.c.bf16 %v5160, %v5159
  %v5170 = vpack.c.bf16 %v5162, %v5161
  %v5171 = vpack.c.bf16 %v5163, %v5163
  %v5180 = vrot.slane %v5164, 4
  %v5181 = vrot.slane %v5165, 4
  %v5182 = vsel %vm1447, %v5180, %v5181
  %v5183 = vrot.slane %v5166, 4
  %v5184 = vsel %vm1447, %v5181, %v5183
  %v5185 = vrot.slane %v5167, 4
  %v5186 = vsel %vm1447, %v5183, %v5185
  %v5187 = vrot.slane %v5168, 4
  %v5188 = vsel %vm1447, %v5185, %v5187
  %v5189 = vrot.slane %v5169, 4
  %v5190 = vsel %vm1447, %v5187, %v5189
  %v5191 = vrot.slane %v5170, 4
  %v5192 = vsel %vm1447, %v5189, %v5191
  %v5193 = vrot.slane %v5171, 4
  %v5194 = vsel %vm1447, %v5191, %v5193
  %5203 = vst [vmem:[#allocation2 + $0x218] sm:$0xf0] %v5180
  %5204 = vst [vmem:[#allocation2 + $0x220] sm:$0xff] %v5182
  %5205 = vst [vmem:[#allocation2 + $0x228] sm:$0xff] %v5184
  %5206 = vst [vmem:[#allocation2 + $0x230] sm:$0xff] %v5186
  %5207 = vst [vmem:[#allocation2 + $0x238] sm:$0xff] %v5188
  %5208 = vst [vmem:[#allocation2 + $0x240] sm:$0xff] %v5190
  %5209 = vst [vmem:[#allocation2 + $0x248] sm:$0xff] %v5192
  %5210 = vst [vmem:[#allocation2 + $0x250] sm:$0xff] %v5194
  %v5211 = vld [vmem:[%s0 + $0x118] sm:$0xf]
  %v5212 = vld [vmem:[%s0 + $0x11c] sm:$0xf]
  %v5213 = vld [vmem:[%s0 + $0x120] sm:$0xf]
  %v5214 = vld [vmem:[%s0 + $0x124] sm:$0xf]
  %v5215 = vld [vmem:[%s0 + $0x128] sm:$0xf]
  %v5216 = vld [vmem:[%s0 + $0x12c] sm:$0xf]
  %v5217 = vld [vmem:[%s0 + $0x130] sm:$0xf]
  %v5218 = vld [vmem:[%s0 + $0x134] sm:$0xf]
  %v5219 = vld [vmem:[%s0 + $0x138] sm:$0xf]
  %v5220 = vld [vmem:[%s0 + $0x13c] sm:$0xf]
  %v5221 = vld [vmem:[%s0 + $0x140] sm:$0xf]
  %v5222 = vld [vmem:[%s0 + $0x144] sm:$0xf]
  %v5223 = vld [vmem:[%s0 + $0x148] sm:$0xf]
  %v5224 = vld [vmem:[%s0 + $0x14c] sm:$0xf]
  %v5225 = vld [vmem:[%s0 + $0x150] sm:$0xf]
  %v5226 = vld [vmem:[%s0 + $0x154] sm:$0xf]
  %v5227 = vld [vmem:[%s0 + $0x158] sm:$0xf]
  %v5228 = vld [vmem:[%s0 + $0x15c] sm:$0xf]
  %v5229 = vld [vmem:[%s0 + $0x160] sm:$0xf]
  %v5230 = vld [vmem:[%s0 + $0x164] sm:$0xf]
  %v5231 = vld [vmem:[%s0 + $0x168] sm:$0xf]
  %v5253 = vunpack.c.l.b16 %v5211
  %v5254 = vunpack.c.l.b16 %v5212
  %v5255 = vunpack.c.l.b16 %v5213
  %v5256 = vunpack.c.l.b16 %v5214
  %v5257 = vunpack.c.l.b16 %v5215
  %v5258 = vunpack.c.l.b16 %v5216
  %v5259 = vunpack.c.l.b16 %v5217
  %v5260 = vunpack.c.l.b16 %v5218
  %v5261 = vunpack.c.l.b16 %v5219
  %v5262 = vunpack.c.l.b16 %v5220
  %v5263 = vunpack.c.l.b16 %v5221
  %v5264 = vunpack.c.l.b16 %v5222
  %v5265 = vunpack.c.l.b16 %v5223
  %v5266 = vunpack.c.l.b16 %v5224
  %v5267 = vunpack.c.l.b16 %v5225
  %v5268 = vunpack.c.l.b16 %v5226
  %v5269 = vunpack.c.l.b16 %v5227
  %v5270 = vunpack.c.l.b16 %v5228
  %v5271 = vunpack.c.l.b16 %v5229
  %v5272 = vunpack.c.l.b16 %v5230
  %v5273 = vunpack.c.l.b16 %v5231
  %v5274 = vpack.c.b16 %v5254, %v5253
  %v5275 = vpack.c.b16 %v5256, %v5255
  %v5276 = vpack.c.b16 %v5258, %v5257
  %v5277 = vpack.c.b16 %v5260, %v5259
  %v5278 = vpack.c.b16 %v5262, %v5261
  %v5279 = vpack.c.b16 %v5264, %v5263
  %v5280 = vpack.c.b16 %v5266, %v5265
  %v5281 = vpack.c.b16 %v5268, %v5267
  %v5282 = vpack.c.b16 %v5270, %v5269
  %v5283 = vpack.c.b16 %v5272, %v5271
  %v5284 = vpack.c.b16 %v5273, %v5273
  %v5296 = vsel %vm553, %v5284, 0
  %5298 = vmatprep.subr.bf16.mxu0 0
  %5299 = vmatpush1.bf16.msra.mxu0 %v5274
  %5300 = vmatprep.subr.bf16.mxu0 0
  %5301 = vmatpush1.bf16.msra.mxu0 %v5275
  %5302 = vmatprep.subr.bf16.mxu0 0
  %5303 = vmatpush1.bf16.msra.mxu0 %v5276
  %5304 = vmatprep.subr.bf16.mxu0 0
  %5305 = vmatpush1.bf16.msra.mxu0 %v5277
  %5306 = vmatprep.subr.bf16.mxu0 0
  %5307 = vmatpush1.bf16.msra.mxu0 %v5278
  %5308 = vmatprep.subr.bf16.mxu0 0
  %5309 = vmatpush1.bf16.msra.mxu0 %v5279
  %5310 = vmatprep.subr.bf16.mxu0 0
  %5311 = vmatpush1.bf16.msra.mxu0 %v5280
  %5312 = vmatprep.subr.bf16.mxu0 0
  %5313 = vmatpush1.bf16.msra.mxu0 %v5281
  %5314 = vmatprep.subr.bf16.mxu0 0
  %5315 = vmatpush1.bf16.msra.mxu0 %v5282
  %5316 = vmatprep.subr.bf16.mxu0 0
  %5317 = vmatpush1.bf16.msra.mxu0 %v5283
  %5318 = vmatprep.subr.bf16.mxu0 0
  %5319 = vmatpush1.bf16.msra.mxu0 %v5296
  %5320 = vmatprep.subr.bf16.mxu0 0
  %5321 = vmatpush1.bf16.msra.mxu0 0
  %5322 = vmatprep.subr.bf16.mxu0 0
  %5323 = vmatpush1.bf16.msra.mxu0 0
  %5324 = vmatprep.subr.bf16.mxu0 0
  %5325 = vmatpush1.bf16.msra.mxu0 0
  %5326 = vmatprep.subr.bf16.mxu0 0
  %5327 = vmatpush1.bf16.msra.mxu0 0
  %5328 = vmatprep.subr.bf16.mxu0 0
  %5329 = vmatpush1.bf16.msra.mxu0 0
  %5330 = vmatprep.mubr.bf16.mxu0 %v464
  %5331 = vmatmul.mubr.bf16.gmra.mrb[0].mxu0 %v309
  %v5332 = vpop.f32.mrb[0].mxu0
  %v5333 = vadd.f32 0.0, %v5332
  %v5334 = vpop.f32.mrb[0].mxu0
  %v5335 = vpop.f32.mrb[0].mxu0
  %v5336 = vadd.f32 0.0, %v5335
  %v5337 = vpop.f32.mrb[0].mxu0
  %5338 = vmatprep.mubr.bf16.mxu0 %v467
  %5339 = vmatmul.mubr.bf16.gmra.mrb[0].mxu0 %v311
  %v5340 = vpop.f32.mrb[0].mxu0
  %v5341 = vadd.f32 0.0, %v5340
  %v5342 = vpop.f32.mrb[0].mxu0
  %v5343 = vpop.f32.mrb[0].mxu0
  %v5344 = vadd.f32 0.0, %v5343
  %v5345 = vpop.f32.mrb[0].mxu0
  %5346 = vmatprep.mubr.bf16.mxu0 %v470
  %5347 = vmatmul.mubr.bf16.gmra.mrb[0].mxu0 %v313
  %v5348 = vpop.f32.mrb[0].mxu0
  %v5349 = vadd.f32 0.0, %v5348
  %v5350 = vpop.f32.mrb[0].mxu0
  %v5351 = vpop.f32.mrb[0].mxu0
  %v5352 = vadd.f32 0.0, %v5351
  %v5353 = vpop.f32.mrb[0].mxu0
  %5354 = vmatprep.mubr.bf16.mxu0 %v473
  %5355 = vmatmul.mubr.bf16.gmra.mrb[0].mxu0 %v315
  %v5356 = vpop.f32.mrb[0].mxu0
  %v5357 = vadd.f32 0.0, %v5356
  %v5358 = vpop.f32.mrb[0].mxu0
  %v5359 = vpop.f32.mrb[0].mxu0
  %v5360 = vadd.f32 0.0, %v5359
  %v5361 = vpop.f32.mrb[0].mxu0
  %5362 = vmatprep.mubr.bf16.mxu0 %v476
  %5363 = vmatmul.mubr.bf16.gmra.mrb[0].mxu0 %v317
  %v5364 = vpop.f32.mrb[0].mxu0
  %v5365 = vadd.f32 0.0, %v5364
  %v5366 = vpop.f32.mrb[0].mxu0
  %v5367 = vpop.f32.mrb[0].mxu0
  %v5368 = vadd.f32 0.0, %v5367
  %v5369 = vpop.f32.mrb[0].mxu0
  %5370 = vmatprep.mubr.bf16.mxu0 %v479
  %5371 = vmatmul.mubr.bf16.gmra.mrb[0].mxu0 %v319
  %v5372 = vpop.f32.mrb[0].mxu0
  %v5373 = vadd.f32 0.0, %v5372
  %v5374 = vpop.f32.mrb[0].mxu0
  %v5375 = vpop.f32.mrb[0].mxu0
  %v5376 = vadd.f32 0.0, %v5375
  %v5377 = vpop.f32.mrb[0].mxu0
  %5378 = vmatprep.mubr.bf16.mxu0 %v482
  %5379 = vmatmul.mubr.bf16.gmra.mrb[0].mxu0 %v321
  %v5380 = vpop.f32.mrb[0].mxu0
  %v5381 = vadd.f32 0.0, %v5380
  %v5382 = vpop.f32.mrb[0].mxu0
  %v5383 = vpop.f32.mrb[0].mxu0
  %v5384 = vadd.f32 0.0, %v5383
  %v5385 = vpop.f32.mrb[0].mxu0
  %5386 = vmatprep.mubr.bf16.mxu0 %v485
  %5387 = vmatmul.mubr.bf16.gmra.mrb[0].mxu0 %v323
  %v5388 = vpop.f32.mrb[0].mxu0
  %v5389 = vadd.f32 0.0, %v5388
  %v5390 = vpop.f32.mrb[0].mxu0
  %v5391 = vpop.f32.mrb[0].mxu0
  %v5392 = vadd.f32 0.0, %v5391
  %v5393 = vpop.f32.mrb[0].mxu0
  %5394 = vmatprep.mubr.bf16.mxu0 %v488
  %5395 = vmatmul.mubr.bf16.gmra.mrb[0].mxu0 %v325
  %v5396 = vpop.f32.mrb[0].mxu0
  %v5397 = vadd.f32 0.0, %v5396
  %v5398 = vpop.f32.mrb[0].mxu0
  %v5399 = vpop.f32.mrb[0].mxu0
  %v5400 = vadd.f32 0.0, %v5399
  %v5401 = vpop.f32.mrb[0].mxu0
  %5402 = vmatprep.mubr.bf16.mxu0 %v491
  %5403 = vmatmul.mubr.bf16.gmra.mrb[0].mxu0 %v327
  %v5404 = vpop.f32.mrb[0].mxu0
  %v5405 = vadd.f32 0.0, %v5404
  %v5406 = vpop.f32.mrb[0].mxu0
  %v5407 = vpop.f32.mrb[0].mxu0
  %v5408 = vadd.f32 0.0, %v5407
  %v5409 = vpop.f32.mrb[0].mxu0
  %5410 = vmatprep.mubr.bf16.mxu0 %v494
  %5411 = vmatmul.mubr.bf16.gmra.mrb[0].mxu0 %v329
  %v5412 = vpop.f32.mrb[0].mxu0
  %v5413 = vadd.f32 0.0, %v5412
  %v5414 = vpop.f32.mrb[0].mxu0
  %v5415 = vpop.f32.mrb[0].mxu0
  %v5416 = vadd.f32 0.0, %v5415
  %v5417 = vpop.f32.mrb[0].mxu0
  %5418 = vmatprep.mubr.bf16.mxu0 %v497
  %5419 = vmatmul.mubr.bf16.gmra.mrb[0].mxu0 %v331
  %v5420 = vpop.f32.mrb[0].mxu0
  %v5421 = vadd.f32 0.0, %v5420
  %v5422 = vpop.f32.mrb[0].mxu0
  %v5423 = vpop.f32.mrb[0].mxu0
  %v5424 = vadd.f32 0.0, %v5423
  %v5425 = vpop.f32.mrb[0].mxu0
  %5426 = vmatprep.mubr.bf16.mxu0 %v500
  %5427 = vmatmul.mubr.bf16.gmra.mrb[0].mxu0 %v333
  %v5428 = vpop.f32.mrb[0].mxu0
  %v5429 = vadd.f32 0.0, %v5428
  %v5430 = vpop.f32.mrb[0].mxu0
  %v5431 = vpop.f32.mrb[0].mxu0
  %v5432 = vadd.f32 0.0, %v5431
  %v5433 = vpop.f32.mrb[0].mxu0
  %5434 = vmatprep.mubr.bf16.mxu0 %v503
  %5435 = vmatmul.mubr.bf16.gmra.mrb[0].mxu0 %v335
  %v5436 = vpop.f32.mrb[0].mxu0
  %v5437 = vadd.f32 0.0, %v5436
  %v5438 = vpop.f32.mrb[0].mxu0
  %v5439 = vpop.f32.mrb[0].mxu0
  %v5440 = vadd.f32 0.0, %v5439
  %v5441 = vpop.f32.mrb[0].mxu0
  %5442 = vmatprep.mubr.bf16.mxu0 %v506
  %5443 = vmatmul.mubr.bf16.gmra.mrb[0].mxu0 %v337
  %v5444 = vpop.f32.mrb[0].mxu0
  %v5445 = vadd.f32 0.0, %v5444
  %v5446 = vpop.f32.mrb[0].mxu0
  %v5447 = vpop.f32.mrb[0].mxu0
  %v5448 = vadd.f32 0.0, %v5447
  %v5449 = vpop.f32.mrb[0].mxu0
  %5450 = vmatprep.mubr.bf16.mxu0 %v509
  %5451 = vmatmul.mubr.bf16.gmra.mrb[0].mxu0 %v339
  %v5452 = vpop.f32.mrb[0].mxu0
  %v5453 = vadd.f32 0.0, %v5452
  %v5454 = vpop.f32.mrb[0].mxu0
  %v5455 = vpop.f32.mrb[0].mxu0
  %v5456 = vadd.f32 0.0, %v5455
  %v5457 = vpop.f32.mrb[0].mxu0
  %5458 = vmatprep.mubr.bf16.mxu0 %v512
  %5459 = vmatmul.mubr.bf16.gmra.mrb[0].mxu0 %v341
  %v5460 = vpop.f32.mrb[0].mxu0
  %v5461 = vadd.f32 0.0, %v5460
  %v5462 = vpop.f32.mrb[0].mxu0
  %v5463 = vpop.f32.mrb[0].mxu0
  %v5464 = vadd.f32 0.0, %v5463
  %v5465 = vpop.f32.mrb[0].mxu0
  %5466 = vmatprep.mubr.bf16.mxu0 %v515
  %5467 = vmatmul.mubr.bf16.gmra.mrb[0].mxu0 %v343
  %v5468 = vpop.f32.mrb[0].mxu0
  %v5469 = vadd.f32 0.0, %v5468
  %v5470 = vpop.f32.mrb[0].mxu0
  %v5471 = vpop.f32.mrb[0].mxu0
  %v5472 = vadd.f32 0.0, %v5471
  %v5473 = vpop.f32.mrb[0].mxu0
  %5474 = vmatprep.mubr.bf16.mxu0 %v518
  %5475 = vmatmul.mubr.bf16.gmra.mrb[0].mxu0 %v345
  %v5476 = vpop.f32.mrb[0].mxu0
  %v5477 = vadd.f32 0.0, %v5476
  %v5478 = vpop.f32.mrb[0].mxu0
  %v5479 = vpop.f32.mrb[0].mxu0
  %v5480 = vadd.f32 0.0, %v5479
  %v5481 = vpop.f32.mrb[0].mxu0
  %5482 = vmatprep.mubr.bf16.mxu0 %v521
  %5483 = vmatmul.mubr.bf16.gmra.mrb[0].mxu0 %v347
  %v5484 = vpop.f32.mrb[0].mxu0
  %v5485 = vadd.f32 0.0, %v5484
  %v5486 = vpop.f32.mrb[0].mxu0
  %v5487 = vpop.f32.mrb[0].mxu0
  %v5488 = vadd.f32 0.0, %v5487
  %v5489 = vpop.f32.mrb[0].mxu0
  %5490 = vmatprep.mubr.bf16.mxu0 %v524
  %5491 = vmatmul.mubr.bf16.gmra.mrb[0].mxu0 %v349
  %v5492 = vpop.f32.mrb[0].mxu0
  %v5493 = vadd.f32 0.0, %v5492
  %v5494 = vpop.f32.mrb[0].mxu0
  %v5495 = vpop.f32.mrb[0].mxu0
  %v5496 = vadd.f32 0.0, %v5495
  %v5497 = vpop.f32.mrb[0].mxu0
  %5498 = vmatprep.mubr.bf16.mxu0 %v527
  %5499 = vmatmul.mubr.bf16.gmra.mrb[0].mxu0 %v351
  %v5500 = vpop.f32.mrb[0].mxu0
  %v5501 = vadd.f32 0.0, %v5500
  %v5502 = vpop.f32.mrb[0].mxu0
  %v5503 = vpop.f32.mrb[0].mxu0
  %v5504 = vadd.f32 0.0, %v5503
  %v5505 = vpop.f32.mrb[0].mxu0
  %5506 = vmatprep.mubr.bf16.mxu0 %v530
  %5507 = vmatmul.mubr.bf16.gmra.mrb[0].mxu0 %v353
  %v5508 = vpop.f32.mrb[0].mxu0
  %v5509 = vadd.f32 0.0, %v5508
  %v5510 = vpop.f32.mrb[0].mxu0
  %v5511 = vpop.f32.mrb[0].mxu0
  %v5512 = vadd.f32 0.0, %v5511
  %v5513 = vpop.f32.mrb[0].mxu0
  %5514 = vmatprep.mubr.bf16.mxu0 %v533
  %5515 = vmatmul.mubr.bf16.gmra.mrb[0].mxu0 %v355
  %v5516 = vpop.f32.mrb[0].mxu0
  %v5517 = vadd.f32 0.0, %v5516
  %v5518 = vpop.f32.mrb[0].mxu0
  %v5519 = vpop.f32.mrb[0].mxu0
  %v5520 = vadd.f32 0.0, %v5519
  %v5521 = vpop.f32.mrb[0].mxu0
  %5522 = vmatprep.mubr.bf16.mxu0 %v536
  %5523 = vmatmul.mubr.bf16.gmra.mrb[0].mxu0 %v357
  %v5524 = vpop.f32.mrb[0].mxu0
  %v5525 = vadd.f32 0.0, %v5524
  %v5526 = vpop.f32.mrb[0].mxu0
  %v5527 = vpop.f32.mrb[0].mxu0
  %v5528 = vadd.f32 0.0, %v5527
  %v5529 = vpop.f32.mrb[0].mxu0
  %5530 = vmatprep.mubr.bf16.mxu0 %v539
  %5531 = vmatmul.mubr.bf16.gmra.mrb[0].mxu0 %v359
  %v5532 = vpop.f32.mrb[0].mxu0
  %v5533 = vadd.f32 0.0, %v5532
  %v5534 = vpop.f32.mrb[0].mxu0
  %v5535 = vpop.f32.mrb[0].mxu0
  %v5536 = vadd.f32 0.0, %v5535
  %v5537 = vpop.f32.mrb[0].mxu0
  %5538 = vmatprep.mubr.bf16.mxu0 %v542
  %5539 = vmatmul.mubr.bf16.gmra.mrb[0].mxu0 %v361
  %v5540 = vpop.f32.mrb[0].mxu0
  %v5541 = vadd.f32 0.0, %v5540
  %v5542 = vpop.f32.mrb[0].mxu0
  %v5543 = vpop.f32.mrb[0].mxu0
  %v5544 = vadd.f32 0.0, %v5543
  %v5545 = vpop.f32.mrb[0].mxu0
  %5546 = vmatprep.mubr.bf16.mxu0 %v545
  %5547 = vmatmul.mubr.bf16.gmra.mrb[0].mxu0 %v363
  %v5548 = vpop.f32.mrb[0].mxu0
  %v5549 = vadd.f32 0.0, %v5548
  %v5550 = vpop.f32.mrb[0].mxu0
  %v5551 = vpop.f32.mrb[0].mxu0
  %v5552 = vadd.f32 0.0, %v5551
  %v5553 = vpop.f32.mrb[0].mxu0
  %5554 = vmatprep.mubr.bf16.mxu0 %v548
  %5555 = vmatmul.mubr.bf16.gmra.mrb[0].mxu0 %v365
  %v5556 = vpop.f32.mrb[0].mxu0
  %v5557 = vadd.f32 0.0, %v5556
  %v5558 = vpop.f32.mrb[0].mxu0
  %v5559 = vpop.f32.mrb[0].mxu0
  %v5560 = vadd.f32 0.0, %v5559
  %v5561 = vpop.f32.mrb[0].mxu0
  %5562 = vmatprep.mubr.bf16.mxu0 %v551
  %5563 = vmatmul.mubr.bf16.gmra.mrb[0].mxu0 %v367
  %v5564 = vpop.f32.mrb[0].mxu0
  %v5565 = vadd.f32 0.0, %v5564
  %v5566 = vpop.f32.mrb[0].mxu0
  %v5567 = vpop.f32.mrb[0].mxu0
  %v5568 = vadd.f32 0.0, %v5567
  %v5569 = vpop.f32.mrb[0].mxu0
  %5570 = vdwg.mxu0
  %v5571 = vmax.f32 %v5333, %v5392
  %v5572 = vmax.f32 %v5336, %v5397
  %v5573 = vmax.f32 %v5341, %v5400
  %v5574 = vmax.f32 %v5344, %v5405
  %v5575 = vmax.f32 %v5349, %v5408
  %v5576 = vmax.f32 %v5352, %v5413
  %v5577 = vmax.f32 %v5357, %v5416
  %v5578 = vmax.f32 %v5360, %v5421
  %v5579 = vmax.f32 %v5365, %v5424
  %v5580 = vmax.f32 %v5368, %v5429
  %v5581 = vmax.f32 %v5373, %v5432
  %v5582 = vmax.f32 %v5376, %v5437
  %v5583 = vmax.f32 %v5381, %v5440
  %v5584 = vmax.f32 %v5384, %v5445
  %v5585 = vmax.f32 %v5389, %v5448
  %v5586 = vmax.f32 %v5453, %v5512
  %v5587 = vmax.f32 %v5456, %v5517
  %v5588 = vmax.f32 %v5461, %v5520
  %v5589 = vmax.f32 %v5464, %v5525
  %v5590 = vmax.f32 %v5469, %v5528
  %v5591 = vmax.f32 %v5472, %v5533
  %v5592 = vmax.f32 %v5477, %v5536
  %v5593 = vmax.f32 %v5480, %v5541
  %v5594 = vmax.f32 %v5485, %v5544
  %v5595 = vmax.f32 %v5488, %v5549
  %v5596 = vmax.f32 %v5493, %v5552
  %v5597 = vmax.f32 %v5496, %v5557
  %v5598 = vmax.f32 %v5501, %v5560
  %v5599 = vmax.f32 %v5504, %v5565
  %v5600 = vmax.f32 %v5509, %v5568
  %v5601 = vmax.f32 %v5571, %v5586
  %v5602 = vmax.f32 %v5572, %v5587
  %v5603 = vmax.f32 %v5573, %v5588
  %v5604 = vmax.f32 %v5574, %v5589
  %v5605 = vmax.f32 %v5575, %v5590
  %v5606 = vmax.f32 %v5576, %v5591
  %v5607 = vmax.f32 %v5577, %v5592
  %v5608 = vmax.f32 %v5578, %v5593
  %v5609 = vmax.f32 %v5579, %v5594
  %v5610 = vmax.f32 %v5580, %v5595
  %v5611 = vmax.f32 %v5581, %v5596
  %v5612 = vmax.f32 %v5582, %v5597
  %v5613 = vmax.f32 %v5583, %v5598
  %v5614 = vmax.f32 %v5584, %v5599
  %v5615 = vmax.f32 %v5585, %v5600
  %v5616 = vadd.f32 %v5601, %v878
  %v5617 = vadd.f32 %v5602, %v883
  %v5618 = vadd.f32 %v5603, %v888
  %v5619 = vadd.f32 %v5604, %v893
  %v5620 = vadd.f32 %v5605, %v898
  %v5621 = vadd.f32 %v5606, %v903
  %v5622 = vadd.f32 %v5607, %v908
  %v5623 = vadd.f32 %v5608, %v913
  %v5624 = vadd.f32 %v5609, %v918
  %v5625 = vadd.f32 %v5610, %v923
  %v5626 = vadd.f32 %v5611, %v928
  %v5627 = vadd.f32 %v5612, %v933
  %v5628 = vadd.f32 %v5613, %v938
  %v5629 = vadd.f32 %v5614, %v943
  %v5630 = vadd.f32 %v5615, %v948
  %v5631 = vmax.f32 %v5616, 0.0
  %v5632 = vmax.f32 %v5617, 0.0
  %v5633 = vmax.f32 %v5618, 0.0
  %v5634 = vmax.f32 %v5619, 0.0
  %v5635 = vmax.f32 %v5620, 0.0
  %v5636 = vmax.f32 %v5621, 0.0
  %v5637 = vmax.f32 %v5622, 0.0
  %v5638 = vmax.f32 %v5623, 0.0
  %v5639 = vmax.f32 %v5624, 0.0
  %v5640 = vmax.f32 %v5625, 0.0
  %v5641 = vmax.f32 %v5626, 0.0
  %v5642 = vmax.f32 %v5627, 0.0
  %v5643 = vmax.f32 %v5628, 0.0
  %v5644 = vmax.f32 %v5629, 0.0
  %v5645 = vmax.f32 %v5630, 0.0
  %v5646 = vpack.c.bf16 %v5632, %v5631
  %v5647 = vpack.c.bf16 %v5634, %v5633
  %v5648 = vpack.c.bf16 %v5636, %v5635
  %v5649 = vpack.c.bf16 %v5638, %v5637
  %v5650 = vpack.c.bf16 %v5640, %v5639
  %v5651 = vpack.c.bf16 %v5642, %v5641
  %v5652 = vpack.c.bf16 %v5644, %v5643
  %v5653 = vpack.c.bf16 %v5645, %v5645
  %5654 = vst [vmem:[#allocation2 + $0x258] sm:$0xff] %v5646
  %5655 = vst [vmem:[#allocation2 + $0x260] sm:$0xff] %v5647
  %5656 = vst [vmem:[#allocation2 + $0x268] sm:$0xff] %v5648
  %5657 = vst [vmem:[#allocation2 + $0x270] sm:$0xff] %v5649
  %5658 = vst [vmem:[#allocation2 + $0x278] sm:$0xff] %v5650
  %5659 = vst [vmem:[#allocation2 + $0x280] sm:$0xff] %v5651
  %5660 = vst [vmem:[#allocation2 + $0x288] sm:$0xff] %v5652
  %5661 = vst [vmem:[#allocation2 + $0x290] sm:$0xf] %v5653
  %v5662 = vld [vmem:[%s0 + $0x134] sm:$0xf]
  %v5663 = vld [vmem:[%s0 + $0x138] sm:$0xf]
  %v5664 = vld [vmem:[%s0 + $0x13c] sm:$0xf]
  %v5665 = vld [vmem:[%s0 + $0x140] sm:$0xf]
  %v5666 = vld [vmem:[%s0 + $0x144] sm:$0xf]
  %v5667 = vld [vmem:[%s0 + $0x148] sm:$0xf]
  %v5668 = vld [vmem:[%s0 + $0x14c] sm:$0xf]
  %v5669 = vld [vmem:[%s0 + $0x150] sm:$0xf]
  %v5670 = vld [vmem:[%s0 + $0x154] sm:$0xf]
  %v5671 = vld [vmem:[%s0 + $0x158] sm:$0xf]
  %v5672 = vld [vmem:[%s0 + $0x15c] sm:$0xf]
  %v5673 = vld [vmem:[%s0 + $0x160] sm:$0xf]
  %v5674 = vld [vmem:[%s0 + $0x164] sm:$0xf]
  %v5675 = vld [vmem:[%s0 + $0x168] sm:$0xf]
  %v5676 = vld [vmem:[%s0 + $0x16c] sm:$0xf]
  %v5677 = vld [vmem:[%s0 + $0x170] sm:$0xf]
  %v5678 = vld [vmem:[%s0 + $0x174] sm:$0xf]
  %v5679 = vld [vmem:[%s0 + $0x178] sm:$0xf]
  %v5680 = vld [vmem:[%s0 + $0x17c] sm:$0xf]
  %v5681 = vld [vmem:[%s0 + $0x180] sm:$0xf]
  %v5682 = vld [vmem:[%s0 + $0x184] sm:$0xf]
  %v5704 = vunpack.c.l.b16 %v5662
  %v5705 = vunpack.c.l.b16 %v5663
  %v5706 = vunpack.c.l.b16 %v5664
  %v5707 = vunpack.c.l.b16 %v5665
  %v5708 = vunpack.c.l.b16 %v5666
  %v5709 = vunpack.c.l.b16 %v5667
  %v5710 = vunpack.c.l.b16 %v5668
  %v5711 = vunpack.c.l.b16 %v5669
  %v5712 = vunpack.c.l.b16 %v5670
  %v5713 = vunpack.c.l.b16 %v5671
  %v5714 = vunpack.c.l.b16 %v5672
  %v5715 = vunpack.c.l.b16 %v5673
  %v5716 = vunpack.c.l.b16 %v5674
  %v5717 = vunpack.c.l.b16 %v5675
  %v5718 = vunpack.c.l.b16 %v5676
  %v5719 = vunpack.c.l.b16 %v5677
  %v5720 = vunpack.c.l.b16 %v5678
  %v5721 = vunpack.c.l.b16 %v5679
  %v5722 = vunpack.c.l.b16 %v5680
  %v5723 = vunpack.c.l.b16 %v5681
  %v5724 = vunpack.c.l.b16 %v5682
  %v5725 = vpack.c.b16 %v5705, %v5704
  %v5726 = vpack.c.b16 %v5707, %v5706
  %v5727 = vpack.c.b16 %v5709, %v5708
  %v5728 = vpack.c.b16 %v5711, %v5710
  %v5729 = vpack.c.b16 %v5713, %v5712
  %v5730 = vpack.c.b16 %v5715, %v5714
  %v5731 = vpack.c.b16 %v5717, %v5716
  %v5732 = vpack.c.b16 %v5719, %v5718
  %v5733 = vpack.c.b16 %v5721, %v5720
  %v5734 = vpack.c.b16 %v5723, %v5722
  %v5735 = vpack.c.b16 %v5724, %v5724
  %v5747 = vsel %vm553, %v5735, 0
  %5749 = vmatprep.subr.bf16.mxu0 0
  %5750 = vmatpush1.bf16.msra.mxu0 %v5725
  %5751 = vmatprep.subr.bf16.mxu0 0
  %5752 = vmatpush1.bf16.msra.mxu0 %v5726
  %5753 = vmatprep.subr.bf16.mxu0 0
  %5754 = vmatpush1.bf16.msra.mxu0 %v5727
  %5755 = vmatprep.subr.bf16.mxu0 0
  %5756 = vmatpush1.bf16.msra.mxu0 %v5728
  %5757 = vmatprep.subr.bf16.mxu0 0
  %5758 = vmatpush1.bf16.msra.mxu0 %v5729
  %5759 = vmatprep.subr.bf16.mxu0 0
  %5760 = vmatpush1.bf16.msra.mxu0 %v5730
  %5761 = vmatprep.subr.bf16.mxu0 0
  %5762 = vmatpush1.bf16.msra.mxu0 %v5731
  %5763 = vmatprep.subr.bf16.mxu0 0
  %5764 = vmatpush1.bf16.msra.mxu0 %v5732
  %5765 = vmatprep.subr.bf16.mxu0 0
  %5766 = vmatpush1.bf16.msra.mxu0 %v5733
  %5767 = vmatprep.subr.bf16.mxu0 0
  %5768 = vmatpush1.bf16.msra.mxu0 %v5734
  %5769 = vmatprep.subr.bf16.mxu0 0
  %5770 = vmatpush1.bf16.msra.mxu0 %v5747
  %5771 = vmatprep.subr.bf16.mxu0 0
  %5772 = vmatpush1.bf16.msra.mxu0 0
  %5773 = vmatprep.subr.bf16.mxu0 0
  %5774 = vmatpush1.bf16.msra.mxu0 0
  %5775 = vmatprep.subr.bf16.mxu0 0
  %5776 = vmatpush1.bf16.msra.mxu0 0
  %5777 = vmatprep.subr.bf16.mxu0 0
  %5778 = vmatpush1.bf16.msra.mxu0 0
  %5779 = vmatprep.subr.bf16.mxu0 0
  %5780 = vmatpush1.bf16.msra.mxu0 0
  %5781 = vmatprep.mubr.bf16.mxu0 %v464
  %5782 = vmatmul.mubr.bf16.gmra.mrb[0].mxu0 %v309
  %v5783 = vpop.f32.mrb[0].mxu0
  %v5784 = vadd.f32 0.0, %v5783
  %v5785 = vpop.f32.mrb[0].mxu0
  %v5786 = vpop.f32.mrb[0].mxu0
  %v5787 = vadd.f32 0.0, %v5786
  %v5788 = vpop.f32.mrb[0].mxu0
  %5789 = vmatprep.mubr.bf16.mxu0 %v467
  %5790 = vmatmul.mubr.bf16.gmra.mrb[0].mxu0 %v311
  %v5791 = vpop.f32.mrb[0].mxu0
  %v5792 = vadd.f32 0.0, %v5791
  %v5793 = vpop.f32.mrb[0].mxu0
  %v5794 = vpop.f32.mrb[0].mxu0
  %v5795 = vadd.f32 0.0, %v5794
  %v5796 = vpop.f32.mrb[0].mxu0
  %5797 = vmatprep.mubr.bf16.mxu0 %v470
  %5798 = vmatmul.mubr.bf16.gmra.mrb[0].mxu0 %v313
  %v5799 = vpop.f32.mrb[0].mxu0
  %v5800 = vadd.f32 0.0, %v5799
  %v5801 = vpop.f32.mrb[0].mxu0
  %v5802 = vpop.f32.mrb[0].mxu0
  %v5803 = vadd.f32 0.0, %v5802
  %v5804 = vpop.f32.mrb[0].mxu0
  %5805 = vmatprep.mubr.bf16.mxu0 %v473
  %5806 = vmatmul.mubr.bf16.gmra.mrb[0].mxu0 %v315
  %v5807 = vpop.f32.mrb[0].mxu0
  %v5808 = vadd.f32 0.0, %v5807
  %v5809 = vpop.f32.mrb[0].mxu0
  %v5810 = vpop.f32.mrb[0].mxu0
  %v5811 = vadd.f32 0.0, %v5810
  %v5812 = vpop.f32.mrb[0].mxu0
  %5813 = vmatprep.mubr.bf16.mxu0 %v476
  %5814 = vmatmul.mubr.bf16.gmra.mrb[0].mxu0 %v317
  %v5815 = vpop.f32.mrb[0].mxu0
  %v5816 = vadd.f32 0.0, %v5815
  %v5817 = vpop.f32.mrb[0].mxu0
  %v5818 = vpop.f32.mrb[0].mxu0
  %v5819 = vadd.f32 0.0, %v5818
  %v5820 = vpop.f32.mrb[0].mxu0
  %5821 = vmatprep.mubr.bf16.mxu0 %v479
  %5822 = vmatmul.mubr.bf16.gmra.mrb[0].mxu0 %v319
  %v5823 = vpop.f32.mrb[0].mxu0
  %v5824 = vadd.f32 0.0, %v5823
  %v5825 = vpop.f32.mrb[0].mxu0
  %v5826 = vpop.f32.mrb[0].mxu0
  %v5827 = vadd.f32 0.0, %v5826
  %v5828 = vpop.f32.mrb[0].mxu0
  %5829 = vmatprep.mubr.bf16.mxu0 %v482
  %5830 = vmatmul.mubr.bf16.gmra.mrb[0].mxu0 %v321
  %v5831 = vpop.f32.mrb[0].mxu0
  %v5832 = vadd.f32 0.0, %v5831
  %v5833 = vpop.f32.mrb[0].mxu0
  %v5834 = vpop.f32.mrb[0].mxu0
  %v5835 = vadd.f32 0.0, %v5834
  %v5836 = vpop.f32.mrb[0].mxu0
  %5837 = vmatprep.mubr.bf16.mxu0 %v485
  %5838 = vmatmul.mubr.bf16.gmra.mrb[0].mxu0 %v323
  %v5839 = vpop.f32.mrb[0].mxu0
  %v5840 = vadd.f32 0.0, %v5839
  %v5841 = vpop.f32.mrb[0].mxu0
  %v5842 = vpop.f32.mrb[0].mxu0
  %v5843 = vadd.f32 0.0, %v5842
  %v5844 = vpop.f32.mrb[0].mxu0
  %5845 = vmatprep.mubr.bf16.mxu0 %v488
  %5846 = vmatmul.mubr.bf16.gmra.mrb[0].mxu0 %v325
  %v5847 = vpop.f32.mrb[0].mxu0
  %v5848 = vadd.f32 0.0, %v5847
  %v5849 = vpop.f32.mrb[0].mxu0
  %v5850 = vpop.f32.mrb[0].mxu0
  %v5851 = vadd.f32 0.0, %v5850
  %v5852 = vpop.f32.mrb[0].mxu0
  %5853 = vmatprep.mubr.bf16.mxu0 %v491
  %5854 = vmatmul.mubr.bf16.gmra.mrb[0].mxu0 %v327
  %v5855 = vpop.f32.mrb[0].mxu0
  %v5856 = vadd.f32 0.0, %v5855
  %v5857 = vpop.f32.mrb[0].mxu0
  %v5858 = vpop.f32.mrb[0].mxu0
  %v5859 = vadd.f32 0.0, %v5858
  %v5860 = vpop.f32.mrb[0].mxu0
  %5861 = vmatprep.mubr.bf16.mxu0 %v494
  %5862 = vmatmul.mubr.bf16.gmra.mrb[0].mxu0 %v329
  %v5863 = vpop.f32.mrb[0].mxu0
  %v5864 = vadd.f32 0.0, %v5863
  %v5865 = vpop.f32.mrb[0].mxu0
  %v5866 = vpop.f32.mrb[0].mxu0
  %v5867 = vadd.f32 0.0, %v5866
  %v5868 = vpop.f32.mrb[0].mxu0
  %5869 = vmatprep.mubr.bf16.mxu0 %v497
  %5870 = vmatmul.mubr.bf16.gmra.mrb[0].mxu0 %v331
  %v5871 = vpop.f32.mrb[0].mxu0
  %v5872 = vadd.f32 0.0, %v5871
  %v5873 = vpop.f32.mrb[0].mxu0
  %v5874 = vpop.f32.mrb[0].mxu0
  %v5875 = vadd.f32 0.0, %v5874
  %v5876 = vpop.f32.mrb[0].mxu0
  %5877 = vmatprep.mubr.bf16.mxu0 %v500
  %5878 = vmatmul.mubr.bf16.gmra.mrb[0].mxu0 %v333
  %v5879 = vpop.f32.mrb[0].mxu0
  %v5880 = vadd.f32 0.0, %v5879
  %v5881 = vpop.f32.mrb[0].mxu0
  %v5882 = vpop.f32.mrb[0].mxu0
  %v5883 = vadd.f32 0.0, %v5882
  %v5884 = vpop.f32.mrb[0].mxu0
  %5885 = vmatprep.mubr.bf16.mxu0 %v503
  %5886 = vmatmul.mubr.bf16.gmra.mrb[0].mxu0 %v335
  %v5887 = vpop.f32.mrb[0].mxu0
  %v5888 = vadd.f32 0.0, %v5887
  %v5889 = vpop.f32.mrb[0].mxu0
  %v5890 = vpop.f32.mrb[0].mxu0
  %v5891 = vadd.f32 0.0, %v5890
  %v5892 = vpop.f32.mrb[0].mxu0
  %5893 = vmatprep.mubr.bf16.mxu0 %v506
  %5894 = vmatmul.mubr.bf16.gmra.mrb[0].mxu0 %v337
  %v5895 = vpop.f32.mrb[0].mxu0
  %v5896 = vadd.f32 0.0, %v5895
  %v5897 = vpop.f32.mrb[0].mxu0
  %v5898 = vpop.f32.mrb[0].mxu0
  %v5899 = vadd.f32 0.0, %v5898
  %v5900 = vpop.f32.mrb[0].mxu0
  %5901 = vmatprep.mubr.bf16.mxu0 %v509
  %5902 = vmatmul.mubr.bf16.gmra.mrb[0].mxu0 %v339
  %v5903 = vpop.f32.mrb[0].mxu0
  %v5904 = vadd.f32 0.0, %v5903
  %v5905 = vpop.f32.mrb[0].mxu0
  %v5906 = vpop.f32.mrb[0].mxu0
  %v5907 = vadd.f32 0.0, %v5906
  %v5908 = vpop.f32.mrb[0].mxu0
  %5909 = vmatprep.mubr.bf16.mxu0 %v512
  %5910 = vmatmul.mubr.bf16.gmra.mrb[0].mxu0 %v341
  %v5911 = vpop.f32.mrb[0].mxu0
  %v5912 = vadd.f32 0.0, %v5911
  %v5913 = vpop.f32.mrb[0].mxu0
  %v5914 = vpop.f32.mrb[0].mxu0
  %v5915 = vadd.f32 0.0, %v5914
  %v5916 = vpop.f32.mrb[0].mxu0
  %5917 = vmatprep.mubr.bf16.mxu0 %v515
  %5918 = vmatmul.mubr.bf16.gmra.mrb[0].mxu0 %v343
  %v5919 = vpop.f32.mrb[0].mxu0
  %v5920 = vadd.f32 0.0, %v5919
  %v5921 = vpop.f32.mrb[0].mxu0
  %v5922 = vpop.f32.mrb[0].mxu0
  %v5923 = vadd.f32 0.0, %v5922
  %v5924 = vpop.f32.mrb[0].mxu0
  %5925 = vmatprep.mubr.bf16.mxu0 %v518
  %5926 = vmatmul.mubr.bf16.gmra.mrb[0].mxu0 %v345
  %v5927 = vpop.f32.mrb[0].mxu0
  %v5928 = vadd.f32 0.0, %v5927
  %v5929 = vpop.f32.mrb[0].mxu0
  %v5930 = vpop.f32.mrb[0].mxu0
  %v5931 = vadd.f32 0.0, %v5930
  %v5932 = vpop.f32.mrb[0].mxu0
  %5933 = vmatprep.mubr.bf16.mxu0 %v521
  %5934 = vmatmul.mubr.bf16.gmra.mrb[0].mxu0 %v347
  %v5935 = vpop.f32.mrb[0].mxu0
  %v5936 = vadd.f32 0.0, %v5935
  %v5937 = vpop.f32.mrb[0].mxu0
  %v5938 = vpop.f32.mrb[0].mxu0
  %v5939 = vadd.f32 0.0, %v5938
  %v5940 = vpop.f32.mrb[0].mxu0
  %5941 = vmatprep.mubr.bf16.mxu0 %v524
  %5942 = vmatmul.mubr.bf16.gmra.mrb[0].mxu0 %v349
  %v5943 = vpop.f32.mrb[0].mxu0
  %v5944 = vadd.f32 0.0, %v5943
  %v5945 = vpop.f32.mrb[0].mxu0
  %v5946 = vpop.f32.mrb[0].mxu0
  %v5947 = vadd.f32 0.0, %v5946
  %v5948 = vpop.f32.mrb[0].mxu0
  %5949 = vmatprep.mubr.bf16.mxu0 %v527
  %5950 = vmatmul.mubr.bf16.gmra.mrb[0].mxu0 %v351
  %v5951 = vpop.f32.mrb[0].mxu0
  %v5952 = vadd.f32 0.0, %v5951
  %v5953 = vpop.f32.mrb[0].mxu0
  %v5954 = vpop.f32.mrb[0].mxu0
  %v5955 = vadd.f32 0.0, %v5954
  %v5956 = vpop.f32.mrb[0].mxu0
  %5957 = vmatprep.mubr.bf16.mxu0 %v530
  %5958 = vmatmul.mubr.bf16.gmra.mrb[0].mxu0 %v353
  %v5959 = vpop.f32.mrb[0].mxu0
  %v5960 = vadd.f32 0.0, %v5959
  %v5961 = vpop.f32.mrb[0].mxu0
  %v5962 = vpop.f32.mrb[0].mxu0
  %v5963 = vadd.f32 0.0, %v5962
  %v5964 = vpop.f32.mrb[0].mxu0
  %5965 = vmatprep.mubr.bf16.mxu0 %v533
  %5966 = vmatmul.mubr.bf16.gmra.mrb[0].mxu0 %v355
  %v5967 = vpop.f32.mrb[0].mxu0
  %v5968 = vadd.f32 0.0, %v5967
  %v5969 = vpop.f32.mrb[0].mxu0
  %v5970 = vpop.f32.mrb[0].mxu0
  %v5971 = vadd.f32 0.0, %v5970
  %v5972 = vpop.f32.mrb[0].mxu0
  %5973 = vmatprep.mubr.bf16.mxu0 %v536
  %5974 = vmatmul.mubr.bf16.gmra.mrb[0].mxu0 %v357
  %v5975 = vpop.f32.mrb[0].mxu0
  %v5976 = vadd.f32 0.0, %v5975
  %v5977 = vpop.f32.mrb[0].mxu0
  %v5978 = vpop.f32.mrb[0].mxu0
  %v5979 = vadd.f32 0.0, %v5978
  %v5980 = vpop.f32.mrb[0].mxu0
  %5981 = vmatprep.mubr.bf16.mxu0 %v539
  %5982 = vmatmul.mubr.bf16.gmra.mrb[0].mxu0 %v359
  %v5983 = vpop.f32.mrb[0].mxu0
  %v5984 = vadd.f32 0.0, %v5983
  %v5985 = vpop.f32.mrb[0].mxu0
  %v5986 = vpop.f32.mrb[0].mxu0
  %v5987 = vadd.f32 0.0, %v5986
  %v5988 = vpop.f32.mrb[0].mxu0
  %5989 = vmatprep.mubr.bf16.mxu0 %v542
  %5990 = vmatmul.mubr.bf16.gmra.mrb[0].mxu0 %v361
  %v5991 = vpop.f32.mrb[0].mxu0
  %v5992 = vadd.f32 0.0, %v5991
  %v5993 = vpop.f32.mrb[0].mxu0
  %v5994 = vpop.f32.mrb[0].mxu0
  %v5995 = vadd.f32 0.0, %v5994
  %v5996 = vpop.f32.mrb[0].mxu0
  %5997 = vmatprep.mubr.bf16.mxu0 %v545
  %5998 = vmatmul.mubr.bf16.gmra.mrb[0].mxu0 %v363
  %v5999 = vpop.f32.mrb[0].mxu0
  %v6000 = vadd.f32 0.0, %v5999
  %v6001 = vpop.f32.mrb[0].mxu0
  %v6002 = vpop.f32.mrb[0].mxu0
  %v6003 = vadd.f32 0.0, %v6002
  %v6004 = vpop.f32.mrb[0].mxu0
  %6005 = vmatprep.mubr.bf16.mxu0 %v548
  %6006 = vmatmul.mubr.bf16.gmra.mrb[0].mxu0 %v365
  %v6007 = vpop.f32.mrb[0].mxu0
  %v6008 = vadd.f32 0.0, %v6007
  %v6009 = vpop.f32.mrb[0].mxu0
  %v6010 = vpop.f32.mrb[0].mxu0
  %v6011 = vadd.f32 0.0, %v6010
  %v6012 = vpop.f32.mrb[0].mxu0
  %6013 = vmatprep.mubr.bf16.mxu0 %v551
  %6014 = vmatmul.mubr.bf16.gmra.mrb[0].mxu0 %v367
  %v6015 = vpop.f32.mrb[0].mxu0
  %v6016 = vadd.f32 0.0, %v6015
  %v6017 = vpop.f32.mrb[0].mxu0
  %v6018 = vpop.f32.mrb[0].mxu0
  %v6019 = vadd.f32 0.0, %v6018
  %v6020 = vpop.f32.mrb[0].mxu0
  %6021 = vdwg.mxu0
  %v6022 = vmax.f32 %v5784, %v5843
  %v6023 = vmax.f32 %v5787, %v5848
  %v6024 = vmax.f32 %v5792, %v5851
  %v6025 = vmax.f32 %v5795, %v5856
  %v6026 = vmax.f32 %v5800, %v5859
  %v6027 = vmax.f32 %v5803, %v5864
  %v6028 = vmax.f32 %v5808, %v5867
  %v6029 = vmax.f32 %v5811, %v5872
  %v6030 = vmax.f32 %v5816, %v5875
  %v6031 = vmax.f32 %v5819, %v5880
  %v6032 = vmax.f32 %v5824, %v5883
  %v6033 = vmax.f32 %v5827, %v5888
  %v6034 = vmax.f32 %v5832, %v5891
  %v6035 = vmax.f32 %v5835, %v5896
  %v6036 = vmax.f32 %v5840, %v5899
  %v6037 = vmax.f32 %v5904, %v5963
  %v6038 = vmax.f32 %v5907, %v5968
  %v6039 = vmax.f32 %v5912, %v5971
  %v6040 = vmax.f32 %v5915, %v5976
  %v6041 = vmax.f32 %v5920, %v5979
  %v6042 = vmax.f32 %v5923, %v5984
  %v6043 = vmax.f32 %v5928, %v5987
  %v6044 = vmax.f32 %v5931, %v5992
  %v6045 = vmax.f32 %v5936, %v5995
  %v6046 = vmax.f32 %v5939, %v6000
  %v6047 = vmax.f32 %v5944, %v6003
  %v6048 = vmax.f32 %v5947, %v6008
  %v6049 = vmax.f32 %v5952, %v6011
  %v6050 = vmax.f32 %v5955, %v6016
  %v6051 = vmax.f32 %v5960, %v6019
  %v6052 = vmax.f32 %v6022, %v6037
  %v6053 = vmax.f32 %v6023, %v6038
  %v6054 = vmax.f32 %v6024, %v6039
  %v6055 = vmax.f32 %v6025, %v6040
  %v6056 = vmax.f32 %v6026, %v6041
  %v6057 = vmax.f32 %v6027, %v6042
  %v6058 = vmax.f32 %v6028, %v6043
  %v6059 = vmax.f32 %v6029, %v6044
  %v6060 = vmax.f32 %v6030, %v6045
  %v6061 = vmax.f32 %v6031, %v6046
  %v6062 = vmax.f32 %v6032, %v6047
  %v6063 = vmax.f32 %v6033, %v6048
  %v6064 = vmax.f32 %v6034, %v6049
  %v6065 = vmax.f32 %v6035, %v6050
  %v6066 = vmax.f32 %v6036, %v6051
  %v6067 = vadd.f32 %v6052, %v878
  %v6068 = vadd.f32 %v6053, %v883
  %v6069 = vadd.f32 %v6054, %v888
  %v6070 = vadd.f32 %v6055, %v893
  %v6071 = vadd.f32 %v6056, %v898
  %v6072 = vadd.f32 %v6057, %v903
  %v6073 = vadd.f32 %v6058, %v908
  %v6074 = vadd.f32 %v6059, %v913
  %v6075 = vadd.f32 %v6060, %v918
  %v6076 = vadd.f32 %v6061, %v923
  %v6077 = vadd.f32 %v6062, %v928
  %v6078 = vadd.f32 %v6063, %v933
  %v6079 = vadd.f32 %v6064, %v938
  %v6080 = vadd.f32 %v6065, %v943
  %v6081 = vadd.f32 %v6066, %v948
  %v6082 = vmax.f32 %v6067, 0.0
  %v6083 = vmax.f32 %v6068, 0.0
  %v6084 = vmax.f32 %v6069, 0.0
  %v6085 = vmax.f32 %v6070, 0.0
  %v6086 = vmax.f32 %v6071, 0.0
  %v6087 = vmax.f32 %v6072, 0.0
  %v6088 = vmax.f32 %v6073, 0.0
  %v6089 = vmax.f32 %v6074, 0.0
  %v6090 = vmax.f32 %v6075, 0.0
  %v6091 = vmax.f32 %v6076, 0.0
  %v6092 = vmax.f32 %v6077, 0.0
  %v6093 = vmax.f32 %v6078, 0.0
  %v6094 = vmax.f32 %v6079, 0.0
  %v6095 = vmax.f32 %v6080, 0.0
  %v6096 = vmax.f32 %v6081, 0.0
  %v6097 = vpack.c.bf16 %v6083, %v6082
  %v6098 = vpack.c.bf16 %v6085, %v6084
  %v6099 = vpack.c.bf16 %v6087, %v6086
  %v6100 = vpack.c.bf16 %v6089, %v6088
  %v6101 = vpack.c.bf16 %v6091, %v6090
  %v6102 = vpack.c.bf16 %v6093, %v6092
  %v6103 = vpack.c.bf16 %v6095, %v6094
  %v6104 = vpack.c.bf16 %v6096, %v6096
  %v6113 = vrot.slane %v6097, 4
  %v6114 = vrot.slane %v6098, 4
  %v6115 = vsel %vm1447, %v6113, %v6114
  %v6116 = vrot.slane %v6099, 4
  %v6117 = vsel %vm1447, %v6114, %v6116
  %v6118 = vrot.slane %v6100, 4
  %v6119 = vsel %vm1447, %v6116, %v6118
  %v6120 = vrot.slane %v6101, 4
  %v6121 = vsel %vm1447, %v6118, %v6120
  %v6122 = vrot.slane %v6102, 4
  %v6123 = vsel %vm1447, %v6120, %v6122
  %v6124 = vrot.slane %v6103, 4
  %v6125 = vsel %vm1447, %v6122, %v6124
  %v6126 = vrot.slane %v6104, 4
  %v6127 = vsel %vm1447, %v6124, %v6126
  %6136 = vst [vmem:[#allocation2 + $0x290] sm:$0xf0] %v6113
  %6137 = vst [vmem:[#allocation2 + $0x298] sm:$0xff] %v6115
  %6138 = vst [vmem:[#allocation2 + $0x2a0] sm:$0xff] %v6117
  %6139 = vst [vmem:[#allocation2 + $0x2a8] sm:$0xff] %v6119
  %6140 = vst [vmem:[#allocation2 + $0x2b0] sm:$0xff] %v6121
  %6141 = vst [vmem:[#allocation2 + $0x2b8] sm:$0xff] %v6123
  %6142 = vst [vmem:[#allocation2 + $0x2c0] sm:$0xff] %v6125
  %6143 = vst [vmem:[#allocation2 + $0x2c8] sm:$0xff] %v6127
  %v6144 = vld [vmem:[%s3] sm:$0xff]
  %v6145 = vld [vmem:[%s3 + $0x8] sm:$0xff]
  %v6146 = vld [vmem:[%s3 + $0x10] sm:$0xff]
  %v6147 = vld [vmem:[%s3 + $0x18] sm:$0xff]
  %v6148 = vld [vmem:[%s3 + $0x20] sm:$0xff]
  %v6149 = vld [vmem:[%s3 + $0x28] sm:$0xff]
  %v6150 = vld [vmem:[%s3 + $0x30] sm:$0xff]
  %v6151 = vld [vmem:[%s3 + $0x38] sm:$0xff]
  %v6152 = vld [vmem:[%s3 + $0x40] sm:$0xff]
  %v6153 = vld [vmem:[%s3 + $0x48] sm:$0xff]
  %v6154 = vld [vmem:[%s3 + $0x50] sm:$0xff]
  %v6155 = vld [vmem:[%s3 + $0x58] sm:$0xff]
  %v6156 = vld [vmem:[%s3 + $0x60] sm:$0xff]
  %v6157 = vld [vmem:[%s3 + $0x68] sm:$0xff]
  %v6158 = vld [vmem:[%s3 + $0x70] sm:$0xff]
  %v6159 = vld [vmem:[%s3 + $0x78] sm:$0xff]
  %v6160 = vld [vmem:[%s3 + $0x80] sm:$0xff]
  %v6161 = vld [vmem:[%s3 + $0x88] sm:$0xff]
  %v6162 = vld [vmem:[%s3 + $0x90] sm:$0xff]
  %v6163 = vld [vmem:[%s3 + $0x98] sm:$0xff]
  %v6164 = vld [vmem:[%s3 + $0xa0] sm:$0xff]
  %v6165 = vld [vmem:[%s3 + $0xa8] sm:$0xff]
  %v6166 = vld [vmem:[%s3 + $0xb0] sm:$0xff]
  %v6167 = vld [vmem:[%s3 + $0xb8] sm:$0xff]
  %v6168 = vld [vmem:[%s3 + $0xc0] sm:$0xff]
  %v6169 = vld [vmem:[%s3 + $0xc8] sm:$0xff]
  %v6170 = vld [vmem:[%s3 + $0xd0] sm:$0xff]
  %v6171 = vld [vmem:[%s3 + $0xd8] sm:$0xff]
  %v6172 = vld [vmem:[%s3 + $0xe0] sm:$0xff]
  %v6173 = vld [vmem:[%s3 + $0xe8] sm:$0xff]
  %v6174 = vld [vmem:[%s3 + $0xf0] sm:$0xff]
  %v6175 = vld [vmem:[%s3 + $0xf8] sm:$0xff]
  %v6176 = vld [vmem:[%s3 + $0x100] sm:$0xff]
  %v6177 = vld [vmem:[%s3 + $0x108] sm:$0xff]
  %v6178 = vld [vmem:[%s3 + $0x110] sm:$0xff]
  %v6179 = vld [vmem:[%s3 + $0x118] sm:$0xff]
  %v6180 = vld [vmem:[%s3 + $0x120] sm:$0xff]
  %v6181 = vld [vmem:[%s3 + $0x128] sm:$0xff]
  %v6182 = vld [vmem:[%s3 + $0x130] sm:$0xff]
  %v6183 = vld [vmem:[%s3 + $0x138] sm:$0xff]
  %v6184 = vld [vmem:[%s3 + $0x140] sm:$0xff]
  %v6185 = vld [vmem:[%s3 + $0x148] sm:$0xff]
  %v6186 = vld [vmem:[%s3 + $0x150] sm:$0xff]
  %v6187 = vld [vmem:[%s3 + $0x158] sm:$0xff]
  %v6188 = vld [vmem:[%s3 + $0x160] sm:$0xff]
  %v6189 = vld [vmem:[%s3 + $0x168] sm:$0xff]
  %v6190 = vld [vmem:[%s3 + $0x170] sm:$0xff]
  %v6191 = vld [vmem:[%s3 + $0x178] sm:$0xff]
  %v6192 = vld [vmem:[%s3 + $0x180] sm:$0xff]
  %v6193 = vld [vmem:[%s3 + $0x188] sm:$0xff]
  %v6194 = vld [vmem:[%s3 + $0x190] sm:$0xff]
  %v6195 = vld [vmem:[%s3 + $0x198] sm:$0xff]
  %v6196 = vld [vmem:[%s3 + $0x1a0] sm:$0xff]
  %v6197 = vld [vmem:[%s3 + $0x1a8] sm:$0xff]
  %v6198 = vld [vmem:[%s3 + $0x1b0] sm:$0xff]
  %v6199 = vld [vmem:[%s3 + $0x1b8] sm:$0xff]
  %v6200 = vld [vmem:[%s3 + $0x1c0] sm:$0xff]
  %v6201 = vld [vmem:[%s3 + $0x1c8] sm:$0xff]
  %v6202 = vld [vmem:[%s3 + $0x1d0] sm:$0xff]
  %v6203 = vld [vmem:[%s3 + $0x1d8] sm:$0xff]
  %v6204 = vld [vmem:[%s3 + $0x1e0] sm:$0xff]
  %v6205 = vld [vmem:[%s3 + $0x1e8] sm:$0xff]
  %v6206 = vld [vmem:[%s3 + $0x1f0] sm:$0xff]
  %v6207 = vld [vmem:[%s3 + $0x1f8] sm:$0xff]
  %v6208 = vld [vmem:[%s3 + $0x200] sm:$0xff]
  %v6209 = vld [vmem:[%s3 + $0x208] sm:$0xff]
  %v6210 = vld [vmem:[%s3 + $0x210] sm:$0xff]
  %v6211 = vld [vmem:[%s3 + $0x218] sm:$0xff]
  %v6212 = vld [vmem:[%s3 + $0x220] sm:$0xff]
  %v6213 = vld [vmem:[%s3 + $0x228] sm:$0xff]
  %v6214 = vld [vmem:[%s3 + $0x230] sm:$0xff]
  %v6215 = vld [vmem:[%s3 + $0x238] sm:$0xff]
  %v6216 = vld [vmem:[%s3 + $0x240] sm:$0xff]
  %v6217 = vld [vmem:[%s3 + $0x248] sm:$0xff]
  %v6218 = vld [vmem:[%s3 + $0x250] sm:$0xff]
  %v6219 = vld [vmem:[%s3 + $0x258] sm:$0xff]
  %v6220 = vld [vmem:[%s3 + $0x260] sm:$0xff]
  %v6221 = vld [vmem:[%s3 + $0x268] sm:$0xff]
  %v6222 = vld [vmem:[%s3 + $0x270] sm:$0xff]
  %v6223 = vld [vmem:[%s3 + $0x278] sm:$0xff]
  %v6224 = vld [vmem:[%s3 + $0x280] sm:$0xff]
  %v6225 = vld [vmem:[%s3 + $0x288] sm:$0xff]
  %v6226 = vld [vmem:[%s3 + $0x290] sm:$0xff]
  %v6227 = vld [vmem:[%s3 + $0x298] sm:$0xff]
  %v6228 = vld [vmem:[%s3 + $0x2a0] sm:$0xff]
  %v6229 = vld [vmem:[%s3 + $0x2a8] sm:$0xff]
  %v6230 = vld [vmem:[%s3 + $0x2b0] sm:$0xff]
  %v6231 = vld [vmem:[%s3 + $0x2b8] sm:$0xff]
  %v6232 = vld [vmem:[%s3 + $0x2c0] sm:$0xff]
  %v6233 = vld [vmem:[%s3 + $0x2c8] sm:$0xff]
  %v6234 = vld [vmem:[%s3 + $0x2d0] sm:$0xff]
  %v6235 = vld [vmem:[%s3 + $0x2d8] sm:$0xff]
  %v6236 = vld [vmem:[%s3 + $0x2e0] sm:$0xff]
  %v6237 = vld [vmem:[%s3 + $0x2e8] sm:$0xff]
  %v6238 = vld [vmem:[%s3 + $0x2f0] sm:$0xff]
  %v6239 = vld [vmem:[%s3 + $0x2f8] sm:$0xff]
  %v6240 = vld [vmem:[%s3 + $0x300] sm:$0xff]
  %v6241 = vld [vmem:[%s3 + $0x308] sm:$0xff]
  %v6242 = vld [vmem:[%s3 + $0x310] sm:$0xff]
  %v6243 = vld [vmem:[%s3 + $0x318] sm:$0xff]
  %v6244 = vld [vmem:[%s3 + $0x320] sm:$0xff]
  %v6245 = vld [vmem:[%s3 + $0x328] sm:$0xff]
  %v6246 = vld [vmem:[%s3 + $0x330] sm:$0xff]
  %v6247 = vld [vmem:[%s3 + $0x338] sm:$0xff]
  %v6248 = vld [vmem:[%s3 + $0x340] sm:$0xff]
  %v6249 = vld [vmem:[%s3 + $0x348] sm:$0xff]
  %v6250 = vld [vmem:[%s3 + $0x350] sm:$0xff]
  %v6251 = vld [vmem:[%s3 + $0x358] sm:$0xff]
  %v6252 = vld [vmem:[%s3 + $0x360] sm:$0xff]
  %v6253 = vld [vmem:[%s3 + $0x368] sm:$0xff]
  %v6254 = vld [vmem:[%s3 + $0x370] sm:$0xff]
  %v6255 = vld [vmem:[%s3 + $0x378] sm:$0xff]
  %v6256 = vld [vmem:[%s3 + $0x380] sm:$0xff]
  %v6257 = vld [vmem:[%s3 + $0x388] sm:$0xff]
  %v6258 = vld [vmem:[%s3 + $0x390] sm:$0xff]
  %v6259 = vld [vmem:[%s3 + $0x398] sm:$0xff]
  %v6260 = vld [vmem:[%s3 + $0x3a0] sm:$0xff]
  %v6261 = vld [vmem:[%s3 + $0x3a8] sm:$0xff]
  %v6262 = vld [vmem:[%s3 + $0x3b0] sm:$0xff]
  %v6263 = vld [vmem:[%s3 + $0x3b8] sm:$0xff]
  %v6264 = vld [vmem:[%s4] sm:$0xff]
  %v6265 = vld [vmem:[%s4 + $0x8] sm:$0xff]
  %v6266 = vld [vmem:[%s4 + $0x10] sm:$0xff]
  %v6267 = vld [vmem:[%s4 + $0x18] sm:$0xff]
  %v6268 = vld [vmem:[%s4 + $0x20] sm:$0xff]
  %v6269 = vld [vmem:[%s4 + $0x28] sm:$0xff]
  %v6270 = vld [vmem:[%s4 + $0x30] sm:$0xff]
  %v6271 = vld [vmem:[%s4 + $0x38] sm:$0xff]
  %v6272 = vld [vmem:[%s4 + $0x40] sm:$0xff]
  %v6273 = vld [vmem:[%s4 + $0x48] sm:$0xff]
  %v6274 = vld [vmem:[#allocation2] sm:$0xff]
  %v6275 = vld [vmem:[#allocation2 + $0x8] sm:$0xff]
  %v6276 = vld [vmem:[#allocation2 + $0x10] sm:$0xff]
  %v6277 = vld [vmem:[#allocation2 + $0x18] sm:$0xff]
  %v6278 = vld [vmem:[#allocation2 + $0x20] sm:$0xff]
  %v6279 = vld [vmem:[#allocation2 + $0x28] sm:$0xff]
  %v6280 = vld [vmem:[#allocation2 + $0x30] sm:$0xff]
  %v6281 = vld [vmem:[#allocation2 + $0x38] sm:$0xff]
  %v6282 = vld [vmem:[#allocation2 + $0x40] sm:$0xff]
  %v6283 = vld [vmem:[#allocation2 + $0x48] sm:$0xff]
  %v6284 = vld [vmem:[#allocation2 + $0x50] sm:$0xff]
  %v6285 = vld [vmem:[#allocation2 + $0x58] sm:$0xff]
  %v6286 = vld [vmem:[#allocation2 + $0x60] sm:$0xff]
  %v6287 = vld [vmem:[#allocation2 + $0x68] sm:$0xff]
  %v6288 = vld [vmem:[#allocation2 + $0x70] sm:$0xff]
  %v6289 = vld [vmem:[#allocation2 + $0x78] sm:$0xff]
  %v6290 = vld [vmem:[#allocation2 + $0x80] sm:$0xff]
  %v6291 = vld [vmem:[#allocation2 + $0x88] sm:$0xff]
  %v6292 = vld [vmem:[#allocation2 + $0x90] sm:$0xff]
  %v6293 = vld [vmem:[#allocation2 + $0x98] sm:$0xff]
  %v6294 = vld [vmem:[#allocation2 + $0xa0] sm:$0xff]
  %v6295 = vld [vmem:[#allocation2 + $0xa8] sm:$0xff]
  %v6296 = vld [vmem:[#allocation2 + $0xb0] sm:$0xff]
  %v6297 = vld [vmem:[#allocation2 + $0xb8] sm:$0xff]
  %v6298 = vld [vmem:[#allocation2 + $0xc0] sm:$0xff]
  %v6299 = vld [vmem:[#allocation2 + $0xc8] sm:$0xff]
  %v6300 = vld [vmem:[#allocation2 + $0xd0] sm:$0xff]
  %v6301 = vld [vmem:[#allocation2 + $0xd8] sm:$0xff]
  %v6302 = vld [vmem:[#allocation2 + $0xe0] sm:$0xff]
  %v6303 = vld [vmem:[#allocation2 + $0xe8] sm:$0xff]
  %v6304 = vld [vmem:[#allocation2 + $0xf0] sm:$0xff]
  %v6305 = vld [vmem:[#allocation2 + $0xf8] sm:$0xff]
  %v6306 = vld [vmem:[#allocation2 + $0x100] sm:$0xff]
  %v6307 = vld [vmem:[#allocation2 + $0x108] sm:$0xff]
  %v6308 = vld [vmem:[#allocation2 + $0x110] sm:$0xff]
  %v6309 = vld [vmem:[#allocation2 + $0x118] sm:$0xff]
  %v6310 = vld [vmem:[#allocation2 + $0x120] sm:$0xff]
  %v6311 = vld [vmem:[#allocation2 + $0x128] sm:$0xff]
  %v6312 = vld [vmem:[#allocation2 + $0x130] sm:$0xff]
  %v6313 = vld [vmem:[#allocation2 + $0x138] sm:$0xff]
  %v6314 = vld [vmem:[#allocation2 + $0x140] sm:$0xff]
  %v6315 = vld [vmem:[#allocation2 + $0x148] sm:$0xff]
  %v6316 = vld [vmem:[#allocation2 + $0x150] sm:$0xff]
  %v6317 = vld [vmem:[#allocation2 + $0x158] sm:$0xff]
  %v6318 = vld [vmem:[#allocation2 + $0x160] sm:$0xff]
  %v6439 = vunpack.c.l.b16 %v6144
  %v6440 = vunpack.c.h.b16 %v6144
  %v6441 = vunpack.c.l.b16 %v6145
  %v6442 = vunpack.c.h.b16 %v6145
  %v6443 = vunpack.c.l.b16 %v6146
  %v6444 = vunpack.c.h.b16 %v6146
  %v6445 = vunpack.c.l.b16 %v6147
  %v6446 = vunpack.c.h.b16 %v6147
  %v6447 = vunpack.c.l.b16 %v6148
  %v6448 = vunpack.c.h.b16 %v6148
  %v6449 = vunpack.c.l.b16 %v6149
  %v6450 = vunpack.c.h.b16 %v6149
  %v6451 = vunpack.c.l.b16 %v6150
  %v6452 = vunpack.c.h.b16 %v6150
  %v6453 = vunpack.c.l.b16 %v6151
  %v6454 = vunpack.c.h.b16 %v6151
  %v6455 = vunpack.c.l.b16 %v6152
  %v6456 = vunpack.c.h.b16 %v6152
  %v6457 = vunpack.c.l.b16 %v6153
  %v6458 = vunpack.c.h.b16 %v6153
  %v6459 = vunpack.c.l.b16 %v6154
  %v6460 = vunpack.c.h.b16 %v6154
  %v6461 = vunpack.c.l.b16 %v6155
  %v6462 = vunpack.c.h.b16 %v6155
  %v6463 = vunpack.c.l.b16 %v6156
  %v6464 = vunpack.c.h.b16 %v6156
  %v6465 = vunpack.c.l.b16 %v6157
  %v6466 = vunpack.c.h.b16 %v6157
  %v6467 = vunpack.c.l.b16 %v6158
  %v6468 = vunpack.c.h.b16 %v6158
  %v6469 = vunpack.c.l.b16 %v6159
  %v6470 = vunpack.c.h.b16 %v6159
  %v6471 = vunpack.c.l.b16 %v6160
  %v6472 = vunpack.c.h.b16 %v6160
  %v6473 = vunpack.c.l.b16 %v6161
  %v6474 = vunpack.c.h.b16 %v6161
  %v6475 = vunpack.c.l.b16 %v6162
  %v6476 = vunpack.c.h.b16 %v6162
  %v6477 = vunpack.c.l.b16 %v6163
  %v6478 = vunpack.c.h.b16 %v6163
  %v6479 = vunpack.c.l.b16 %v6164
  %v6480 = vunpack.c.h.b16 %v6164
  %v6481 = vunpack.c.l.b16 %v6165
  %v6482 = vunpack.c.h.b16 %v6165
  %v6483 = vunpack.c.l.b16 %v6166
  %v6484 = vunpack.c.h.b16 %v6166
  %v6485 = vunpack.c.l.b16 %v6167
  %v6486 = vunpack.c.h.b16 %v6167
  %v6487 = vunpack.c.l.b16 %v6168
  %v6488 = vunpack.c.h.b16 %v6168
  %v6489 = vunpack.c.l.b16 %v6169
  %v6490 = vunpack.c.h.b16 %v6169
  %v6491 = vunpack.c.l.b16 %v6170
  %v6492 = vunpack.c.h.b16 %v6170
  %v6493 = vunpack.c.l.b16 %v6171
  %v6494 = vunpack.c.h.b16 %v6171
  %v6495 = vunpack.c.l.b16 %v6172
  %v6496 = vunpack.c.h.b16 %v6172
  %v6497 = vunpack.c.l.b16 %v6173
  %v6498 = vunpack.c.h.b16 %v6173
  %v6499 = vunpack.c.l.b16 %v6174
  %v6500 = vunpack.c.h.b16 %v6174
  %v6501 = vunpack.c.l.b16 %v6175
  %v6502 = vunpack.c.h.b16 %v6175
  %v6503 = vunpack.c.l.b16 %v6176
  %v6504 = vunpack.c.h.b16 %v6176
  %v6505 = vunpack.c.l.b16 %v6177
  %v6506 = vunpack.c.h.b16 %v6177
  %v6507 = vunpack.c.l.b16 %v6178
  %v6508 = vunpack.c.h.b16 %v6178
  %v6509 = vunpack.c.l.b16 %v6179
  %v6510 = vunpack.c.h.b16 %v6179
  %v6511 = vunpack.c.l.b16 %v6180
  %v6512 = vunpack.c.h.b16 %v6180
  %v6513 = vunpack.c.l.b16 %v6181
  %v6514 = vunpack.c.h.b16 %v6181
  %v6515 = vunpack.c.l.b16 %v6182
  %v6516 = vunpack.c.h.b16 %v6182
  %v6517 = vunpack.c.l.b16 %v6183
  %v6518 = vunpack.c.h.b16 %v6183
  %v6519 = vunpack.c.l.b16 %v6184
  %v6520 = vunpack.c.h.b16 %v6184
  %v6521 = vunpack.c.l.b16 %v6185
  %v6522 = vunpack.c.h.b16 %v6185
  %v6523 = vunpack.c.l.b16 %v6186
  %v6524 = vunpack.c.h.b16 %v6186
  %v6525 = vunpack.c.l.b16 %v6187
  %v6526 = vunpack.c.h.b16 %v6187
  %v6527 = vunpack.c.l.b16 %v6188
  %v6528 = vunpack.c.h.b16 %v6188
  %v6529 = vunpack.c.l.b16 %v6189
  %v6530 = vunpack.c.h.b16 %v6189
  %v6531 = vunpack.c.l.b16 %v6190
  %v6532 = vunpack.c.h.b16 %v6190
  %v6533 = vunpack.c.l.b16 %v6191
  %v6534 = vunpack.c.h.b16 %v6191
  %v6535 = vunpack.c.l.b16 %v6192
  %v6536 = vunpack.c.h.b16 %v6192
  %v6537 = vunpack.c.l.b16 %v6193
  %v6538 = vunpack.c.h.b16 %v6193
  %v6539 = vunpack.c.l.b16 %v6194
  %v6540 = vunpack.c.h.b16 %v6194
  %v6541 = vunpack.c.l.b16 %v6195
  %v6542 = vunpack.c.h.b16 %v6195
  %v6543 = vunpack.c.l.b16 %v6196
  %v6544 = vunpack.c.h.b16 %v6196
  %v6545 = vunpack.c.l.b16 %v6197
  %v6546 = vunpack.c.h.b16 %v6197
  %v6547 = vunpack.c.l.b16 %v6198
  %v6548 = vunpack.c.h.b16 %v6198
  %v6549 = vunpack.c.l.b16 %v6199
  %v6550 = vunpack.c.h.b16 %v6199
  %v6551 = vunpack.c.l.b16 %v6200
  %v6552 = vunpack.c.h.b16 %v6200
  %v6553 = vunpack.c.l.b16 %v6201
  %v6554 = vunpack.c.h.b16 %v6201
  %v6555 = vunpack.c.l.b16 %v6202
  %v6556 = vunpack.c.h.b16 %v6202
  %v6557 = vunpack.c.l.b16 %v6203
  %v6558 = vunpack.c.h.b16 %v6203
  %v6559 = vunpack.c.l.b16 %v6204
  %v6560 = vunpack.c.h.b16 %v6204
  %v6561 = vunpack.c.l.b16 %v6205
  %v6562 = vunpack.c.h.b16 %v6205
  %v6563 = vunpack.c.l.b16 %v6206
  %v6564 = vunpack.c.h.b16 %v6206
  %v6565 = vunpack.c.l.b16 %v6207
  %v6566 = vunpack.c.h.b16 %v6207
  %v6567 = vunpack.c.l.b16 %v6208
  %v6568 = vunpack.c.h.b16 %v6208
  %v6569 = vunpack.c.l.b16 %v6209
  %v6570 = vunpack.c.h.b16 %v6209
  %v6571 = vunpack.c.l.b16 %v6210
  %v6572 = vunpack.c.h.b16 %v6210
  %v6573 = vunpack.c.l.b16 %v6211
  %v6574 = vunpack.c.h.b16 %v6211
  %v6575 = vunpack.c.l.b16 %v6212
  %v6576 = vunpack.c.h.b16 %v6212
  %v6577 = vunpack.c.l.b16 %v6213
  %v6578 = vunpack.c.h.b16 %v6213
  %v6579 = vunpack.c.l.b16 %v6214
  %v6580 = vunpack.c.h.b16 %v6214
  %v6581 = vunpack.c.l.b16 %v6215
  %v6582 = vunpack.c.h.b16 %v6215
  %v6583 = vunpack.c.l.b16 %v6216
  %v6584 = vunpack.c.h.b16 %v6216
  %v6585 = vunpack.c.l.b16 %v6217
  %v6586 = vunpack.c.h.b16 %v6217
  %v6587 = vunpack.c.l.b16 %v6218
  %v6588 = vunpack.c.h.b16 %v6218
  %v6589 = vunpack.c.l.b16 %v6219
  %v6590 = vunpack.c.h.b16 %v6219
  %v6591 = vunpack.c.l.b16 %v6220
  %v6592 = vunpack.c.h.b16 %v6220
  %v6593 = vunpack.c.l.b16 %v6221
  %v6594 = vunpack.c.h.b16 %v6221
  %v6595 = vunpack.c.l.b16 %v6222
  %v6596 = vunpack.c.h.b16 %v6222
  %v6597 = vunpack.c.l.b16 %v6223
  %v6598 = vunpack.c.h.b16 %v6223
  %v6599 = vunpack.c.l.b16 %v6224
  %v6600 = vunpack.c.h.b16 %v6224
  %v6601 = vunpack.c.l.b16 %v6225
  %v6602 = vunpack.c.h.b16 %v6225
  %v6603 = vunpack.c.l.b16 %v6226
  %v6604 = vunpack.c.h.b16 %v6226
  %v6605 = vunpack.c.l.b16 %v6227
  %v6606 = vunpack.c.h.b16 %v6227
  %v6607 = vunpack.c.l.b16 %v6228
  %v6608 = vunpack.c.h.b16 %v6228
  %v6609 = vunpack.c.l.b16 %v6229
  %v6610 = vunpack.c.h.b16 %v6229
  %v6611 = vunpack.c.l.b16 %v6230
  %v6612 = vunpack.c.h.b16 %v6230
  %v6613 = vunpack.c.l.b16 %v6231
  %v6614 = vunpack.c.h.b16 %v6231
  %v6615 = vunpack.c.l.b16 %v6232
  %v6616 = vunpack.c.h.b16 %v6232
  %v6617 = vunpack.c.l.b16 %v6233
  %v6618 = vunpack.c.h.b16 %v6233
  %v6619 = vunpack.c.l.b16 %v6234
  %v6620 = vunpack.c.h.b16 %v6234
  %v6621 = vunpack.c.l.b16 %v6235
  %v6622 = vunpack.c.h.b16 %v6235
  %v6623 = vunpack.c.l.b16 %v6236
  %v6624 = vunpack.c.h.b16 %v6236
  %v6625 = vunpack.c.l.b16 %v6237
  %v6626 = vunpack.c.h.b16 %v6237
  %v6627 = vunpack.c.l.b16 %v6238
  %v6628 = vunpack.c.h.b16 %v6238
  %v6629 = vunpack.c.l.b16 %v6239
  %v6630 = vunpack.c.h.b16 %v6239
  %v6631 = vunpack.c.l.b16 %v6240
  %v6632 = vunpack.c.h.b16 %v6240
  %v6633 = vunpack.c.l.b16 %v6241
  %v6634 = vunpack.c.h.b16 %v6241
  %v6635 = vunpack.c.l.b16 %v6242
  %v6636 = vunpack.c.h.b16 %v6242
  %v6637 = vunpack.c.l.b16 %v6243
  %v6638 = vunpack.c.h.b16 %v6243
  %v6639 = vunpack.c.l.b16 %v6244
  %v6640 = vunpack.c.h.b16 %v6244
  %v6641 = vunpack.c.l.b16 %v6245
  %v6642 = vunpack.c.h.b16 %v6245
  %v6643 = vunpack.c.l.b16 %v6246
  %v6644 = vunpack.c.h.b16 %v6246
  %v6645 = vunpack.c.l.b16 %v6247
  %v6646 = vunpack.c.h.b16 %v6247
  %v6647 = vunpack.c.l.b16 %v6248
  %v6648 = vunpack.c.h.b16 %v6248
  %v6649 = vunpack.c.l.b16 %v6249
  %v6650 = vunpack.c.h.b16 %v6249
  %v6651 = vunpack.c.l.b16 %v6250
  %v6652 = vunpack.c.h.b16 %v6250
  %v6653 = vunpack.c.l.b16 %v6251
  %v6654 = vunpack.c.h.b16 %v6251
  %v6655 = vunpack.c.l.b16 %v6252
  %v6656 = vunpack.c.h.b16 %v6252
  %v6657 = vunpack.c.l.b16 %v6253
  %v6658 = vunpack.c.h.b16 %v6253
  %v6659 = vunpack.c.l.b16 %v6254
  %v6660 = vunpack.c.h.b16 %v6254
  %v6661 = vunpack.c.l.b16 %v6255
  %v6662 = vunpack.c.h.b16 %v6255
  %v6663 = vunpack.c.l.b16 %v6256
  %v6664 = vunpack.c.h.b16 %v6256
  %v6665 = vunpack.c.l.b16 %v6257
  %v6666 = vunpack.c.h.b16 %v6257
  %v6667 = vunpack.c.l.b16 %v6258
  %v6668 = vunpack.c.h.b16 %v6258
  %v6669 = vunpack.c.l.b16 %v6259
  %v6670 = vunpack.c.h.b16 %v6259
  %v6671 = vunpack.c.l.b16 %v6260
  %v6672 = vunpack.c.h.b16 %v6260
  %v6673 = vunpack.c.l.b16 %v6261
  %v6674 = vunpack.c.h.b16 %v6261
  %v6675 = vunpack.c.l.b16 %v6262
  %v6676 = vunpack.c.h.b16 %v6262
  %v6677 = vunpack.c.l.b16 %v6263
  %v6678 = vunpack.c.h.b16 %v6263
  %v6679 = vpack.c.b16 %v6445, %v6439
  %v6680 = vpack.c.b16 %v6446, %v6440
  %v6681 = vpack.c.b16 %v6447, %v6441
  %v6682 = vpack.c.b16 %v6448, %v6442
  %v6683 = vpack.c.b16 %v6449, %v6443
  %v6684 = vpack.c.b16 %v6450, %v6444
  %v6685 = vpack.c.b16 %v6457, %v6451
  %v6686 = vpack.c.b16 %v6458, %v6452
  %v6687 = vpack.c.b16 %v6459, %v6453
  %v6688 = vpack.c.b16 %v6460, %v6454
  %v6689 = vpack.c.b16 %v6461, %v6455
  %v6690 = vpack.c.b16 %v6462, %v6456
  %v6691 = vpack.c.b16 %v6469, %v6463
  %v6692 = vpack.c.b16 %v6470, %v6464
  %v6693 = vpack.c.b16 %v6471, %v6465
  %v6694 = vpack.c.b16 %v6472, %v6466
  %v6695 = vpack.c.b16 %v6473, %v6467
  %v6696 = vpack.c.b16 %v6474, %v6468
  %v6697 = vpack.c.b16 %v6481, %v6475
  %v6698 = vpack.c.b16 %v6482, %v6476
  %v6699 = vpack.c.b16 %v6483, %v6477
  %v6700 = vpack.c.b16 %v6484, %v6478
  %v6701 = vpack.c.b16 %v6485, %v6479
  %v6702 = vpack.c.b16 %v6486, %v6480
  %v6703 = vpack.c.b16 %v6493, %v6487
  %v6704 = vpack.c.b16 %v6494, %v6488
  %v6705 = vpack.c.b16 %v6495, %v6489
  %v6706 = vpack.c.b16 %v6496, %v6490
  %v6707 = vpack.c.b16 %v6497, %v6491
  %v6708 = vpack.c.b16 %v6498, %v6492
  %v6709 = vpack.c.b16 %v6505, %v6499
  %v6710 = vpack.c.b16 %v6506, %v6500
  %v6711 = vpack.c.b16 %v6507, %v6501
  %v6712 = vpack.c.b16 %v6508, %v6502
  %v6713 = vpack.c.b16 %v6509, %v6503
  %v6714 = vpack.c.b16 %v6510, %v6504
  %v6715 = vpack.c.b16 %v6517, %v6511
  %v6716 = vpack.c.b16 %v6518, %v6512
  %v6717 = vpack.c.b16 %v6519, %v6513
  %v6718 = vpack.c.b16 %v6520, %v6514
  %v6719 = vpack.c.b16 %v6521, %v6515
  %v6720 = vpack.c.b16 %v6522, %v6516
  %v6721 = vpack.c.b16 %v6529, %v6523
  %v6722 = vpack.c.b16 %v6530, %v6524
  %v6723 = vpack.c.b16 %v6531, %v6525
  %v6724 = vpack.c.b16 %v6532, %v6526
  %v6725 = vpack.c.b16 %v6533, %v6527
  %v6726 = vpack.c.b16 %v6534, %v6528
  %v6727 = vpack.c.b16 %v6541, %v6535
  %v6728 = vpack.c.b16 %v6542, %v6536
  %v6729 = vpack.c.b16 %v6543, %v6537
  %v6730 = vpack.c.b16 %v6544, %v6538
  %v6731 = vpack.c.b16 %v6545, %v6539
  %v6732 = vpack.c.b16 %v6546, %v6540
  %v6733 = vpack.c.b16 %v6553, %v6547
  %v6734 = vpack.c.b16 %v6554, %v6548
  %v6735 = vpack.c.b16 %v6555, %v6549
  %v6736 = vpack.c.b16 %v6556, %v6550
  %v6737 = vpack.c.b16 %v6557, %v6551
  %v6738 = vpack.c.b16 %v6558, %v6552
  %v6739 = vpack.c.b16 %v6565, %v6559
  %v6740 = vpack.c.b16 %v6566, %v6560
  %v6741 = vpack.c.b16 %v6567, %v6561
  %v6742 = vpack.c.b16 %v6568, %v6562
  %v6743 = vpack.c.b16 %v6569, %v6563
  %v6744 = vpack.c.b16 %v6570, %v6564
  %v6745 = vpack.c.b16 %v6577, %v6571
  %v6746 = vpack.c.b16 %v6578, %v6572
  %v6747 = vpack.c.b16 %v6579, %v6573
  %v6748 = vpack.c.b16 %v6580, %v6574
  %v6749 = vpack.c.b16 %v6581, %v6575
  %v6750 = vpack.c.b16 %v6582, %v6576
  %v6751 = vpack.c.b16 %v6589, %v6583
  %v6752 = vpack.c.b16 %v6590, %v6584
  %v6753 = vpack.c.b16 %v6591, %v6585
  %v6754 = vpack.c.b16 %v6592, %v6586
  %v6755 = vpack.c.b16 %v6593, %v6587
  %v6756 = vpack.c.b16 %v6594, %v6588
  %v6757 = vpack.c.b16 %v6601, %v6595
  %v6758 = vpack.c.b16 %v6602, %v6596
  %v6759 = vpack.c.b16 %v6603, %v6597
  %v6760 = vpack.c.b16 %v6604, %v6598
  %v6761 = vpack.c.b16 %v6605, %v6599
  %v6762 = vpack.c.b16 %v6606, %v6600
  %v6763 = vpack.c.b16 %v6613, %v6607
  %v6764 = vpack.c.b16 %v6614, %v6608
  %v6765 = vpack.c.b16 %v6615, %v6609
  %v6766 = vpack.c.b16 %v6616, %v6610
  %v6767 = vpack.c.b16 %v6617, %v6611
  %v6768 = vpack.c.b16 %v6618, %v6612
  %v6769 = vpack.c.b16 %v6625, %v6619
  %v6770 = vpack.c.b16 %v6626, %v6620
  %v6771 = vpack.c.b16 %v6627, %v6621
  %v6772 = vpack.c.b16 %v6628, %v6622
  %v6773 = vpack.c.b16 %v6629, %v6623
  %v6774 = vpack.c.b16 %v6630, %v6624
  %v6775 = vpack.c.b16 %v6637, %v6631
  %v6776 = vpack.c.b16 %v6638, %v6632
  %v6777 = vpack.c.b16 %v6639, %v6633
  %v6778 = vpack.c.b16 %v6640, %v6634
  %v6779 = vpack.c.b16 %v6641, %v6635
  %v6780 = vpack.c.b16 %v6642, %v6636
  %v6781 = vpack.c.b16 %v6649, %v6643
  %v6782 = vpack.c.b16 %v6650, %v6644
  %v6783 = vpack.c.b16 %v6651, %v6645
  %v6784 = vpack.c.b16 %v6652, %v6646
  %v6785 = vpack.c.b16 %v6653, %v6647
  %v6786 = vpack.c.b16 %v6654, %v6648
  %v6787 = vpack.c.b16 %v6661, %v6655
  %v6788 = vpack.c.b16 %v6662, %v6656
  %v6789 = vpack.c.b16 %v6663, %v6657
  %v6790 = vpack.c.b16 %v6664, %v6658
  %v6791 = vpack.c.b16 %v6665, %v6659
  %v6792 = vpack.c.b16 %v6666, %v6660
  %v6793 = vpack.c.b16 %v6673, %v6667
  %v6794 = vpack.c.b16 %v6674, %v6668
  %v6795 = vpack.c.b16 %v6675, %v6669
  %v6796 = vpack.c.b16 %v6676, %v6670
  %v6797 = vpack.c.b16 %v6677, %v6671
  %v6798 = vpack.c.b16 %v6678, %v6672
  %vm6899 = vcmask 654336
  %v6901 = vsel %vm6899, %v6684, 0
  %v6904 = vsel %vm6899, %v6690, 0
  %v6907 = vsel %vm6899, %v6696, 0
  %v6910 = vsel %vm6899, %v6702, 0
  %v6913 = vsel %vm6899, %v6708, 0
  %v6916 = vsel %vm6899, %v6714, 0
  %v6919 = vsel %vm6899, %v6720, 0
  %v6922 = vsel %vm6899, %v6726, 0
  %v6925 = vsel %vm6899, %v6732, 0
  %v6928 = vsel %vm6899, %v6738, 0
  %v6931 = vsel %vm6899, %v6744, 0
  %v6934 = vsel %vm6899, %v6750, 0
  %v6937 = vsel %vm6899, %v6756, 0
  %v6940 = vsel %vm6899, %v6762, 0
  %v6943 = vsel %vm6899, %v6768, 0
  %v6946 = vsel %vm6899, %v6774, 0
  %v6949 = vsel %vm6899, %v6780, 0
  %v6952 = vsel %vm6899, %v6786, 0
  %v6955 = vsel %vm6899, %v6792, 0
  %v6958 = vsel %vm6899, %v6798, 0
  %6960 = vmatprep.subr.bf16.mxu0 0
  %6961 = vmatpush1.bf16.msra.mxu0 %v6274
  %6962 = vmatprep.subr.bf16.mxu0 0
  %6963 = vmatpush1.bf16.msra.mxu0 %v6275
  %6964 = vmatprep.subr.bf16.mxu0 0
  %6965 = vmatpush1.bf16.msra.mxu0 %v6276
  %6966 = vmatprep.subr.bf16.mxu0 0
  %6967 = vmatpush1.bf16.msra.mxu0 %v6277
  %6968 = vmatprep.subr.bf16.mxu0 0
  %6969 = vmatpush1.bf16.msra.mxu0 %v6278
  %6970 = vmatprep.subr.bf16.mxu0 0
  %6971 = vmatpush1.bf16.msra.mxu0 %v6279
  %6972 = vmatprep.subr.bf16.mxu0 0
  %6973 = vmatpush1.bf16.msra.mxu0 %v6280
  %6974 = vmatprep.subr.bf16.mxu0 0
  %6975 = vmatpush1.bf16.msra.mxu0 %v6281
  %6976 = vmatprep.subr.bf16.mxu0 0
  %6977 = vmatpush1.bf16.msra.mxu0 %v6282
  %6978 = vmatprep.subr.bf16.mxu0 0
  %6979 = vmatpush1.bf16.msra.mxu0 %v6283
  %6980 = vmatprep.subr.bf16.mxu0 0
  %6981 = vmatpush1.bf16.msra.mxu0 %v6284
  %6982 = vmatprep.subr.bf16.mxu0 0
  %6983 = vmatpush1.bf16.msra.mxu0 %v6285
  %6984 = vmatprep.subr.bf16.mxu0 0
  %6985 = vmatpush1.bf16.msra.mxu0 %v6286
  %6986 = vmatprep.subr.bf16.mxu0 0
  %6987 = vmatpush1.bf16.msra.mxu0 %v6287
  %6988 = vmatprep.subr.bf16.mxu0 0
  %6989 = vmatpush1.bf16.msra.mxu0 %v6288
  %6990 = vmatprep.subr.bf16.mxu0 0
  %6991 = vmatpush1.bf16.msra.mxu0 %v6289
  %6992 = vmatprep.mubr.bf16.mxu0 %v6680
  %6993 = vmatmul.mubr.bf16.gmra.mrb[0].mxu0 %v6679
  %v6994 = vpop.f32.mrb[0].mxu0
  %v6995 = vadd.f32 0.0, %v6994
  %v6996 = vpop.f32.mrb[0].mxu0
  %v6997 = vpop.f32.mrb[0].mxu0
  %v6998 = vadd.f32 0.0, %v6997
  %v6999 = vpop.f32.mrb[0].mxu0
  %7000 = vmatprep.mubr.bf16.mxu0 %v6686
  %7001 = vmatmul.mubr.bf16.gmra.mrb[0].mxu0 %v6685
  %v7002 = vpop.f32.mrb[0].mxu0
  %v7003 = vadd.f32 0.0, %v7002
  %v7004 = vpop.f32.mrb[0].mxu0
  %v7005 = vpop.f32.mrb[0].mxu0
  %v7006 = vadd.f32 0.0, %v7005
  %v7007 = vpop.f32.mrb[0].mxu0
  %7008 = vmatprep.mubr.bf16.mxu0 %v6692
  %7009 = vmatmul.mubr.bf16.gmra.mrb[0].mxu0 %v6691
  %v7010 = vpop.f32.mrb[0].mxu0
  %v7011 = vadd.f32 0.0, %v7010
  %v7012 = vpop.f32.mrb[0].mxu0
  %v7013 = vpop.f32.mrb[0].mxu0
  %v7014 = vadd.f32 0.0, %v7013
  %v7015 = vpop.f32.mrb[0].mxu0
  %7016 = vmatprep.mubr.bf16.mxu0 %v6698
  %7017 = vmatmul.mubr.bf16.gmra.mrb[0].mxu0 %v6697
  %v7018 = vpop.f32.mrb[0].mxu0
  %v7019 = vadd.f32 0.0, %v7018
  %v7020 = vpop.f32.mrb[0].mxu0
  %v7021 = vpop.f32.mrb[0].mxu0
  %v7022 = vadd.f32 0.0, %v7021
  %v7023 = vpop.f32.mrb[0].mxu0
  %7024 = vmatprep.mubr.bf16.mxu0 %v6704
  %7025 = vmatmul.mubr.bf16.gmra.mrb[0].mxu0 %v6703
  %v7026 = vpop.f32.mrb[0].mxu0
  %v7027 = vadd.f32 0.0, %v7026
  %v7028 = vpop.f32.mrb[0].mxu0
  %v7029 = vpop.f32.mrb[0].mxu0
  %v7030 = vadd.f32 0.0, %v7029
  %v7031 = vpop.f32.mrb[0].mxu0
  %7032 = vmatprep.mubr.bf16.mxu0 %v6710
  %7033 = vmatmul.mubr.bf16.gmra.mrb[0].mxu0 %v6709
  %v7034 = vpop.f32.mrb[0].mxu0
  %v7035 = vadd.f32 0.0, %v7034
  %v7036 = vpop.f32.mrb[0].mxu0
  %v7037 = vpop.f32.mrb[0].mxu0
  %v7038 = vadd.f32 0.0, %v7037
  %v7039 = vpop.f32.mrb[0].mxu0
  %7040 = vmatprep.mubr.bf16.mxu0 %v6716
  %7041 = vmatmul.mubr.bf16.gmra.mrb[0].mxu0 %v6715
  %v7042 = vpop.f32.mrb[0].mxu0
  %v7043 = vadd.f32 0.0, %v7042
  %v7044 = vpop.f32.mrb[0].mxu0
  %v7045 = vpop.f32.mrb[0].mxu0
  %v7046 = vadd.f32 0.0, %v7045
  %v7047 = vpop.f32.mrb[0].mxu0
  %7048 = vmatprep.mubr.bf16.mxu0 %v6722
  %7049 = vmatmul.mubr.bf16.gmra.mrb[0].mxu0 %v6721
  %v7050 = vpop.f32.mrb[0].mxu0
  %v7051 = vadd.f32 0.0, %v7050
  %v7052 = vpop.f32.mrb[0].mxu0
  %v7053 = vpop.f32.mrb[0].mxu0
  %v7054 = vadd.f32 0.0, %v7053
  %v7055 = vpop.f32.mrb[0].mxu0
  %7056 = vmatprep.mubr.bf16.mxu0 %v6728
  %7057 = vmatmul.mubr.bf16.gmra.mrb[0].mxu0 %v6727
  %v7058 = vpop.f32.mrb[0].mxu0
  %v7059 = vadd.f32 0.0, %v7058
  %v7060 = vpop.f32.mrb[0].mxu0
  %v7061 = vpop.f32.mrb[0].mxu0
  %v7062 = vadd.f32 0.0, %v7061
  %v7063 = vpop.f32.mrb[0].mxu0
  %7064 = vmatprep.mubr.bf16.mxu0 %v6734
  %7065 = vmatmul.mubr.bf16.gmra.mrb[0].mxu0 %v6733
  %v7066 = vpop.f32.mrb[0].mxu0
  %v7067 = vadd.f32 0.0, %v7066
  %v7068 = vpop.f32.mrb[0].mxu0
  %v7069 = vpop.f32.mrb[0].mxu0
  %v7070 = vadd.f32 0.0, %v7069
  %v7071 = vpop.f32.mrb[0].mxu0
  %7072 = vmatprep.mubr.bf16.mxu0 %v6740
  %7073 = vmatmul.mubr.bf16.gmra.mrb[0].mxu0 %v6739
  %v7074 = vpop.f32.mrb[0].mxu0
  %v7075 = vadd.f32 0.0, %v7074
  %v7076 = vpop.f32.mrb[0].mxu0
  %v7077 = vpop.f32.mrb[0].mxu0
  %v7078 = vadd.f32 0.0, %v7077
  %v7079 = vpop.f32.mrb[0].mxu0
  %7080 = vmatprep.mubr.bf16.mxu0 %v6746
  %7081 = vmatmul.mubr.bf16.gmra.mrb[0].mxu0 %v6745
  %v7082 = vpop.f32.mrb[0].mxu0
  %v7083 = vadd.f32 0.0, %v7082
  %v7084 = vpop.f32.mrb[0].mxu0
  %v7085 = vpop.f32.mrb[0].mxu0
  %v7086 = vadd.f32 0.0, %v7085
  %v7087 = vpop.f32.mrb[0].mxu0
  %7088 = vmatprep.mubr.bf16.mxu0 %v6752
  %7089 = vmatmul.mubr.bf16.gmra.mrb[0].mxu0 %v6751
  %v7090 = vpop.f32.mrb[0].mxu0
  %v7091 = vadd.f32 0.0, %v7090
  %v7092 = vpop.f32.mrb[0].mxu0
  %v7093 = vpop.f32.mrb[0].mxu0
  %v7094 = vadd.f32 0.0, %v7093
  %v7095 = vpop.f32.mrb[0].mxu0
  %7096 = vmatprep.mubr.bf16.mxu0 %v6758
  %7097 = vmatmul.mubr.bf16.gmra.mrb[0].mxu0 %v6757
  %v7098 = vpop.f32.mrb[0].mxu0
  %v7099 = vadd.f32 0.0, %v7098
  %v7100 = vpop.f32.mrb[0].mxu0
  %v7101 = vpop.f32.mrb[0].mxu0
  %v7102 = vadd.f32 0.0, %v7101
  %v7103 = vpop.f32.mrb[0].mxu0
  %7104 = vmatprep.mubr.bf16.mxu0 %v6764
  %7105 = vmatmul.mubr.bf16.gmra.mrb[0].mxu0 %v6763
  %v7106 = vpop.f32.mrb[0].mxu0
  %v7107 = vadd.f32 0.0, %v7106
  %v7108 = vpop.f32.mrb[0].mxu0
  %v7109 = vpop.f32.mrb[0].mxu0
  %v7110 = vadd.f32 0.0, %v7109
  %v7111 = vpop.f32.mrb[0].mxu0
  %7112 = vmatprep.mubr.bf16.mxu0 %v6770
  %7113 = vmatmul.mubr.bf16.gmra.mrb[0].mxu0 %v6769
  %v7114 = vpop.f32.mrb[0].mxu0
  %v7115 = vadd.f32 0.0, %v7114
  %v7116 = vpop.f32.mrb[0].mxu0
  %v7117 = vpop.f32.mrb[0].mxu0
  %v7118 = vadd.f32 0.0, %v7117
  %v7119 = vpop.f32.mrb[0].mxu0
  %7120 = vmatprep.mubr.bf16.mxu0 %v6776
  %7121 = vmatmul.mubr.bf16.gmra.mrb[0].mxu0 %v6775
  %v7122 = vpop.f32.mrb[0].mxu0
  %v7123 = vadd.f32 0.0, %v7122
  %v7124 = vpop.f32.mrb[0].mxu0
  %v7125 = vpop.f32.mrb[0].mxu0
  %v7126 = vadd.f32 0.0, %v7125
  %v7127 = vpop.f32.mrb[0].mxu0
  %7128 = vmatprep.mubr.bf16.mxu0 %v6782
  %7129 = vmatmul.mubr.bf16.gmra.mrb[0].mxu0 %v6781
  %v7130 = vpop.f32.mrb[0].mxu0
  %v7131 = vadd.f32 0.0, %v7130
  %v7132 = vpop.f32.mrb[0].mxu0
  %v7133 = vpop.f32.mrb[0].mxu0
  %v7134 = vadd.f32 0.0, %v7133
  %v7135 = vpop.f32.mrb[0].mxu0
  %7136 = vmatprep.mubr.bf16.mxu0 %v6788
  %7137 = vmatmul.mubr.bf16.gmra.mrb[0].mxu0 %v6787
  %v7138 = vpop.f32.mrb[0].mxu0
  %v7139 = vadd.f32 0.0, %v7138
  %v7140 = vpop.f32.mrb[0].mxu0
  %v7141 = vpop.f32.mrb[0].mxu0
  %v7142 = vadd.f32 0.0, %v7141
  %v7143 = vpop.f32.mrb[0].mxu0
  %7144 = vmatprep.mubr.bf16.mxu0 %v6794
  %7145 = vmatmul.mubr.bf16.gmra.mrb[0].mxu0 %v6793
  %v7146 = vpop.f32.mrb[0].mxu0
  %v7147 = vadd.f32 0.0, %v7146
  %v7148 = vpop.f32.mrb[0].mxu0
  %v7149 = vpop.f32.mrb[0].mxu0
  %v7150 = vadd.f32 0.0, %v7149
  %v7151 = vpop.f32.mrb[0].mxu0
  %7152 = vdwg.mxu0
  %7153 = vmatprep.subr.bf16.mxu0 0
  %7154 = vmatpush1.bf16.msra.mxu0 %v6290
  %7155 = vmatprep.subr.bf16.mxu0 0
  %7156 = vmatpush1.bf16.msra.mxu0 %v6291
  %7157 = vmatprep.subr.bf16.mxu0 0
  %7158 = vmatpush1.bf16.msra.mxu0 %v6292
  %7159 = vmatprep.subr.bf16.mxu0 0
  %7160 = vmatpush1.bf16.msra.mxu0 %v6293
  %7161 = vmatprep.subr.bf16.mxu0 0
  %7162 = vmatpush1.bf16.msra.mxu0 %v6294
  %7163 = vmatprep.subr.bf16.mxu0 0
  %7164 = vmatpush1.bf16.msra.mxu0 %v6295
  %7165 = vmatprep.subr.bf16.mxu0 0
  %7166 = vmatpush1.bf16.msra.mxu0 %v6296
  %7167 = vmatprep.subr.bf16.mxu0 0
  %7168 = vmatpush1.bf16.msra.mxu0 %v6297
  %7169 = vmatprep.subr.bf16.mxu0 0
  %7170 = vmatpush1.bf16.msra.mxu0 %v6298
  %7171 = vmatprep.subr.bf16.mxu0 0
  %7172 = vmatpush1.bf16.msra.mxu0 %v6299
  %7173 = vmatprep.subr.bf16.mxu0 0
  %7174 = vmatpush1.bf16.msra.mxu0 %v6300
  %7175 = vmatprep.subr.bf16.mxu0 0
  %7176 = vmatpush1.bf16.msra.mxu0 %v6301
  %7177 = vmatprep.subr.bf16.mxu0 0
  %7178 = vmatpush1.bf16.msra.mxu0 %v6302
  %7179 = vmatprep.subr.bf16.mxu0 0
  %7180 = vmatpush1.bf16.msra.mxu0 %v6303
  %7181 = vmatprep.subr.bf16.mxu0 0
  %7182 = vmatpush1.bf16.msra.mxu0 %v6304
  %7183 = vmatprep.subr.bf16.mxu0 0
  %7184 = vmatpush1.bf16.msra.mxu0 %v6305
  %7185 = vmatprep.mubr.bf16.mxu0 %v6682
  %7186 = vmatmul.mubr.bf16.gmra.mrb[0].mxu0 %v6681
  %v7187 = vpop.f32.mrb[0].mxu0
  %v7188 = vadd.f32 %v6995, %v7187
  %v7189 = vpop.f32.mrb[0].mxu0
  %v7190 = vpop.f32.mrb[0].mxu0
  %v7191 = vadd.f32 %v6998, %v7190
  %v7192 = vpop.f32.mrb[0].mxu0
  %7193 = vmatprep.mubr.bf16.mxu0 %v6688
  %7194 = vmatmul.mubr.bf16.gmra.mrb[0].mxu0 %v6687
  %v7195 = vpop.f32.mrb[0].mxu0
  %v7196 = vadd.f32 %v7003, %v7195
  %v7197 = vpop.f32.mrb[0].mxu0
  %v7198 = vpop.f32.mrb[0].mxu0
  %v7199 = vadd.f32 %v7006, %v7198
  %v7200 = vpop.f32.mrb[0].mxu0
  %7201 = vmatprep.mubr.bf16.mxu0 %v6694
  %7202 = vmatmul.mubr.bf16.gmra.mrb[0].mxu0 %v6693
  %v7203 = vpop.f32.mrb[0].mxu0
  %v7204 = vadd.f32 %v7011, %v7203
  %v7205 = vpop.f32.mrb[0].mxu0
  %v7206 = vpop.f32.mrb[0].mxu0
  %v7207 = vadd.f32 %v7014, %v7206
  %v7208 = vpop.f32.mrb[0].mxu0
  %7209 = vmatprep.mubr.bf16.mxu0 %v6700
  %7210 = vmatmul.mubr.bf16.gmra.mrb[0].mxu0 %v6699
  %v7211 = vpop.f32.mrb[0].mxu0
  %v7212 = vadd.f32 %v7019, %v7211
  %v7213 = vpop.f32.mrb[0].mxu0
  %v7214 = vpop.f32.mrb[0].mxu0
  %v7215 = vadd.f32 %v7022, %v7214
  %v7216 = vpop.f32.mrb[0].mxu0
  %7217 = vmatprep.mubr.bf16.mxu0 %v6706
  %7218 = vmatmul.mubr.bf16.gmra.mrb[0].mxu0 %v6705
  %v7219 = vpop.f32.mrb[0].mxu0
  %v7220 = vadd.f32 %v7027, %v7219
  %v7221 = vpop.f32.mrb[0].mxu0
  %v7222 = vpop.f32.mrb[0].mxu0
  %v7223 = vadd.f32 %v7030, %v7222
  %v7224 = vpop.f32.mrb[0].mxu0
  %7225 = vmatprep.mubr.bf16.mxu0 %v6712
  %7226 = vmatmul.mubr.bf16.gmra.mrb[0].mxu0 %v6711
  %v7227 = vpop.f32.mrb[0].mxu0
  %v7228 = vadd.f32 %v7035, %v7227
  %v7229 = vpop.f32.mrb[0].mxu0
  %v7230 = vpop.f32.mrb[0].mxu0
  %v7231 = vadd.f32 %v7038, %v7230
  %v7232 = vpop.f32.mrb[0].mxu0
  %7233 = vmatprep.mubr.bf16.mxu0 %v6718
  %7234 = vmatmul.mubr.bf16.gmra.mrb[0].mxu0 %v6717
  %v7235 = vpop.f32.mrb[0].mxu0
  %v7236 = vadd.f32 %v7043, %v7235
  %v7237 = vpop.f32.mrb[0].mxu0
  %v7238 = vpop.f32.mrb[0].mxu0
  %v7239 = vadd.f32 %v7046, %v7238
  %v7240 = vpop.f32.mrb[0].mxu0
  %7241 = vmatprep.mubr.bf16.mxu0 %v6724
  %7242 = vmatmul.mubr.bf16.gmra.mrb[0].mxu0 %v6723
  %v7243 = vpop.f32.mrb[0].mxu0
  %v7244 = vadd.f32 %v7051, %v7243
  %v7245 = vpop.f32.mrb[0].mxu0
  %v7246 = vpop.f32.mrb[0].mxu0
  %v7247 = vadd.f32 %v7054, %v7246
  %v7248 = vpop.f32.mrb[0].mxu0
  %7249 = vmatprep.mubr.bf16.mxu0 %v6730
  %7250 = vmatmul.mubr.bf16.gmra.mrb[0].mxu0 %v6729
  %v7251 = vpop.f32.mrb[0].mxu0
  %v7252 = vadd.f32 %v7059, %v7251
  %v7253 = vpop.f32.mrb[0].mxu0
  %v7254 = vpop.f32.mrb[0].mxu0
  %v7255 = vadd.f32 %v7062, %v7254
  %v7256 = vpop.f32.mrb[0].mxu0
  %7257 = vmatprep.mubr.bf16.mxu0 %v6736
  %7258 = vmatmul.mubr.bf16.gmra.mrb[0].mxu0 %v6735
  %v7259 = vpop.f32.mrb[0].mxu0
  %v7260 = vadd.f32 %v7067, %v7259
  %v7261 = vpop.f32.mrb[0].mxu0
  %v7262 = vpop.f32.mrb[0].mxu0
  %v7263 = vadd.f32 %v7070, %v7262
  %v7264 = vpop.f32.mrb[0].mxu0
  %7265 = vmatprep.mubr.bf16.mxu0 %v6742
  %7266 = vmatmul.mubr.bf16.gmra.mrb[0].mxu0 %v6741
  %v7267 = vpop.f32.mrb[0].mxu0
  %v7268 = vadd.f32 %v7075, %v7267
  %v7269 = vpop.f32.mrb[0].mxu0
  %v7270 = vpop.f32.mrb[0].mxu0
  %v7271 = vadd.f32 %v7078, %v7270
  %v7272 = vpop.f32.mrb[0].mxu0
  %7273 = vmatprep.mubr.bf16.mxu0 %v6748
  %7274 = vmatmul.mubr.bf16.gmra.mrb[0].mxu0 %v6747
  %v7275 = vpop.f32.mrb[0].mxu0
  %v7276 = vadd.f32 %v7083, %v7275
  %v7277 = vpop.f32.mrb[0].mxu0
  %v7278 = vpop.f32.mrb[0].mxu0
  %v7279 = vadd.f32 %v7086, %v7278
  %v7280 = vpop.f32.mrb[0].mxu0
  %7281 = vmatprep.mubr.bf16.mxu0 %v6754
  %7282 = vmatmul.mubr.bf16.gmra.mrb[0].mxu0 %v6753
  %v7283 = vpop.f32.mrb[0].mxu0
  %v7284 = vadd.f32 %v7091, %v7283
  %v7285 = vpop.f32.mrb[0].mxu0
  %v7286 = vpop.f32.mrb[0].mxu0
  %v7287 = vadd.f32 %v7094, %v7286
  %v7288 = vpop.f32.mrb[0].mxu0
  %7289 = vmatprep.mubr.bf16.mxu0 %v6760
  %7290 = vmatmul.mubr.bf16.gmra.mrb[0].mxu0 %v6759
  %v7291 = vpop.f32.mrb[0].mxu0
  %v7292 = vadd.f32 %v7099, %v7291
  %v7293 = vpop.f32.mrb[0].mxu0
  %v7294 = vpop.f32.mrb[0].mxu0
  %v7295 = vadd.f32 %v7102, %v7294
  %v7296 = vpop.f32.mrb[0].mxu0
  %7297 = vmatprep.mubr.bf16.mxu0 %v6766
  %7298 = vmatmul.mubr.bf16.gmra.mrb[0].mxu0 %v6765
  %v7299 = vpop.f32.mrb[0].mxu0
  %v7300 = vadd.f32 %v7107, %v7299
  %v7301 = vpop.f32.mrb[0].mxu0
  %v7302 = vpop.f32.mrb[0].mxu0
  %v7303 = vadd.f32 %v7110, %v7302
  %v7304 = vpop.f32.mrb[0].mxu0
  %7305 = vmatprep.mubr.bf16.mxu0 %v6772
  %7306 = vmatmul.mubr.bf16.gmra.mrb[0].mxu0 %v6771
  %v7307 = vpop.f32.mrb[0].mxu0
  %v7308 = vadd.f32 %v7115, %v7307
  %v7309 = vpop.f32.mrb[0].mxu0
  %v7310 = vpop.f32.mrb[0].mxu0
  %v7311 = vadd.f32 %v7118, %v7310
  %v7312 = vpop.f32.mrb[0].mxu0
  %7313 = vmatprep.mubr.bf16.mxu0 %v6778
  %7314 = vmatmul.mubr.bf16.gmra.mrb[0].mxu0 %v6777
  %v7315 = vpop.f32.mrb[0].mxu0
  %v7316 = vadd.f32 %v7123, %v7315
  %v7317 = vpop.f32.mrb[0].mxu0
  %v7318 = vpop.f32.mrb[0].mxu0
  %v7319 = vadd.f32 %v7126, %v7318
  %v7320 = vpop.f32.mrb[0].mxu0
  %7321 = vmatprep.mubr.bf16.mxu0 %v6784
  %7322 = vmatmul.mubr.bf16.gmra.mrb[0].mxu0 %v6783
  %v7323 = vpop.f32.mrb[0].mxu0
  %v7324 = vadd.f32 %v7131, %v7323
  %v7325 = vpop.f32.mrb[0].mxu0
  %v7326 = vpop.f32.mrb[0].mxu0
  %v7327 = vadd.f32 %v7134, %v7326
  %v7328 = vpop.f32.mrb[0].mxu0
  %7329 = vmatprep.mubr.bf16.mxu0 %v6790
  %7330 = vmatmul.mubr.bf16.gmra.mrb[0].mxu0 %v6789
  %v7331 = vpop.f32.mrb[0].mxu0
  %v7332 = vadd.f32 %v7139, %v7331
  %v7333 = vpop.f32.mrb[0].mxu0
  %v7334 = vpop.f32.mrb[0].mxu0
  %v7335 = vadd.f32 %v7142, %v7334
  %v7336 = vpop.f32.mrb[0].mxu0
  %7337 = vmatprep.mubr.bf16.mxu0 %v6796
  %7338 = vmatmul.mubr.bf16.gmra.mrb[0].mxu0 %v6795
  %v7339 = vpop.f32.mrb[0].mxu0
  %v7340 = vadd.f32 %v7147, %v7339
  %v7341 = vpop.f32.mrb[0].mxu0
  %v7342 = vpop.f32.mrb[0].mxu0
  %v7343 = vadd.f32 %v7150, %v7342
  %v7344 = vpop.f32.mrb[0].mxu0
  %7345 = vdwg.mxu0
  %7346 = vmatprep.subr.bf16.mxu0 0
  %7347 = vmatpush1.bf16.msra.mxu0 %v6306
  %7348 = vmatprep.subr.bf16.mxu0 0
  %7349 = vmatpush1.bf16.msra.mxu0 %v6307
  %7350 = vmatprep.subr.bf16.mxu0 0
  %7351 = vmatpush1.bf16.msra.mxu0 %v6308
  %7352 = vmatprep.subr.bf16.mxu0 0
  %7353 = vmatpush1.bf16.msra.mxu0 %v6309
  %7354 = vmatprep.subr.bf16.mxu0 0
  %7355 = vmatpush1.bf16.msra.mxu0 %v6310
  %7356 = vmatprep.subr.bf16.mxu0 0
  %7357 = vmatpush1.bf16.msra.mxu0 %v6311
  %7358 = vmatprep.subr.bf16.mxu0 0
  %7359 = vmatpush1.bf16.msra.mxu0 %v6312
  %7360 = vmatprep.subr.bf16.mxu0 0
  %7361 = vmatpush1.bf16.msra.mxu0 %v6313
  %7362 = vmatprep.subr.bf16.mxu0 0
  %7363 = vmatpush1.bf16.msra.mxu0 %v6314
  %7364 = vmatprep.subr.bf16.mxu0 0
  %7365 = vmatpush1.bf16.msra.mxu0 %v6315
  %7366 = vmatprep.subr.bf16.mxu0 0
  %7367 = vmatpush1.bf16.msra.mxu0 %v6316
  %7368 = vmatprep.subr.bf16.mxu0 0
  %7369 = vmatpush1.bf16.msra.mxu0 %v6317
  %7370 = vmatprep.subr.bf16.mxu0 0
  %7371 = vmatpush1.bf16.msra.mxu0 %v6318
  %7372 = vmatprep.subr.bf16.mxu0 0
  %7373 = vmatpush1.bf16.msra.mxu0 0
  %7374 = vmatprep.subr.bf16.mxu0 0
  %7375 = vmatpush1.bf16.msra.mxu0 0
  %7376 = vmatprep.subr.bf16.mxu0 0
  %7377 = vmatpush1.bf16.msra.mxu0 0
  %7378 = vmatprep.mubr.bf16.mxu0 %v6901
  %7379 = vmatmul.mubr.bf16.gmra.mrb[0].mxu0 %v6683
  %v7380 = vpop.f32.mrb[0].mxu0
  %v7381 = vadd.f32 %v7188, %v7380
  %v7382 = vpop.f32.mrb[0].mxu0
  %v7383 = vpop.f32.mrb[0].mxu0
  %v7384 = vadd.f32 %v7191, %v7383
  %v7385 = vpop.f32.mrb[0].mxu0
  %7386 = vmatprep.mubr.bf16.mxu0 %v6904
  %7387 = vmatmul.mubr.bf16.gmra.mrb[0].mxu0 %v6689
  %v7388 = vpop.f32.mrb[0].mxu0
  %v7389 = vadd.f32 %v7196, %v7388
  %v7390 = vpop.f32.mrb[0].mxu0
  %v7391 = vpop.f32.mrb[0].mxu0
  %v7392 = vadd.f32 %v7199, %v7391
  %v7393 = vpop.f32.mrb[0].mxu0
  %7394 = vmatprep.mubr.bf16.mxu0 %v6907
  %7395 = vmatmul.mubr.bf16.gmra.mrb[0].mxu0 %v6695
  %v7396 = vpop.f32.mrb[0].mxu0
  %v7397 = vadd.f32 %v7204, %v7396
  %v7398 = vpop.f32.mrb[0].mxu0
  %v7399 = vpop.f32.mrb[0].mxu0
  %v7400 = vadd.f32 %v7207, %v7399
  %v7401 = vpop.f32.mrb[0].mxu0
  %7402 = vmatprep.mubr.bf16.mxu0 %v6910
  %7403 = vmatmul.mubr.bf16.gmra.mrb[0].mxu0 %v6701
  %v7404 = vpop.f32.mrb[0].mxu0
  %v7405 = vadd.f32 %v7212, %v7404
  %v7406 = vpop.f32.mrb[0].mxu0
  %v7407 = vpop.f32.mrb[0].mxu0
  %v7408 = vadd.f32 %v7215, %v7407
  %v7409 = vpop.f32.mrb[0].mxu0
  %7410 = vmatprep.mubr.bf16.mxu0 %v6913
  %7411 = vmatmul.mubr.bf16.gmra.mrb[0].mxu0 %v6707
  %v7412 = vpop.f32.mrb[0].mxu0
  %v7413 = vadd.f32 %v7220, %v7412
  %v7414 = vpop.f32.mrb[0].mxu0
  %v7415 = vpop.f32.mrb[0].mxu0
  %v7416 = vadd.f32 %v7223, %v7415
  %v7417 = vpop.f32.mrb[0].mxu0
  %7418 = vmatprep.mubr.bf16.mxu0 %v6916
  %7419 = vmatmul.mubr.bf16.gmra.mrb[0].mxu0 %v6713
  %v7420 = vpop.f32.mrb[0].mxu0
  %v7421 = vadd.f32 %v7228, %v7420
  %v7422 = vpop.f32.mrb[0].mxu0
  %v7423 = vpop.f32.mrb[0].mxu0
  %v7424 = vadd.f32 %v7231, %v7423
  %v7425 = vpop.f32.mrb[0].mxu0
  %7426 = vmatprep.mubr.bf16.mxu0 %v6919
  %7427 = vmatmul.mubr.bf16.gmra.mrb[0].mxu0 %v6719
  %v7428 = vpop.f32.mrb[0].mxu0
  %v7429 = vadd.f32 %v7236, %v7428
  %v7430 = vpop.f32.mrb[0].mxu0
  %v7431 = vpop.f32.mrb[0].mxu0
  %v7432 = vadd.f32 %v7239, %v7431
  %v7433 = vpop.f32.mrb[0].mxu0
  %7434 = vmatprep.mubr.bf16.mxu0 %v6922
  %7435 = vmatmul.mubr.bf16.gmra.mrb[0].mxu0 %v6725
  %v7436 = vpop.f32.mrb[0].mxu0
  %v7437 = vadd.f32 %v7244, %v7436
  %v7438 = vpop.f32.mrb[0].mxu0
  %v7439 = vpop.f32.mrb[0].mxu0
  %v7440 = vadd.f32 %v7247, %v7439
  %v7441 = vpop.f32.mrb[0].mxu0
  %7442 = vmatprep.mubr.bf16.mxu0 %v6925
  %7443 = vmatmul.mubr.bf16.gmra.mrb[0].mxu0 %v6731
  %v7444 = vpop.f32.mrb[0].mxu0
  %v7445 = vadd.f32 %v7252, %v7444
  %v7446 = vpop.f32.mrb[0].mxu0
  %v7447 = vpop.f32.mrb[0].mxu0
  %v7448 = vadd.f32 %v7255, %v7447
  %v7449 = vpop.f32.mrb[0].mxu0
  %7450 = vmatprep.mubr.bf16.mxu0 %v6928
  %7451 = vmatmul.mubr.bf16.gmra.mrb[0].mxu0 %v6737
  %v7452 = vpop.f32.mrb[0].mxu0
  %v7453 = vadd.f32 %v7260, %v7452
  %v7454 = vpop.f32.mrb[0].mxu0
  %v7455 = vpop.f32.mrb[0].mxu0
  %v7456 = vadd.f32 %v7263, %v7455
  %v7457 = vpop.f32.mrb[0].mxu0
  %7458 = vmatprep.mubr.bf16.mxu0 %v6931
  %7459 = vmatmul.mubr.bf16.gmra.mrb[0].mxu0 %v6743
  %v7460 = vpop.f32.mrb[0].mxu0
  %v7461 = vadd.f32 %v7268, %v7460
  %v7462 = vpop.f32.mrb[0].mxu0
  %v7463 = vpop.f32.mrb[0].mxu0
  %v7464 = vadd.f32 %v7271, %v7463
  %v7465 = vpop.f32.mrb[0].mxu0
  %7466 = vmatprep.mubr.bf16.mxu0 %v6934
  %7467 = vmatmul.mubr.bf16.gmra.mrb[0].mxu0 %v6749
  %v7468 = vpop.f32.mrb[0].mxu0
  %v7469 = vadd.f32 %v7276, %v7468
  %v7470 = vpop.f32.mrb[0].mxu0
  %v7471 = vpop.f32.mrb[0].mxu0
  %v7472 = vadd.f32 %v7279, %v7471
  %v7473 = vpop.f32.mrb[0].mxu0
  %7474 = vmatprep.mubr.bf16.mxu0 %v6937
  %7475 = vmatmul.mubr.bf16.gmra.mrb[0].mxu0 %v6755
  %v7476 = vpop.f32.mrb[0].mxu0
  %v7477 = vadd.f32 %v7284, %v7476
  %v7478 = vpop.f32.mrb[0].mxu0
  %v7479 = vpop.f32.mrb[0].mxu0
  %v7480 = vadd.f32 %v7287, %v7479
  %v7481 = vpop.f32.mrb[0].mxu0
  %7482 = vmatprep.mubr.bf16.mxu0 %v6940
  %7483 = vmatmul.mubr.bf16.gmra.mrb[0].mxu0 %v6761
  %v7484 = vpop.f32.mrb[0].mxu0
  %v7485 = vadd.f32 %v7292, %v7484
  %v7486 = vpop.f32.mrb[0].mxu0
  %v7487 = vpop.f32.mrb[0].mxu0
  %v7488 = vadd.f32 %v7295, %v7487
  %v7489 = vpop.f32.mrb[0].mxu0
  %7490 = vmatprep.mubr.bf16.mxu0 %v6943
  %7491 = vmatmul.mubr.bf16.gmra.mrb[0].mxu0 %v6767
  %v7492 = vpop.f32.mrb[0].mxu0
  %v7493 = vadd.f32 %v7300, %v7492
  %v7494 = vpop.f32.mrb[0].mxu0
  %v7495 = vpop.f32.mrb[0].mxu0
  %v7496 = vadd.f32 %v7303, %v7495
  %v7497 = vpop.f32.mrb[0].mxu0
  %7498 = vmatprep.mubr.bf16.mxu0 %v6946
  %7499 = vmatmul.mubr.bf16.gmra.mrb[0].mxu0 %v6773
  %v7500 = vpop.f32.mrb[0].mxu0
  %v7501 = vadd.f32 %v7308, %v7500
  %v7502 = vpop.f32.mrb[0].mxu0
  %v7503 = vpop.f32.mrb[0].mxu0
  %v7504 = vadd.f32 %v7311, %v7503
  %v7505 = vpop.f32.mrb[0].mxu0
  %7506 = vmatprep.mubr.bf16.mxu0 %v6949
  %7507 = vmatmul.mubr.bf16.gmra.mrb[0].mxu0 %v6779
  %v7508 = vpop.f32.mrb[0].mxu0
  %v7509 = vadd.f32 %v7316, %v7508
  %v7510 = vpop.f32.mrb[0].mxu0
  %v7511 = vpop.f32.mrb[0].mxu0
  %v7512 = vadd.f32 %v7319, %v7511
  %v7513 = vpop.f32.mrb[0].mxu0
  %7514 = vmatprep.mubr.bf16.mxu0 %v6952
  %7515 = vmatmul.mubr.bf16.gmra.mrb[0].mxu0 %v6785
  %v7516 = vpop.f32.mrb[0].mxu0
  %v7517 = vadd.f32 %v7324, %v7516
  %v7518 = vpop.f32.mrb[0].mxu0
  %v7519 = vpop.f32.mrb[0].mxu0
  %v7520 = vadd.f32 %v7327, %v7519
  %v7521 = vpop.f32.mrb[0].mxu0
  %7522 = vmatprep.mubr.bf16.mxu0 %v6955
  %7523 = vmatmul.mubr.bf16.gmra.mrb[0].mxu0 %v6791
  %v7524 = vpop.f32.mrb[0].mxu0
  %v7525 = vadd.f32 %v7332, %v7524
  %v7526 = vpop.f32.mrb[0].mxu0
  %v7527 = vpop.f32.mrb[0].mxu0
  %v7528 = vadd.f32 %v7335, %v7527
  %v7529 = vpop.f32.mrb[0].mxu0
  %7530 = vmatprep.mubr.bf16.mxu0 %v6958
  %7531 = vmatmul.mubr.bf16.gmra.mrb[0].mxu0 %v6797
  %v7532 = vpop.f32.mrb[0].mxu0
  %v7533 = vadd.f32 %v7340, %v7532
  %v7534 = vpop.f32.mrb[0].mxu0
  %v7535 = vpop.f32.mrb[0].mxu0
  %v7536 = vadd.f32 %v7343, %v7535
  %v7537 = vpop.f32.mrb[0].mxu0
  %7538 = vdwg.mxu0
  %v7539 = vmax.f32 %v7381, %v7421
  %v7540 = vmax.f32 %v7384, %v7424
  %v7541 = vmax.f32 %v7389, %v7429
  %v7542 = vmax.f32 %v7392, %v7432
  %v7543 = vmax.f32 %v7397, %v7437
  %v7544 = vmax.f32 %v7400, %v7440
  %v7545 = vmax.f32 %v7405, %v7445
  %v7546 = vmax.f32 %v7408, %v7448
  %v7547 = vmax.f32 %v7413, %v7453
  %v7548 = vmax.f32 %v7416, %v7456
  %v7549 = vmax.f32 %v7461, %v7501
  %v7550 = vmax.f32 %v7464, %v7504
  %v7551 = vmax.f32 %v7469, %v7509
  %v7552 = vmax.f32 %v7472, %v7512
  %v7553 = vmax.f32 %v7477, %v7517
  %v7554 = vmax.f32 %v7480, %v7520
  %v7555 = vmax.f32 %v7485, %v7525
  %v7556 = vmax.f32 %v7488, %v7528
  %v7557 = vmax.f32 %v7493, %v7533
  %v7558 = vmax.f32 %v7496, %v7536
  %v7559 = vmax.f32 %v7539, %v7549
  %v7560 = vmax.f32 %v7540, %v7550
  %v7561 = vmax.f32 %v7541, %v7551
  %v7562 = vmax.f32 %v7542, %v7552
  %v7563 = vmax.f32 %v7543, %v7553
  %v7564 = vmax.f32 %v7544, %v7554
  %v7565 = vmax.f32 %v7545, %v7555
  %v7566 = vmax.f32 %v7546, %v7556
  %v7567 = vmax.f32 %v7547, %v7557
  %v7568 = vmax.f32 %v7548, %v7558
  %7570 = vset.pattern.permute.xlu0 0
  %7571 = vperm.xlu0 %7570, %v6264
  %v7572 = vpop.permute.xlu0 %7571
  %7575 = vset.pattern.permute.xlu0 0
  %7576 = vperm.xlu0 %7575, %v6265
  %v7577 = vpop.permute.xlu0 %7576
  %7580 = vset.pattern.permute.xlu0 0
  %7581 = vperm.xlu0 %7580, %v6266
  %v7582 = vpop.permute.xlu0 %7581
  %7585 = vset.pattern.permute.xlu0 0
  %7586 = vperm.xlu0 %7585, %v6267
  %v7587 = vpop.permute.xlu0 %7586
  %7590 = vset.pattern.permute.xlu0 0
  %7591 = vperm.xlu0 %7590, %v6268
  %v7592 = vpop.permute.xlu0 %7591
  %7595 = vset.pattern.permute.xlu0 0
  %7596 = vperm.xlu0 %7595, %v6269
  %v7597 = vpop.permute.xlu0 %7596
  %7600 = vset.pattern.permute.xlu0 0
  %7601 = vperm.xlu0 %7600, %v6270
  %v7602 = vpop.permute.xlu0 %7601
  %7605 = vset.pattern.permute.xlu0 0
  %7606 = vperm.xlu0 %7605, %v6271
  %v7607 = vpop.permute.xlu0 %7606
  %7610 = vset.pattern.permute.xlu0 0
  %7611 = vperm.xlu0 %7610, %v6272
  %v7612 = vpop.permute.xlu0 %7611
  %7615 = vset.pattern.permute.xlu0 0
  %7616 = vperm.xlu0 %7615, %v6273
  %v7617 = vpop.permute.xlu0 %7616
  %v7619 = vadd.f32 %v7559, %v7572
  %v7620 = vadd.f32 %v7560, %v7577
  %v7621 = vadd.f32 %v7561, %v7582
  %v7622 = vadd.f32 %v7562, %v7587
  %v7623 = vadd.f32 %v7563, %v7592
  %v7624 = vadd.f32 %v7564, %v7597
  %v7625 = vadd.f32 %v7565, %v7602
  %v7626 = vadd.f32 %v7566, %v7607
  %v7627 = vadd.f32 %v7567, %v7612
  %v7628 = vadd.f32 %v7568, %v7617
  %v7629 = vmax.f32 %v7619, 0.0
  %v7630 = vmax.f32 %v7620, 0.0
  %v7631 = vmax.f32 %v7621, 0.0
  %v7632 = vmax.f32 %v7622, 0.0
  %v7633 = vmax.f32 %v7623, 0.0
  %v7634 = vmax.f32 %v7624, 0.0
  %v7635 = vmax.f32 %v7625, 0.0
  %v7636 = vmax.f32 %v7626, 0.0
  %v7637 = vmax.f32 %v7627, 0.0
  %v7638 = vmax.f32 %v7628, 0.0
  %v7639 = vpack.c.bf16 %v7630, %v7629
  %v7640 = vpack.c.bf16 %v7632, %v7631
  %v7641 = vpack.c.bf16 %v7634, %v7633
  %v7642 = vpack.c.bf16 %v7636, %v7635
  %v7643 = vpack.c.bf16 %v7638, %v7637
  %7644 = vst [vmem:[#allocation3] sm:$0xff] %v7639
  %7645 = vst [vmem:[#allocation3 + $0x8] sm:$0xff] %v7640
  %7646 = vst [vmem:[#allocation3 + $0x10] sm:$0xff] %v7641
  %7647 = vst [vmem:[#allocation3 + $0x18] sm:$0xff] %v7642
  %7648 = vst [vmem:[#allocation3 + $0x20] sm:$0xff] %v7643
  %v7649 = vld [vmem:[#allocation2 + $0x78] sm:$0xff]
  %v7650 = vld [vmem:[#allocation2 + $0x80] sm:$0xff]
  %v7651 = vld [vmem:[#allocation2 + $0x88] sm:$0xff]
  %v7652 = vld [vmem:[#allocation2 + $0x90] sm:$0xff]
  %v7653 = vld [vmem:[#allocation2 + $0x98] sm:$0xff]
  %v7654 = vld [vmem:[#allocation2 + $0xa0] sm:$0xff]
  %v7655 = vld [vmem:[#allocation2 + $0xa8] sm:$0xff]
  %v7656 = vld [vmem:[#allocation2 + $0xb0] sm:$0xff]
  %v7657 = vld [vmem:[#allocation2 + $0xb8] sm:$0xff]
  %v7658 = vld [vmem:[#allocation2 + $0xc0] sm:$0xff]
  %v7659 = vld [vmem:[#allocation2 + $0xc8] sm:$0xff]
  %v7660 = vld [vmem:[#allocation2 + $0xd0] sm:$0xff]
  %v7661 = vld [vmem:[#allocation2 + $0xd8] sm:$0xff]
  %v7662 = vld [vmem:[#allocation2 + $0xe0] sm:$0xff]
  %v7663 = vld [vmem:[#allocation2 + $0xe8] sm:$0xff]
  %v7664 = vld [vmem:[#allocation2 + $0xf0] sm:$0xff]
  %v7665 = vld [vmem:[#allocation2 + $0xf8] sm:$0xff]
  %v7666 = vld [vmem:[#allocation2 + $0x100] sm:$0xff]
  %v7667 = vld [vmem:[#allocation2 + $0x108] sm:$0xff]
  %v7668 = vld [vmem:[#allocation2 + $0x110] sm:$0xff]
  %v7669 = vld [vmem:[#allocation2 + $0x118] sm:$0xff]
  %v7670 = vld [vmem:[#allocation2 + $0x120] sm:$0xff]
  %v7671 = vld [vmem:[#allocation2 + $0x128] sm:$0xff]
  %v7672 = vld [vmem:[#allocation2 + $0x130] sm:$0xff]
  %v7673 = vld [vmem:[#allocation2 + $0x138] sm:$0xff]
  %v7674 = vld [vmem:[#allocation2 + $0x140] sm:$0xff]
  %v7675 = vld [vmem:[#allocation2 + $0x148] sm:$0xff]
  %v7676 = vld [vmem:[#allocation2 + $0x150] sm:$0xff]
  %v7677 = vld [vmem:[#allocation2 + $0x158] sm:$0xff]
  %v7678 = vld [vmem:[#allocation2 + $0x160] sm:$0xff]
  %v7679 = vld [vmem:[#allocation2 + $0x168] sm:$0xff]
  %v7680 = vld [vmem:[#allocation2 + $0x170] sm:$0xff]
  %v7681 = vld [vmem:[#allocation2 + $0x178] sm:$0xff]
  %v7682 = vld [vmem:[#allocation2 + $0x180] sm:$0xff]
  %v7683 = vld [vmem:[#allocation2 + $0x188] sm:$0xff]
  %v7684 = vld [vmem:[#allocation2 + $0x190] sm:$0xff]
  %v7685 = vld [vmem:[#allocation2 + $0x198] sm:$0xff]
  %v7686 = vld [vmem:[#allocation2 + $0x1a0] sm:$0xff]
  %v7687 = vld [vmem:[#allocation2 + $0x1a8] sm:$0xff]
  %v7688 = vld [vmem:[#allocation2 + $0x1b0] sm:$0xff]
  %v7689 = vld [vmem:[#allocation2 + $0x1b8] sm:$0xff]
  %v7690 = vld [vmem:[#allocation2 + $0x1c0] sm:$0xff]
  %v7691 = vld [vmem:[#allocation2 + $0x1c8] sm:$0xff]
  %v7692 = vld [vmem:[#allocation2 + $0x1d0] sm:$0xff]
  %v7693 = vld [vmem:[#allocation2 + $0x1d8] sm:$0xff]
  %7694 = vmatprep.subr.bf16.mxu0 0
  %7695 = vmatpush1.bf16.msra.mxu0 %v7649
  %7696 = vmatprep.subr.bf16.mxu0 0
  %7697 = vmatpush1.bf16.msra.mxu0 %v7650
  %7698 = vmatprep.subr.bf16.mxu0 0
  %7699 = vmatpush1.bf16.msra.mxu0 %v7651
  %7700 = vmatprep.subr.bf16.mxu0 0
  %7701 = vmatpush1.bf16.msra.mxu0 %v7652
  %7702 = vmatprep.subr.bf16.mxu0 0
  %7703 = vmatpush1.bf16.msra.mxu0 %v7653
  %7704 = vmatprep.subr.bf16.mxu0 0
  %7705 = vmatpush1.bf16.msra.mxu0 %v7654
  %7706 = vmatprep.subr.bf16.mxu0 0
  %7707 = vmatpush1.bf16.msra.mxu0 %v7655
  %7708 = vmatprep.subr.bf16.mxu0 0
  %7709 = vmatpush1.bf16.msra.mxu0 %v7656
  %7710 = vmatprep.subr.bf16.mxu0 0
  %7711 = vmatpush1.bf16.msra.mxu0 %v7657
  %7712 = vmatprep.subr.bf16.mxu0 0
  %7713 = vmatpush1.bf16.msra.mxu0 %v7658
  %7714 = vmatprep.subr.bf16.mxu0 0
  %7715 = vmatpush1.bf16.msra.mxu0 %v7659
  %7716 = vmatprep.subr.bf16.mxu0 0
  %7717 = vmatpush1.bf16.msra.mxu0 %v7660
  %7718 = vmatprep.subr.bf16.mxu0 0
  %7719 = vmatpush1.bf16.msra.mxu0 %v7661
  %7720 = vmatprep.subr.bf16.mxu0 0
  %7721 = vmatpush1.bf16.msra.mxu0 %v7662
  %7722 = vmatprep.subr.bf16.mxu0 0
  %7723 = vmatpush1.bf16.msra.mxu0 %v7663
  %7724 = vmatprep.subr.bf16.mxu0 0
  %7725 = vmatpush1.bf16.msra.mxu0 %v7664
  %7726 = vmatprep.mubr.bf16.mxu0 %v6680
  %7727 = vmatmul.mubr.bf16.gmra.mrb[0].mxu0 %v6679
  %v7728 = vpop.f32.mrb[0].mxu0
  %v7729 = vadd.f32 0.0, %v7728
  %v7730 = vpop.f32.mrb[0].mxu0
  %v7731 = vpop.f32.mrb[0].mxu0
  %v7732 = vadd.f32 0.0, %v7731
  %v7733 = vpop.f32.mrb[0].mxu0
  %7734 = vmatprep.mubr.bf16.mxu0 %v6686
  %7735 = vmatmul.mubr.bf16.gmra.mrb[0].mxu0 %v6685
  %v7736 = vpop.f32.mrb[0].mxu0
  %v7737 = vadd.f32 0.0, %v7736
  %v7738 = vpop.f32.mrb[0].mxu0
  %v7739 = vpop.f32.mrb[0].mxu0
  %v7740 = vadd.f32 0.0, %v7739
  %v7741 = vpop.f32.mrb[0].mxu0
  %7742 = vmatprep.mubr.bf16.mxu0 %v6692
  %7743 = vmatmul.mubr.bf16.gmra.mrb[0].mxu0 %v6691
  %v7744 = vpop.f32.mrb[0].mxu0
  %v7745 = vadd.f32 0.0, %v7744
  %v7746 = vpop.f32.mrb[0].mxu0
  %v7747 = vpop.f32.mrb[0].mxu0
  %v7748 = vadd.f32 0.0, %v7747
  %v7749 = vpop.f32.mrb[0].mxu0
  %7750 = vmatprep.mubr.bf16.mxu0 %v6698
  %7751 = vmatmul.mubr.bf16.gmra.mrb[0].mxu0 %v6697
  %v7752 = vpop.f32.mrb[0].mxu0
  %v7753 = vadd.f32 0.0, %v7752
  %v7754 = vpop.f32.mrb[0].mxu0
  %v7755 = vpop.f32.mrb[0].mxu0
  %v7756 = vadd.f32 0.0, %v7755
  %v7757 = vpop.f32.mrb[0].mxu0
  %7758 = vmatprep.mubr.bf16.mxu0 %v6704
  %7759 = vmatmul.mubr.bf16.gmra.mrb[0].mxu0 %v6703
  %v7760 = vpop.f32.mrb[0].mxu0
  %v7761 = vadd.f32 0.0, %v7760
  %v7762 = vpop.f32.mrb[0].mxu0
  %v7763 = vpop.f32.mrb[0].mxu0
  %v7764 = vadd.f32 0.0, %v7763
  %v7765 = vpop.f32.mrb[0].mxu0
  %7766 = vmatprep.mubr.bf16.mxu0 %v6710
  %7767 = vmatmul.mubr.bf16.gmra.mrb[0].mxu0 %v6709
  %v7768 = vpop.f32.mrb[0].mxu0
  %v7769 = vadd.f32 0.0, %v7768
  %v7770 = vpop.f32.mrb[0].mxu0
  %v7771 = vpop.f32.mrb[0].mxu0
  %v7772 = vadd.f32 0.0, %v7771
  %v7773 = vpop.f32.mrb[0].mxu0
  %7774 = vmatprep.mubr.bf16.mxu0 %v6716
  %7775 = vmatmul.mubr.bf16.gmra.mrb[0].mxu0 %v6715
  %v7776 = vpop.f32.mrb[0].mxu0
  %v7777 = vadd.f32 0.0, %v7776
  %v7778 = vpop.f32.mrb[0].mxu0
  %v7779 = vpop.f32.mrb[0].mxu0
  %v7780 = vadd.f32 0.0, %v7779
  %v7781 = vpop.f32.mrb[0].mxu0
  %7782 = vmatprep.mubr.bf16.mxu0 %v6722
  %7783 = vmatmul.mubr.bf16.gmra.mrb[0].mxu0 %v6721
  %v7784 = vpop.f32.mrb[0].mxu0
  %v7785 = vadd.f32 0.0, %v7784
  %v7786 = vpop.f32.mrb[0].mxu0
  %v7787 = vpop.f32.mrb[0].mxu0
  %v7788 = vadd.f32 0.0, %v7787
  %v7789 = vpop.f32.mrb[0].mxu0
  %7790 = vmatprep.mubr.bf16.mxu0 %v6728
  %7791 = vmatmul.mubr.bf16.gmra.mrb[0].mxu0 %v6727
  %v7792 = vpop.f32.mrb[0].mxu0
  %v7793 = vadd.f32 0.0, %v7792
  %v7794 = vpop.f32.mrb[0].mxu0
  %v7795 = vpop.f32.mrb[0].mxu0
  %v7796 = vadd.f32 0.0, %v7795
  %v7797 = vpop.f32.mrb[0].mxu0
  %7798 = vmatprep.mubr.bf16.mxu0 %v6734
  %7799 = vmatmul.mubr.bf16.gmra.mrb[0].mxu0 %v6733
  %v7800 = vpop.f32.mrb[0].mxu0
  %v7801 = vadd.f32 0.0, %v7800
  %v7802 = vpop.f32.mrb[0].mxu0
  %v7803 = vpop.f32.mrb[0].mxu0
  %v7804 = vadd.f32 0.0, %v7803
  %v7805 = vpop.f32.mrb[0].mxu0
  %7806 = vmatprep.mubr.bf16.mxu0 %v6740
  %7807 = vmatmul.mubr.bf16.gmra.mrb[0].mxu0 %v6739
  %v7808 = vpop.f32.mrb[0].mxu0
  %v7809 = vadd.f32 0.0, %v7808
  %v7810 = vpop.f32.mrb[0].mxu0
  %v7811 = vpop.f32.mrb[0].mxu0
  %v7812 = vadd.f32 0.0, %v7811
  %v7813 = vpop.f32.mrb[0].mxu0
  %7814 = vmatprep.mubr.bf16.mxu0 %v6746
  %7815 = vmatmul.mubr.bf16.gmra.mrb[0].mxu0 %v6745
  %v7816 = vpop.f32.mrb[0].mxu0
  %v7817 = vadd.f32 0.0, %v7816
  %v7818 = vpop.f32.mrb[0].mxu0
  %v7819 = vpop.f32.mrb[0].mxu0
  %v7820 = vadd.f32 0.0, %v7819
  %v7821 = vpop.f32.mrb[0].mxu0
  %7822 = vmatprep.mubr.bf16.mxu0 %v6752
  %7823 = vmatmul.mubr.bf16.gmra.mrb[0].mxu0 %v6751
  %v7824 = vpop.f32.mrb[0].mxu0
  %v7825 = vadd.f32 0.0, %v7824
  %v7826 = vpop.f32.mrb[0].mxu0
  %v7827 = vpop.f32.mrb[0].mxu0
  %v7828 = vadd.f32 0.0, %v7827
  %v7829 = vpop.f32.mrb[0].mxu0
  %7830 = vmatprep.mubr.bf16.mxu0 %v6758
  %7831 = vmatmul.mubr.bf16.gmra.mrb[0].mxu0 %v6757
  %v7832 = vpop.f32.mrb[0].mxu0
  %v7833 = vadd.f32 0.0, %v7832
  %v7834 = vpop.f32.mrb[0].mxu0
  %v7835 = vpop.f32.mrb[0].mxu0
  %v7836 = vadd.f32 0.0, %v7835
  %v7837 = vpop.f32.mrb[0].mxu0
  %7838 = vmatprep.mubr.bf16.mxu0 %v6764
  %7839 = vmatmul.mubr.bf16.gmra.mrb[0].mxu0 %v6763
  %v7840 = vpop.f32.mrb[0].mxu0
  %v7841 = vadd.f32 0.0, %v7840
  %v7842 = vpop.f32.mrb[0].mxu0
  %v7843 = vpop.f32.mrb[0].mxu0
  %v7844 = vadd.f32 0.0, %v7843
  %v7845 = vpop.f32.mrb[0].mxu0
  %7846 = vmatprep.mubr.bf16.mxu0 %v6770
  %7847 = vmatmul.mubr.bf16.gmra.mrb[0].mxu0 %v6769
  %v7848 = vpop.f32.mrb[0].mxu0
  %v7849 = vadd.f32 0.0, %v7848
  %v7850 = vpop.f32.mrb[0].mxu0
  %v7851 = vpop.f32.mrb[0].mxu0
  %v7852 = vadd.f32 0.0, %v7851
  %v7853 = vpop.f32.mrb[0].mxu0
  %7854 = vmatprep.mubr.bf16.mxu0 %v6776
  %7855 = vmatmul.mubr.bf16.gmra.mrb[0].mxu0 %v6775
  %v7856 = vpop.f32.mrb[0].mxu0
  %v7857 = vadd.f32 0.0, %v7856
  %v7858 = vpop.f32.mrb[0].mxu0
  %v7859 = vpop.f32.mrb[0].mxu0
  %v7860 = vadd.f32 0.0, %v7859
  %v7861 = vpop.f32.mrb[0].mxu0
  %7862 = vmatprep.mubr.bf16.mxu0 %v6782
  %7863 = vmatmul.mubr.bf16.gmra.mrb[0].mxu0 %v6781
  %v7864 = vpop.f32.mrb[0].mxu0
  %v7865 = vadd.f32 0.0, %v7864
  %v7866 = vpop.f32.mrb[0].mxu0
  %v7867 = vpop.f32.mrb[0].mxu0
  %v7868 = vadd.f32 0.0, %v7867
  %v7869 = vpop.f32.mrb[0].mxu0
  %7870 = vmatprep.mubr.bf16.mxu0 %v6788
  %7871 = vmatmul.mubr.bf16.gmra.mrb[0].mxu0 %v6787
  %v7872 = vpop.f32.mrb[0].mxu0
  %v7873 = vadd.f32 0.0, %v7872
  %v7874 = vpop.f32.mrb[0].mxu0
  %v7875 = vpop.f32.mrb[0].mxu0
  %v7876 = vadd.f32 0.0, %v7875
  %v7877 = vpop.f32.mrb[0].mxu0
  %7878 = vmatprep.mubr.bf16.mxu0 %v6794
  %7879 = vmatmul.mubr.bf16.gmra.mrb[0].mxu0 %v6793
  %v7880 = vpop.f32.mrb[0].mxu0
  %v7881 = vadd.f32 0.0, %v7880
  %v7882 = vpop.f32.mrb[0].mxu0
  %v7883 = vpop.f32.mrb[0].mxu0
  %v7884 = vadd.f32 0.0, %v7883
  %v7885 = vpop.f32.mrb[0].mxu0
  %7886 = vdwg.mxu0
  %7887 = vmatprep.subr.bf16.mxu0 0
  %7888 = vmatpush1.bf16.msra.mxu0 %v7665
  %7889 = vmatprep.subr.bf16.mxu0 0
  %7890 = vmatpush1.bf16.msra.mxu0 %v7666
  %7891 = vmatprep.subr.bf16.mxu0 0
  %7892 = vmatpush1.bf16.msra.mxu0 %v7667
  %7893 = vmatprep.subr.bf16.mxu0 0
  %7894 = vmatpush1.bf16.msra.mxu0 %v7668
  %7895 = vmatprep.subr.bf16.mxu0 0
  %7896 = vmatpush1.bf16.msra.mxu0 %v7669
  %7897 = vmatprep.subr.bf16.mxu0 0
  %7898 = vmatpush1.bf16.msra.mxu0 %v7670
  %7899 = vmatprep.subr.bf16.mxu0 0
  %7900 = vmatpush1.bf16.msra.mxu0 %v7671
  %7901 = vmatprep.subr.bf16.mxu0 0
  %7902 = vmatpush1.bf16.msra.mxu0 %v7672
  %7903 = vmatprep.subr.bf16.mxu0 0
  %7904 = vmatpush1.bf16.msra.mxu0 %v7673
  %7905 = vmatprep.subr.bf16.mxu0 0
  %7906 = vmatpush1.bf16.msra.mxu0 %v7674
  %7907 = vmatprep.subr.bf16.mxu0 0
  %7908 = vmatpush1.bf16.msra.mxu0 %v7675
  %7909 = vmatprep.subr.bf16.mxu0 0
  %7910 = vmatpush1.bf16.msra.mxu0 %v7676
  %7911 = vmatprep.subr.bf16.mxu0 0
  %7912 = vmatpush1.bf16.msra.mxu0 %v7677
  %7913 = vmatprep.subr.bf16.mxu0 0
  %7914 = vmatpush1.bf16.msra.mxu0 %v7678
  %7915 = vmatprep.subr.bf16.mxu0 0
  %7916 = vmatpush1.bf16.msra.mxu0 %v7679
  %7917 = vmatprep.subr.bf16.mxu0 0
  %7918 = vmatpush1.bf16.msra.mxu0 %v7680
  %7919 = vmatprep.mubr.bf16.mxu0 %v6682
  %7920 = vmatmul.mubr.bf16.gmra.mrb[0].mxu0 %v6681
  %v7921 = vpop.f32.mrb[0].mxu0
  %v7922 = vadd.f32 %v7729, %v7921
  %v7923 = vpop.f32.mrb[0].mxu0
  %v7924 = vpop.f32.mrb[0].mxu0
  %v7925 = vadd.f32 %v7732, %v7924
  %v7926 = vpop.f32.mrb[0].mxu0
  %7927 = vmatprep.mubr.bf16.mxu0 %v6688
  %7928 = vmatmul.mubr.bf16.gmra.mrb[0].mxu0 %v6687
  %v7929 = vpop.f32.mrb[0].mxu0
  %v7930 = vadd.f32 %v7737, %v7929
  %v7931 = vpop.f32.mrb[0].mxu0
  %v7932 = vpop.f32.mrb[0].mxu0
  %v7933 = vadd.f32 %v7740, %v7932
  %v7934 = vpop.f32.mrb[0].mxu0
  %7935 = vmatprep.mubr.bf16.mxu0 %v6694
  %7936 = vmatmul.mubr.bf16.gmra.mrb[0].mxu0 %v6693
  %v7937 = vpop.f32.mrb[0].mxu0
  %v7938 = vadd.f32 %v7745, %v7937
  %v7939 = vpop.f32.mrb[0].mxu0
  %v7940 = vpop.f32.mrb[0].mxu0
  %v7941 = vadd.f32 %v7748, %v7940
  %v7942 = vpop.f32.mrb[0].mxu0
  %7943 = vmatprep.mubr.bf16.mxu0 %v6700
  %7944 = vmatmul.mubr.bf16.gmra.mrb[0].mxu0 %v6699
  %v7945 = vpop.f32.mrb[0].mxu0
  %v7946 = vadd.f32 %v7753, %v7945
  %v7947 = vpop.f32.mrb[0].mxu0
  %v7948 = vpop.f32.mrb[0].mxu0
  %v7949 = vadd.f32 %v7756, %v7948
  %v7950 = vpop.f32.mrb[0].mxu0
  %7951 = vmatprep.mubr.bf16.mxu0 %v6706
  %7952 = vmatmul.mubr.bf16.gmra.mrb[0].mxu0 %v6705
  %v7953 = vpop.f32.mrb[0].mxu0
  %v7954 = vadd.f32 %v7761, %v7953
  %v7955 = vpop.f32.mrb[0].mxu0
  %v7956 = vpop.f32.mrb[0].mxu0
  %v7957 = vadd.f32 %v7764, %v7956
  %v7958 = vpop.f32.mrb[0].mxu0
  %7959 = vmatprep.mubr.bf16.mxu0 %v6712
  %7960 = vmatmul.mubr.bf16.gmra.mrb[0].mxu0 %v6711
  %v7961 = vpop.f32.mrb[0].mxu0
  %v7962 = vadd.f32 %v7769, %v7961
  %v7963 = vpop.f32.mrb[0].mxu0
  %v7964 = vpop.f32.mrb[0].mxu0
  %v7965 = vadd.f32 %v7772, %v7964
  %v7966 = vpop.f32.mrb[0].mxu0
  %7967 = vmatprep.mubr.bf16.mxu0 %v6718
  %7968 = vmatmul.mubr.bf16.gmra.mrb[0].mxu0 %v6717
  %v7969 = vpop.f32.mrb[0].mxu0
  %v7970 = vadd.f32 %v7777, %v7969
  %v7971 = vpop.f32.mrb[0].mxu0
  %v7972 = vpop.f32.mrb[0].mxu0
  %v7973 = vadd.f32 %v7780, %v7972
  %v7974 = vpop.f32.mrb[0].mxu0
  %7975 = vmatprep.mubr.bf16.mxu0 %v6724
  %7976 = vmatmul.mubr.bf16.gmra.mrb[0].mxu0 %v6723
  %v7977 = vpop.f32.mrb[0].mxu0
  %v7978 = vadd.f32 %v7785, %v7977
  %v7979 = vpop.f32.mrb[0].mxu0
  %v7980 = vpop.f32.mrb[0].mxu0
  %v7981 = vadd.f32 %v7788, %v7980
  %v7982 = vpop.f32.mrb[0].mxu0
  %7983 = vmatprep.mubr.bf16.mxu0 %v6730
  %7984 = vmatmul.mubr.bf16.gmra.mrb[0].mxu0 %v6729
  %v7985 = vpop.f32.mrb[0].mxu0
  %v7986 = vadd.f32 %v7793, %v7985
  %v7987 = vpop.f32.mrb[0].mxu0
  %v7988 = vpop.f32.mrb[0].mxu0
  %v7989 = vadd.f32 %v7796, %v7988
  %v7990 = vpop.f32.mrb[0].mxu0
  %7991 = vmatprep.mubr.bf16.mxu0 %v6736
  %7992 = vmatmul.mubr.bf16.gmra.mrb[0].mxu0 %v6735
  %v7993 = vpop.f32.mrb[0].mxu0
  %v7994 = vadd.f32 %v7801, %v7993
  %v7995 = vpop.f32.mrb[0].mxu0
  %v7996 = vpop.f32.mrb[0].mxu0
  %v7997 = vadd.f32 %v7804, %v7996
  %v7998 = vpop.f32.mrb[0].mxu0
  %7999 = vmatprep.mubr.bf16.mxu0 %v6742
  %8000 = vmatmul.mubr.bf16.gmra.mrb[0].mxu0 %v6741
  %v8001 = vpop.f32.mrb[0].mxu0
  %v8002 = vadd.f32 %v7809, %v8001
  %v8003 = vpop.f32.mrb[0].mxu0
  %v8004 = vpop.f32.mrb[0].mxu0
  %v8005 = vadd.f32 %v7812, %v8004
  %v8006 = vpop.f32.mrb[0].mxu0
  %8007 = vmatprep.mubr.bf16.mxu0 %v6748
  %8008 = vmatmul.mubr.bf16.gmra.mrb[0].mxu0 %v6747
  %v8009 = vpop.f32.mrb[0].mxu0
  %v8010 = vadd.f32 %v7817, %v8009
  %v8011 = vpop.f32.mrb[0].mxu0
  %v8012 = vpop.f32.mrb[0].mxu0
  %v8013 = vadd.f32 %v7820, %v8012
  %v8014 = vpop.f32.mrb[0].mxu0
  %8015 = vmatprep.mubr.bf16.mxu0 %v6754
  %8016 = vmatmul.mubr.bf16.gmra.mrb[0].mxu0 %v6753
  %v8017 = vpop.f32.mrb[0].mxu0
  %v8018 = vadd.f32 %v7825, %v8017
  %v8019 = vpop.f32.mrb[0].mxu0
  %v8020 = vpop.f32.mrb[0].mxu0
  %v8021 = vadd.f32 %v7828, %v8020
  %v8022 = vpop.f32.mrb[0].mxu0
  %8023 = vmatprep.mubr.bf16.mxu0 %v6760
  %8024 = vmatmul.mubr.bf16.gmra.mrb[0].mxu0 %v6759
  %v8025 = vpop.f32.mrb[0].mxu0
  %v8026 = vadd.f32 %v7833, %v8025
  %v8027 = vpop.f32.mrb[0].mxu0
  %v8028 = vpop.f32.mrb[0].mxu0
  %v8029 = vadd.f32 %v7836, %v8028
  %v8030 = vpop.f32.mrb[0].mxu0
  %8031 = vmatprep.mubr.bf16.mxu0 %v6766
  %8032 = vmatmul.mubr.bf16.gmra.mrb[0].mxu0 %v6765
  %v8033 = vpop.f32.mrb[0].mxu0
  %v8034 = vadd.f32 %v7841, %v8033
  %v8035 = vpop.f32.mrb[0].mxu0
  %v8036 = vpop.f32.mrb[0].mxu0
  %v8037 = vadd.f32 %v7844, %v8036
  %v8038 = vpop.f32.mrb[0].mxu0
  %8039 = vmatprep.mubr.bf16.mxu0 %v6772
  %8040 = vmatmul.mubr.bf16.gmra.mrb[0].mxu0 %v6771
  %v8041 = vpop.f32.mrb[0].mxu0
  %v8042 = vadd.f32 %v7849, %v8041
  %v8043 = vpop.f32.mrb[0].mxu0
  %v8044 = vpop.f32.mrb[0].mxu0
  %v8045 = vadd.f32 %v7852, %v8044
  %v8046 = vpop.f32.mrb[0].mxu0
  %8047 = vmatprep.mubr.bf16.mxu0 %v6778
  %8048 = vmatmul.mubr.bf16.gmra.mrb[0].mxu0 %v6777
  %v8049 = vpop.f32.mrb[0].mxu0
  %v8050 = vadd.f32 %v7857, %v8049
  %v8051 = vpop.f32.mrb[0].mxu0
  %v8052 = vpop.f32.mrb[0].mxu0
  %v8053 = vadd.f32 %v7860, %v8052
  %v8054 = vpop.f32.mrb[0].mxu0
  %8055 = vmatprep.mubr.bf16.mxu0 %v6784
  %8056 = vmatmul.mubr.bf16.gmra.mrb[0].mxu0 %v6783
  %v8057 = vpop.f32.mrb[0].mxu0
  %v8058 = vadd.f32 %v7865, %v8057
  %v8059 = vpop.f32.mrb[0].mxu0
  %v8060 = vpop.f32.mrb[0].mxu0
  %v8061 = vadd.f32 %v7868, %v8060
  %v8062 = vpop.f32.mrb[0].mxu0
  %8063 = vmatprep.mubr.bf16.mxu0 %v6790
  %8064 = vmatmul.mubr.bf16.gmra.mrb[0].mxu0 %v6789
  %v8065 = vpop.f32.mrb[0].mxu0
  %v8066 = vadd.f32 %v7873, %v8065
  %v8067 = vpop.f32.mrb[0].mxu0
  %v8068 = vpop.f32.mrb[0].mxu0
  %v8069 = vadd.f32 %v7876, %v8068
  %v8070 = vpop.f32.mrb[0].mxu0
  %8071 = vmatprep.mubr.bf16.mxu0 %v6796
  %8072 = vmatmul.mubr.bf16.gmra.mrb[0].mxu0 %v6795
  %v8073 = vpop.f32.mrb[0].mxu0
  %v8074 = vadd.f32 %v7881, %v8073
  %v8075 = vpop.f32.mrb[0].mxu0
  %v8076 = vpop.f32.mrb[0].mxu0
  %v8077 = vadd.f32 %v7884, %v8076
  %v8078 = vpop.f32.mrb[0].mxu0
  %8079 = vdwg.mxu0
  %8080 = vmatprep.subr.bf16.mxu0 0
  %8081 = vmatpush1.bf16.msra.mxu0 %v7681
  %8082 = vmatprep.subr.bf16.mxu0 0
  %8083 = vmatpush1.bf16.msra.mxu0 %v7682
  %8084 = vmatprep.subr.bf16.mxu0 0
  %8085 = vmatpush1.bf16.msra.mxu0 %v7683
  %8086 = vmatprep.subr.bf16.mxu0 0
  %8087 = vmatpush1.bf16.msra.mxu0 %v7684
  %8088 = vmatprep.subr.bf16.mxu0 0
  %8089 = vmatpush1.bf16.msra.mxu0 %v7685
  %8090 = vmatprep.subr.bf16.mxu0 0
  %8091 = vmatpush1.bf16.msra.mxu0 %v7686
  %8092 = vmatprep.subr.bf16.mxu0 0
  %8093 = vmatpush1.bf16.msra.mxu0 %v7687
  %8094 = vmatprep.subr.bf16.mxu0 0
  %8095 = vmatpush1.bf16.msra.mxu0 %v7688
  %8096 = vmatprep.subr.bf16.mxu0 0
  %8097 = vmatpush1.bf16.msra.mxu0 %v7689
  %8098 = vmatprep.subr.bf16.mxu0 0
  %8099 = vmatpush1.bf16.msra.mxu0 %v7690
  %8100 = vmatprep.subr.bf16.mxu0 0
  %8101 = vmatpush1.bf16.msra.mxu0 %v7691
  %8102 = vmatprep.subr.bf16.mxu0 0
  %8103 = vmatpush1.bf16.msra.mxu0 %v7692
  %8104 = vmatprep.subr.bf16.mxu0 0
  %8105 = vmatpush1.bf16.msra.mxu0 %v7693
  %8106 = vmatprep.subr.bf16.mxu0 0
  %8107 = vmatpush1.bf16.msra.mxu0 0
  %8108 = vmatprep.subr.bf16.mxu0 0
  %8109 = vmatpush1.bf16.msra.mxu0 0
  %8110 = vmatprep.subr.bf16.mxu0 0
  %8111 = vmatpush1.bf16.msra.mxu0 0
  %8112 = vmatprep.mubr.bf16.mxu0 %v6901
  %8113 = vmatmul.mubr.bf16.gmra.mrb[0].mxu0 %v6683
  %v8114 = vpop.f32.mrb[0].mxu0
  %v8115 = vadd.f32 %v7922, %v8114
  %v8116 = vpop.f32.mrb[0].mxu0
  %v8117 = vpop.f32.mrb[0].mxu0
  %v8118 = vadd.f32 %v7925, %v8117
  %v8119 = vpop.f32.mrb[0].mxu0
  %8120 = vmatprep.mubr.bf16.mxu0 %v6904
  %8121 = vmatmul.mubr.bf16.gmra.mrb[0].mxu0 %v6689
  %v8122 = vpop.f32.mrb[0].mxu0
  %v8123 = vadd.f32 %v7930, %v8122
  %v8124 = vpop.f32.mrb[0].mxu0
  %v8125 = vpop.f32.mrb[0].mxu0
  %v8126 = vadd.f32 %v7933, %v8125
  %v8127 = vpop.f32.mrb[0].mxu0
  %8128 = vmatprep.mubr.bf16.mxu0 %v6907
  %8129 = vmatmul.mubr.bf16.gmra.mrb[0].mxu0 %v6695
  %v8130 = vpop.f32.mrb[0].mxu0
  %v8131 = vadd.f32 %v7938, %v8130
  %v8132 = vpop.f32.mrb[0].mxu0
  %v8133 = vpop.f32.mrb[0].mxu0
  %v8134 = vadd.f32 %v7941, %v8133
  %v8135 = vpop.f32.mrb[0].mxu0
  %8136 = vmatprep.mubr.bf16.mxu0 %v6910
  %8137 = vmatmul.mubr.bf16.gmra.mrb[0].mxu0 %v6701
  %v8138 = vpop.f32.mrb[0].mxu0
  %v8139 = vadd.f32 %v7946, %v8138
  %v8140 = vpop.f32.mrb[0].mxu0
  %v8141 = vpop.f32.mrb[0].mxu0
  %v8142 = vadd.f32 %v7949, %v8141
  %v8143 = vpop.f32.mrb[0].mxu0
  %8144 = vmatprep.mubr.bf16.mxu0 %v6913
  %8145 = vmatmul.mubr.bf16.gmra.mrb[0].mxu0 %v6707
  %v8146 = vpop.f32.mrb[0].mxu0
  %v8147 = vadd.f32 %v7954, %v8146
  %v8148 = vpop.f32.mrb[0].mxu0
  %v8149 = vpop.f32.mrb[0].mxu0
  %v8150 = vadd.f32 %v7957, %v8149
  %v8151 = vpop.f32.mrb[0].mxu0
  %8152 = vmatprep.mubr.bf16.mxu0 %v6916
  %8153 = vmatmul.mubr.bf16.gmra.mrb[0].mxu0 %v6713
  %v8154 = vpop.f32.mrb[0].mxu0
  %v8155 = vadd.f32 %v7962, %v8154
  %v8156 = vpop.f32.mrb[0].mxu0
  %v8157 = vpop.f32.mrb[0].mxu0
  %v8158 = vadd.f32 %v7965, %v8157
  %v8159 = vpop.f32.mrb[0].mxu0
  %8160 = vmatprep.mubr.bf16.mxu0 %v6919
  %8161 = vmatmul.mubr.bf16.gmra.mrb[0].mxu0 %v6719
  %v8162 = vpop.f32.mrb[0].mxu0
  %v8163 = vadd.f32 %v7970, %v8162
  %v8164 = vpop.f32.mrb[0].mxu0
  %v8165 = vpop.f32.mrb[0].mxu0
  %v8166 = vadd.f32 %v7973, %v8165
  %v8167 = vpop.f32.mrb[0].mxu0
  %8168 = vmatprep.mubr.bf16.mxu0 %v6922
  %8169 = vmatmul.mubr.bf16.gmra.mrb[0].mxu0 %v6725
  %v8170 = vpop.f32.mrb[0].mxu0
  %v8171 = vadd.f32 %v7978, %v8170
  %v8172 = vpop.f32.mrb[0].mxu0
  %v8173 = vpop.f32.mrb[0].mxu0
  %v8174 = vadd.f32 %v7981, %v8173
  %v8175 = vpop.f32.mrb[0].mxu0
  %8176 = vmatprep.mubr.bf16.mxu0 %v6925
  %8177 = vmatmul.mubr.bf16.gmra.mrb[0].mxu0 %v6731
  %v8178 = vpop.f32.mrb[0].mxu0
  %v8179 = vadd.f32 %v7986, %v8178
  %v8180 = vpop.f32.mrb[0].mxu0
  %v8181 = vpop.f32.mrb[0].mxu0
  %v8182 = vadd.f32 %v7989, %v8181
  %v8183 = vpop.f32.mrb[0].mxu0
  %8184 = vmatprep.mubr.bf16.mxu0 %v6928
  %8185 = vmatmul.mubr.bf16.gmra.mrb[0].mxu0 %v6737
  %v8186 = vpop.f32.mrb[0].mxu0
  %v8187 = vadd.f32 %v7994, %v8186
  %v8188 = vpop.f32.mrb[0].mxu0
  %v8189 = vpop.f32.mrb[0].mxu0
  %v8190 = vadd.f32 %v7997, %v8189
  %v8191 = vpop.f32.mrb[0].mxu0
  %8192 = vmatprep.mubr.bf16.mxu0 %v6931
  %8193 = vmatmul.mubr.bf16.gmra.mrb[0].mxu0 %v6743
  %v8194 = vpop.f32.mrb[0].mxu0
  %v8195 = vadd.f32 %v8002, %v8194
  %v8196 = vpop.f32.mrb[0].mxu0
  %v8197 = vpop.f32.mrb[0].mxu0
  %v8198 = vadd.f32 %v8005, %v8197
  %v8199 = vpop.f32.mrb[0].mxu0
  %8200 = vmatprep.mubr.bf16.mxu0 %v6934
  %8201 = vmatmul.mubr.bf16.gmra.mrb[0].mxu0 %v6749
  %v8202 = vpop.f32.mrb[0].mxu0
  %v8203 = vadd.f32 %v8010, %v8202
  %v8204 = vpop.f32.mrb[0].mxu0
  %v8205 = vpop.f32.mrb[0].mxu0
  %v8206 = vadd.f32 %v8013, %v8205
  %v8207 = vpop.f32.mrb[0].mxu0
  %8208 = vmatprep.mubr.bf16.mxu0 %v6937
  %8209 = vmatmul.mubr.bf16.gmra.mrb[0].mxu0 %v6755
  %v8210 = vpop.f32.mrb[0].mxu0
  %v8211 = vadd.f32 %v8018, %v8210
  %v8212 = vpop.f32.mrb[0].mxu0
  %v8213 = vpop.f32.mrb[0].mxu0
  %v8214 = vadd.f32 %v8021, %v8213
  %v8215 = vpop.f32.mrb[0].mxu0
  %8216 = vmatprep.mubr.bf16.mxu0 %v6940
  %8217 = vmatmul.mubr.bf16.gmra.mrb[0].mxu0 %v6761
  %v8218 = vpop.f32.mrb[0].mxu0
  %v8219 = vadd.f32 %v8026, %v8218
  %v8220 = vpop.f32.mrb[0].mxu0
  %v8221 = vpop.f32.mrb[0].mxu0
  %v8222 = vadd.f32 %v8029, %v8221
  %v8223 = vpop.f32.mrb[0].mxu0
  %8224 = vmatprep.mubr.bf16.mxu0 %v6943
  %8225 = vmatmul.mubr.bf16.gmra.mrb[0].mxu0 %v6767
  %v8226 = vpop.f32.mrb[0].mxu0
  %v8227 = vadd.f32 %v8034, %v8226
  %v8228 = vpop.f32.mrb[0].mxu0
  %v8229 = vpop.f32.mrb[0].mxu0
  %v8230 = vadd.f32 %v8037, %v8229
  %v8231 = vpop.f32.mrb[0].mxu0
  %8232 = vmatprep.mubr.bf16.mxu0 %v6946
  %8233 = vmatmul.mubr.bf16.gmra.mrb[0].mxu0 %v6773
  %v8234 = vpop.f32.mrb[0].mxu0
  %v8235 = vadd.f32 %v8042, %v8234
  %v8236 = vpop.f32.mrb[0].mxu0
  %v8237 = vpop.f32.mrb[0].mxu0
  %v8238 = vadd.f32 %v8045, %v8237
  %v8239 = vpop.f32.mrb[0].mxu0
  %8240 = vmatprep.mubr.bf16.mxu0 %v6949
  %8241 = vmatmul.mubr.bf16.gmra.mrb[0].mxu0 %v6779
  %v8242 = vpop.f32.mrb[0].mxu0
  %v8243 = vadd.f32 %v8050, %v8242
  %v8244 = vpop.f32.mrb[0].mxu0
  %v8245 = vpop.f32.mrb[0].mxu0
  %v8246 = vadd.f32 %v8053, %v8245
  %v8247 = vpop.f32.mrb[0].mxu0
  %8248 = vmatprep.mubr.bf16.mxu0 %v6952
  %8249 = vmatmul.mubr.bf16.gmra.mrb[0].mxu0 %v6785
  %v8250 = vpop.f32.mrb[0].mxu0
  %v8251 = vadd.f32 %v8058, %v8250
  %v8252 = vpop.f32.mrb[0].mxu0
  %v8253 = vpop.f32.mrb[0].mxu0
  %v8254 = vadd.f32 %v8061, %v8253
  %v8255 = vpop.f32.mrb[0].mxu0
  %8256 = vmatprep.mubr.bf16.mxu0 %v6955
  %8257 = vmatmul.mubr.bf16.gmra.mrb[0].mxu0 %v6791
  %v8258 = vpop.f32.mrb[0].mxu0
  %v8259 = vadd.f32 %v8066, %v8258
  %v8260 = vpop.f32.mrb[0].mxu0
  %v8261 = vpop.f32.mrb[0].mxu0
  %v8262 = vadd.f32 %v8069, %v8261
  %v8263 = vpop.f32.mrb[0].mxu0
  %8264 = vmatprep.mubr.bf16.mxu0 %v6958
  %8265 = vmatmul.mubr.bf16.gmra.mrb[0].mxu0 %v6797
  %v8266 = vpop.f32.mrb[0].mxu0
  %v8267 = vadd.f32 %v8074, %v8266
  %v8268 = vpop.f32.mrb[0].mxu0
  %v8269 = vpop.f32.mrb[0].mxu0
  %v8270 = vadd.f32 %v8077, %v8269
  %v8271 = vpop.f32.mrb[0].mxu0
  %8272 = vdwg.mxu0
  %v8273 = vmax.f32 %v8115, %v8155
  %v8274 = vmax.f32 %v8118, %v8158
  %v8275 = vmax.f32 %v8123, %v8163
  %v8276 = vmax.f32 %v8126, %v8166
  %v8277 = vmax.f32 %v8131, %v8171
  %v8278 = vmax.f32 %v8134, %v8174
  %v8279 = vmax.f32 %v8139, %v8179
  %v8280 = vmax.f32 %v8142, %v8182
  %v8281 = vmax.f32 %v8147, %v8187
  %v8282 = vmax.f32 %v8150, %v8190
  %v8283 = vmax.f32 %v8195, %v8235
  %v8284 = vmax.f32 %v8198, %v8238
  %v8285 = vmax.f32 %v8203, %v8243
  %v8286 = vmax.f32 %v8206, %v8246
  %v8287 = vmax.f32 %v8211, %v8251
  %v8288 = vmax.f32 %v8214, %v8254
  %v8289 = vmax.f32 %v8219, %v8259
  %v8290 = vmax.f32 %v8222, %v8262
  %v8291 = vmax.f32 %v8227, %v8267
  %v8292 = vmax.f32 %v8230, %v8270
  %v8293 = vmax.f32 %v8273, %v8283
  %v8294 = vmax.f32 %v8274, %v8284
  %v8295 = vmax.f32 %v8275, %v8285
  %v8296 = vmax.f32 %v8276, %v8286
  %v8297 = vmax.f32 %v8277, %v8287
  %v8298 = vmax.f32 %v8278, %v8288
  %v8299 = vmax.f32 %v8279, %v8289
  %v8300 = vmax.f32 %v8280, %v8290
  %v8301 = vmax.f32 %v8281, %v8291
  %v8302 = vmax.f32 %v8282, %v8292
  %v8303 = vadd.f32 %v8293, %v7572
  %v8304 = vadd.f32 %v8294, %v7577
  %v8305 = vadd.f32 %v8295, %v7582
  %v8306 = vadd.f32 %v8296, %v7587
  %v8307 = vadd.f32 %v8297, %v7592
  %v8308 = vadd.f32 %v8298, %v7597
  %v8309 = vadd.f32 %v8299, %v7602
  %v8310 = vadd.f32 %v8300, %v7607
  %v8311 = vadd.f32 %v8301, %v7612
  %v8312 = vadd.f32 %v8302, %v7617
  %v8313 = vmax.f32 %v8303, 0.0
  %v8314 = vmax.f32 %v8304, 0.0
  %v8315 = vmax.f32 %v8305, 0.0
  %v8316 = vmax.f32 %v8306, 0.0
  %v8317 = vmax.f32 %v8307, 0.0
  %v8318 = vmax.f32 %v8308, 0.0
  %v8319 = vmax.f32 %v8309, 0.0
  %v8320 = vmax.f32 %v8310, 0.0
  %v8321 = vmax.f32 %v8311, 0.0
  %v8322 = vmax.f32 %v8312, 0.0
  %v8323 = vpack.c.bf16 %v8314, %v8313
  %v8324 = vpack.c.bf16 %v8316, %v8315
  %v8325 = vpack.c.bf16 %v8318, %v8317
  %v8326 = vpack.c.bf16 %v8320, %v8319
  %v8327 = vpack.c.bf16 %v8322, %v8321
  %8328 = vst [vmem:[#allocation3 + $0x28] sm:$0xff] %v8323
  %8329 = vst [vmem:[#allocation3 + $0x30] sm:$0xff] %v8324
  %8330 = vst [vmem:[#allocation3 + $0x38] sm:$0xff] %v8325
  %8331 = vst [vmem:[#allocation3 + $0x40] sm:$0xff] %v8326
  %8332 = vst [vmem:[#allocation3 + $0x48] sm:$0xff] %v8327
  %v8333 = vld [vmem:[#allocation2 + $0xf0] sm:$0xff]
  %v8334 = vld [vmem:[#allocation2 + $0xf8] sm:$0xff]
  %v8335 = vld [vmem:[#allocation2 + $0x100] sm:$0xff]
  %v8336 = vld [vmem:[#allocation2 + $0x108] sm:$0xff]
  %v8337 = vld [vmem:[#allocation2 + $0x110] sm:$0xff]
  %v8338 = vld [vmem:[#allocation2 + $0x118] sm:$0xff]
  %v8339 = vld [vmem:[#allocation2 + $0x120] sm:$0xff]
  %v8340 = vld [vmem:[#allocation2 + $0x128] sm:$0xff]
  %v8341 = vld [vmem:[#allocation2 + $0x130] sm:$0xff]
  %v8342 = vld [vmem:[#allocation2 + $0x138] sm:$0xff]
  %v8343 = vld [vmem:[#allocation2 + $0x140] sm:$0xff]
  %v8344 = vld [vmem:[#allocation2 + $0x148] sm:$0xff]
  %v8345 = vld [vmem:[#allocation2 + $0x150] sm:$0xff]
  %v8346 = vld [vmem:[#allocation2 + $0x158] sm:$0xff]
  %v8347 = vld [vmem:[#allocation2 + $0x160] sm:$0xff]
  %v8348 = vld [vmem:[#allocation2 + $0x168] sm:$0xff]
  %v8349 = vld [vmem:[#allocation2 + $0x170] sm:$0xff]
  %v8350 = vld [vmem:[#allocation2 + $0x178] sm:$0xff]
  %v8351 = vld [vmem:[#allocation2 + $0x180] sm:$0xff]
  %v8352 = vld [vmem:[#allocation2 + $0x188] sm:$0xff]
  %v8353 = vld [vmem:[#allocation2 + $0x190] sm:$0xff]
  %v8354 = vld [vmem:[#allocation2 + $0x198] sm:$0xff]
  %v8355 = vld [vmem:[#allocation2 + $0x1a0] sm:$0xff]
  %v8356 = vld [vmem:[#allocation2 + $0x1a8] sm:$0xff]
  %v8357 = vld [vmem:[#allocation2 + $0x1b0] sm:$0xff]
  %v8358 = vld [vmem:[#allocation2 + $0x1b8] sm:$0xff]
  %v8359 = vld [vmem:[#allocation2 + $0x1c0] sm:$0xff]
  %v8360 = vld [vmem:[#allocation2 + $0x1c8] sm:$0xff]
  %v8361 = vld [vmem:[#allocation2 + $0x1d0] sm:$0xff]
  %v8362 = vld [vmem:[#allocation2 + $0x1d8] sm:$0xff]
  %v8363 = vld [vmem:[#allocation2 + $0x1e0] sm:$0xff]
  %v8364 = vld [vmem:[#allocation2 + $0x1e8] sm:$0xff]
  %v8365 = vld [vmem:[#allocation2 + $0x1f0] sm:$0xff]
  %v8366 = vld [vmem:[#allocation2 + $0x1f8] sm:$0xff]
  %v8367 = vld [vmem:[#allocation2 + $0x200] sm:$0xff]
  %v8368 = vld [vmem:[#allocation2 + $0x208] sm:$0xff]
  %v8369 = vld [vmem:[#allocation2 + $0x210] sm:$0xff]
  %v8370 = vld [vmem:[#allocation2 + $0x218] sm:$0xff]
  %v8371 = vld [vmem:[#allocation2 + $0x220] sm:$0xff]
  %v8372 = vld [vmem:[#allocation2 + $0x228] sm:$0xff]
  %v8373 = vld [vmem:[#allocation2 + $0x230] sm:$0xff]
  %v8374 = vld [vmem:[#allocation2 + $0x238] sm:$0xff]
  %v8375 = vld [vmem:[#allocation2 + $0x240] sm:$0xff]
  %v8376 = vld [vmem:[#allocation2 + $0x248] sm:$0xff]
  %v8377 = vld [vmem:[#allocation2 + $0x250] sm:$0xff]
  %8378 = vmatprep.subr.bf16.mxu0 0
  %8379 = vmatpush1.bf16.msra.mxu0 %v8333
  %8380 = vmatprep.subr.bf16.mxu0 0
  %8381 = vmatpush1.bf16.msra.mxu0 %v8334
  %8382 = vmatprep.subr.bf16.mxu0 0
  %8383 = vmatpush1.bf16.msra.mxu0 %v8335
  %8384 = vmatprep.subr.bf16.mxu0 0
  %8385 = vmatpush1.bf16.msra.mxu0 %v8336
  %8386 = vmatprep.subr.bf16.mxu0 0
  %8387 = vmatpush1.bf16.msra.mxu0 %v8337
  %8388 = vmatprep.subr.bf16.mxu0 0
  %8389 = vmatpush1.bf16.msra.mxu0 %v8338
  %8390 = vmatprep.subr.bf16.mxu0 0
  %8391 = vmatpush1.bf16.msra.mxu0 %v8339
  %8392 = vmatprep.subr.bf16.mxu0 0
  %8393 = vmatpush1.bf16.msra.mxu0 %v8340
  %8394 = vmatprep.subr.bf16.mxu0 0
  %8395 = vmatpush1.bf16.msra.mxu0 %v8341
  %8396 = vmatprep.subr.bf16.mxu0 0
  %8397 = vmatpush1.bf16.msra.mxu0 %v8342
  %8398 = vmatprep.subr.bf16.mxu0 0
  %8399 = vmatpush1.bf16.msra.mxu0 %v8343
  %8400 = vmatprep.subr.bf16.mxu0 0
  %8401 = vmatpush1.bf16.msra.mxu0 %v8344
  %8402 = vmatprep.subr.bf16.mxu0 0
  %8403 = vmatpush1.bf16.msra.mxu0 %v8345
  %8404 = vmatprep.subr.bf16.mxu0 0
  %8405 = vmatpush1.bf16.msra.mxu0 %v8346
  %8406 = vmatprep.subr.bf16.mxu0 0
  %8407 = vmatpush1.bf16.msra.mxu0 %v8347
  %8408 = vmatprep.subr.bf16.mxu0 0
  %8409 = vmatpush1.bf16.msra.mxu0 %v8348
  %8410 = vmatprep.mubr.bf16.mxu0 %v6680
  %8411 = vmatmul.mubr.bf16.gmra.mrb[0].mxu0 %v6679
  %v8412 = vpop.f32.mrb[0].mxu0
  %v8413 = vadd.f32 0.0, %v8412
  %v8414 = vpop.f32.mrb[0].mxu0
  %v8415 = vpop.f32.mrb[0].mxu0
  %v8416 = vadd.f32 0.0, %v8415
  %v8417 = vpop.f32.mrb[0].mxu0
  %8418 = vmatprep.mubr.bf16.mxu0 %v6686
  %8419 = vmatmul.mubr.bf16.gmra.mrb[0].mxu0 %v6685
  %v8420 = vpop.f32.mrb[0].mxu0
  %v8421 = vadd.f32 0.0, %v8420
  %v8422 = vpop.f32.mrb[0].mxu0
  %v8423 = vpop.f32.mrb[0].mxu0
  %v8424 = vadd.f32 0.0, %v8423
  %v8425 = vpop.f32.mrb[0].mxu0
  %8426 = vmatprep.mubr.bf16.mxu0 %v6692
  %8427 = vmatmul.mubr.bf16.gmra.mrb[0].mxu0 %v6691
  %v8428 = vpop.f32.mrb[0].mxu0
  %v8429 = vadd.f32 0.0, %v8428
  %v8430 = vpop.f32.mrb[0].mxu0
  %v8431 = vpop.f32.mrb[0].mxu0
  %v8432 = vadd.f32 0.0, %v8431
  %v8433 = vpop.f32.mrb[0].mxu0
  %8434 = vmatprep.mubr.bf16.mxu0 %v6698
  %8435 = vmatmul.mubr.bf16.gmra.mrb[0].mxu0 %v6697
  %v8436 = vpop.f32.mrb[0].mxu0
  %v8437 = vadd.f32 0.0, %v8436
  %v8438 = vpop.f32.mrb[0].mxu0
  %v8439 = vpop.f32.mrb[0].mxu0
  %v8440 = vadd.f32 0.0, %v8439
  %v8441 = vpop.f32.mrb[0].mxu0
  %8442 = vmatprep.mubr.bf16.mxu0 %v6704
  %8443 = vmatmul.mubr.bf16.gmra.mrb[0].mxu0 %v6703
  %v8444 = vpop.f32.mrb[0].mxu0
  %v8445 = vadd.f32 0.0, %v8444
  %v8446 = vpop.f32.mrb[0].mxu0
  %v8447 = vpop.f32.mrb[0].mxu0
  %v8448 = vadd.f32 0.0, %v8447
  %v8449 = vpop.f32.mrb[0].mxu0
  %8450 = vmatprep.mubr.bf16.mxu0 %v6710
  %8451 = vmatmul.mubr.bf16.gmra.mrb[0].mxu0 %v6709
  %v8452 = vpop.f32.mrb[0].mxu0
  %v8453 = vadd.f32 0.0, %v8452
  %v8454 = vpop.f32.mrb[0].mxu0
  %v8455 = vpop.f32.mrb[0].mxu0
  %v8456 = vadd.f32 0.0, %v8455
  %v8457 = vpop.f32.mrb[0].mxu0
  %8458 = vmatprep.mubr.bf16.mxu0 %v6716
  %8459 = vmatmul.mubr.bf16.gmra.mrb[0].mxu0 %v6715
  %v8460 = vpop.f32.mrb[0].mxu0
  %v8461 = vadd.f32 0.0, %v8460
  %v8462 = vpop.f32.mrb[0].mxu0
  %v8463 = vpop.f32.mrb[0].mxu0
  %v8464 = vadd.f32 0.0, %v8463
  %v8465 = vpop.f32.mrb[0].mxu0
  %8466 = vmatprep.mubr.bf16.mxu0 %v6722
  %8467 = vmatmul.mubr.bf16.gmra.mrb[0].mxu0 %v6721
  %v8468 = vpop.f32.mrb[0].mxu0
  %v8469 = vadd.f32 0.0, %v8468
  %v8470 = vpop.f32.mrb[0].mxu0
  %v8471 = vpop.f32.mrb[0].mxu0
  %v8472 = vadd.f32 0.0, %v8471
  %v8473 = vpop.f32.mrb[0].mxu0
  %8474 = vmatprep.mubr.bf16.mxu0 %v6728
  %8475 = vmatmul.mubr.bf16.gmra.mrb[0].mxu0 %v6727
  %v8476 = vpop.f32.mrb[0].mxu0
  %v8477 = vadd.f32 0.0, %v8476
  %v8478 = vpop.f32.mrb[0].mxu0
  %v8479 = vpop.f32.mrb[0].mxu0
  %v8480 = vadd.f32 0.0, %v8479
  %v8481 = vpop.f32.mrb[0].mxu0
  %8482 = vmatprep.mubr.bf16.mxu0 %v6734
  %8483 = vmatmul.mubr.bf16.gmra.mrb[0].mxu0 %v6733
  %v8484 = vpop.f32.mrb[0].mxu0
  %v8485 = vadd.f32 0.0, %v8484
  %v8486 = vpop.f32.mrb[0].mxu0
  %v8487 = vpop.f32.mrb[0].mxu0
  %v8488 = vadd.f32 0.0, %v8487
  %v8489 = vpop.f32.mrb[0].mxu0
  %8490 = vmatprep.mubr.bf16.mxu0 %v6740
  %8491 = vmatmul.mubr.bf16.gmra.mrb[0].mxu0 %v6739
  %v8492 = vpop.f32.mrb[0].mxu0
  %v8493 = vadd.f32 0.0, %v8492
  %v8494 = vpop.f32.mrb[0].mxu0
  %v8495 = vpop.f32.mrb[0].mxu0
  %v8496 = vadd.f32 0.0, %v8495
  %v8497 = vpop.f32.mrb[0].mxu0
  %8498 = vmatprep.mubr.bf16.mxu0 %v6746
  %8499 = vmatmul.mubr.bf16.gmra.mrb[0].mxu0 %v6745
  %v8500 = vpop.f32.mrb[0].mxu0
  %v8501 = vadd.f32 0.0, %v8500
  %v8502 = vpop.f32.mrb[0].mxu0
  %v8503 = vpop.f32.mrb[0].mxu0
  %v8504 = vadd.f32 0.0, %v8503
  %v8505 = vpop.f32.mrb[0].mxu0
  %8506 = vmatprep.mubr.bf16.mxu0 %v6752
  %8507 = vmatmul.mubr.bf16.gmra.mrb[0].mxu0 %v6751
  %v8508 = vpop.f32.mrb[0].mxu0
  %v8509 = vadd.f32 0.0, %v8508
  %v8510 = vpop.f32.mrb[0].mxu0
  %v8511 = vpop.f32.mrb[0].mxu0
  %v8512 = vadd.f32 0.0, %v8511
  %v8513 = vpop.f32.mrb[0].mxu0
  %8514 = vmatprep.mubr.bf16.mxu0 %v6758
  %8515 = vmatmul.mubr.bf16.gmra.mrb[0].mxu0 %v6757
  %v8516 = vpop.f32.mrb[0].mxu0
  %v8517 = vadd.f32 0.0, %v8516
  %v8518 = vpop.f32.mrb[0].mxu0
  %v8519 = vpop.f32.mrb[0].mxu0
  %v8520 = vadd.f32 0.0, %v8519
  %v8521 = vpop.f32.mrb[0].mxu0
  %8522 = vmatprep.mubr.bf16.mxu0 %v6764
  %8523 = vmatmul.mubr.bf16.gmra.mrb[0].mxu0 %v6763
  %v8524 = vpop.f32.mrb[0].mxu0
  %v8525 = vadd.f32 0.0, %v8524
  %v8526 = vpop.f32.mrb[0].mxu0
  %v8527 = vpop.f32.mrb[0].mxu0
  %v8528 = vadd.f32 0.0, %v8527
  %v8529 = vpop.f32.mrb[0].mxu0
  %8530 = vmatprep.mubr.bf16.mxu0 %v6770
  %8531 = vmatmul.mubr.bf16.gmra.mrb[0].mxu0 %v6769
  %v8532 = vpop.f32.mrb[0].mxu0
  %v8533 = vadd.f32 0.0, %v8532
  %v8534 = vpop.f32.mrb[0].mxu0
  %v8535 = vpop.f32.mrb[0].mxu0
  %v8536 = vadd.f32 0.0, %v8535
  %v8537 = vpop.f32.mrb[0].mxu0
  %8538 = vmatprep.mubr.bf16.mxu0 %v6776
  %8539 = vmatmul.mubr.bf16.gmra.mrb[0].mxu0 %v6775
  %v8540 = vpop.f32.mrb[0].mxu0
  %v8541 = vadd.f32 0.0, %v8540
  %v8542 = vpop.f32.mrb[0].mxu0
  %v8543 = vpop.f32.mrb[0].mxu0
  %v8544 = vadd.f32 0.0, %v8543
  %v8545 = vpop.f32.mrb[0].mxu0
  %8546 = vmatprep.mubr.bf16.mxu0 %v6782
  %8547 = vmatmul.mubr.bf16.gmra.mrb[0].mxu0 %v6781
  %v8548 = vpop.f32.mrb[0].mxu0
  %v8549 = vadd.f32 0.0, %v8548
  %v8550 = vpop.f32.mrb[0].mxu0
  %v8551 = vpop.f32.mrb[0].mxu0
  %v8552 = vadd.f32 0.0, %v8551
  %v8553 = vpop.f32.mrb[0].mxu0
  %8554 = vmatprep.mubr.bf16.mxu0 %v6788
  %8555 = vmatmul.mubr.bf16.gmra.mrb[0].mxu0 %v6787
  %v8556 = vpop.f32.mrb[0].mxu0
  %v8557 = vadd.f32 0.0, %v8556
  %v8558 = vpop.f32.mrb[0].mxu0
  %v8559 = vpop.f32.mrb[0].mxu0
  %v8560 = vadd.f32 0.0, %v8559
  %v8561 = vpop.f32.mrb[0].mxu0
  %8562 = vmatprep.mubr.bf16.mxu0 %v6794
  %8563 = vmatmul.mubr.bf16.gmra.mrb[0].mxu0 %v6793
  %v8564 = vpop.f32.mrb[0].mxu0
  %v8565 = vadd.f32 0.0, %v8564
  %v8566 = vpop.f32.mrb[0].mxu0
  %v8567 = vpop.f32.mrb[0].mxu0
  %v8568 = vadd.f32 0.0, %v8567
  %v8569 = vpop.f32.mrb[0].mxu0
  %8570 = vdwg.mxu0
  %8571 = vmatprep.subr.bf16.mxu0 0
  %8572 = vmatpush1.bf16.msra.mxu0 %v8349
  %8573 = vmatprep.subr.bf16.mxu0 0
  %8574 = vmatpush1.bf16.msra.mxu0 %v8350
  %8575 = vmatprep.subr.bf16.mxu0 0
  %8576 = vmatpush1.bf16.msra.mxu0 %v8351
  %8577 = vmatprep.subr.bf16.mxu0 0
  %8578 = vmatpush1.bf16.msra.mxu0 %v8352
  %8579 = vmatprep.subr.bf16.mxu0 0
  %8580 = vmatpush1.bf16.msra.mxu0 %v8353
  %8581 = vmatprep.subr.bf16.mxu0 0
  %8582 = vmatpush1.bf16.msra.mxu0 %v8354
  %8583 = vmatprep.subr.bf16.mxu0 0
  %8584 = vmatpush1.bf16.msra.mxu0 %v8355
  %8585 = vmatprep.subr.bf16.mxu0 0
  %8586 = vmatpush1.bf16.msra.mxu0 %v8356
  %8587 = vmatprep.subr.bf16.mxu0 0
  %8588 = vmatpush1.bf16.msra.mxu0 %v8357
  %8589 = vmatprep.subr.bf16.mxu0 0
  %8590 = vmatpush1.bf16.msra.mxu0 %v8358
  %8591 = vmatprep.subr.bf16.mxu0 0
  %8592 = vmatpush1.bf16.msra.mxu0 %v8359
  %8593 = vmatprep.subr.bf16.mxu0 0
  %8594 = vmatpush1.bf16.msra.mxu0 %v8360
  %8595 = vmatprep.subr.bf16.mxu0 0
  %8596 = vmatpush1.bf16.msra.mxu0 %v8361
  %8597 = vmatprep.subr.bf16.mxu0 0
  %8598 = vmatpush1.bf16.msra.mxu0 %v8362
  %8599 = vmatprep.subr.bf16.mxu0 0
  %8600 = vmatpush1.bf16.msra.mxu0 %v8363
  %8601 = vmatprep.subr.bf16.mxu0 0
  %8602 = vmatpush1.bf16.msra.mxu0 %v8364
  %8603 = vmatprep.mubr.bf16.mxu0 %v6682
  %8604 = vmatmul.mubr.bf16.gmra.mrb[0].mxu0 %v6681
  %v8605 = vpop.f32.mrb[0].mxu0
  %v8606 = vadd.f32 %v8413, %v8605
  %v8607 = vpop.f32.mrb[0].mxu0
  %v8608 = vpop.f32.mrb[0].mxu0
  %v8609 = vadd.f32 %v8416, %v8608
  %v8610 = vpop.f32.mrb[0].mxu0
  %8611 = vmatprep.mubr.bf16.mxu0 %v6688
  %8612 = vmatmul.mubr.bf16.gmra.mrb[0].mxu0 %v6687
  %v8613 = vpop.f32.mrb[0].mxu0
  %v8614 = vadd.f32 %v8421, %v8613
  %v8615 = vpop.f32.mrb[0].mxu0
  %v8616 = vpop.f32.mrb[0].mxu0
  %v8617 = vadd.f32 %v8424, %v8616
  %v8618 = vpop.f32.mrb[0].mxu0
  %8619 = vmatprep.mubr.bf16.mxu0 %v6694
  %8620 = vmatmul.mubr.bf16.gmra.mrb[0].mxu0 %v6693
  %v8621 = vpop.f32.mrb[0].mxu0
  %v8622 = vadd.f32 %v8429, %v8621
  %v8623 = vpop.f32.mrb[0].mxu0
  %v8624 = vpop.f32.mrb[0].mxu0
  %v8625 = vadd.f32 %v8432, %v8624
  %v8626 = vpop.f32.mrb[0].mxu0
  %8627 = vmatprep.mubr.bf16.mxu0 %v6700
  %8628 = vmatmul.mubr.bf16.gmra.mrb[0].mxu0 %v6699
  %v8629 = vpop.f32.mrb[0].mxu0
  %v8630 = vadd.f32 %v8437, %v8629
  %v8631 = vpop.f32.mrb[0].mxu0
  %v8632 = vpop.f32.mrb[0].mxu0
  %v8633 = vadd.f32 %v8440, %v8632
  %v8634 = vpop.f32.mrb[0].mxu0
  %8635 = vmatprep.mubr.bf16.mxu0 %v6706
  %8636 = vmatmul.mubr.bf16.gmra.mrb[0].mxu0 %v6705
  %v8637 = vpop.f32.mrb[0].mxu0
  %v8638 = vadd.f32 %v8445, %v8637
  %v8639 = vpop.f32.mrb[0].mxu0
  %v8640 = vpop.f32.mrb[0].mxu0
  %v8641 = vadd.f32 %v8448, %v8640
  %v8642 = vpop.f32.mrb[0].mxu0
  %8643 = vmatprep.mubr.bf16.mxu0 %v6712
  %8644 = vmatmul.mubr.bf16.gmra.mrb[0].mxu0 %v6711
  %v8645 = vpop.f32.mrb[0].mxu0
  %v8646 = vadd.f32 %v8453, %v8645
  %v8647 = vpop.f32.mrb[0].mxu0
  %v8648 = vpop.f32.mrb[0].mxu0
  %v8649 = vadd.f32 %v8456, %v8648
  %v8650 = vpop.f32.mrb[0].mxu0
  %8651 = vmatprep.mubr.bf16.mxu0 %v6718
  %8652 = vmatmul.mubr.bf16.gmra.mrb[0].mxu0 %v6717
  %v8653 = vpop.f32.mrb[0].mxu0
  %v8654 = vadd.f32 %v8461, %v8653
  %v8655 = vpop.f32.mrb[0].mxu0
  %v8656 = vpop.f32.mrb[0].mxu0
  %v8657 = vadd.f32 %v8464, %v8656
  %v8658 = vpop.f32.mrb[0].mxu0
  %8659 = vmatprep.mubr.bf16.mxu0 %v6724
  %8660 = vmatmul.mubr.bf16.gmra.mrb[0].mxu0 %v6723
  %v8661 = vpop.f32.mrb[0].mxu0
  %v8662 = vadd.f32 %v8469, %v8661
  %v8663 = vpop.f32.mrb[0].mxu0
  %v8664 = vpop.f32.mrb[0].mxu0
  %v8665 = vadd.f32 %v8472, %v8664
  %v8666 = vpop.f32.mrb[0].mxu0
  %8667 = vmatprep.mubr.bf16.mxu0 %v6730
  %8668 = vmatmul.mubr.bf16.gmra.mrb[0].mxu0 %v6729
  %v8669 = vpop.f32.mrb[0].mxu0
  %v8670 = vadd.f32 %v8477, %v8669
  %v8671 = vpop.f32.mrb[0].mxu0
  %v8672 = vpop.f32.mrb[0].mxu0
  %v8673 = vadd.f32 %v8480, %v8672
  %v8674 = vpop.f32.mrb[0].mxu0
  %8675 = vmatprep.mubr.bf16.mxu0 %v6736
  %8676 = vmatmul.mubr.bf16.gmra.mrb[0].mxu0 %v6735
  %v8677 = vpop.f32.mrb[0].mxu0
  %v8678 = vadd.f32 %v8485, %v8677
  %v8679 = vpop.f32.mrb[0].mxu0
  %v8680 = vpop.f32.mrb[0].mxu0
  %v8681 = vadd.f32 %v8488, %v8680
  %v8682 = vpop.f32.mrb[0].mxu0
  %8683 = vmatprep.mubr.bf16.mxu0 %v6742
  %8684 = vmatmul.mubr.bf16.gmra.mrb[0].mxu0 %v6741
  %v8685 = vpop.f32.mrb[0].mxu0
  %v8686 = vadd.f32 %v8493, %v8685
  %v8687 = vpop.f32.mrb[0].mxu0
  %v8688 = vpop.f32.mrb[0].mxu0
  %v8689 = vadd.f32 %v8496, %v8688
  %v8690 = vpop.f32.mrb[0].mxu0
  %8691 = vmatprep.mubr.bf16.mxu0 %v6748
  %8692 = vmatmul.mubr.bf16.gmra.mrb[0].mxu0 %v6747
  %v8693 = vpop.f32.mrb[0].mxu0
  %v8694 = vadd.f32 %v8501, %v8693
  %v8695 = vpop.f32.mrb[0].mxu0
  %v8696 = vpop.f32.mrb[0].mxu0
  %v8697 = vadd.f32 %v8504, %v8696
  %v8698 = vpop.f32.mrb[0].mxu0
  %8699 = vmatprep.mubr.bf16.mxu0 %v6754
  %8700 = vmatmul.mubr.bf16.gmra.mrb[0].mxu0 %v6753
  %v8701 = vpop.f32.mrb[0].mxu0
  %v8702 = vadd.f32 %v8509, %v8701
  %v8703 = vpop.f32.mrb[0].mxu0
  %v8704 = vpop.f32.mrb[0].mxu0
  %v8705 = vadd.f32 %v8512, %v8704
  %v8706 = vpop.f32.mrb[0].mxu0
  %8707 = vmatprep.mubr.bf16.mxu0 %v6760
  %8708 = vmatmul.mubr.bf16.gmra.mrb[0].mxu0 %v6759
  %v8709 = vpop.f32.mrb[0].mxu0
  %v8710 = vadd.f32 %v8517, %v8709
  %v8711 = vpop.f32.mrb[0].mxu0
  %v8712 = vpop.f32.mrb[0].mxu0
  %v8713 = vadd.f32 %v8520, %v8712
  %v8714 = vpop.f32.mrb[0].mxu0
  %8715 = vmatprep.mubr.bf16.mxu0 %v6766
  %8716 = vmatmul.mubr.bf16.gmra.mrb[0].mxu0 %v6765
  %v8717 = vpop.f32.mrb[0].mxu0
  %v8718 = vadd.f32 %v8525, %v8717
  %v8719 = vpop.f32.mrb[0].mxu0
  %v8720 = vpop.f32.mrb[0].mxu0
  %v8721 = vadd.f32 %v8528, %v8720
  %v8722 = vpop.f32.mrb[0].mxu0
  %8723 = vmatprep.mubr.bf16.mxu0 %v6772
  %8724 = vmatmul.mubr.bf16.gmra.mrb[0].mxu0 %v6771
  %v8725 = vpop.f32.mrb[0].mxu0
  %v8726 = vadd.f32 %v8533, %v8725
  %v8727 = vpop.f32.mrb[0].mxu0
  %v8728 = vpop.f32.mrb[0].mxu0
  %v8729 = vadd.f32 %v8536, %v8728
  %v8730 = vpop.f32.mrb[0].mxu0
  %8731 = vmatprep.mubr.bf16.mxu0 %v6778
  %8732 = vmatmul.mubr.bf16.gmra.mrb[0].mxu0 %v6777
  %v8733 = vpop.f32.mrb[0].mxu0
  %v8734 = vadd.f32 %v8541, %v8733
  %v8735 = vpop.f32.mrb[0].mxu0
  %v8736 = vpop.f32.mrb[0].mxu0
  %v8737 = vadd.f32 %v8544, %v8736
  %v8738 = vpop.f32.mrb[0].mxu0
  %8739 = vmatprep.mubr.bf16.mxu0 %v6784
  %8740 = vmatmul.mubr.bf16.gmra.mrb[0].mxu0 %v6783
  %v8741 = vpop.f32.mrb[0].mxu0
  %v8742 = vadd.f32 %v8549, %v8741
  %v8743 = vpop.f32.mrb[0].mxu0
  %v8744 = vpop.f32.mrb[0].mxu0
  %v8745 = vadd.f32 %v8552, %v8744
  %v8746 = vpop.f32.mrb[0].mxu0
  %8747 = vmatprep.mubr.bf16.mxu0 %v6790
  %8748 = vmatmul.mubr.bf16.gmra.mrb[0].mxu0 %v6789
  %v8749 = vpop.f32.mrb[0].mxu0
  %v8750 = vadd.f32 %v8557, %v8749
  %v8751 = vpop.f32.mrb[0].mxu0
  %v8752 = vpop.f32.mrb[0].mxu0
  %v8753 = vadd.f32 %v8560, %v8752
  %v8754 = vpop.f32.mrb[0].mxu0
  %8755 = vmatprep.mubr.bf16.mxu0 %v6796
  %8756 = vmatmul.mubr.bf16.gmra.mrb[0].mxu0 %v6795
  %v8757 = vpop.f32.mrb[0].mxu0
  %v8758 = vadd.f32 %v8565, %v8757
  %v8759 = vpop.f32.mrb[0].mxu0
  %v8760 = vpop.f32.mrb[0].mxu0
  %v8761 = vadd.f32 %v8568, %v8760
  %v8762 = vpop.f32.mrb[0].mxu0
  %8763 = vdwg.mxu0
  %8764 = vmatprep.subr.bf16.mxu0 0
  %8765 = vmatpush1.bf16.msra.mxu0 %v8365
  %8766 = vmatprep.subr.bf16.mxu0 0
  %8767 = vmatpush1.bf16.msra.mxu0 %v8366
  %8768 = vmatprep.subr.bf16.mxu0 0
  %8769 = vmatpush1.bf16.msra.mxu0 %v8367
  %8770 = vmatprep.subr.bf16.mxu0 0
  %8771 = vmatpush1.bf16.msra.mxu0 %v8368
  %8772 = vmatprep.subr.bf16.mxu0 0
  %8773 = vmatpush1.bf16.msra.mxu0 %v8369
  %8774 = vmatprep.subr.bf16.mxu0 0
  %8775 = vmatpush1.bf16.msra.mxu0 %v8370
  %8776 = vmatprep.subr.bf16.mxu0 0
  %8777 = vmatpush1.bf16.msra.mxu0 %v8371
  %8778 = vmatprep.subr.bf16.mxu0 0
  %8779 = vmatpush1.bf16.msra.mxu0 %v8372
  %8780 = vmatprep.subr.bf16.mxu0 0
  %8781 = vmatpush1.bf16.msra.mxu0 %v8373
  %8782 = vmatprep.subr.bf16.mxu0 0
  %8783 = vmatpush1.bf16.msra.mxu0 %v8374
  %8784 = vmatprep.subr.bf16.mxu0 0
  %8785 = vmatpush1.bf16.msra.mxu0 %v8375
  %8786 = vmatprep.subr.bf16.mxu0 0
  %8787 = vmatpush1.bf16.msra.mxu0 %v8376
  %8788 = vmatprep.subr.bf16.mxu0 0
  %8789 = vmatpush1.bf16.msra.mxu0 %v8377
  %8790 = vmatprep.subr.bf16.mxu0 0
  %8791 = vmatpush1.bf16.msra.mxu0 0
  %8792 = vmatprep.subr.bf16.mxu0 0
  %8793 = vmatpush1.bf16.msra.mxu0 0
  %8794 = vmatprep.subr.bf16.mxu0 0
  %8795 = vmatpush1.bf16.msra.mxu0 0
  %8796 = vmatprep.mubr.bf16.mxu0 %v6901
  %8797 = vmatmul.mubr.bf16.gmra.mrb[0].mxu0 %v6683
  %v8798 = vpop.f32.mrb[0].mxu0
  %v8799 = vadd.f32 %v8606, %v8798
  %v8800 = vpop.f32.mrb[0].mxu0
  %v8801 = vpop.f32.mrb[0].mxu0
  %v8802 = vadd.f32 %v8609, %v8801
  %v8803 = vpop.f32.mrb[0].mxu0
  %8804 = vmatprep.mubr.bf16.mxu0 %v6904
  %8805 = vmatmul.mubr.bf16.gmra.mrb[0].mxu0 %v6689
  %v8806 = vpop.f32.mrb[0].mxu0
  %v8807 = vadd.f32 %v8614, %v8806
  %v8808 = vpop.f32.mrb[0].mxu0
  %v8809 = vpop.f32.mrb[0].mxu0
  %v8810 = vadd.f32 %v8617, %v8809
  %v8811 = vpop.f32.mrb[0].mxu0
  %8812 = vmatprep.mubr.bf16.mxu0 %v6907
  %8813 = vmatmul.mubr.bf16.gmra.mrb[0].mxu0 %v6695
  %v8814 = vpop.f32.mrb[0].mxu0
  %v8815 = vadd.f32 %v8622, %v8814
  %v8816 = vpop.f32.mrb[0].mxu0
  %v8817 = vpop.f32.mrb[0].mxu0
  %v8818 = vadd.f32 %v8625, %v8817
  %v8819 = vpop.f32.mrb[0].mxu0
  %8820 = vmatprep.mubr.bf16.mxu0 %v6910
  %8821 = vmatmul.mubr.bf16.gmra.mrb[0].mxu0 %v6701
  %v8822 = vpop.f32.mrb[0].mxu0
  %v8823 = vadd.f32 %v8630, %v8822
  %v8824 = vpop.f32.mrb[0].mxu0
  %v8825 = vpop.f32.mrb[0].mxu0
  %v8826 = vadd.f32 %v8633, %v8825
  %v8827 = vpop.f32.mrb[0].mxu0
  %8828 = vmatprep.mubr.bf16.mxu0 %v6913
  %8829 = vmatmul.mubr.bf16.gmra.mrb[0].mxu0 %v6707
  %v8830 = vpop.f32.mrb[0].mxu0
  %v8831 = vadd.f32 %v8638, %v8830
  %v8832 = vpop.f32.mrb[0].mxu0
  %v8833 = vpop.f32.mrb[0].mxu0
  %v8834 = vadd.f32 %v8641, %v8833
  %v8835 = vpop.f32.mrb[0].mxu0
  %8836 = vmatprep.mubr.bf16.mxu0 %v6916
  %8837 = vmatmul.mubr.bf16.gmra.mrb[0].mxu0 %v6713
  %v8838 = vpop.f32.mrb[0].mxu0
  %v8839 = vadd.f32 %v8646, %v8838
  %v8840 = vpop.f32.mrb[0].mxu0
  %v8841 = vpop.f32.mrb[0].mxu0
  %v8842 = vadd.f32 %v8649, %v8841
  %v8843 = vpop.f32.mrb[0].mxu0
  %8844 = vmatprep.mubr.bf16.mxu0 %v6919
  %8845 = vmatmul.mubr.bf16.gmra.mrb[0].mxu0 %v6719
  %v8846 = vpop.f32.mrb[0].mxu0
  %v8847 = vadd.f32 %v8654, %v8846
  %v8848 = vpop.f32.mrb[0].mxu0
  %v8849 = vpop.f32.mrb[0].mxu0
  %v8850 = vadd.f32 %v8657, %v8849
  %v8851 = vpop.f32.mrb[0].mxu0
  %8852 = vmatprep.mubr.bf16.mxu0 %v6922
  %8853 = vmatmul.mubr.bf16.gmra.mrb[0].mxu0 %v6725
  %v8854 = vpop.f32.mrb[0].mxu0
  %v8855 = vadd.f32 %v8662, %v8854
  %v8856 = vpop.f32.mrb[0].mxu0
  %v8857 = vpop.f32.mrb[0].mxu0
  %v8858 = vadd.f32 %v8665, %v8857
  %v8859 = vpop.f32.mrb[0].mxu0
  %8860 = vmatprep.mubr.bf16.mxu0 %v6925
  %8861 = vmatmul.mubr.bf16.gmra.mrb[0].mxu0 %v6731
  %v8862 = vpop.f32.mrb[0].mxu0
  %v8863 = vadd.f32 %v8670, %v8862
  %v8864 = vpop.f32.mrb[0].mxu0
  %v8865 = vpop.f32.mrb[0].mxu0
  %v8866 = vadd.f32 %v8673, %v8865
  %v8867 = vpop.f32.mrb[0].mxu0
  %8868 = vmatprep.mubr.bf16.mxu0 %v6928
  %8869 = vmatmul.mubr.bf16.gmra.mrb[0].mxu0 %v6737
  %v8870 = vpop.f32.mrb[0].mxu0
  %v8871 = vadd.f32 %v8678, %v8870
  %v8872 = vpop.f32.mrb[0].mxu0
  %v8873 = vpop.f32.mrb[0].mxu0
  %v8874 = vadd.f32 %v8681, %v8873
  %v8875 = vpop.f32.mrb[0].mxu0
  %8876 = vmatprep.mubr.bf16.mxu0 %v6931
  %8877 = vmatmul.mubr.bf16.gmra.mrb[0].mxu0 %v6743
  %v8878 = vpop.f32.mrb[0].mxu0
  %v8879 = vadd.f32 %v8686, %v8878
  %v8880 = vpop.f32.mrb[0].mxu0
  %v8881 = vpop.f32.mrb[0].mxu0
  %v8882 = vadd.f32 %v8689, %v8881
  %v8883 = vpop.f32.mrb[0].mxu0
  %8884 = vmatprep.mubr.bf16.mxu0 %v6934
  %8885 = vmatmul.mubr.bf16.gmra.mrb[0].mxu0 %v6749
  %v8886 = vpop.f32.mrb[0].mxu0
  %v8887 = vadd.f32 %v8694, %v8886
  %v8888 = vpop.f32.mrb[0].mxu0
  %v8889 = vpop.f32.mrb[0].mxu0
  %v8890 = vadd.f32 %v8697, %v8889
  %v8891 = vpop.f32.mrb[0].mxu0
  %8892 = vmatprep.mubr.bf16.mxu0 %v6937
  %8893 = vmatmul.mubr.bf16.gmra.mrb[0].mxu0 %v6755
  %v8894 = vpop.f32.mrb[0].mxu0
  %v8895 = vadd.f32 %v8702, %v8894
  %v8896 = vpop.f32.mrb[0].mxu0
  %v8897 = vpop.f32.mrb[0].mxu0
  %v8898 = vadd.f32 %v8705, %v8897
  %v8899 = vpop.f32.mrb[0].mxu0
  %8900 = vmatprep.mubr.bf16.mxu0 %v6940
  %8901 = vmatmul.mubr.bf16.gmra.mrb[0].mxu0 %v6761
  %v8902 = vpop.f32.mrb[0].mxu0
  %v8903 = vadd.f32 %v8710, %v8902
  %v8904 = vpop.f32.mrb[0].mxu0
  %v8905 = vpop.f32.mrb[0].mxu0
  %v8906 = vadd.f32 %v8713, %v8905
  %v8907 = vpop.f32.mrb[0].mxu0
  %8908 = vmatprep.mubr.bf16.mxu0 %v6943
  %8909 = vmatmul.mubr.bf16.gmra.mrb[0].mxu0 %v6767
  %v8910 = vpop.f32.mrb[0].mxu0
  %v8911 = vadd.f32 %v8718, %v8910
  %v8912 = vpop.f32.mrb[0].mxu0
  %v8913 = vpop.f32.mrb[0].mxu0
  %v8914 = vadd.f32 %v8721, %v8913
  %v8915 = vpop.f32.mrb[0].mxu0
  %8916 = vmatprep.mubr.bf16.mxu0 %v6946
  %8917 = vmatmul.mubr.bf16.gmra.mrb[0].mxu0 %v6773
  %v8918 = vpop.f32.mrb[0].mxu0
  %v8919 = vadd.f32 %v8726, %v8918
  %v8920 = vpop.f32.mrb[0].mxu0
  %v8921 = vpop.f32.mrb[0].mxu0
  %v8922 = vadd.f32 %v8729, %v8921
  %v8923 = vpop.f32.mrb[0].mxu0
  %8924 = vmatprep.mubr.bf16.mxu0 %v6949
  %8925 = vmatmul.mubr.bf16.gmra.mrb[0].mxu0 %v6779
  %v8926 = vpop.f32.mrb[0].mxu0
  %v8927 = vadd.f32 %v8734, %v8926
  %v8928 = vpop.f32.mrb[0].mxu0
  %v8929 = vpop.f32.mrb[0].mxu0
  %v8930 = vadd.f32 %v8737, %v8929
  %v8931 = vpop.f32.mrb[0].mxu0
  %8932 = vmatprep.mubr.bf16.mxu0 %v6952
  %8933 = vmatmul.mubr.bf16.gmra.mrb[0].mxu0 %v6785
  %v8934 = vpop.f32.mrb[0].mxu0
  %v8935 = vadd.f32 %v8742, %v8934
  %v8936 = vpop.f32.mrb[0].mxu0
  %v8937 = vpop.f32.mrb[0].mxu0
  %v8938 = vadd.f32 %v8745, %v8937
  %v8939 = vpop.f32.mrb[0].mxu0
  %8940 = vmatprep.mubr.bf16.mxu0 %v6955
  %8941 = vmatmul.mubr.bf16.gmra.mrb[0].mxu0 %v6791
  %v8942 = vpop.f32.mrb[0].mxu0
  %v8943 = vadd.f32 %v8750, %v8942
  %v8944 = vpop.f32.mrb[0].mxu0
  %v8945 = vpop.f32.mrb[0].mxu0
  %v8946 = vadd.f32 %v8753, %v8945
  %v8947 = vpop.f32.mrb[0].mxu0
  %8948 = vmatprep.mubr.bf16.mxu0 %v6958
  %8949 = vmatmul.mubr.bf16.gmra.mrb[0].mxu0 %v6797
  %v8950 = vpop.f32.mrb[0].mxu0
  %v8951 = vadd.f32 %v8758, %v8950
  %v8952 = vpop.f32.mrb[0].mxu0
  %v8953 = vpop.f32.mrb[0].mxu0
  %v8954 = vadd.f32 %v8761, %v8953
  %v8955 = vpop.f32.mrb[0].mxu0
  %8956 = vdwg.mxu0
  %v8957 = vmax.f32 %v8799, %v8839
  %v8958 = vmax.f32 %v8802, %v8842
  %v8959 = vmax.f32 %v8807, %v8847
  %v8960 = vmax.f32 %v8810, %v8850
  %v8961 = vmax.f32 %v8815, %v8855
  %v8962 = vmax.f32 %v8818, %v8858
  %v8963 = vmax.f32 %v8823, %v8863
  %v8964 = vmax.f32 %v8826, %v8866
  %v8965 = vmax.f32 %v8831, %v8871
  %v8966 = vmax.f32 %v8834, %v8874
  %v8967 = vmax.f32 %v8879, %v8919
  %v8968 = vmax.f32 %v8882, %v8922
  %v8969 = vmax.f32 %v8887, %v8927
  %v8970 = vmax.f32 %v8890, %v8930
  %v8971 = vmax.f32 %v8895, %v8935
  %v8972 = vmax.f32 %v8898, %v8938
  %v8973 = vmax.f32 %v8903, %v8943
  %v8974 = vmax.f32 %v8906, %v8946
  %v8975 = vmax.f32 %v8911, %v8951
  %v8976 = vmax.f32 %v8914, %v8954
  %v8977 = vmax.f32 %v8957, %v8967
  %v8978 = vmax.f32 %v8958, %v8968
  %v8979 = vmax.f32 %v8959, %v8969
  %v8980 = vmax.f32 %v8960, %v8970
  %v8981 = vmax.f32 %v8961, %v8971
  %v8982 = vmax.f32 %v8962, %v8972
  %v8983 = vmax.f32 %v8963, %v8973
  %v8984 = vmax.f32 %v8964, %v8974
  %v8985 = vmax.f32 %v8965, %v8975
  %v8986 = vmax.f32 %v8966, %v8976
  %v8987 = vadd.f32 %v8977, %v7572
  %v8988 = vadd.f32 %v8978, %v7577
  %v8989 = vadd.f32 %v8979, %v7582
  %v8990 = vadd.f32 %v8980, %v7587
  %v8991 = vadd.f32 %v8981, %v7592
  %v8992 = vadd.f32 %v8982, %v7597
  %v8993 = vadd.f32 %v8983, %v7602
  %v8994 = vadd.f32 %v8984, %v7607
  %v8995 = vadd.f32 %v8985, %v7612
  %v8996 = vadd.f32 %v8986, %v7617
  %v8997 = vmax.f32 %v8987, 0.0
  %v8998 = vmax.f32 %v8988, 0.0
  %v8999 = vmax.f32 %v8989, 0.0
  %v9000 = vmax.f32 %v8990, 0.0
  %v9001 = vmax.f32 %v8991, 0.0
  %v9002 = vmax.f32 %v8992, 0.0
  %v9003 = vmax.f32 %v8993, 0.0
  %v9004 = vmax.f32 %v8994, 0.0
  %v9005 = vmax.f32 %v8995, 0.0
  %v9006 = vmax.f32 %v8996, 0.0
  %v9007 = vpack.c.bf16 %v8998, %v8997
  %v9008 = vpack.c.bf16 %v9000, %v8999
  %v9009 = vpack.c.bf16 %v9002, %v9001
  %v9010 = vpack.c.bf16 %v9004, %v9003
  %v9011 = vpack.c.bf16 %v9006, %v9005
  %9012 = vst [vmem:[#allocation3 + $0x50] sm:$0xff] %v9007
  %9013 = vst [vmem:[#allocation3 + $0x58] sm:$0xff] %v9008
  %9014 = vst [vmem:[#allocation3 + $0x60] sm:$0xff] %v9009
  %9015 = vst [vmem:[#allocation3 + $0x68] sm:$0xff] %v9010
  %9016 = vst [vmem:[#allocation3 + $0x70] sm:$0xff] %v9011
  %v9017 = vld [vmem:[#allocation2 + $0x168] sm:$0xff]
  %v9018 = vld [vmem:[#allocation2 + $0x170] sm:$0xff]
  %v9019 = vld [vmem:[#allocation2 + $0x178] sm:$0xff]
  %v9020 = vld [vmem:[#allocation2 + $0x180] sm:$0xff]
  %v9021 = vld [vmem:[#allocation2 + $0x188] sm:$0xff]
  %v9022 = vld [vmem:[#allocation2 + $0x190] sm:$0xff]
  %v9023 = vld [vmem:[#allocation2 + $0x198] sm:$0xff]
  %v9024 = vld [vmem:[#allocation2 + $0x1a0] sm:$0xff]
  %v9025 = vld [vmem:[#allocation2 + $0x1a8] sm:$0xff]
  %v9026 = vld [vmem:[#allocation2 + $0x1b0] sm:$0xff]
  %v9027 = vld [vmem:[#allocation2 + $0x1b8] sm:$0xff]
  %v9028 = vld [vmem:[#allocation2 + $0x1c0] sm:$0xff]
  %v9029 = vld [vmem:[#allocation2 + $0x1c8] sm:$0xff]
  %v9030 = vld [vmem:[#allocation2 + $0x1d0] sm:$0xff]
  %v9031 = vld [vmem:[#allocation2 + $0x1d8] sm:$0xff]
  %v9032 = vld [vmem:[#allocation2 + $0x1e0] sm:$0xff]
  %v9033 = vld [vmem:[#allocation2 + $0x1e8] sm:$0xff]
  %v9034 = vld [vmem:[#allocation2 + $0x1f0] sm:$0xff]
  %v9035 = vld [vmem:[#allocation2 + $0x1f8] sm:$0xff]
  %v9036 = vld [vmem:[#allocation2 + $0x200] sm:$0xff]
  %v9037 = vld [vmem:[#allocation2 + $0x208] sm:$0xff]
  %v9038 = vld [vmem:[#allocation2 + $0x210] sm:$0xff]
  %v9039 = vld [vmem:[#allocation2 + $0x218] sm:$0xff]
  %v9040 = vld [vmem:[#allocation2 + $0x220] sm:$0xff]
  %v9041 = vld [vmem:[#allocation2 + $0x228] sm:$0xff]
  %v9042 = vld [vmem:[#allocation2 + $0x230] sm:$0xff]
  %v9043 = vld [vmem:[#allocation2 + $0x238] sm:$0xff]
  %v9044 = vld [vmem:[#allocation2 + $0x240] sm:$0xff]
  %v9045 = vld [vmem:[#allocation2 + $0x248] sm:$0xff]
  %v9046 = vld [vmem:[#allocation2 + $0x250] sm:$0xff]
  %v9047 = vld [vmem:[#allocation2 + $0x258] sm:$0xff]
  %v9048 = vld [vmem:[#allocation2 + $0x260] sm:$0xff]
  %v9049 = vld [vmem:[#allocation2 + $0x268] sm:$0xff]
  %v9050 = vld [vmem:[#allocation2 + $0x270] sm:$0xff]
  %v9051 = vld [vmem:[#allocation2 + $0x278] sm:$0xff]
  %v9052 = vld [vmem:[#allocation2 + $0x280] sm:$0xff]
  %v9053 = vld [vmem:[#allocation2 + $0x288] sm:$0xff]
  %v9054 = vld [vmem:[#allocation2 + $0x290] sm:$0xff]
  %v9055 = vld [vmem:[#allocation2 + $0x298] sm:$0xff]
  %v9056 = vld [vmem:[#allocation2 + $0x2a0] sm:$0xff]
  %v9057 = vld [vmem:[#allocation2 + $0x2a8] sm:$0xff]
  %v9058 = vld [vmem:[#allocation2 + $0x2b0] sm:$0xff]
  %v9059 = vld [vmem:[#allocation2 + $0x2b8] sm:$0xff]
  %v9060 = vld [vmem:[#allocation2 + $0x2c0] sm:$0xff]
  %v9061 = vld [vmem:[#allocation2 + $0x2c8] sm:$0xff]
  %9062 = vmatprep.subr.bf16.mxu0 0
  %9063 = vmatpush1.bf16.msra.mxu0 %v9017
  %9064 = vmatprep.subr.bf16.mxu0 0
  %9065 = vmatpush1.bf16.msra.mxu0 %v9018
  %9066 = vmatprep.subr.bf16.mxu0 0
  %9067 = vmatpush1.bf16.msra.mxu0 %v9019
  %9068 = vmatprep.subr.bf16.mxu0 0
  %9069 = vmatpush1.bf16.msra.mxu0 %v9020
  %9070 = vmatprep.subr.bf16.mxu0 0
  %9071 = vmatpush1.bf16.msra.mxu0 %v9021
  %9072 = vmatprep.subr.bf16.mxu0 0
  %9073 = vmatpush1.bf16.msra.mxu0 %v9022
  %9074 = vmatprep.subr.bf16.mxu0 0
  %9075 = vmatpush1.bf16.msra.mxu0 %v9023
  %9076 = vmatprep.subr.bf16.mxu0 0
  %9077 = vmatpush1.bf16.msra.mxu0 %v9024
  %9078 = vmatprep.subr.bf16.mxu0 0
  %9079 = vmatpush1.bf16.msra.mxu0 %v9025
  %9080 = vmatprep.subr.bf16.mxu0 0
  %9081 = vmatpush1.bf16.msra.mxu0 %v9026
  %9082 = vmatprep.subr.bf16.mxu0 0
  %9083 = vmatpush1.bf16.msra.mxu0 %v9027
  %9084 = vmatprep.subr.bf16.mxu0 0
  %9085 = vmatpush1.bf16.msra.mxu0 %v9028
  %9086 = vmatprep.subr.bf16.mxu0 0
  %9087 = vmatpush1.bf16.msra.mxu0 %v9029
  %9088 = vmatprep.subr.bf16.mxu0 0
  %9089 = vmatpush1.bf16.msra.mxu0 %v9030
  %9090 = vmatprep.subr.bf16.mxu0 0
  %9091 = vmatpush1.bf16.msra.mxu0 %v9031
  %9092 = vmatprep.subr.bf16.mxu0 0
  %9093 = vmatpush1.bf16.msra.mxu0 %v9032
  %9094 = vmatprep.mubr.bf16.mxu0 %v6680
  %9095 = vmatmul.mubr.bf16.gmra.mrb[0].mxu0 %v6679
  %v9096 = vpop.f32.mrb[0].mxu0
  %v9097 = vadd.f32 0.0, %v9096
  %v9098 = vpop.f32.mrb[0].mxu0
  %v9099 = vpop.f32.mrb[0].mxu0
  %v9100 = vadd.f32 0.0, %v9099
  %v9101 = vpop.f32.mrb[0].mxu0
  %9102 = vmatprep.mubr.bf16.mxu0 %v6686
  %9103 = vmatmul.mubr.bf16.gmra.mrb[0].mxu0 %v6685
  %v9104 = vpop.f32.mrb[0].mxu0
  %v9105 = vadd.f32 0.0, %v9104
  %v9106 = vpop.f32.mrb[0].mxu0
  %v9107 = vpop.f32.mrb[0].mxu0
  %v9108 = vadd.f32 0.0, %v9107
  %v9109 = vpop.f32.mrb[0].mxu0
  %9110 = vmatprep.mubr.bf16.mxu0 %v6692
  %9111 = vmatmul.mubr.bf16.gmra.mrb[0].mxu0 %v6691
  %v9112 = vpop.f32.mrb[0].mxu0
  %v9113 = vadd.f32 0.0, %v9112
  %v9114 = vpop.f32.mrb[0].mxu0
  %v9115 = vpop.f32.mrb[0].mxu0
  %v9116 = vadd.f32 0.0, %v9115
  %v9117 = vpop.f32.mrb[0].mxu0
  %9118 = vmatprep.mubr.bf16.mxu0 %v6698
  %9119 = vmatmul.mubr.bf16.gmra.mrb[0].mxu0 %v6697
  %v9120 = vpop.f32.mrb[0].mxu0
  %v9121 = vadd.f32 0.0, %v9120
  %v9122 = vpop.f32.mrb[0].mxu0
  %v9123 = vpop.f32.mrb[0].mxu0
  %v9124 = vadd.f32 0.0, %v9123
  %v9125 = vpop.f32.mrb[0].mxu0
  %9126 = vmatprep.mubr.bf16.mxu0 %v6704
  %9127 = vmatmul.mubr.bf16.gmra.mrb[0].mxu0 %v6703
  %v9128 = vpop.f32.mrb[0].mxu0
  %v9129 = vadd.f32 0.0, %v9128
  %v9130 = vpop.f32.mrb[0].mxu0
  %v9131 = vpop.f32.mrb[0].mxu0
  %v9132 = vadd.f32 0.0, %v9131
  %v9133 = vpop.f32.mrb[0].mxu0
  %9134 = vmatprep.mubr.bf16.mxu0 %v6710
  %9135 = vmatmul.mubr.bf16.gmra.mrb[0].mxu0 %v6709
  %v9136 = vpop.f32.mrb[0].mxu0
  %v9137 = vadd.f32 0.0, %v9136
  %v9138 = vpop.f32.mrb[0].mxu0
  %v9139 = vpop.f32.mrb[0].mxu0
  %v9140 = vadd.f32 0.0, %v9139
  %v9141 = vpop.f32.mrb[0].mxu0
  %9142 = vmatprep.mubr.bf16.mxu0 %v6716
  %9143 = vmatmul.mubr.bf16.gmra.mrb[0].mxu0 %v6715
  %v9144 = vpop.f32.mrb[0].mxu0
  %v9145 = vadd.f32 0.0, %v9144
  %v9146 = vpop.f32.mrb[0].mxu0
  %v9147 = vpop.f32.mrb[0].mxu0
  %v9148 = vadd.f32 0.0, %v9147
  %v9149 = vpop.f32.mrb[0].mxu0
  %9150 = vmatprep.mubr.bf16.mxu0 %v6722
  %9151 = vmatmul.mubr.bf16.gmra.mrb[0].mxu0 %v6721
  %v9152 = vpop.f32.mrb[0].mxu0
  %v9153 = vadd.f32 0.0, %v9152
  %v9154 = vpop.f32.mrb[0].mxu0
  %v9155 = vpop.f32.mrb[0].mxu0
  %v9156 = vadd.f32 0.0, %v9155
  %v9157 = vpop.f32.mrb[0].mxu0
  %9158 = vmatprep.mubr.bf16.mxu0 %v6728
  %9159 = vmatmul.mubr.bf16.gmra.mrb[0].mxu0 %v6727
  %v9160 = vpop.f32.mrb[0].mxu0
  %v9161 = vadd.f32 0.0, %v9160
  %v9162 = vpop.f32.mrb[0].mxu0
  %v9163 = vpop.f32.mrb[0].mxu0
  %v9164 = vadd.f32 0.0, %v9163
  %v9165 = vpop.f32.mrb[0].mxu0
  %9166 = vmatprep.mubr.bf16.mxu0 %v6734
  %9167 = vmatmul.mubr.bf16.gmra.mrb[0].mxu0 %v6733
  %v9168 = vpop.f32.mrb[0].mxu0
  %v9169 = vadd.f32 0.0, %v9168
  %v9170 = vpop.f32.mrb[0].mxu0
  %v9171 = vpop.f32.mrb[0].mxu0
  %v9172 = vadd.f32 0.0, %v9171
  %v9173 = vpop.f32.mrb[0].mxu0
  %9174 = vmatprep.mubr.bf16.mxu0 %v6740
  %9175 = vmatmul.mubr.bf16.gmra.mrb[0].mxu0 %v6739
  %v9176 = vpop.f32.mrb[0].mxu0
  %v9177 = vadd.f32 0.0, %v9176
  %v9178 = vpop.f32.mrb[0].mxu0
  %v9179 = vpop.f32.mrb[0].mxu0
  %v9180 = vadd.f32 0.0, %v9179
  %v9181 = vpop.f32.mrb[0].mxu0
  %9182 = vmatprep.mubr.bf16.mxu0 %v6746
  %9183 = vmatmul.mubr.bf16.gmra.mrb[0].mxu0 %v6745
  %v9184 = vpop.f32.mrb[0].mxu0
  %v9185 = vadd.f32 0.0, %v9184
  %v9186 = vpop.f32.mrb[0].mxu0
  %v9187 = vpop.f32.mrb[0].mxu0
  %v9188 = vadd.f32 0.0, %v9187
  %v9189 = vpop.f32.mrb[0].mxu0
  %9190 = vmatprep.mubr.bf16.mxu0 %v6752
  %9191 = vmatmul.mubr.bf16.gmra.mrb[0].mxu0 %v6751
  %v9192 = vpop.f32.mrb[0].mxu0
  %v9193 = vadd.f32 0.0, %v9192
  %v9194 = vpop.f32.mrb[0].mxu0
  %v9195 = vpop.f32.mrb[0].mxu0
  %v9196 = vadd.f32 0.0, %v9195
  %v9197 = vpop.f32.mrb[0].mxu0
  %9198 = vmatprep.mubr.bf16.mxu0 %v6758
  %9199 = vmatmul.mubr.bf16.gmra.mrb[0].mxu0 %v6757
  %v9200 = vpop.f32.mrb[0].mxu0
  %v9201 = vadd.f32 0.0, %v9200
  %v9202 = vpop.f32.mrb[0].mxu0
  %v9203 = vpop.f32.mrb[0].mxu0
  %v9204 = vadd.f32 0.0, %v9203
  %v9205 = vpop.f32.mrb[0].mxu0
  %9206 = vmatprep.mubr.bf16.mxu0 %v6764
  %9207 = vmatmul.mubr.bf16.gmra.mrb[0].mxu0 %v6763
  %v9208 = vpop.f32.mrb[0].mxu0
  %v9209 = vadd.f32 0.0, %v9208
  %v9210 = vpop.f32.mrb[0].mxu0
  %v9211 = vpop.f32.mrb[0].mxu0
  %v9212 = vadd.f32 0.0, %v9211
  %v9213 = vpop.f32.mrb[0].mxu0
  %9214 = vmatprep.mubr.bf16.mxu0 %v6770
  %9215 = vmatmul.mubr.bf16.gmra.mrb[0].mxu0 %v6769
  %v9216 = vpop.f32.mrb[0].mxu0
  %v9217 = vadd.f32 0.0, %v9216
  %v9218 = vpop.f32.mrb[0].mxu0
  %v9219 = vpop.f32.mrb[0].mxu0
  %v9220 = vadd.f32 0.0, %v9219
  %v9221 = vpop.f32.mrb[0].mxu0
  %9222 = vmatprep.mubr.bf16.mxu0 %v6776
  %9223 = vmatmul.mubr.bf16.gmra.mrb[0].mxu0 %v6775
  %v9224 = vpop.f32.mrb[0].mxu0
  %v9225 = vadd.f32 0.0, %v9224
  %v9226 = vpop.f32.mrb[0].mxu0
  %v9227 = vpop.f32.mrb[0].mxu0
  %v9228 = vadd.f32 0.0, %v9227
  %v9229 = vpop.f32.mrb[0].mxu0
  %9230 = vmatprep.mubr.bf16.mxu0 %v6782
  %9231 = vmatmul.mubr.bf16.gmra.mrb[0].mxu0 %v6781
  %v9232 = vpop.f32.mrb[0].mxu0
  %v9233 = vadd.f32 0.0, %v9232
  %v9234 = vpop.f32.mrb[0].mxu0
  %v9235 = vpop.f32.mrb[0].mxu0
  %v9236 = vadd.f32 0.0, %v9235
  %v9237 = vpop.f32.mrb[0].mxu0
  %9238 = vmatprep.mubr.bf16.mxu0 %v6788
  %9239 = vmatmul.mubr.bf16.gmra.mrb[0].mxu0 %v6787
  %v9240 = vpop.f32.mrb[0].mxu0
  %v9241 = vadd.f32 0.0, %v9240
  %v9242 = vpop.f32.mrb[0].mxu0
  %v9243 = vpop.f32.mrb[0].mxu0
  %v9244 = vadd.f32 0.0, %v9243
  %v9245 = vpop.f32.mrb[0].mxu0
  %9246 = vmatprep.mubr.bf16.mxu0 %v6794
  %9247 = vmatmul.mubr.bf16.gmra.mrb[0].mxu0 %v6793
  %v9248 = vpop.f32.mrb[0].mxu0
  %v9249 = vadd.f32 0.0, %v9248
  %v9250 = vpop.f32.mrb[0].mxu0
  %v9251 = vpop.f32.mrb[0].mxu0
  %v9252 = vadd.f32 0.0, %v9251
  %v9253 = vpop.f32.mrb[0].mxu0
  %9254 = vdwg.mxu0
  %9255 = vmatprep.subr.bf16.mxu0 0
  %9256 = vmatpush1.bf16.msra.mxu0 %v9033
  %9257 = vmatprep.subr.bf16.mxu0 0
  %9258 = vmatpush1.bf16.msra.mxu0 %v9034
  %9259 = vmatprep.subr.bf16.mxu0 0
  %9260 = vmatpush1.bf16.msra.mxu0 %v9035
  %9261 = vmatprep.subr.bf16.mxu0 0
  %9262 = vmatpush1.bf16.msra.mxu0 %v9036
  %9263 = vmatprep.subr.bf16.mxu0 0
  %9264 = vmatpush1.bf16.msra.mxu0 %v9037
  %9265 = vmatprep.subr.bf16.mxu0 0
  %9266 = vmatpush1.bf16.msra.mxu0 %v9038
  %9267 = vmatprep.subr.bf16.mxu0 0
  %9268 = vmatpush1.bf16.msra.mxu0 %v9039
  %9269 = vmatprep.subr.bf16.mxu0 0
  %9270 = vmatpush1.bf16.msra.mxu0 %v9040
  %9271 = vmatprep.subr.bf16.mxu0 0
  %9272 = vmatpush1.bf16.msra.mxu0 %v9041
  %9273 = vmatprep.subr.bf16.mxu0 0
  %9274 = vmatpush1.bf16.msra.mxu0 %v9042
  %9275 = vmatprep.subr.bf16.mxu0 0
  %9276 = vmatpush1.bf16.msra.mxu0 %v9043
  %9277 = vmatprep.subr.bf16.mxu0 0
  %9278 = vmatpush1.bf16.msra.mxu0 %v9044
  %9279 = vmatprep.subr.bf16.mxu0 0
  %9280 = vmatpush1.bf16.msra.mxu0 %v9045
  %9281 = vmatprep.subr.bf16.mxu0 0
  %9282 = vmatpush1.bf16.msra.mxu0 %v9046
  %9283 = vmatprep.subr.bf16.mxu0 0
  %9284 = vmatpush1.bf16.msra.mxu0 %v9047
  %9285 = vmatprep.subr.bf16.mxu0 0
  %9286 = vmatpush1.bf16.msra.mxu0 %v9048
  %9287 = vmatprep.mubr.bf16.mxu0 %v6682
  %9288 = vmatmul.mubr.bf16.gmra.mrb[0].mxu0 %v6681
  %v9289 = vpop.f32.mrb[0].mxu0
  %v9290 = vadd.f32 %v9097, %v9289
  %v9291 = vpop.f32.mrb[0].mxu0
  %v9292 = vpop.f32.mrb[0].mxu0
  %v9293 = vadd.f32 %v9100, %v9292
  %v9294 = vpop.f32.mrb[0].mxu0
  %9295 = vmatprep.mubr.bf16.mxu0 %v6688
  %9296 = vmatmul.mubr.bf16.gmra.mrb[0].mxu0 %v6687
  %v9297 = vpop.f32.mrb[0].mxu0
  %v9298 = vadd.f32 %v9105, %v9297
  %v9299 = vpop.f32.mrb[0].mxu0
  %v9300 = vpop.f32.mrb[0].mxu0
  %v9301 = vadd.f32 %v9108, %v9300
  %v9302 = vpop.f32.mrb[0].mxu0
  %9303 = vmatprep.mubr.bf16.mxu0 %v6694
  %9304 = vmatmul.mubr.bf16.gmra.mrb[0].mxu0 %v6693
  %v9305 = vpop.f32.mrb[0].mxu0
  %v9306 = vadd.f32 %v9113, %v9305
  %v9307 = vpop.f32.mrb[0].mxu0
  %v9308 = vpop.f32.mrb[0].mxu0
  %v9309 = vadd.f32 %v9116, %v9308
  %v9310 = vpop.f32.mrb[0].mxu0
  %9311 = vmatprep.mubr.bf16.mxu0 %v6700
  %9312 = vmatmul.mubr.bf16.gmra.mrb[0].mxu0 %v6699
  %v9313 = vpop.f32.mrb[0].mxu0
  %v9314 = vadd.f32 %v9121, %v9313
  %v9315 = vpop.f32.mrb[0].mxu0
  %v9316 = vpop.f32.mrb[0].mxu0
  %v9317 = vadd.f32 %v9124, %v9316
  %v9318 = vpop.f32.mrb[0].mxu0
  %9319 = vmatprep.mubr.bf16.mxu0 %v6706
  %9320 = vmatmul.mubr.bf16.gmra.mrb[0].mxu0 %v6705
  %v9321 = vpop.f32.mrb[0].mxu0
  %v9322 = vadd.f32 %v9129, %v9321
  %v9323 = vpop.f32.mrb[0].mxu0
  %v9324 = vpop.f32.mrb[0].mxu0
  %v9325 = vadd.f32 %v9132, %v9324
  %v9326 = vpop.f32.mrb[0].mxu0
  %9327 = vmatprep.mubr.bf16.mxu0 %v6712
  %9328 = vmatmul.mubr.bf16.gmra.mrb[0].mxu0 %v6711
  %v9329 = vpop.f32.mrb[0].mxu0
  %v9330 = vadd.f32 %v9137, %v9329
  %v9331 = vpop.f32.mrb[0].mxu0
  %v9332 = vpop.f32.mrb[0].mxu0
  %v9333 = vadd.f32 %v9140, %v9332
  %v9334 = vpop.f32.mrb[0].mxu0
  %9335 = vmatprep.mubr.bf16.mxu0 %v6718
  %9336 = vmatmul.mubr.bf16.gmra.mrb[0].mxu0 %v6717
  %v9337 = vpop.f32.mrb[0].mxu0
  %v9338 = vadd.f32 %v9145, %v9337
  %v9339 = vpop.f32.mrb[0].mxu0
  %v9340 = vpop.f32.mrb[0].mxu0
  %v9341 = vadd.f32 %v9148, %v9340
  %v9342 = vpop.f32.mrb[0].mxu0
  %9343 = vmatprep.mubr.bf16.mxu0 %v6724
  %9344 = vmatmul.mubr.bf16.gmra.mrb[0].mxu0 %v6723
  %v9345 = vpop.f32.mrb[0].mxu0
  %v9346 = vadd.f32 %v9153, %v9345
  %v9347 = vpop.f32.mrb[0].mxu0
  %v9348 = vpop.f32.mrb[0].mxu0
  %v9349 = vadd.f32 %v9156, %v9348
  %v9350 = vpop.f32.mrb[0].mxu0
  %9351 = vmatprep.mubr.bf16.mxu0 %v6730
  %9352 = vmatmul.mubr.bf16.gmra.mrb[0].mxu0 %v6729
  %v9353 = vpop.f32.mrb[0].mxu0
  %v9354 = vadd.f32 %v9161, %v9353
  %v9355 = vpop.f32.mrb[0].mxu0
  %v9356 = vpop.f32.mrb[0].mxu0
  %v9357 = vadd.f32 %v9164, %v9356
  %v9358 = vpop.f32.mrb[0].mxu0
  %9359 = vmatprep.mubr.bf16.mxu0 %v6736
  %9360 = vmatmul.mubr.bf16.gmra.mrb[0].mxu0 %v6735
  %v9361 = vpop.f32.mrb[0].mxu0
  %v9362 = vadd.f32 %v9169, %v9361
  %v9363 = vpop.f32.mrb[0].mxu0
  %v9364 = vpop.f32.mrb[0].mxu0
  %v9365 = vadd.f32 %v9172, %v9364
  %v9366 = vpop.f32.mrb[0].mxu0
  %9367 = vmatprep.mubr.bf16.mxu0 %v6742
  %9368 = vmatmul.mubr.bf16.gmra.mrb[0].mxu0 %v6741
  %v9369 = vpop.f32.mrb[0].mxu0
  %v9370 = vadd.f32 %v9177, %v9369
  %v9371 = vpop.f32.mrb[0].mxu0
  %v9372 = vpop.f32.mrb[0].mxu0
  %v9373 = vadd.f32 %v9180, %v9372
  %v9374 = vpop.f32.mrb[0].mxu0
  %9375 = vmatprep.mubr.bf16.mxu0 %v6748
  %9376 = vmatmul.mubr.bf16.gmra.mrb[0].mxu0 %v6747
  %v9377 = vpop.f32.mrb[0].mxu0
  %v9378 = vadd.f32 %v9185, %v9377
  %v9379 = vpop.f32.mrb[0].mxu0
  %v9380 = vpop.f32.mrb[0].mxu0
  %v9381 = vadd.f32 %v9188, %v9380
  %v9382 = vpop.f32.mrb[0].mxu0
  %9383 = vmatprep.mubr.bf16.mxu0 %v6754
  %9384 = vmatmul.mubr.bf16.gmra.mrb[0].mxu0 %v6753
  %v9385 = vpop.f32.mrb[0].mxu0
  %v9386 = vadd.f32 %v9193, %v9385
  %v9387 = vpop.f32.mrb[0].mxu0
  %v9388 = vpop.f32.mrb[0].mxu0
  %v9389 = vadd.f32 %v9196, %v9388
  %v9390 = vpop.f32.mrb[0].mxu0
  %9391 = vmatprep.mubr.bf16.mxu0 %v6760
  %9392 = vmatmul.mubr.bf16.gmra.mrb[0].mxu0 %v6759
  %v9393 = vpop.f32.mrb[0].mxu0
  %v9394 = vadd.f32 %v9201, %v9393
  %v9395 = vpop.f32.mrb[0].mxu0
  %v9396 = vpop.f32.mrb[0].mxu0
  %v9397 = vadd.f32 %v9204, %v9396
  %v9398 = vpop.f32.mrb[0].mxu0
  %9399 = vmatprep.mubr.bf16.mxu0 %v6766
  %9400 = vmatmul.mubr.bf16.gmra.mrb[0].mxu0 %v6765
  %v9401 = vpop.f32.mrb[0].mxu0
  %v9402 = vadd.f32 %v9209, %v9401
  %v9403 = vpop.f32.mrb[0].mxu0
  %v9404 = vpop.f32.mrb[0].mxu0
  %v9405 = vadd.f32 %v9212, %v9404
  %v9406 = vpop.f32.mrb[0].mxu0
  %9407 = vmatprep.mubr.bf16.mxu0 %v6772
  %9408 = vmatmul.mubr.bf16.gmra.mrb[0].mxu0 %v6771
  %v9409 = vpop.f32.mrb[0].mxu0
  %v9410 = vadd.f32 %v9217, %v9409
  %v9411 = vpop.f32.mrb[0].mxu0
  %v9412 = vpop.f32.mrb[0].mxu0
  %v9413 = vadd.f32 %v9220, %v9412
  %v9414 = vpop.f32.mrb[0].mxu0
  %9415 = vmatprep.mubr.bf16.mxu0 %v6778
  %9416 = vmatmul.mubr.bf16.gmra.mrb[0].mxu0 %v6777
  %v9417 = vpop.f32.mrb[0].mxu0
  %v9418 = vadd.f32 %v9225, %v9417
  %v9419 = vpop.f32.mrb[0].mxu0
  %v9420 = vpop.f32.mrb[0].mxu0
  %v9421 = vadd.f32 %v9228, %v9420
  %v9422 = vpop.f32.mrb[0].mxu0
  %9423 = vmatprep.mubr.bf16.mxu0 %v6784
  %9424 = vmatmul.mubr.bf16.gmra.mrb[0].mxu0 %v6783
  %v9425 = vpop.f32.mrb[0].mxu0
  %v9426 = vadd.f32 %v9233, %v9425
  %v9427 = vpop.f32.mrb[0].mxu0
  %v9428 = vpop.f32.mrb[0].mxu0
  %v9429 = vadd.f32 %v9236, %v9428
  %v9430 = vpop.f32.mrb[0].mxu0
  %9431 = vmatprep.mubr.bf16.mxu0 %v6790
  %9432 = vmatmul.mubr.bf16.gmra.mrb[0].mxu0 %v6789
  %v9433 = vpop.f32.mrb[0].mxu0
  %v9434 = vadd.f32 %v9241, %v9433
  %v9435 = vpop.f32.mrb[0].mxu0
  %v9436 = vpop.f32.mrb[0].mxu0
  %v9437 = vadd.f32 %v9244, %v9436
  %v9438 = vpop.f32.mrb[0].mxu0
  %9439 = vmatprep.mubr.bf16.mxu0 %v6796
  %9440 = vmatmul.mubr.bf16.gmra.mrb[0].mxu0 %v6795
  %v9441 = vpop.f32.mrb[0].mxu0
  %v9442 = vadd.f32 %v9249, %v9441
  %v9443 = vpop.f32.mrb[0].mxu0
  %v9444 = vpop.f32.mrb[0].mxu0
  %v9445 = vadd.f32 %v9252, %v9444
  %v9446 = vpop.f32.mrb[0].mxu0
  %9447 = vdwg.mxu0
  %9448 = vmatprep.subr.bf16.mxu0 0
  %9449 = vmatpush1.bf16.msra.mxu0 %v9049
  %9450 = vmatprep.subr.bf16.mxu0 0
  %9451 = vmatpush1.bf16.msra.mxu0 %v9050
  %9452 = vmatprep.subr.bf16.mxu0 0
  %9453 = vmatpush1.bf16.msra.mxu0 %v9051
  %9454 = vmatprep.subr.bf16.mxu0 0
  %9455 = vmatpush1.bf16.msra.mxu0 %v9052
  %9456 = vmatprep.subr.bf16.mxu0 0
  %9457 = vmatpush1.bf16.msra.mxu0 %v9053
  %9458 = vmatprep.subr.bf16.mxu0 0
  %9459 = vmatpush1.bf16.msra.mxu0 %v9054
  %9460 = vmatprep.subr.bf16.mxu0 0
  %9461 = vmatpush1.bf16.msra.mxu0 %v9055
  %9462 = vmatprep.subr.bf16.mxu0 0
  %9463 = vmatpush1.bf16.msra.mxu0 %v9056
  %9464 = vmatprep.subr.bf16.mxu0 0
  %9465 = vmatpush1.bf16.msra.mxu0 %v9057
  %9466 = vmatprep.subr.bf16.mxu0 0
  %9467 = vmatpush1.bf16.msra.mxu0 %v9058
  %9468 = vmatprep.subr.bf16.mxu0 0
  %9469 = vmatpush1.bf16.msra.mxu0 %v9059
  %9470 = vmatprep.subr.bf16.mxu0 0
  %9471 = vmatpush1.bf16.msra.mxu0 %v9060
  %9472 = vmatprep.subr.bf16.mxu0 0
  %9473 = vmatpush1.bf16.msra.mxu0 %v9061
  %9474 = vmatprep.subr.bf16.mxu0 0
  %9475 = vmatpush1.bf16.msra.mxu0 0
  %9476 = vmatprep.subr.bf16.mxu0 0
  %9477 = vmatpush1.bf16.msra.mxu0 0
  %9478 = vmatprep.subr.bf16.mxu0 0
  %9479 = vmatpush1.bf16.msra.mxu0 0
  %9480 = vmatprep.mubr.bf16.mxu0 %v6901
  %9481 = vmatmul.mubr.bf16.gmra.mrb[0].mxu0 %v6683
  %v9482 = vpop.f32.mrb[0].mxu0
  %v9483 = vadd.f32 %v9290, %v9482
  %v9484 = vpop.f32.mrb[0].mxu0
  %v9485 = vpop.f32.mrb[0].mxu0
  %v9486 = vadd.f32 %v9293, %v9485
  %v9487 = vpop.f32.mrb[0].mxu0
  %9488 = vmatprep.mubr.bf16.mxu0 %v6904
  %9489 = vmatmul.mubr.bf16.gmra.mrb[0].mxu0 %v6689
  %v9490 = vpop.f32.mrb[0].mxu0
  %v9491 = vadd.f32 %v9298, %v9490
  %v9492 = vpop.f32.mrb[0].mxu0
  %v9493 = vpop.f32.mrb[0].mxu0
  %v9494 = vadd.f32 %v9301, %v9493
  %v9495 = vpop.f32.mrb[0].mxu0
  %9496 = vmatprep.mubr.bf16.mxu0 %v6907
  %9497 = vmatmul.mubr.bf16.gmra.mrb[0].mxu0 %v6695
  %v9498 = vpop.f32.mrb[0].mxu0
  %v9499 = vadd.f32 %v9306, %v9498
  %v9500 = vpop.f32.mrb[0].mxu0
  %v9501 = vpop.f32.mrb[0].mxu0
  %v9502 = vadd.f32 %v9309, %v9501
  %v9503 = vpop.f32.mrb[0].mxu0
  %9504 = vmatprep.mubr.bf16.mxu0 %v6910
  %9505 = vmatmul.mubr.bf16.gmra.mrb[0].mxu0 %v6701
  %v9506 = vpop.f32.mrb[0].mxu0
  %v9507 = vadd.f32 %v9314, %v9506
  %v9508 = vpop.f32.mrb[0].mxu0
  %v9509 = vpop.f32.mrb[0].mxu0
  %v9510 = vadd.f32 %v9317, %v9509
  %v9511 = vpop.f32.mrb[0].mxu0
  %9512 = vmatprep.mubr.bf16.mxu0 %v6913
  %9513 = vmatmul.mubr.bf16.gmra.mrb[0].mxu0 %v6707
  %v9514 = vpop.f32.mrb[0].mxu0
  %v9515 = vadd.f32 %v9322, %v9514
  %v9516 = vpop.f32.mrb[0].mxu0
  %v9517 = vpop.f32.mrb[0].mxu0
  %v9518 = vadd.f32 %v9325, %v9517
  %v9519 = vpop.f32.mrb[0].mxu0
  %9520 = vmatprep.mubr.bf16.mxu0 %v6916
  %9521 = vmatmul.mubr.bf16.gmra.mrb[0].mxu0 %v6713
  %v9522 = vpop.f32.mrb[0].mxu0
  %v9523 = vadd.f32 %v9330, %v9522
  %v9524 = vpop.f32.mrb[0].mxu0
  %v9525 = vpop.f32.mrb[0].mxu0
  %v9526 = vadd.f32 %v9333, %v9525
  %v9527 = vpop.f32.mrb[0].mxu0
  %9528 = vmatprep.mubr.bf16.mxu0 %v6919
  %9529 = vmatmul.mubr.bf16.gmra.mrb[0].mxu0 %v6719
  %v9530 = vpop.f32.mrb[0].mxu0
  %v9531 = vadd.f32 %v9338, %v9530
  %v9532 = vpop.f32.mrb[0].mxu0
  %v9533 = vpop.f32.mrb[0].mxu0
  %v9534 = vadd.f32 %v9341, %v9533
  %v9535 = vpop.f32.mrb[0].mxu0
  %9536 = vmatprep.mubr.bf16.mxu0 %v6922
  %9537 = vmatmul.mubr.bf16.gmra.mrb[0].mxu0 %v6725
  %v9538 = vpop.f32.mrb[0].mxu0
  %v9539 = vadd.f32 %v9346, %v9538
  %v9540 = vpop.f32.mrb[0].mxu0
  %v9541 = vpop.f32.mrb[0].mxu0
  %v9542 = vadd.f32 %v9349, %v9541
  %v9543 = vpop.f32.mrb[0].mxu0
  %9544 = vmatprep.mubr.bf16.mxu0 %v6925
  %9545 = vmatmul.mubr.bf16.gmra.mrb[0].mxu0 %v6731
  %v9546 = vpop.f32.mrb[0].mxu0
  %v9547 = vadd.f32 %v9354, %v9546
  %v9548 = vpop.f32.mrb[0].mxu0
  %v9549 = vpop.f32.mrb[0].mxu0
  %v9550 = vadd.f32 %v9357, %v9549
  %v9551 = vpop.f32.mrb[0].mxu0
  %9552 = vmatprep.mubr.bf16.mxu0 %v6928
  %9553 = vmatmul.mubr.bf16.gmra.mrb[0].mxu0 %v6737
  %v9554 = vpop.f32.mrb[0].mxu0
  %v9555 = vadd.f32 %v9362, %v9554
  %v9556 = vpop.f32.mrb[0].mxu0
  %v9557 = vpop.f32.mrb[0].mxu0
  %v9558 = vadd.f32 %v9365, %v9557
  %v9559 = vpop.f32.mrb[0].mxu0
  %9560 = vmatprep.mubr.bf16.mxu0 %v6931
  %9561 = vmatmul.mubr.bf16.gmra.mrb[0].mxu0 %v6743
  %v9562 = vpop.f32.mrb[0].mxu0
  %v9563 = vadd.f32 %v9370, %v9562
  %v9564 = vpop.f32.mrb[0].mxu0
  %v9565 = vpop.f32.mrb[0].mxu0
  %v9566 = vadd.f32 %v9373, %v9565
  %v9567 = vpop.f32.mrb[0].mxu0
  %9568 = vmatprep.mubr.bf16.mxu0 %v6934
  %9569 = vmatmul.mubr.bf16.gmra.mrb[0].mxu0 %v6749
  %v9570 = vpop.f32.mrb[0].mxu0
  %v9571 = vadd.f32 %v9378, %v9570
  %v9572 = vpop.f32.mrb[0].mxu0
  %v9573 = vpop.f32.mrb[0].mxu0
  %v9574 = vadd.f32 %v9381, %v9573
  %v9575 = vpop.f32.mrb[0].mxu0
  %9576 = vmatprep.mubr.bf16.mxu0 %v6937
  %9577 = vmatmul.mubr.bf16.gmra.mrb[0].mxu0 %v6755
  %v9578 = vpop.f32.mrb[0].mxu0
  %v9579 = vadd.f32 %v9386, %v9578
  %v9580 = vpop.f32.mrb[0].mxu0
  %v9581 = vpop.f32.mrb[0].mxu0
  %v9582 = vadd.f32 %v9389, %v9581
  %v9583 = vpop.f32.mrb[0].mxu0
  %9584 = vmatprep.mubr.bf16.mxu0 %v6940
  %9585 = vmatmul.mubr.bf16.gmra.mrb[0].mxu0 %v6761
  %v9586 = vpop.f32.mrb[0].mxu0
  %v9587 = vadd.f32 %v9394, %v9586
  %v9588 = vpop.f32.mrb[0].mxu0
  %v9589 = vpop.f32.mrb[0].mxu0
  %v9590 = vadd.f32 %v9397, %v9589
  %v9591 = vpop.f32.mrb[0].mxu0
  %9592 = vmatprep.mubr.bf16.mxu0 %v6943
  %9593 = vmatmul.mubr.bf16.gmra.mrb[0].mxu0 %v6767
  %v9594 = vpop.f32.mrb[0].mxu0
  %v9595 = vadd.f32 %v9402, %v9594
  %v9596 = vpop.f32.mrb[0].mxu0
  %v9597 = vpop.f32.mrb[0].mxu0
  %v9598 = vadd.f32 %v9405, %v9597
  %v9599 = vpop.f32.mrb[0].mxu0
  %9600 = vmatprep.mubr.bf16.mxu0 %v6946
  %9601 = vmatmul.mubr.bf16.gmra.mrb[0].mxu0 %v6773
  %v9602 = vpop.f32.mrb[0].mxu0
  %v9603 = vadd.f32 %v9410, %v9602
  %v9604 = vpop.f32.mrb[0].mxu0
  %v9605 = vpop.f32.mrb[0].mxu0
  %v9606 = vadd.f32 %v9413, %v9605
  %v9607 = vpop.f32.mrb[0].mxu0
  %9608 = vmatprep.mubr.bf16.mxu0 %v6949
  %9609 = vmatmul.mubr.bf16.gmra.mrb[0].mxu0 %v6779
  %v9610 = vpop.f32.mrb[0].mxu0
  %v9611 = vadd.f32 %v9418, %v9610
  %v9612 = vpop.f32.mrb[0].mxu0
  %v9613 = vpop.f32.mrb[0].mxu0
  %v9614 = vadd.f32 %v9421, %v9613
  %v9615 = vpop.f32.mrb[0].mxu0
  %9616 = vmatprep.mubr.bf16.mxu0 %v6952
  %9617 = vmatmul.mubr.bf16.gmra.mrb[0].mxu0 %v6785
  %v9618 = vpop.f32.mrb[0].mxu0
  %v9619 = vadd.f32 %v9426, %v9618
  %v9620 = vpop.f32.mrb[0].mxu0
  %v9621 = vpop.f32.mrb[0].mxu0
  %v9622 = vadd.f32 %v9429, %v9621
  %v9623 = vpop.f32.mrb[0].mxu0
  %9624 = vmatprep.mubr.bf16.mxu0 %v6955
  %9625 = vmatmul.mubr.bf16.gmra.mrb[0].mxu0 %v6791
  %v9626 = vpop.f32.mrb[0].mxu0
  %v9627 = vadd.f32 %v9434, %v9626
  %v9628 = vpop.f32.mrb[0].mxu0
  %v9629 = vpop.f32.mrb[0].mxu0
  %v9630 = vadd.f32 %v9437, %v9629
  %v9631 = vpop.f32.mrb[0].mxu0
  %9632 = vmatprep.mubr.bf16.mxu0 %v6958
  %9633 = vmatmul.mubr.bf16.gmra.mrb[0].mxu0 %v6797
  %v9634 = vpop.f32.mrb[0].mxu0
  %v9635 = vadd.f32 %v9442, %v9634
  %v9636 = vpop.f32.mrb[0].mxu0
  %v9637 = vpop.f32.mrb[0].mxu0
  %v9638 = vadd.f32 %v9445, %v9637
  %v9639 = vpop.f32.mrb[0].mxu0
  %9640 = vdwg.mxu0
  %v9641 = vmax.f32 %v9483, %v9523
  %v9642 = vmax.f32 %v9486, %v9526
  %v9643 = vmax.f32 %v9491, %v9531
  %v9644 = vmax.f32 %v9494, %v9534
  %v9645 = vmax.f32 %v9499, %v9539
  %v9646 = vmax.f32 %v9502, %v9542
  %v9647 = vmax.f32 %v9507, %v9547
  %v9648 = vmax.f32 %v9510, %v9550
  %v9649 = vmax.f32 %v9515, %v9555
  %v9650 = vmax.f32 %v9518, %v9558
  %v9651 = vmax.f32 %v9563, %v9603
  %v9652 = vmax.f32 %v9566, %v9606
  %v9653 = vmax.f32 %v9571, %v9611
  %v9654 = vmax.f32 %v9574, %v9614
  %v9655 = vmax.f32 %v9579, %v9619
  %v9656 = vmax.f32 %v9582, %v9622
  %v9657 = vmax.f32 %v9587, %v9627
  %v9658 = vmax.f32 %v9590, %v9630
  %v9659 = vmax.f32 %v9595, %v9635
  %v9660 = vmax.f32 %v9598, %v9638
  %v9661 = vmax.f32 %v9641, %v9651
  %v9662 = vmax.f32 %v9642, %v9652
  %v9663 = vmax.f32 %v9643, %v9653
  %v9664 = vmax.f32 %v9644, %v9654
  %v9665 = vmax.f32 %v9645, %v9655
  %v9666 = vmax.f32 %v9646, %v9656
  %v9667 = vmax.f32 %v9647, %v9657
  %v9668 = vmax.f32 %v9648, %v9658
  %v9669 = vmax.f32 %v9649, %v9659
  %v9670 = vmax.f32 %v9650, %v9660
  %v9671 = vadd.f32 %v9661, %v7572
  %v9672 = vadd.f32 %v9662, %v7577
  %v9673 = vadd.f32 %v9663, %v7582
  %v9674 = vadd.f32 %v9664, %v7587
  %v9675 = vadd.f32 %v9665, %v7592
  %v9676 = vadd.f32 %v9666, %v7597
  %v9677 = vadd.f32 %v9667, %v7602
  %v9678 = vadd.f32 %v9668, %v7607
  %v9679 = vadd.f32 %v9669, %v7612
  %v9680 = vadd.f32 %v9670, %v7617
  %v9681 = vmax.f32 %v9671, 0.0
  %v9682 = vmax.f32 %v9672, 0.0
  %v9683 = vmax.f32 %v9673, 0.0
  %v9684 = vmax.f32 %v9674, 0.0
  %v9685 = vmax.f32 %v9675, 0.0
  %v9686 = vmax.f32 %v9676, 0.0
  %v9687 = vmax.f32 %v9677, 0.0
  %v9688 = vmax.f32 %v9678, 0.0
  %v9689 = vmax.f32 %v9679, 0.0
  %v9690 = vmax.f32 %v9680, 0.0
  %v9691 = vpack.c.bf16 %v9682, %v9681
  %v9692 = vpack.c.bf16 %v9684, %v9683
  %v9693 = vpack.c.bf16 %v9686, %v9685
  %v9694 = vpack.c.bf16 %v9688, %v9687
  %v9695 = vpack.c.bf16 %v9690, %v9689
  %9696 = vst [vmem:[#allocation3 + $0x78] sm:$0xff] %v9691
  %9697 = vst [vmem:[#allocation3 + $0x80] sm:$0xff] %v9692
  %9698 = vst [vmem:[#allocation3 + $0x88] sm:$0xff] %v9693
  %9699 = vst [vmem:[#allocation3 + $0x90] sm:$0xff] %v9694
  %9700 = vst [vmem:[#allocation3 + $0x98] sm:$0xff] %v9695
  %v9701 = vld [vmem:[%s5] sm:$0xff]
  %v9702 = vld [vmem:[%s5 + $0x8] sm:$0xf]
  %v9703 = vld [vmem:[%s5 + $0xc] sm:$0xff]
  %v9704 = vld [vmem:[%s5 + $0x14] sm:$0xf]
  %v9705 = vld [vmem:[%s5 + $0x18] sm:$0xff]
  %v9706 = vld [vmem:[%s5 + $0x20] sm:$0xf]
  %v9707 = vld [vmem:[%s5 + $0x24] sm:$0xff]
  %v9708 = vld [vmem:[%s5 + $0x2c] sm:$0xf]
  %v9709 = vld [vmem:[%s5 + $0x30] sm:$0xff]
  %v9710 = vld [vmem:[%s5 + $0x38] sm:$0xf]
  %v9711 = vld [vmem:[%s5 + $0x3c] sm:$0xff]
  %v9712 = vld [vmem:[%s5 + $0x44] sm:$0xf]
  %v9713 = vld [vmem:[%s5 + $0x48] sm:$0x11]
  %v9714 = vld [vmem:[%s5 + $0x50] sm:$0x1]
  %v9715 = vld [vmem:[#allocation3] sm:$0xff]
  %v9716 = vld [vmem:[#allocation3 + $0x8] sm:$0xff]
  %v9717 = vld [vmem:[#allocation3 + $0x10] sm:$0xff]
  %v9718 = vld [vmem:[#allocation3 + $0x18] sm:$0xff]
  %v9719 = vld [vmem:[#allocation3 + $0x20] sm:$0xff]
  %v9720 = vld [vmem:[#allocation3 + $0x28] sm:$0xff]
  %v9721 = vld [vmem:[#allocation3 + $0x30] sm:$0xff]
  %v9722 = vld [vmem:[#allocation3 + $0x38] sm:$0xff]
  %v9723 = vld [vmem:[#allocation3 + $0x40] sm:$0xff]
  %v9724 = vld [vmem:[#allocation3 + $0x48] sm:$0xff]
  %v9725 = vld [vmem:[#allocation3 + $0x50] sm:$0xff]
  %v9726 = vld [vmem:[#allocation3 + $0x58] sm:$0xff]
  %v9727 = vld [vmem:[#allocation3 + $0x60] sm:$0xff]
  %v9728 = vld [vmem:[#allocation3 + $0x68] sm:$0xff]
  %v9729 = vld [vmem:[#allocation3 + $0x70] sm:$0xff]
  %v9730 = vld [vmem:[#allocation3 + $0x78] sm:$0xff]
  %v9731 = vld [vmem:[#allocation3 + $0x80] sm:$0xff]
  %v9732 = vld [vmem:[#allocation3 + $0x88] sm:$0xff]
  %v9733 = vld [vmem:[#allocation3 + $0x90] sm:$0xff]
  %v9734 = vld [vmem:[#allocation3 + $0x98] sm:$0xff]
  %v9735 = vld [vmem:[%s6] sm:$0xff]
  %v9736 = vld [vmem:[%s6 + $0x8] sm:$0xff]
  %v9737 = vld [vmem:[%s6 + $0x10] sm:$0xff]
  %v9738 = vld [vmem:[%s6 + $0x18] sm:$0xff]
  %v9739 = vld [vmem:[%s6 + $0x20] sm:$0xff]
  %v9740 = vld [vmem:[%s6 + $0x28] sm:$0xff]
  %v9741 = vld [vmem:[%s6 + $0x30] sm:$0x3]
  %9743 = vset.pattern.permute.xlu0 0
  %9744 = vperm.xlu0 %9743, %v9735
  %v9745 = vpop.permute.xlu0 %9744
  %9748 = vset.pattern.permute.xlu0 0
  %9749 = vperm.xlu0 %9748, %v9736
  %v9750 = vpop.permute.xlu0 %9749
  %9753 = vset.pattern.permute.xlu0 0
  %9754 = vperm.xlu0 %9753, %v9737
  %v9755 = vpop.permute.xlu0 %9754
  %9758 = vset.pattern.permute.xlu0 0
  %9759 = vperm.xlu0 %9758, %v9738
  %v9760 = vpop.permute.xlu0 %9759
  %9763 = vset.pattern.permute.xlu0 0
  %9764 = vperm.xlu0 %9763, %v9739
  %v9765 = vpop.permute.xlu0 %9764
  %9768 = vset.pattern.permute.xlu0 0
  %9769 = vperm.xlu0 %9768, %v9740
  %v9770 = vpop.permute.xlu0 %9769
  %9773 = vset.pattern.permute.xlu0 0
  %9774 = vperm.xlu0 %9773, %v9741
  %v9775 = vpop.permute.xlu0 %9774
  %v9791 = vunpack.c.l.b16 %v9701
  %v9792 = vunpack.c.h.b16 %v9701
  %v9793 = vunpack.c.l.b16 %v9702
  %v9794 = vunpack.c.l.b16 %v9703
  %v9795 = vunpack.c.h.b16 %v9703
  %v9796 = vunpack.c.l.b16 %v9704
  %v9797 = vunpack.c.l.b16 %v9705
  %v9798 = vunpack.c.h.b16 %v9705
  %v9799 = vunpack.c.l.b16 %v9706
  %v9800 = vunpack.c.l.b16 %v9707
  %v9801 = vunpack.c.h.b16 %v9707
  %v9802 = vunpack.c.l.b16 %v9708
  %v9803 = vunpack.c.l.b16 %v9709
  %v9804 = vunpack.c.h.b16 %v9709
  %v9805 = vunpack.c.l.b16 %v9710
  %v9806 = vunpack.c.l.b16 %v9711
  %v9807 = vunpack.c.h.b16 %v9711
  %v9808 = vunpack.c.l.b16 %v9712
  %v9809 = vunpack.c.l.b16 %v9713
  %v9810 = vunpack.c.h.b16 %v9713
  %v9811 = vunpack.c.l.b16 %v9714
  %v9812 = vpack.c.b16 %v9794, %v9791
  %v9813 = vpack.c.b16 %v9795, %v9792
  %v9814 = vpack.c.b16 %v9796, %v9793
  %v9815 = vpack.c.b16 %v9800, %v9797
  %v9816 = vpack.c.b16 %v9801, %v9798
  %v9817 = vpack.c.b16 %v9802, %v9799
  %v9818 = vpack.c.b16 %v9806, %v9803
  %v9819 = vpack.c.b16 %v9807, %v9804
  %v9820 = vpack.c.b16 %v9808, %v9805
  %v9821 = vpack.c.b16 %v9809, %v9809
  %v9822 = vpack.c.b16 %v9810, %v9810
  %v9823 = vpack.c.b16 %v9811, %v9811
  %vm9832 = vcmask 523264
  %v9834 = vsel %vm9832, %v9814, 0
  %v9837 = vsel %vm9832, %v9817, 0
  %v9840 = vsel %vm9832, %v9820, 0
  %v9843 = vsel %vm9832, %v9823, 0
  %9845 = vmatprep.subr.bf16.mxu0 0
  %9846 = vmatpush1.bf16.msra.mxu0 %v9715
  %9847 = vmatprep.subr.bf16.mxu0 0
  %9848 = vmatpush1.bf16.msra.mxu0 %v9716
  %9849 = vmatprep.subr.bf16.mxu0 0
  %9850 = vmatpush1.bf16.msra.mxu0 %v9717
  %9851 = vmatprep.subr.bf16.mxu0 0
  %9852 = vmatpush1.bf16.msra.mxu0 %v9718
  %9853 = vmatprep.subr.bf16.mxu0 0
  %9854 = vmatpush1.bf16.msra.mxu0 %v9719
  %9855 = vmatprep.subr.bf16.mxu0 0
  %9856 = vmatpush1.bf16.msra.mxu0 %v9720
  %9857 = vmatprep.subr.bf16.mxu0 0
  %9858 = vmatpush1.bf16.msra.mxu0 %v9721
  %9859 = vmatprep.subr.bf16.mxu0 0
  %9860 = vmatpush1.bf16.msra.mxu0 %v9722
  %9861 = vmatprep.subr.bf16.mxu0 0
  %9862 = vmatpush1.bf16.msra.mxu0 %v9723
  %9863 = vmatprep.subr.bf16.mxu0 0
  %9864 = vmatpush1.bf16.msra.mxu0 %v9724
  %9865 = vmatprep.subr.bf16.mxu0 0
  %9866 = vmatpush1.bf16.msra.mxu0 %v9725
  %9867 = vmatprep.subr.bf16.mxu0 0
  %9868 = vmatpush1.bf16.msra.mxu0 %v9726
  %9869 = vmatprep.subr.bf16.mxu0 0
  %9870 = vmatpush1.bf16.msra.mxu0 %v9727
  %9871 = vmatprep.subr.bf16.mxu0 0
  %9872 = vmatpush1.bf16.msra.mxu0 %v9728
  %9873 = vmatprep.subr.bf16.mxu0 0
  %9874 = vmatpush1.bf16.msra.mxu0 %v9729
  %9875 = vmatprep.subr.bf16.mxu0 0
  %9876 = vmatpush1.bf16.msra.mxu0 %v9730
  %9877 = vmatprep.mubr.bf16.mxu0 %v9813
  %9878 = vmatmul.mubr.bf16.gmra.mrb[0].mxu0 %v9812
  %v9879 = vpop.f32.mrb[0].mxu0
  %v9880 = vadd.f32 %v9745, %v9879
  %v9881 = vpop.f32.mrb[0].mxu0
  %v9882 = vpop.f32.mrb[0].mxu0
  %v9883 = vadd.f32 %v9750, %v9882
  %v9884 = vpop.f32.mrb[0].mxu0
  %9885 = vmatprep.mubr.bf16.mxu0 %v9816
  %9886 = vmatmul.mubr.bf16.gmra.mrb[0].mxu0 %v9815
  %v9887 = vpop.f32.mrb[0].mxu0
  %v9888 = vadd.f32 %v9755, %v9887
  %v9889 = vpop.f32.mrb[0].mxu0
  %v9890 = vpop.f32.mrb[0].mxu0
  %v9891 = vadd.f32 %v9760, %v9890
  %v9892 = vpop.f32.mrb[0].mxu0
  %9893 = vmatprep.mubr.bf16.mxu0 %v9819
  %9894 = vmatmul.mubr.bf16.gmra.mrb[0].mxu0 %v9818
  %v9895 = vpop.f32.mrb[0].mxu0
  %v9896 = vadd.f32 %v9765, %v9895
  %v9897 = vpop.f32.mrb[0].mxu0
  %v9898 = vpop.f32.mrb[0].mxu0
  %v9899 = vadd.f32 %v9770, %v9898
  %v9900 = vpop.f32.mrb[0].mxu0
  %9901 = vmatprep.mubr.bf16.mxu0 %v9822
  %9902 = vmatmul.mubr.bf16.gmra.mrb[0].mxu0 %v9821
  %v9903 = vpop.f32.mrb[0].mxu0
  %v9904 = vadd.f32 %v9775, %v9903
  %v9905 = vpop.f32.mrb[0].mxu0
  %v9906 = vpop.f32.mrb[0].mxu0
  %v9907 = vpop.f32.mrb[0].mxu0
  %9908 = vdwg.mxu0
  %9909 = vmatprep.subr.bf16.mxu0 0
  %9910 = vmatpush1.bf16.msra.mxu0 %v9731
  %9911 = vmatprep.subr.bf16.mxu0 0
  %9912 = vmatpush1.bf16.msra.mxu0 %v9732
  %9913 = vmatprep.subr.bf16.mxu0 0
  %9914 = vmatpush1.bf16.msra.mxu0 %v9733
  %9915 = vmatprep.subr.bf16.mxu0 0
  %9916 = vmatpush1.bf16.msra.mxu0 %v9734
  %9917 = vmatprep.subr.bf16.mxu0 0
  %9918 = vmatpush1.bf16.msra.mxu0 0
  %9919 = vmatprep.subr.bf16.mxu0 0
  %9920 = vmatpush1.bf16.msra.mxu0 0
  %9921 = vmatprep.subr.bf16.mxu0 0
  %9922 = vmatpush1.bf16.msra.mxu0 0
  %9923 = vmatprep.subr.bf16.mxu0 0
  %9924 = vmatpush1.bf16.msra.mxu0 0
  %9925 = vmatprep.subr.bf16.mxu0 0
  %9926 = vmatpush1.bf16.msra.mxu0 0
  %9927 = vmatprep.subr.bf16.mxu0 0
  %9928 = vmatpush1.bf16.msra.mxu0 0
  %9929 = vmatprep.subr.bf16.mxu0 0
  %9930 = vmatpush1.bf16.msra.mxu0 0
  %9931 = vmatprep.subr.bf16.mxu0 0
  %9932 = vmatpush1.bf16.msra.mxu0 0
  %9933 = vmatprep.subr.bf16.mxu0 0
  %9934 = vmatpush1.bf16.msra.mxu0 0
  %9935 = vmatprep.subr.bf16.mxu0 0
  %9936 = vmatpush1.bf16.msra.mxu0 0
  %9937 = vmatprep.subr.bf16.mxu0 0
  %9938 = vmatpush1.bf16.msra.mxu0 0
  %9939 = vmatprep.subr.bf16.mxu0 0
  %9940 = vmatpush1.bf16.msra.mxu0 0
  %9941 = vmatprep.mubr.bf16.mxu0 0
  %9942 = vmatmul.mubr.bf16.gmra.mrb[0].mxu0 %v9834
  %v9943 = vpop.f32.mrb[0].mxu0
  %v9944 = vadd.f32 %v9880, %v9943
  %v9945 = vpop.f32.mrb[0].mxu0
  %v9946 = vpop.f32.mrb[0].mxu0
  %v9947 = vadd.f32 %v9883, %v9946
  %v9948 = vpop.f32.mrb[0].mxu0
  %9949 = vmatprep.mubr.bf16.mxu0 0
  %9950 = vmatmul.mubr.bf16.gmra.mrb[0].mxu0 %v9837
  %v9951 = vpop.f32.mrb[0].mxu0
  %v9952 = vadd.f32 %v9888, %v9951
  %v9953 = vpop.f32.mrb[0].mxu0
  %v9954 = vpop.f32.mrb[0].mxu0
  %v9955 = vadd.f32 %v9891, %v9954
  %v9956 = vpop.f32.mrb[0].mxu0
  %9957 = vmatprep.mubr.bf16.mxu0 0
  %9958 = vmatmul.mubr.bf16.gmra.mrb[0].mxu0 %v9840
  %v9959 = vpop.f32.mrb[0].mxu0
  %v9960 = vadd.f32 %v9896, %v9959
  %v9961 = vpop.f32.mrb[0].mxu0
  %v9962 = vpop.f32.mrb[0].mxu0
  %v9963 = vadd.f32 %v9899, %v9962
  %v9964 = vpop.f32.mrb[0].mxu0
  %9965 = vmatprep.mubr.bf16.mxu0 0
  %9966 = vmatmul.mubr.bf16.gmra.mrb[0].mxu0 %v9843
  %v9967 = vpop.f32.mrb[0].mxu0
  %v9968 = vadd.f32 %v9904, %v9967
  %v9969 = vpop.f32.mrb[0].mxu0
  %v9970 = vpop.f32.mrb[0].mxu0
  %v9971 = vpop.f32.mrb[0].mxu0
  %9972 = vdwg.mxu0
  %v9973 = vmax.f32 %v9944, 0.0
  %v9974 = vmax.f32 %v9947, 0.0
  %v9975 = vmax.f32 %v9952, 0.0
  %v9976 = vmax.f32 %v9955, 0.0
  %v9977 = vmax.f32 %v9960, 0.0
  %v9978 = vmax.f32 %v9963, 0.0
  %v9979 = vmax.f32 %v9968, 0.0
  %v9980 = vpack.c.bf16 %v9974, %v9973
  %v9981 = vpack.c.bf16 %v9976, %v9975
  %v9982 = vpack.c.bf16 %v9978, %v9977
  %v9983 = vpack.c.bf16 %v9979, %v9979
  %v9984 = vld [vmem:[%s7] sm:$0xf]
  %v9985 = vld [vmem:[%s7 + $0x4] sm:$0x1]
  %v9986 = vld [vmem:[%s8] sm:$0xff]
  %v9987 = vld [vmem:[%s8 + $0x8] sm:$0x3]
  %9989 = vset.pattern.permute.xlu0 0
  %9990 = vperm.xlu0 %9989, %v9986
  %v9991 = vpop.permute.xlu0 %9990
  %9994 = vset.pattern.permute.xlu0 0
  %9995 = vperm.xlu0 %9994, %v9987
  %v9996 = vpop.permute.xlu0 %9995
  %v10000 = vunpack.c.l.b16 %v9984
  %v10001 = vunpack.c.l.b16 %v9985
  %v10002 = vpack.c.b16 %v10001, %v10000
  %vm10003 = vcmask 408576
  %v10005 = vsel %vm10003, %v10002, 0
  %vm10007 = vcmask 1040384
  %v10009 = vsel %vm10007, %v9983, 0
  %10011 = vmatprep.subr.bf16.mxu0 0
  %10012 = vmatpush1.bf16.msra.mxu0 %v9980
  %10013 = vmatprep.subr.bf16.mxu0 0
  %10014 = vmatpush1.bf16.msra.mxu0 %v9981
  %10015 = vmatprep.subr.bf16.mxu0 0
  %10016 = vmatpush1.bf16.msra.mxu0 %v9982
  %10017 = vmatprep.subr.bf16.mxu0 0
  %10018 = vmatpush1.bf16.msra.mxu0 %v10009
  %10019 = vmatprep.subr.bf16.mxu0 0
  %10020 = vmatpush1.bf16.msra.mxu0 0
  %10021 = vmatprep.subr.bf16.mxu0 0
  %10022 = vmatpush1.bf16.msra.mxu0 0
  %10023 = vmatprep.subr.bf16.mxu0 0
  %10024 = vmatpush1.bf16.msra.mxu0 0
  %10025 = vmatprep.subr.bf16.mxu0 0
  %10026 = vmatpush1.bf16.msra.mxu0 0
  %10027 = vmatprep.subr.bf16.mxu0 0
  %10028 = vmatpush1.bf16.msra.mxu0 0
  %10029 = vmatprep.subr.bf16.mxu0 0
  %10030 = vmatpush1.bf16.msra.mxu0 0
  %10031 = vmatprep.subr.bf16.mxu0 0
  %10032 = vmatpush1.bf16.msra.mxu0 0
  %10033 = vmatprep.subr.bf16.mxu0 0
  %10034 = vmatpush1.bf16.msra.mxu0 0
  %10035 = vmatprep.subr.bf16.mxu0 0
  %10036 = vmatpush1.bf16.msra.mxu0 0
  %10037 = vmatprep.subr.bf16.mxu0 0
  %10038 = vmatpush1.bf16.msra.mxu0 0
  %10039 = vmatprep.subr.bf16.mxu0 0
  %10040 = vmatpush1.bf16.msra.mxu0 0
  %10041 = vmatprep.subr.bf16.mxu0 0
  %10042 = vmatpush1.bf16.msra.mxu0 0
  %10043 = vmatprep.mubr.bf16.mxu0 0
  %10044 = vmatmul.mubr.bf16.gmra.mrb[0].mxu0 %v10005
  %v10045 = vpop.f32.mrb[0].mxu0
  %v10046 = vadd.f32 %v9991, %v10045
  %v10047 = vpop.f32.mrb[0].mxu0
  %v10048 = vpop.f32.mrb[0].mxu0
  %v10049 = vadd.f32 %v9996, %v10048
  %v10050 = vpop.f32.mrb[0].mxu0
  %10051 = vdwg.mxu0
  %vm10052 = vcmask 1041408
  %v10053 = vsel %vm10052, %v10049, -inf
  %v10054 = vmax.f32 %v10046, %v10053
  %v10055 = vrot.slane %v10054, 4
  %v10056 = vmax.f32 %v10054, %v10055
  %v10057 = vrot.slane %v10056, 2
  %v10058 = vmax.f32 %v10056, %v10057
  %v10059 = vrot.slane %v10058, 1
  %v10060 = vmax.f32 %v10058, %v10059
  %v10061 = vsub.f32 %v10046, %v10060
  %v10062 = vsub.f32 %v10049, %v10060
  %v10063 = vmul.f32 %v10061, 1.442695
  %v10064 = vpow.pop %v10063
  %v10065 = vmul.f32 %v10062, 1.442695
  %v10066 = vpow.pop %v10065
  %v10067 = vsel %vm10052, %v10066, 0.0
  %v10068 = vadd.f32 %v10064, %v10067
  %v10069 = vrot.slane %v10068, 4
  %v10070 = vadd.f32 %v10068, %v10069
  %v10071 = vrot.slane %v10070, 2
  %v10072 = vadd.f32 %v10070, %v10071
  %v10073 = vrot.slane %v10072, 1
  %v10074 = vadd.f32 %v10072, %v10073
  %v10075 = vlog2.pop %v10074
  %v10076 = vmul.f32 %v10075, 0.6931472
  %v10077 = vsub.f32 %v10061, %v10076
  %v10078 = vsub.f32 %v10062, %v10076
  %10079 = vst [vmem:[%s9] sm:$0xff] %v10077
  %10080 = vst [vmem:[%s9 + $0x8] sm:$0x3] %v10078
  // Predicated region
  $region38: #{net_forward.1} parent=0 // pred_check
    _
  $region39: #{net_forward.1} parent=0 // pred_check_branch
    %10082 = sbr.rel (0) target = $region41
  $region40: #{net_forward.1} parent=0 // pred_region
    _
  $region41: #{net_forward.1} parent=0 // pred_fallthru
    _
  // Predicated region
  $region42: #{net_forward.1} parent=0 // pred_check
    _
  $region43: #{net_forward.1} parent=0 // pred_check_branch
    %10084 = sbr.rel (0) target = $region45
  $region44: #{net_forward.1} parent=0 // pred_region
    _
  $region45: #{net_forward.1} parent=0 // pred_fallthru
    _

</llo_original>
